<compile_context>
chip_gen: v5e
topology: v5e:2x2
jax: 0.10.0
libtpu: 0.0.40
codegen_flags: <defaults>
</compile_context>

<pallas_src>
import jax
import jax.numpy as jnp
from jax import lax
from jax.experimental import pallas as pl
from jax.experimental.pallas import tpu as pltpu

HIDDEN = 256          # torch.nn.LSTM(hidden_size=256)
NUM_DIRS = 2          # bidirectional=True
NUM_CLASSES = 10
FEATURE = 32
BATCH = 2
SEQ = 8


def _bilstm_fc_kernel(x2_ref, wih_ref, whh_ref, b_ref, fcw_ref, fcb_ref,
                      out_ref, gx_ref):
    """Single-invocation fused bidirectional LSTM + FC.

    x2_ref : (T*B, F)       time-major flattened input, row t*B + b == x[b, t]
    wih_ref: (F, 2*4H)      [W_ih_fwd | W_ih_rev] pre-transposed & fused
    whh_ref: (2, H, 4H)     per-direction hidden->gates weights (pre-transposed)
    b_ref  : (1, 2*4H)      [b_fwd | b_rev]  (b_ih + b_hh per direction)
    fcw_ref: (2H, C)        FC weight (pre-transposed)
    fcb_ref: (1, C)         FC bias
    out_ref: (B, C)         logits
    gx_ref : (T*B, 2*4H)    VMEM scratch holding the hoisted input projection
    Gate order follows PyTorch: i, f, g, o.
    """
    B, _C = out_ref.shape
    TB, _F = x2_ref.shape
    T = TB // B
    H = whh_ref.shape[1]
    G = 4 * H

    # ---- hoisted input projection for BOTH directions + bias: one wide matmul ----
    gx_ref[...] = (jnp.dot(x2_ref[...], wih_ref[...],
                           preferred_element_type=jnp.float32) + b_ref[...])

    w_hh_f = whh_ref[0]          # (H, 4H)
    w_hh_r = whh_ref[1]          # (H, 4H)

    h_f = jnp.zeros((B, H), jnp.float32)
    c_f = jnp.zeros((B, H), jnp.float32)
    h_r = jnp.zeros((B, H), jnp.float32)
    c_r = jnp.zeros((B, H), jnp.float32)

    def cell(gates, c):
        i_g = jax.nn.sigmoid(gates[:, 0 * H:1 * H])
        f_g = jax.nn.sigmoid(gates[:, 1 * H:2 * H])
        g_g = jnp.tanh(gates[:, 2 * H:3 * H])
        o_g = jax.nn.sigmoid(gates[:, 3 * H:4 * H])
        c_new = f_g * c + i_g * g_g
        h_new = o_g * jnp.tanh(c_new)
        return h_new, c_new

    # Fully unrolled recurrence (T is a static Python int): only one h @ W_hh
    # matmul per direction per step; forward/reverse interleaved for ILP.
    for t in range(T):
        gx_f = gx_ref[t * B:(t + 1) * B, 0:G]                  # forward uses step t
        gx_r = gx_ref[(T - 1 - t) * B:(T - t) * B, G:2 * G]    # reverse uses T-1-t
        gates_f = gx_f + jnp.dot(h_f, w_hh_f, preferred_element_type=jnp.float32)
        gates_r = gx_r + jnp.dot(h_r, w_hh_r, preferred_element_type=jnp.float32)
        h_f, c_f = cell(gates_f, c_f)
        h_r, c_r = cell(gates_r, c_r)

    # ---- fused FC, reproducing PyTorch's hn.view(B, -1) on the (2, B, H) hn ----
    # hn_flat row i is the flat chunk [i*2H : (i+1)*2H] of hn; chunk k of size H
    # maps to (direction, batch) = divmod(k, B).  Row i uses chunks 2i and 2i+1.
    h_dirs = (h_f, h_r)
    for i in range(B):
        d0, b0 = divmod(2 * i, B)
        d1, b1 = divmod(2 * i + 1, B)
        row = (jnp.dot(h_dirs[d0][b0:b0 + 1, :], fcw_ref[0:H, :],
                       preferred_element_type=jnp.float32)
               + jnp.dot(h_dirs[d1][b1:b1 + 1, :], fcw_ref[H:2 * H, :],
                         preferred_element_type=jnp.float32)
               + fcb_ref[...])
        out_ref[i:i + 1, :] = row


def lstm_model_forward(x, params):
    """x: (B, T, F) float32, batch_first like the PyTorch module."""
    B, T, F = x.shape
    H = HIDDEN
    # time-major rows: row t*B + b == x[b, t]
    x2 = jnp.transpose(x, (1, 0, 2)).reshape(T * B, F)
    # fuse both directions' input weights / biases along the gate axis
    w_ih_both = jnp.concatenate([params["w_ih"][0], params["w_ih"][1]], axis=1)  # (F, 8H)
    b_both = jnp.concatenate([params["b"][0], params["b"][1]], axis=1)           # (1, 8H)
    num_classes = params["fc_w"].shape[1]

    # No grid: everything (~2.6 MB of weights + a 128 KB scratch) is fully VMEM
    # resident on every generation, so one invocation with whole-array blocks.
    out = pl.pallas_call(
        _bilstm_fc_kernel,
        out_shape=jax.ShapeDtypeStruct((B, num_classes), jnp.float32),
        scratch_shapes=[pltpu.VMEM((T * B, NUM_DIRS * 4 * H), jnp.float32)],
    )(x2, w_ih_both, params["w_hh"], b_both, params["fc_w"], params["fc_b"])
    return out


def init_params(key, feature_size, num_classes):
    """Deterministic parameter init matching PyTorch shapes (transposed for matmul)."""
    H = HIDDEN
    ks = jax.random.split(key, 8)
    s_lstm = 1.0 / jnp.sqrt(H)
    s_fc = 1.0 / jnp.sqrt(2 * H)
    # stacked per direction: [forward, reverse]
    w_ih = jax.random.uniform(ks[0], (NUM_DIRS, feature_size, 4 * H),
                              jnp.float32, -s_lstm, s_lstm)
    w_hh = jax.random.uniform(ks[1], (NUM_DIRS, H, 4 * H),
                              jnp.float32, -s_lstm, s_lstm)
    b_ih = jax.random.uniform(ks[2], (NUM_DIRS, 1, 4 * H),
                              jnp.float32, -s_lstm, s_lstm)
    b_hh = jax.random.uniform(ks[3], (NUM_DIRS, 1, 4 * H),
                              jnp.float32, -s_lstm, s_lstm)
    fc_w = jax.random.uniform(ks[4], (2 * H, num_classes),
                              jnp.float32, -s_fc, s_fc)
    fc_b = jax.random.uniform(ks[5], (1, num_classes),
                              jnp.float32, -s_fc, s_fc)
    return {"w_ih": w_ih, "w_hh": w_hh, "b": b_ih + b_hh,
            "fc_w": fc_w, "fc_b": fc_b}


def _reference_forward(x, params):
    """Pure-JAX reference (same math) for a sanity check."""
    B, T, F = x.shape
    H = HIDDEN

    def run_dir(d):
        w_ih, w_hh, bias = params["w_ih"][d], params["w_hh"][d], params["b"][d]
        xs = x if d == 0 else x[:, ::-1, :]

        def step(carry, x_t):
            h, c = carry
            gates = x_t @ w_ih + h @ w_hh + bias
            i_g = jax.nn.sigmoid(gates[:, 0 * H:1 * H])
            f_g = jax.nn.sigmoid(gates[:, 1 * H:2 * H])
            g_g = jnp.tanh(gates[:, 2 * H:3 * H])
            o_g = jax.nn.sigmoid(gates[:, 3 * H:4 * H])
            c_new = f_g * c + i_g * g_g
            h_new = o_g * jnp.tanh(c_new)
            return (h_new, c_new), None

        (h_fin, _), _ = lax.scan(step, (jnp.zeros((B, H)), jnp.zeros((B, H))),
                                 jnp.transpose(xs, (1, 0, 2)))
        return h_fin

    hn = jnp.stack([run_dir(0), run_dir(1)], axis=0)      # (2, B, H)
    hn_flat = hn.reshape(B, 2 * H)                        # PyTorch hn.view(B, -1)
    return hn_flat @ params["fc_w"] + params["fc_b"]


if __name__ == "__main__":
    key = jax.random.PRNGKey(0)
    k_x, k_p = jax.random.split(key)
    x = jax.random.normal(k_x, (BATCH, SEQ, FEATURE), jnp.float32)
    params = init_params(k_p, FEATURE, NUM_CLASSES)

    out = jax.block_until_ready(lstm_model_forward(x, params))
    ref = jax.block_until_ready(_reference_forward(x, params))
    assert out.shape == (BATCH, NUM_CLASSES)
    assert jnp.allclose(out, ref, atol=1e-3, rtol=1e-3)
    print("KERNEL_OK")
</pallas_src>

<mosaic_0001>
module attributes {stable_mosaic.version = 11 : i64} {
  func.func @_bilstm_fc_kernel(%arg0: memref<16x32xf32, #tpu.memory_space<vmem>>, %arg1: memref<32x2048xf32, #tpu.memory_space<vmem>>, %arg2: memref<2x256x1024xf32, #tpu.memory_space<vmem>>, %arg3: memref<1x2048xf32, #tpu.memory_space<vmem>>, %arg4: memref<512x10xf32, #tpu.memory_space<vmem>>, %arg5: memref<1x10xf32, #tpu.memory_space<vmem>>, %arg6: memref<2x10xf32, #tpu.memory_space<vmem>>, %arg7: memref<16x2048xf32, #tpu.memory_space<vmem>>) attributes {dimension_semantics = [], scalar_prefetch = 0 : i64, scratch_operands = 1 : i64, tpu.core_type = #tpu.core_type<tc>} {
    %c0 = arith.constant 0 : index
    %c0_0 = arith.constant 0 : index
    %0 = vector.load %arg0[%c0, %c0_0] : memref<16x32xf32, #tpu.memory_space<vmem>>, vector<16x32xf32>
    %c0_1 = arith.constant 0 : index
    %c0_2 = arith.constant 0 : index
    %1 = vector.load %arg1[%c0_1, %c0_2] : memref<32x2048xf32, #tpu.memory_space<vmem>>, vector<32x2048xf32>
    %cst = arith.constant dense<0.000000e+00> : vector<16x2048xf32>
    %2 = tpu.matmul %0, %1, %cst {dimension_numbers = #tpu.dot_dimension_numbers<[1], [0], [0], [1], [0, 0, 1, 1], [], []>} : vector<16x32xf32>, vector<32x2048xf32>, vector<16x2048xf32> -> vector<16x2048xf32>
    %c0_3 = arith.constant 0 : index
    %c0_4 = arith.constant 0 : index
    %3 = vector.load %arg3[%c0_3, %c0_4] : memref<1x2048xf32, #tpu.memory_space<vmem>>, vector<1x2048xf32>
    %4 = vector.broadcast %3 : vector<1x2048xf32> to vector<16x2048xf32>
    %5 = arith.addf %2, %4 : vector<16x2048xf32>
    %c0_5 = arith.constant 0 : index
    %c0_6 = arith.constant 0 : index
    %6 = vector.load %arg7[%c0_5, %c0_6] : memref<16x2048xf32, #tpu.memory_space<vmem>>, vector<16x2048xf32>
    tpu.vector_store %arg7[%c0_5, %c0_6], %5 {strides = array<i32>} : memref<16x2048xf32, #tpu.memory_space<vmem>>, vector<16x2048xf32>,
    %c0_7 = arith.constant 0 : index
    %c0_8 = arith.constant 0 : index
    %c0_9 = arith.constant 0 : index
    %7 = vector.load %arg2[%c0_7, %c0_8, %c0_9] : memref<2x256x1024xf32, #tpu.memory_space<vmem>>, vector<1x256x1024xf32>
    %8 = vector.shape_cast %7 : vector<1x256x1024xf32> to vector<256x1024xf32>
    %c1 = arith.constant 1 : index
    %c0_10 = arith.constant 0 : index
    %c0_11 = arith.constant 0 : index
    %9 = vector.load %arg2[%c1, %c0_10, %c0_11] : memref<2x256x1024xf32, #tpu.memory_space<vmem>>, vector<1x256x1024xf32>
    %10 = vector.shape_cast %9 : vector<1x256x1024xf32> to vector<256x1024xf32>
    %cst_12 = arith.constant 0.000000e+00 : f32
    %11 = vector.broadcast %cst_12 : f32 to vector<2x256xf32>
    %cst_13 = arith.constant 0.000000e+00 : f32
    %12 = vector.broadcast %cst_13 : f32 to vector<2x256xf32>
    %cst_14 = arith.constant 0.000000e+00 : f32
    %13 = vector.broadcast %cst_14 : f32 to vector<2x256xf32>
    %cst_15 = arith.constant 0.000000e+00 : f32
    %14 = vector.broadcast %cst_15 : f32 to vector<2x256xf32>
    %c0_16 = arith.constant 0 : index
    %c0_17 = arith.constant 0 : index
    %15 = vector.load %arg7[%c0_16, %c0_17] : memref<16x2048xf32, #tpu.memory_space<vmem>>, vector<2x1024xf32>
    %c14 = arith.constant 14 : index
    %c1024 = arith.constant 1024 : index
    %16 = vector.load %arg7[%c14, %c1024] : memref<16x2048xf32, #tpu.memory_space<vmem>>, vector<2x1024xf32>
    %cst_18 = arith.constant dense<0.000000e+00> : vector<2x1024xf32>
    %17 = tpu.matmul %11, %8, %cst_18 {dimension_numbers = #tpu.dot_dimension_numbers<[1], [0], [0], [1], [0, 0, 1, 1], [], []>} : vector<2x256xf32>, vector<256x1024xf32>, vector<2x1024xf32> -> vector<2x1024xf32>
    %18 = arith.addf %15, %17 : vector<2x1024xf32>
    %cst_19 = arith.constant dense<0.000000e+00> : vector<2x1024xf32>
    %19 = tpu.matmul %13, %10, %cst_19 {dimension_numbers = #tpu.dot_dimension_numbers<[1], [0], [0], [1], [0, 0, 1, 1], [], []>} : vector<2x256xf32>, vector<256x1024xf32>, vector<2x1024xf32> -> vector<2x1024xf32>
    %20 = arith.addf %16, %19 : vector<2x1024xf32>
    %21 = vector.extract_strided_slice %18 {offsets = [0, 0], sizes = [2, 256], strides = [1, 1]} : vector<2x1024xf32> to vector<2x256xf32>
    %22 = arith.negf %21 : vector<2x256xf32>
    %23 = math.exp %22 : vector<2x256xf32>
    %cst_20 = arith.constant 1.000000e+00 : f32
    %24 = vector.broadcast %cst_20 : f32 to vector<2x256xf32>
    %25 = arith.addf %24, %23 : vector<2x256xf32>
    %26 = arith.divf %24, %25 : vector<2x256xf32>
    %27 = vector.extract_strided_slice %18 {offsets = [0, 256], sizes = [2, 256], strides = [1, 1]} : vector<2x1024xf32> to vector<2x256xf32>
    %28 = arith.negf %27 : vector<2x256xf32>
    %29 = math.exp %28 : vector<2x256xf32>
    %cst_21 = arith.constant 1.000000e+00 : f32
    %30 = vector.broadcast %cst_21 : f32 to vector<2x256xf32>
    %31 = arith.addf %30, %29 : vector<2x256xf32>
    %32 = arith.divf %30, %31 : vector<2x256xf32>
    %33 = vector.extract_strided_slice %18 {offsets = [0, 512], sizes = [2, 256], strides = [1, 1]} : vector<2x1024xf32> to vector<2x256xf32>
    %34 = math.tanh %33 : vector<2x256xf32>
    %35 = vector.extract_strided_slice %18 {offsets = [0, 768], sizes = [2, 256], strides = [1, 1]} : vector<2x1024xf32> to vector<2x256xf32>
    %36 = arith.negf %35 : vector<2x256xf32>
    %37 = math.exp %36 : vector<2x256xf32>
    %cst_22 = arith.constant 1.000000e+00 : f32
    %38 = vector.broadcast %cst_22 : f32 to vector<2x256xf32>
    %39 = arith.addf %38, %37 : vector<2x256xf32>
    %40 = arith.divf %38, %39 : vector<2x256xf32>
    %41 = arith.mulf %32, %12 : vector<2x256xf32>
    %42 = arith.mulf %26, %34 : vector<2x256xf32>
    %43 = arith.addf %41, %42 : vector<2x256xf32>
    %44 = math.tanh %43 : vector<2x256xf32>
    %45 = arith.mulf %40, %44 : vector<2x256xf32>
    %46 = vector.extract_strided_slice %20 {offsets = [0, 0], sizes = [2, 256], strides = [1, 1]} : vector<2x1024xf32> to vector<2x256xf32>
    %47 = arith.negf %46 : vector<2x256xf32>
    %48 = math.exp %47 : vector<2x256xf32>
    %cst_23 = arith.constant 1.000000e+00 : f32
    %49 = vector.broadcast %cst_23 : f32 to vector<2x256xf32>
    %50 = arith.addf %49, %48 : vector<2x256xf32>
    %51 = arith.divf %49, %50 : vector<2x256xf32>
    %52 = vector.extract_strided_slice %20 {offsets = [0, 256], sizes = [2, 256], strides = [1, 1]} : vector<2x1024xf32> to vector<2x256xf32>
    %53 = arith.negf %52 : vector<2x256xf32>
    %54 = math.exp %53 : vector<2x256xf32>
    %cst_24 = arith.constant 1.000000e+00 : f32
    %55 = vector.broadcast %cst_24 : f32 to vector<2x256xf32>
    %56 = arith.addf %55, %54 : vector<2x256xf32>
    %57 = arith.divf %55, %56 : vector<2x256xf32>
    %58 = vector.extract_strided_slice %20 {offsets = [0, 512], sizes = [2, 256], strides = [1, 1]} : vector<2x1024xf32> to vector<2x256xf32>
    %59 = math.tanh %58 : vector<2x256xf32>
    %60 = vector.extract_strided_slice %20 {offsets = [0, 768], sizes = [2, 256], strides = [1, 1]} : vector<2x1024xf32> to vector<2x256xf32>
    %61 = arith.negf %60 : vector<2x256xf32>
    %62 = math.exp %61 : vector<2x256xf32>
    %cst_25 = arith.constant 1.000000e+00 : f32
    %63 = vector.broadcast %cst_25 : f32 to vector<2x256xf32>
    %64 = arith.addf %63, %62 : vector<2x256xf32>
    %65 = arith.divf %63, %64 : vector<2x256xf32>
    %66 = arith.mulf %57, %14 : vector<2x256xf32>
    %67 = arith.mulf %51, %59 : vector<2x256xf32>
    %68 = arith.addf %66, %67 : vector<2x256xf32>
    %69 = math.tanh %68 : vector<2x256xf32>
    %70 = arith.mulf %65, %69 : vector<2x256xf32>
    %c2 = arith.constant 2 : index
    %c0_26 = arith.constant 0 : index
    %71 = vector.load %arg7[%c2, %c0_26] : memref<16x2048xf32, #tpu.memory_space<vmem>>, vector<2x1024xf32>
    %c12 = arith.constant 12 : index
    %c1024_27 = arith.constant 1024 : index
    %72 = vector.load %arg7[%c12, %c1024_27] : memref<16x2048xf32, #tpu.memory_space<vmem>>, vector<2x1024xf32>
    %cst_28 = arith.constant dense<0.000000e+00> : vector<2x1024xf32>
    %73 = tpu.matmul %45, %8, %cst_28 {dimension_numbers = #tpu.dot_dimension_numbers<[1], [0], [0], [1], [0, 0, 1, 1], [], []>} : vector<2x256xf32>, vector<256x1024xf32>, vector<2x1024xf32> -> vector<2x1024xf32>
    %74 = arith.addf %71, %73 : vector<2x1024xf32>
    %cst_29 = arith.constant dense<0.000000e+00> : vector<2x1024xf32>
    %75 = tpu.matmul %70, %10, %cst_29 {dimension_numbers = #tpu.dot_dimension_numbers<[1], [0], [0], [1], [0, 0, 1, 1], [], []>} : vector<2x256xf32>, vector<256x1024xf32>, vector<2x1024xf32> -> vector<2x1024xf32>
    %76 = arith.addf %72, %75 : vector<2x1024xf32>
    %77 = vector.extract_strided_slice %74 {offsets = [0, 0], sizes = [2, 256], strides = [1, 1]} : vector<2x1024xf32> to vector<2x256xf32>
    %78 = arith.negf %77 : vector<2x256xf32>
    %79 = math.exp %78 : vector<2x256xf32>
    %cst_30 = arith.constant 1.000000e+00 : f32
    %80 = vector.broadcast %cst_30 : f32 to vector<2x256xf32>
    %81 = arith.addf %80, %79 : vector<2x256xf32>
    %82 = arith.divf %80, %81 : vector<2x256xf32>
    %83 = vector.extract_strided_slice %74 {offsets = [0, 256], sizes = [2, 256], strides = [1, 1]} : vector<2x1024xf32> to vector<2x256xf32>
    %84 = arith.negf %83 : vector<2x256xf32>
    %85 = math.exp %84 : vector<2x256xf32>
    %cst_31 = arith.constant 1.000000e+00 : f32
    %86 = vector.broadcast %cst_31 : f32 to vector<2x256xf32>
    %87 = arith.addf %86, %85 : vector<2x256xf32>
    %88 = arith.divf %86, %87 : vector<2x256xf32>
    %89 = vector.extract_strided_slice %74 {offsets = [0, 512], sizes = [2, 256], strides = [1, 1]} : vector<2x1024xf32> to vector<2x256xf32>
    %90 = math.tanh %89 : vector<2x256xf32>
    %91 = vector.extract_strided_slice %74 {offsets = [0, 768], sizes = [2, 256], strides = [1, 1]} : vector<2x1024xf32> to vector<2x256xf32>
    %92 = arith.negf %91 : vector<2x256xf32>
    %93 = math.exp %92 : vector<2x256xf32>
    %cst_32 = arith.constant 1.000000e+00 : f32
    %94 = vector.broadcast %cst_32 : f32 to vector<2x256xf32>
    %95 = arith.addf %94, %93 : vector<2x256xf32>
    %96 = arith.divf %94, %95 : vector<2x256xf32>
    %97 = arith.mulf %88, %43 : vector<2x256xf32>
    %98 = arith.mulf %82, %90 : vector<2x256xf32>
    %99 = arith.addf %97, %98 : vector<2x256xf32>
    %100 = math.tanh %99 : vector<2x256xf32>
    %101 = arith.mulf %96, %100 : vector<2x256xf32>
    %102 = vector.extract_strided_slice %76 {offsets = [0, 0], sizes = [2, 256], strides = [1, 1]} : vector<2x1024xf32> to vector<2x256xf32>
    %103 = arith.negf %102 : vector<2x256xf32>
    %104 = math.exp %103 : vector<2x256xf32>
    %cst_33 = arith.constant 1.000000e+00 : f32
    %105 = vector.broadcast %cst_33 : f32 to vector<2x256xf32>
    %106 = arith.addf %105, %104 : vector<2x256xf32>
    %107 = arith.divf %105, %106 : vector<2x256xf32>
    %108 = vector.extract_strided_slice %76 {offsets = [0, 256], sizes = [2, 256], strides = [1, 1]} : vector<2x1024xf32> to vector<2x256xf32>
    %109 = arith.negf %108 : vector<2x256xf32>
    %110 = math.exp %109 : vector<2x256xf32>
    %cst_34 = arith.constant 1.000000e+00 : f32
    %111 = vector.broadcast %cst_34 : f32 to vector<2x256xf32>
    %112 = arith.addf %111, %110 : vector<2x256xf32>
    %113 = arith.divf %111, %112 : vector<2x256xf32>
    %114 = vector.extract_strided_slice %76 {offsets = [0, 512], sizes = [2, 256], strides = [1, 1]} : vector<2x1024xf32> to vector<2x256xf32>
    %115 = math.tanh %114 : vector<2x256xf32>
    %116 = vector.extract_strided_slice %76 {offsets = [0, 768], sizes = [2, 256], strides = [1, 1]} : vector<2x1024xf32> to vector<2x256xf32>
    %117 = arith.negf %116 : vector<2x256xf32>
    %118 = math.exp %117 : vector<2x256xf32>
    %cst_35 = arith.constant 1.000000e+00 : f32
    %119 = vector.broadcast %cst_35 : f32 to vector<2x256xf32>
    %120 = arith.addf %119, %118 : vector<2x256xf32>
    %121 = arith.divf %119, %120 : vector<2x256xf32>
    %122 = arith.mulf %113, %68 : vector<2x256xf32>
    %123 = arith.mulf %107, %115 : vector<2x256xf32>
    %124 = arith.addf %122, %123 : vector<2x256xf32>
    %125 = math.tanh %124 : vector<2x256xf32>
    %126 = arith.mulf %121, %125 : vector<2x256xf32>
    %c4 = arith.constant 4 : index
    %c0_36 = arith.constant 0 : index
    %127 = vector.load %arg7[%c4, %c0_36] : memref<16x2048xf32, #tpu.memory_space<vmem>>, vector<2x1024xf32>
    %c10 = arith.constant 10 : index
    %c1024_37 = arith.constant 1024 : index
    %128 = vector.load %arg7[%c10, %c1024_37] : memref<16x2048xf32, #tpu.memory_space<vmem>>, vector<2x1024xf32>
    %cst_38 = arith.constant dense<0.000000e+00> : vector<2x1024xf32>
    %129 = tpu.matmul %101, %8, %cst_38 {dimension_numbers = #tpu.dot_dimension_numbers<[1], [0], [0], [1], [0, 0, 1, 1], [], []>} : vector<2x256xf32>, vector<256x1024xf32>, vector<2x1024xf32> -> vector<2x1024xf32>
    %130 = arith.addf %127, %129 : vector<2x1024xf32>
    %cst_39 = arith.constant dense<0.000000e+00> : vector<2x1024xf32>
    %131 = tpu.matmul %126, %10, %cst_39 {dimension_numbers = #tpu.dot_dimension_numbers<[1], [0], [0], [1], [0, 0, 1, 1], [], []>} : vector<2x256xf32>, vector<256x1024xf32>, vector<2x1024xf32> -> vector<2x1024xf32>
    %132 = arith.addf %128, %131 : vector<2x1024xf32>
    %133 = vector.extract_strided_slice %130 {offsets = [0, 0], sizes = [2, 256], strides = [1, 1]} : vector<2x1024xf32> to vector<2x256xf32>
    %134 = arith.negf %133 : vector<2x256xf32>
    %135 = math.exp %134 : vector<2x256xf32>
    %cst_40 = arith.constant 1.000000e+00 : f32
    %136 = vector.broadcast %cst_40 : f32 to vector<2x256xf32>
    %137 = arith.addf %136, %135 : vector<2x256xf32>
    %138 = arith.divf %136, %137 : vector<2x256xf32>
    %139 = vector.extract_strided_slice %130 {offsets = [0, 256], sizes = [2, 256], strides = [1, 1]} : vector<2x1024xf32> to vector<2x256xf32>
    %140 = arith.negf %139 : vector<2x256xf32>
    %141 = math.exp %140 : vector<2x256xf32>
    %cst_41 = arith.constant 1.000000e+00 : f32
    %142 = vector.broadcast %cst_41 : f32 to vector<2x256xf32>
    %143 = arith.addf %142, %141 : vector<2x256xf32>
    %144 = arith.divf %142, %143 : vector<2x256xf32>
    %145 = vector.extract_strided_slice %130 {offsets = [0, 512], sizes = [2, 256], strides = [1, 1]} : vector<2x1024xf32> to vector<2x256xf32>
    %146 = math.tanh %145 : vector<2x256xf32>
    %147 = vector.extract_strided_slice %130 {offsets = [0, 768], sizes = [2, 256], strides = [1, 1]} : vector<2x1024xf32> to vector<2x256xf32>
    %148 = arith.negf %147 : vector<2x256xf32>
    %149 = math.exp %148 : vector<2x256xf32>
    %cst_42 = arith.constant 1.000000e+00 : f32
    %150 = vector.broadcast %cst_42 : f32 to vector<2x256xf32>
    %151 = arith.addf %150, %149 : vector<2x256xf32>
    %152 = arith.divf %150, %151 : vector<2x256xf32>
    %153 = arith.mulf %144, %99 : vector<2x256xf32>
    %154 = arith.mulf %138, %146 : vector<2x256xf32>
    %155 = arith.addf %153, %154 : vector<2x256xf32>
    %156 = math.tanh %155 : vector<2x256xf32>
    %157 = arith.mulf %152, %156 : vector<2x256xf32>
    %158 = vector.extract_strided_slice %132 {offsets = [0, 0], sizes = [2, 256], strides = [1, 1]} : vector<2x1024xf32> to vector<2x256xf32>
    %159 = arith.negf %158 : vector<2x256xf32>
    %160 = math.exp %159 : vector<2x256xf32>
    %cst_43 = arith.constant 1.000000e+00 : f32
    %161 = vector.broadcast %cst_43 : f32 to vector<2x256xf32>
    %162 = arith.addf %161, %160 : vector<2x256xf32>
    %163 = arith.divf %161, %162 : vector<2x256xf32>
    %164 = vector.extract_strided_slice %132 {offsets = [0, 256], sizes = [2, 256], strides = [1, 1]} : vector<2x1024xf32> to vector<2x256xf32>
    %165 = arith.negf %164 : vector<2x256xf32>
    %166 = math.exp %165 : vector<2x256xf32>
    %cst_44 = arith.constant 1.000000e+00 : f32
    %167 = vector.broadcast %cst_44 : f32 to vector<2x256xf32>
    %168 = arith.addf %167, %166 : vector<2x256xf32>
    %169 = arith.divf %167, %168 : vector<2x256xf32>
    %170 = vector.extract_strided_slice %132 {offsets = [0, 512], sizes = [2, 256], strides = [1, 1]} : vector<2x1024xf32> to vector<2x256xf32>
    %171 = math.tanh %170 : vector<2x256xf32>
    %172 = vector.extract_strided_slice %132 {offsets = [0, 768], sizes = [2, 256], strides = [1, 1]} : vector<2x1024xf32> to vector<2x256xf32>
    %173 = arith.negf %172 : vector<2x256xf32>
    %174 = math.exp %173 : vector<2x256xf32>
    %cst_45 = arith.constant 1.000000e+00 : f32
    %175 = vector.broadcast %cst_45 : f32 to vector<2x256xf32>
    %176 = arith.addf %175, %174 : vector<2x256xf32>
    %177 = arith.divf %175, %176 : vector<2x256xf32>
    %178 = arith.mulf %169, %124 : vector<2x256xf32>
    %179 = arith.mulf %163, %171 : vector<2x256xf32>
    %180 = arith.addf %178, %179 : vector<2x256xf32>
    %181 = math.tanh %180 : vector<2x256xf32>
    %182 = arith.mulf %177, %181 : vector<2x256xf32>
    %c6 = arith.constant 6 : index
    %c0_46 = arith.constant 0 : index
    %183 = vector.load %arg7[%c6, %c0_46] : memref<16x2048xf32, #tpu.memory_space<vmem>>, vector<2x1024xf32>
    %c8 = arith.constant 8 : index
    %c1024_47 = arith.constant 1024 : index
    %184 = vector.load %arg7[%c8, %c1024_47] : memref<16x2048xf32, #tpu.memory_space<vmem>>, vector<2x1024xf32>
    %cst_48 = arith.constant dense<0.000000e+00> : vector<2x1024xf32>
    %185 = tpu.matmul %157, %8, %cst_48 {dimension_numbers = #tpu.dot_dimension_numbers<[1], [0], [0], [1], [0, 0, 1, 1], [], []>} : vector<2x256xf32>, vector<256x1024xf32>, vector<2x1024xf32> -> vector<2x1024xf32>
    %186 = arith.addf %183, %185 : vector<2x1024xf32>
    %cst_49 = arith.constant dense<0.000000e+00> : vector<2x1024xf32>
    %187 = tpu.matmul %182, %10, %cst_49 {dimension_numbers = #tpu.dot_dimension_numbers<[1], [0], [0], [1], [0, 0, 1, 1], [], []>} : vector<2x256xf32>, vector<256x1024xf32>, vector<2x1024xf32> -> vector<2x1024xf32>
    %188 = arith.addf %184, %187 : vector<2x1024xf32>
    %189 = vector.extract_strided_slice %186 {offsets = [0, 0], sizes = [2, 256], strides = [1, 1]} : vector<2x1024xf32> to vector<2x256xf32>
    %190 = arith.negf %189 : vector<2x256xf32>
    %191 = math.exp %190 : vector<2x256xf32>
    %cst_50 = arith.constant 1.000000e+00 : f32
    %192 = vector.broadcast %cst_50 : f32 to vector<2x256xf32>
    %193 = arith.addf %192, %191 : vector<2x256xf32>
    %194 = arith.divf %192, %193 : vector<2x256xf32>
    %195 = vector.extract_strided_slice %186 {offsets = [0, 256], sizes = [2, 256], strides = [1, 1]} : vector<2x1024xf32> to vector<2x256xf32>
    %196 = arith.negf %195 : vector<2x256xf32>
    %197 = math.exp %196 : vector<2x256xf32>
    %cst_51 = arith.constant 1.000000e+00 : f32
    %198 = vector.broadcast %cst_51 : f32 to vector<2x256xf32>
    %199 = arith.addf %198, %197 : vector<2x256xf32>
    %200 = arith.divf %198, %199 : vector<2x256xf32>
    %201 = vector.extract_strided_slice %186 {offsets = [0, 512], sizes = [2, 256], strides = [1, 1]} : vector<2x1024xf32> to vector<2x256xf32>
    %202 = math.tanh %201 : vector<2x256xf32>
    %203 = vector.extract_strided_slice %186 {offsets = [0, 768], sizes = [2, 256], strides = [1, 1]} : vector<2x1024xf32> to vector<2x256xf32>
    %204 = arith.negf %203 : vector<2x256xf32>
    %205 = math.exp %204 : vector<2x256xf32>
    %cst_52 = arith.constant 1.000000e+00 : f32
    %206 = vector.broadcast %cst_52 : f32 to vector<2x256xf32>
    %207 = arith.addf %206, %205 : vector<2x256xf32>
    %208 = arith.divf %206, %207 : vector<2x256xf32>
    %209 = arith.mulf %200, %155 : vector<2x256xf32>
    %210 = arith.mulf %194, %202 : vector<2x256xf32>
    %211 = arith.addf %209, %210 : vector<2x256xf32>
    %212 = math.tanh %211 : vector<2x256xf32>
    %213 = arith.mulf %208, %212 : vector<2x256xf32>
    %214 = vector.extract_strided_slice %188 {offsets = [0, 0], sizes = [2, 256], strides = [1, 1]} : vector<2x1024xf32> to vector<2x256xf32>
    %215 = arith.negf %214 : vector<2x256xf32>
    %216 = math.exp %215 : vector<2x256xf32>
    %cst_53 = arith.constant 1.000000e+00 : f32
    %217 = vector.broadcast %cst_53 : f32 to vector<2x256xf32>
    %218 = arith.addf %217, %216 : vector<2x256xf32>
    %219 = arith.divf %217, %218 : vector<2x256xf32>
    %220 = vector.extract_strided_slice %188 {offsets = [0, 256], sizes = [2, 256], strides = [1, 1]} : vector<2x1024xf32> to vector<2x256xf32>
    %221 = arith.negf %220 : vector<2x256xf32>
    %222 = math.exp %221 : vector<2x256xf32>
    %cst_54 = arith.constant 1.000000e+00 : f32
    %223 = vector.broadcast %cst_54 : f32 to vector<2x256xf32>
    %224 = arith.addf %223, %222 : vector<2x256xf32>
    %225 = arith.divf %223, %224 : vector<2x256xf32>
    %226 = vector.extract_strided_slice %188 {offsets = [0, 512], sizes = [2, 256], strides = [1, 1]} : vector<2x1024xf32> to vector<2x256xf32>
    %227 = math.tanh %226 : vector<2x256xf32>
    %228 = vector.extract_strided_slice %188 {offsets = [0, 768], sizes = [2, 256], strides = [1, 1]} : vector<2x1024xf32> to vector<2x256xf32>
    %229 = arith.negf %228 : vector<2x256xf32>
    %230 = math.exp %229 : vector<2x256xf32>
    %cst_55 = arith.constant 1.000000e+00 : f32
    %231 = vector.broadcast %cst_55 : f32 to vector<2x256xf32>
    %232 = arith.addf %231, %230 : vector<2x256xf32>
    %233 = arith.divf %231, %232 : vector<2x256xf32>
    %234 = arith.mulf %225, %180 : vector<2x256xf32>
    %235 = arith.mulf %219, %227 : vector<2x256xf32>
    %236 = arith.addf %234, %235 : vector<2x256xf32>
    %237 = math.tanh %236 : vector<2x256xf32>
    %238 = arith.mulf %233, %237 : vector<2x256xf32>
    %c8_56 = arith.constant 8 : index
    %c0_57 = arith.constant 0 : index
    %239 = vector.load %arg7[%c8_56, %c0_57] : memref<16x2048xf32, #tpu.memory_space<vmem>>, vector<2x1024xf32>
    %c6_58 = arith.constant 6 : index
    %c1024_59 = arith.constant 1024 : index
    %240 = vector.load %arg7[%c6_58, %c1024_59] : memref<16x2048xf32, #tpu.memory_space<vmem>>, vector<2x1024xf32>
    %cst_60 = arith.constant dense<0.000000e+00> : vector<2x1024xf32>
    %241 = tpu.matmul %213, %8, %cst_60 {dimension_numbers = #tpu.dot_dimension_numbers<[1], [0], [0], [1], [0, 0, 1, 1], [], []>} : vector<2x256xf32>, vector<256x1024xf32>, vector<2x1024xf32> -> vector<2x1024xf32>
    %242 = arith.addf %239, %241 : vector<2x1024xf32>
    %cst_61 = arith.constant dense<0.000000e+00> : vector<2x1024xf32>
    %243 = tpu.matmul %238, %10, %cst_61 {dimension_numbers = #tpu.dot_dimension_numbers<[1], [0], [0], [1], [0, 0, 1, 1], [], []>} : vector<2x256xf32>, vector<256x1024xf32>, vector<2x1024xf32> -> vector<2x1024xf32>
    %244 = arith.addf %240, %243 : vector<2x1024xf32>
    %245 = vector.extract_strided_slice %242 {offsets = [0, 0], sizes = [2, 256], strides = [1, 1]} : vector<2x1024xf32> to vector<2x256xf32>
    %246 = arith.negf %245 : vector<2x256xf32>
    %247 = math.exp %246 : vector<2x256xf32>
    %cst_62 = arith.constant 1.000000e+00 : f32
    %248 = vector.broadcast %cst_62 : f32 to vector<2x256xf32>
    %249 = arith.addf %248, %247 : vector<2x256xf32>
    %250 = arith.divf %248, %249 : vector<2x256xf32>
    %251 = vector.extract_strided_slice %242 {offsets = [0, 256], sizes = [2, 256], strides = [1, 1]} : vector<2x1024xf32> to vector<2x256xf32>
    %252 = arith.negf %251 : vector<2x256xf32>
    %253 = math.exp %252 : vector<2x256xf32>
    %cst_63 = arith.constant 1.000000e+00 : f32
    %254 = vector.broadcast %cst_63 : f32 to vector<2x256xf32>
    %255 = arith.addf %254, %253 : vector<2x256xf32>
    %256 = arith.divf %254, %255 : vector<2x256xf32>
    %257 = vector.extract_strided_slice %242 {offsets = [0, 512], sizes = [2, 256], strides = [1, 1]} : vector<2x1024xf32> to vector<2x256xf32>
    %258 = math.tanh %257 : vector<2x256xf32>
    %259 = vector.extract_strided_slice %242 {offsets = [0, 768], sizes = [2, 256], strides = [1, 1]} : vector<2x1024xf32> to vector<2x256xf32>
    %260 = arith.negf %259 : vector<2x256xf32>
    %261 = math.exp %260 : vector<2x256xf32>
    %cst_64 = arith.constant 1.000000e+00 : f32
    %262 = vector.broadcast %cst_64 : f32 to vector<2x256xf32>
    %263 = arith.addf %262, %261 : vector<2x256xf32>
    %264 = arith.divf %262, %263 : vector<2x256xf32>
    %265 = arith.mulf %256, %211 : vector<2x256xf32>
    %266 = arith.mulf %250, %258 : vector<2x256xf32>
    %267 = arith.addf %265, %266 : vector<2x256xf32>
    %268 = math.tanh %267 : vector<2x256xf32>
    %269 = arith.mulf %264, %268 : vector<2x256xf32>
    %270 = vector.extract_strided_slice %244 {offsets = [0, 0], sizes = [2, 256], strides = [1, 1]} : vector<2x1024xf32> to vector<2x256xf32>
    %271 = arith.negf %270 : vector<2x256xf32>
    %272 = math.exp %271 : vector<2x256xf32>
    %cst_65 = arith.constant 1.000000e+00 : f32
    %273 = vector.broadcast %cst_65 : f32 to vector<2x256xf32>
    %274 = arith.addf %273, %272 : vector<2x256xf32>
    %275 = arith.divf %273, %274 : vector<2x256xf32>
    %276 = vector.extract_strided_slice %244 {offsets = [0, 256], sizes = [2, 256], strides = [1, 1]} : vector<2x1024xf32> to vector<2x256xf32>
    %277 = arith.negf %276 : vector<2x256xf32>
    %278 = math.exp %277 : vector<2x256xf32>
    %cst_66 = arith.constant 1.000000e+00 : f32
    %279 = vector.broadcast %cst_66 : f32 to vector<2x256xf32>
    %280 = arith.addf %279, %278 : vector<2x256xf32>
    %281 = arith.divf %279, %280 : vector<2x256xf32>
    %282 = vector.extract_strided_slice %244 {offsets = [0, 512], sizes = [2, 256], strides = [1, 1]} : vector<2x1024xf32> to vector<2x256xf32>
    %283 = math.tanh %282 : vector<2x256xf32>
    %284 = vector.extract_strided_slice %244 {offsets = [0, 768], sizes = [2, 256], strides = [1, 1]} : vector<2x1024xf32> to vector<2x256xf32>
    %285 = arith.negf %284 : vector<2x256xf32>
    %286 = math.exp %285 : vector<2x256xf32>
    %cst_67 = arith.constant 1.000000e+00 : f32
    %287 = vector.broadcast %cst_67 : f32 to vector<2x256xf32>
    %288 = arith.addf %287, %286 : vector<2x256xf32>
    %289 = arith.divf %287, %288 : vector<2x256xf32>
    %290 = arith.mulf %281, %236 : vector<2x256xf32>
    %291 = arith.mulf %275, %283 : vector<2x256xf32>
    %292 = arith.addf %290, %291 : vector<2x256xf32>
    %293 = math.tanh %292 : vector<2x256xf32>
    %294 = arith.mulf %289, %293 : vector<2x256xf32>
    %c10_68 = arith.constant 10 : index
    %c0_69 = arith.constant 0 : index
    %295 = vector.load %arg7[%c10_68, %c0_69] : memref<16x2048xf32, #tpu.memory_space<vmem>>, vector<2x1024xf32>
    %c4_70 = arith.constant 4 : index
    %c1024_71 = arith.constant 1024 : index
    %296 = vector.load %arg7[%c4_70, %c1024_71] : memref<16x2048xf32, #tpu.memory_space<vmem>>, vector<2x1024xf32>
    %cst_72 = arith.constant dense<0.000000e+00> : vector<2x1024xf32>
    %297 = tpu.matmul %269, %8, %cst_72 {dimension_numbers = #tpu.dot_dimension_numbers<[1], [0], [0], [1], [0, 0, 1, 1], [], []>} : vector<2x256xf32>, vector<256x1024xf32>, vector<2x1024xf32> -> vector<2x1024xf32>
    %298 = arith.addf %295, %297 : vector<2x1024xf32>
    %cst_73 = arith.constant dense<0.000000e+00> : vector<2x1024xf32>
    %299 = tpu.matmul %294, %10, %cst_73 {dimension_numbers = #tpu.dot_dimension_numbers<[1], [0], [0], [1], [0, 0, 1, 1], [], []>} : vector<2x256xf32>, vector<256x1024xf32>, vector<2x1024xf32> -> vector<2x1024xf32>
    %300 = arith.addf %296, %299 : vector<2x1024xf32>
    %301 = vector.extract_strided_slice %298 {offsets = [0, 0], sizes = [2, 256], strides = [1, 1]} : vector<2x1024xf32> to vector<2x256xf32>
    %302 = arith.negf %301 : vector<2x256xf32>
    %303 = math.exp %302 : vector<2x256xf32>
    %cst_74 = arith.constant 1.000000e+00 : f32
    %304 = vector.broadcast %cst_74 : f32 to vector<2x256xf32>
    %305 = arith.addf %304, %303 : vector<2x256xf32>
    %306 = arith.divf %304, %305 : vector<2x256xf32>
    %307 = vector.extract_strided_slice %298 {offsets = [0, 256], sizes = [2, 256], strides = [1, 1]} : vector<2x1024xf32> to vector<2x256xf32>
    %308 = arith.negf %307 : vector<2x256xf32>
    %309 = math.exp %308 : vector<2x256xf32>
    %cst_75 = arith.constant 1.000000e+00 : f32
    %310 = vector.broadcast %cst_75 : f32 to vector<2x256xf32>
    %311 = arith.addf %310, %309 : vector<2x256xf32>
    %312 = arith.divf %310, %311 : vector<2x256xf32>
    %313 = vector.extract_strided_slice %298 {offsets = [0, 512], sizes = [2, 256], strides = [1, 1]} : vector<2x1024xf32> to vector<2x256xf32>
    %314 = math.tanh %313 : vector<2x256xf32>
    %315 = vector.extract_strided_slice %298 {offsets = [0, 768], sizes = [2, 256], strides = [1, 1]} : vector<2x1024xf32> to vector<2x256xf32>
    %316 = arith.negf %315 : vector<2x256xf32>
    %317 = math.exp %316 : vector<2x256xf32>
    %cst_76 = arith.constant 1.000000e+00 : f32
    %318 = vector.broadcast %cst_76 : f32 to vector<2x256xf32>
    %319 = arith.addf %318, %317 : vector<2x256xf32>
    %320 = arith.divf %318, %319 : vector<2x256xf32>
    %321 = arith.mulf %312, %267 : vector<2x256xf32>
    %322 = arith.mulf %306, %314 : vector<2x256xf32>
    %323 = arith.addf %321, %322 : vector<2x256xf32>
    %324 = math.tanh %323 : vector<2x256xf32>
    %325 = arith.mulf %320, %324 : vector<2x256xf32>
    %326 = vector.extract_strided_slice %300 {offsets = [0, 0], sizes = [2, 256], strides = [1, 1]} : vector<2x1024xf32> to vector<2x256xf32>
    %327 = arith.negf %326 : vector<2x256xf32>
    %328 = math.exp %327 : vector<2x256xf32>
    %cst_77 = arith.constant 1.000000e+00 : f32
    %329 = vector.broadcast %cst_77 : f32 to vector<2x256xf32>
    %330 = arith.addf %329, %328 : vector<2x256xf32>
    %331 = arith.divf %329, %330 : vector<2x256xf32>
    %332 = vector.extract_strided_slice %300 {offsets = [0, 256], sizes = [2, 256], strides = [1, 1]} : vector<2x1024xf32> to vector<2x256xf32>
    %333 = arith.negf %332 : vector<2x256xf32>
    %334 = math.exp %333 : vector<2x256xf32>
    %cst_78 = arith.constant 1.000000e+00 : f32
    %335 = vector.broadcast %cst_78 : f32 to vector<2x256xf32>
    %336 = arith.addf %335, %334 : vector<2x256xf32>
    %337 = arith.divf %335, %336 : vector<2x256xf32>
    %338 = vector.extract_strided_slice %300 {offsets = [0, 512], sizes = [2, 256], strides = [1, 1]} : vector<2x1024xf32> to vector<2x256xf32>
    %339 = math.tanh %338 : vector<2x256xf32>
    %340 = vector.extract_strided_slice %300 {offsets = [0, 768], sizes = [2, 256], strides = [1, 1]} : vector<2x1024xf32> to vector<2x256xf32>
    %341 = arith.negf %340 : vector<2x256xf32>
    %342 = math.exp %341 : vector<2x256xf32>
    %cst_79 = arith.constant 1.000000e+00 : f32
    %343 = vector.broadcast %cst_79 : f32 to vector<2x256xf32>
    %344 = arith.addf %343, %342 : vector<2x256xf32>
    %345 = arith.divf %343, %344 : vector<2x256xf32>
    %346 = arith.mulf %337, %292 : vector<2x256xf32>
    %347 = arith.mulf %331, %339 : vector<2x256xf32>
    %348 = arith.addf %346, %347 : vector<2x256xf32>
    %349 = math.tanh %348 : vector<2x256xf32>
    %350 = arith.mulf %345, %349 : vector<2x256xf32>
    %c12_80 = arith.constant 12 : index
    %c0_81 = arith.constant 0 : index
    %351 = vector.load %arg7[%c12_80, %c0_81] : memref<16x2048xf32, #tpu.memory_space<vmem>>, vector<2x1024xf32>
    %c2_82 = arith.constant 2 : index
    %c1024_83 = arith.constant 1024 : index
    %352 = vector.load %arg7[%c2_82, %c1024_83] : memref<16x2048xf32, #tpu.memory_space<vmem>>, vector<2x1024xf32>
    %cst_84 = arith.constant dense<0.000000e+00> : vector<2x1024xf32>
    %353 = tpu.matmul %325, %8, %cst_84 {dimension_numbers = #tpu.dot_dimension_numbers<[1], [0], [0], [1], [0, 0, 1, 1], [], []>} : vector<2x256xf32>, vector<256x1024xf32>, vector<2x1024xf32> -> vector<2x1024xf32>
    %354 = arith.addf %351, %353 : vector<2x1024xf32>
    %cst_85 = arith.constant dense<0.000000e+00> : vector<2x1024xf32>
    %355 = tpu.matmul %350, %10, %cst_85 {dimension_numbers = #tpu.dot_dimension_numbers<[1], [0], [0], [1], [0, 0, 1, 1], [], []>} : vector<2x256xf32>, vector<256x1024xf32>, vector<2x1024xf32> -> vector<2x1024xf32>
    %356 = arith.addf %352, %355 : vector<2x1024xf32>
    %357 = vector.extract_strided_slice %354 {offsets = [0, 0], sizes = [2, 256], strides = [1, 1]} : vector<2x1024xf32> to vector<2x256xf32>
    %358 = arith.negf %357 : vector<2x256xf32>
    %359 = math.exp %358 : vector<2x256xf32>
    %cst_86 = arith.constant 1.000000e+00 : f32
    %360 = vector.broadcast %cst_86 : f32 to vector<2x256xf32>
    %361 = arith.addf %360, %359 : vector<2x256xf32>
    %362 = arith.divf %360, %361 : vector<2x256xf32>
    %363 = vector.extract_strided_slice %354 {offsets = [0, 256], sizes = [2, 256], strides = [1, 1]} : vector<2x1024xf32> to vector<2x256xf32>
    %364 = arith.negf %363 : vector<2x256xf32>
    %365 = math.exp %364 : vector<2x256xf32>
    %cst_87 = arith.constant 1.000000e+00 : f32
    %366 = vector.broadcast %cst_87 : f32 to vector<2x256xf32>
    %367 = arith.addf %366, %365 : vector<2x256xf32>
    %368 = arith.divf %366, %367 : vector<2x256xf32>
    %369 = vector.extract_strided_slice %354 {offsets = [0, 512], sizes = [2, 256], strides = [1, 1]} : vector<2x1024xf32> to vector<2x256xf32>
    %370 = math.tanh %369 : vector<2x256xf32>
    %371 = vector.extract_strided_slice %354 {offsets = [0, 768], sizes = [2, 256], strides = [1, 1]} : vector<2x1024xf32> to vector<2x256xf32>
    %372 = arith.negf %371 : vector<2x256xf32>
    %373 = math.exp %372 : vector<2x256xf32>
    %cst_88 = arith.constant 1.000000e+00 : f32
    %374 = vector.broadcast %cst_88 : f32 to vector<2x256xf32>
    %375 = arith.addf %374, %373 : vector<2x256xf32>
    %376 = arith.divf %374, %375 : vector<2x256xf32>
    %377 = arith.mulf %368, %323 : vector<2x256xf32>
    %378 = arith.mulf %362, %370 : vector<2x256xf32>
    %379 = arith.addf %377, %378 : vector<2x256xf32>
    %380 = math.tanh %379 : vector<2x256xf32>
    %381 = arith.mulf %376, %380 : vector<2x256xf32>
    %382 = vector.extract_strided_slice %356 {offsets = [0, 0], sizes = [2, 256], strides = [1, 1]} : vector<2x1024xf32> to vector<2x256xf32>
    %383 = arith.negf %382 : vector<2x256xf32>
    %384 = math.exp %383 : vector<2x256xf32>
    %cst_89 = arith.constant 1.000000e+00 : f32
    %385 = vector.broadcast %cst_89 : f32 to vector<2x256xf32>
    %386 = arith.addf %385, %384 : vector<2x256xf32>
    %387 = arith.divf %385, %386 : vector<2x256xf32>
    %388 = vector.extract_strided_slice %356 {offsets = [0, 256], sizes = [2, 256], strides = [1, 1]} : vector<2x1024xf32> to vector<2x256xf32>
    %389 = arith.negf %388 : vector<2x256xf32>
    %390 = math.exp %389 : vector<2x256xf32>
    %cst_90 = arith.constant 1.000000e+00 : f32
    %391 = vector.broadcast %cst_90 : f32 to vector<2x256xf32>
    %392 = arith.addf %391, %390 : vector<2x256xf32>
    %393 = arith.divf %391, %392 : vector<2x256xf32>
    %394 = vector.extract_strided_slice %356 {offsets = [0, 512], sizes = [2, 256], strides = [1, 1]} : vector<2x1024xf32> to vector<2x256xf32>
    %395 = math.tanh %394 : vector<2x256xf32>
    %396 = vector.extract_strided_slice %356 {offsets = [0, 768], sizes = [2, 256], strides = [1, 1]} : vector<2x1024xf32> to vector<2x256xf32>
    %397 = arith.negf %396 : vector<2x256xf32>
    %398 = math.exp %397 : vector<2x256xf32>
    %cst_91 = arith.constant 1.000000e+00 : f32
    %399 = vector.broadcast %cst_91 : f32 to vector<2x256xf32>
    %400 = arith.addf %399, %398 : vector<2x256xf32>
    %401 = arith.divf %399, %400 : vector<2x256xf32>
    %402 = arith.mulf %393, %348 : vector<2x256xf32>
    %403 = arith.mulf %387, %395 : vector<2x256xf32>
    %404 = arith.addf %402, %403 : vector<2x256xf32>
    %405 = math.tanh %404 : vector<2x256xf32>
    %406 = arith.mulf %401, %405 : vector<2x256xf32>
    %c14_92 = arith.constant 14 : index
    %c0_93 = arith.constant 0 : index
    %407 = vector.load %arg7[%c14_92, %c0_93] : memref<16x2048xf32, #tpu.memory_space<vmem>>, vector<2x1024xf32>
    %c0_94 = arith.constant 0 : index
    %c1024_95 = arith.constant 1024 : index
    %408 = vector.load %arg7[%c0_94, %c1024_95] : memref<16x2048xf32, #tpu.memory_space<vmem>>, vector<2x1024xf32>
    %cst_96 = arith.constant dense<0.000000e+00> : vector<2x1024xf32>
    %409 = tpu.matmul %381, %8, %cst_96 {dimension_numbers = #tpu.dot_dimension_numbers<[1], [0], [0], [1], [0, 0, 1, 1], [], []>} : vector<2x256xf32>, vector<256x1024xf32>, vector<2x1024xf32> -> vector<2x1024xf32>
    %410 = arith.addf %407, %409 : vector<2x1024xf32>
    %cst_97 = arith.constant dense<0.000000e+00> : vector<2x1024xf32>
    %411 = tpu.matmul %406, %10, %cst_97 {dimension_numbers = #tpu.dot_dimension_numbers<[1], [0], [0], [1], [0, 0, 1, 1], [], []>} : vector<2x256xf32>, vector<256x1024xf32>, vector<2x1024xf32> -> vector<2x1024xf32>
    %412 = arith.addf %408, %411 : vector<2x1024xf32>
    %413 = vector.extract_strided_slice %410 {offsets = [0, 0], sizes = [2, 256], strides = [1, 1]} : vector<2x1024xf32> to vector<2x256xf32>
    %414 = arith.negf %413 : vector<2x256xf32>
    %415 = math.exp %414 : vector<2x256xf32>
    %cst_98 = arith.constant 1.000000e+00 : f32
    %416 = vector.broadcast %cst_98 : f32 to vector<2x256xf32>
    %417 = arith.addf %416, %415 : vector<2x256xf32>
    %418 = arith.divf %416, %417 : vector<2x256xf32>
    %419 = vector.extract_strided_slice %410 {offsets = [0, 256], sizes = [2, 256], strides = [1, 1]} : vector<2x1024xf32> to vector<2x256xf32>
    %420 = arith.negf %419 : vector<2x256xf32>
    %421 = math.exp %420 : vector<2x256xf32>
    %cst_99 = arith.constant 1.000000e+00 : f32
    %422 = vector.broadcast %cst_99 : f32 to vector<2x256xf32>
    %423 = arith.addf %422, %421 : vector<2x256xf32>
    %424 = arith.divf %422, %423 : vector<2x256xf32>
    %425 = vector.extract_strided_slice %410 {offsets = [0, 512], sizes = [2, 256], strides = [1, 1]} : vector<2x1024xf32> to vector<2x256xf32>
    %426 = math.tanh %425 : vector<2x256xf32>
    %427 = vector.extract_strided_slice %410 {offsets = [0, 768], sizes = [2, 256], strides = [1, 1]} : vector<2x1024xf32> to vector<2x256xf32>
    %428 = arith.negf %427 : vector<2x256xf32>
    %429 = math.exp %428 : vector<2x256xf32>
    %cst_100 = arith.constant 1.000000e+00 : f32
    %430 = vector.broadcast %cst_100 : f32 to vector<2x256xf32>
    %431 = arith.addf %430, %429 : vector<2x256xf32>
    %432 = arith.divf %430, %431 : vector<2x256xf32>
    %433 = arith.mulf %424, %379 : vector<2x256xf32>
    %434 = arith.mulf %418, %426 : vector<2x256xf32>
    %435 = arith.addf %433, %434 : vector<2x256xf32>
    %436 = math.tanh %435 : vector<2x256xf32>
    %437 = arith.mulf %432, %436 : vector<2x256xf32>
    %438 = vector.extract_strided_slice %412 {offsets = [0, 0], sizes = [2, 256], strides = [1, 1]} : vector<2x1024xf32> to vector<2x256xf32>
    %439 = arith.negf %438 : vector<2x256xf32>
    %440 = math.exp %439 : vector<2x256xf32>
    %cst_101 = arith.constant 1.000000e+00 : f32
    %441 = vector.broadcast %cst_101 : f32 to vector<2x256xf32>
    %442 = arith.addf %441, %440 : vector<2x256xf32>
    %443 = arith.divf %441, %442 : vector<2x256xf32>
    %444 = vector.extract_strided_slice %412 {offsets = [0, 256], sizes = [2, 256], strides = [1, 1]} : vector<2x1024xf32> to vector<2x256xf32>
    %445 = arith.negf %444 : vector<2x256xf32>
    %446 = math.exp %445 : vector<2x256xf32>
    %cst_102 = arith.constant 1.000000e+00 : f32
    %447 = vector.broadcast %cst_102 : f32 to vector<2x256xf32>
    %448 = arith.addf %447, %446 : vector<2x256xf32>
    %449 = arith.divf %447, %448 : vector<2x256xf32>
    %450 = vector.extract_strided_slice %412 {offsets = [0, 512], sizes = [2, 256], strides = [1, 1]} : vector<2x1024xf32> to vector<2x256xf32>
    %451 = math.tanh %450 : vector<2x256xf32>
    %452 = vector.extract_strided_slice %412 {offsets = [0, 768], sizes = [2, 256], strides = [1, 1]} : vector<2x1024xf32> to vector<2x256xf32>
    %453 = arith.negf %452 : vector<2x256xf32>
    %454 = math.exp %453 : vector<2x256xf32>
    %cst_103 = arith.constant 1.000000e+00 : f32
    %455 = vector.broadcast %cst_103 : f32 to vector<2x256xf32>
    %456 = arith.addf %455, %454 : vector<2x256xf32>
    %457 = arith.divf %455, %456 : vector<2x256xf32>
    %458 = arith.mulf %449, %404 : vector<2x256xf32>
    %459 = arith.mulf %443, %451 : vector<2x256xf32>
    %460 = arith.addf %458, %459 : vector<2x256xf32>
    %461 = math.tanh %460 : vector<2x256xf32>
    %462 = arith.mulf %457, %461 : vector<2x256xf32>
    %463 = vector.extract_strided_slice %437 {offsets = [0, 0], sizes = [1, 256], strides = [1, 1]} : vector<2x256xf32> to vector<1x256xf32>
    %c0_104 = arith.constant 0 : index
    %c0_105 = arith.constant 0 : index
    %464 = vector.load %arg4[%c0_104, %c0_105] : memref<512x10xf32, #tpu.memory_space<vmem>>, vector<256x10xf32>
    %cst_106 = arith.constant dense<0.000000e+00> : vector<1x10xf32>
    %465 = tpu.matmul %463, %464, %cst_106 {dimension_numbers = #tpu.dot_dimension_numbers<[1], [0], [0], [1], [0, 0, 1, 1], [], []>} : vector<1x256xf32>, vector<256x10xf32>, vector<1x10xf32> -> vector<1x10xf32>
    %466 = vector.extract_strided_slice %437 {offsets = [1, 0], sizes = [1, 256], strides = [1, 1]} : vector<2x256xf32> to vector<1x256xf32>
    %c256 = arith.constant 256 : index
    %c0_107 = arith.constant 0 : index
    %467 = vector.load %arg4[%c256, %c0_107] : memref<512x10xf32, #tpu.memory_space<vmem>>, vector<256x10xf32>
    %cst_108 = arith.constant dense<0.000000e+00> : vector<1x10xf32>
    %468 = tpu.matmul %466, %467, %cst_108 {dimension_numbers = #tpu.dot_dimension_numbers<[1], [0], [0], [1], [0, 0, 1, 1], [], []>} : vector<1x256xf32>, vector<256x10xf32>, vector<1x10xf32> -> vector<1x10xf32>
    %469 = arith.addf %465, %468 : vector<1x10xf32>
    %c0_109 = arith.constant 0 : index
    %c0_110 = arith.constant 0 : index
    %470 = vector.load %arg5[%c0_109, %c0_110] : memref<1x10xf32, #tpu.memory_space<vmem>>, vector<1x10xf32>
    %471 = arith.addf %469, %470 : vector<1x10xf32>
    %c0_111 = arith.constant 0 : index
    %c0_112 = arith.constant 0 : index
    %472 = vector.load %arg6[%c0_111, %c0_112] : memref<2x10xf32, #tpu.memory_space<vmem>>, vector<1x10xf32>
    tpu.vector_store %arg6[%c0_111, %c0_112], %471 {strides = array<i32>} : memref<2x10xf32, #tpu.memory_space<vmem>>, vector<1x10xf32>,
    %473 = vector.extract_strided_slice %462 {offsets = [0, 0], sizes = [1, 256], strides = [1, 1]} : vector<2x256xf32> to vector<1x256xf32>
    %c0_113 = arith.constant 0 : index
    %c0_114 = arith.constant 0 : index
    %474 = vector.load %arg4[%c0_113, %c0_114] : memref<512x10xf32, #tpu.memory_space<vmem>>, vector<256x10xf32>
    %cst_115 = arith.constant dense<0.000000e+00> : vector<1x10xf32>
    %475 = tpu.matmul %473, %474, %cst_115 {dimension_numbers = #tpu.dot_dimension_numbers<[1], [0], [0], [1], [0, 0, 1, 1], [], []>} : vector<1x256xf32>, vector<256x10xf32>, vector<1x10xf32> -> vector<1x10xf32>
    %476 = vector.extract_strided_slice %462 {offsets = [1, 0], sizes = [1, 256], strides = [1, 1]} : vector<2x256xf32> to vector<1x256xf32>
    %c256_116 = arith.constant 256 : index
    %c0_117 = arith.constant 0 : index
    %477 = vector.load %arg4[%c256_116, %c0_117] : memref<512x10xf32, #tpu.memory_space<vmem>>, vector<256x10xf32>
    %cst_118 = arith.constant dense<0.000000e+00> : vector<1x10xf32>
    %478 = tpu.matmul %476, %477, %cst_118 {dimension_numbers = #tpu.dot_dimension_numbers<[1], [0], [0], [1], [0, 0, 1, 1], [], []>} : vector<1x256xf32>, vector<256x10xf32>, vector<1x10xf32> -> vector<1x10xf32>
    %479 = arith.addf %475, %478 : vector<1x10xf32>
    %c0_119 = arith.constant 0 : index
    %c0_120 = arith.constant 0 : index
    %480 = vector.load %arg5[%c0_119, %c0_120] : memref<1x10xf32, #tpu.memory_space<vmem>>, vector<1x10xf32>
    %481 = arith.addf %479, %480 : vector<1x10xf32>
    %c1_121 = arith.constant 1 : index
    %c0_122 = arith.constant 0 : index
    %482 = vector.load %arg6[%c1_121, %c0_122] : memref<2x10xf32, #tpu.memory_space<vmem>>, vector<1x10xf32>
    tpu.vector_store %arg6[%c1_121, %c0_122], %481 {strides = array<i32>} : memref<2x10xf32, #tpu.memory_space<vmem>>, vector<1x10xf32>,
    return
  }
}

</mosaic_0001>

<llo_original>
// kernel: tpu_custom_call.1
$region0: #{tpu_custom_call.1}
  #allocation0 [shape = 'u32[]', space=smem, size = 0x4, offset = 0x4, fixed_abs, tag = 'smem constant byte address 0x4 - core index']
  #allocation1 [shape = 'u32[72,128]{1,0:T(1,128)}', space=vmem, size = 0x9000, scoped, tag = 'internal scratch']
  #allocation2 [shape = 'f32[16,2048]{1,0:T(8,128)}', space=vmem, size = 0x20000, scoped, tag = 'scratch operand']
  %s0 = inlined_call_operand.hbm [shape: f32[16,32], index: 0, kind: input, shape index: {}]
  %s1 = inlined_call_operand.hbm [shape: f32[32,2048], index: 1, kind: input, shape index: {}]
  %s2 = inlined_call_operand.hbm [shape: f32[2,256,1024], index: 2, kind: input, shape index: {}]
  %s3 = inlined_call_operand.hbm [shape: f32[1,2048], index: 3, kind: input, shape index: {}]
  %s4 = inlined_call_operand.vmem [shape: f32[512,10], index: 4, kind: input, shape index: {}]
  %s5 = inlined_call_operand.hbm [shape: f32[1,10], index: 5, kind: input, shape index: {}]
  %s6 = inlined_call_operand.hbm [shape: f32[2,10], index: 6, kind: output, shape index: {}]
  %s7 = sld [smem:[#allocation0]]
  $region54: #{tpu_custom_call.1} parent=0
    _
  %s9 = ssub.s32 1, %s7
  %s10 = scalar_select 0, %s9, %s7
  $region1: #{tpu_custom_call.1} parent=0
    #allocation3 [shape = 'u8[8192]{0}', space=vmem, size = 0x2000, scoped, tag = 'input window, operand 0, single buffered']
    #allocation4 [shape = 's32[1]{0}', space=sflag, size = 0x4, scoped, tag = 'scoped memory for tpu_custom_call.1']
    #allocation5 [shape = 's32[1]{0}', space=sflag, size = 0x4, scoped, tag = 'scoped memory for tpu_custom_call.1']
    #allocation6 [shape = 'u8[262144]{0}', space=vmem, size = 0x40000, scoped, tag = 'input window, operand 1, single buffered']
    #allocation7 [shape = 's32[1]{0}', space=sflag, size = 0x4, scoped, tag = 'scoped memory for tpu_custom_call.1']
    #allocation8 [shape = 'u8[2097152]{0}', space=vmem, size = 0x200000, scoped, tag = 'input window, operand 2, single buffered']
    #allocation9 [shape = 'u8[8192]{0}', space=vmem, size = 0x2000, scoped, tag = 'input window, operand 3, single buffered']
    #allocation10 [shape = 's32[1]{0}', space=sflag, size = 0x4, scoped, tag = 'scoped memory for tpu_custom_call.1']
    #allocation11 [shape = 'u8[512]{0}', space=vmem, size = 0x400, scoped, tag = 'input window, operand 5, single buffered']
    #allocation12 [shape = 'u8[1024]{0}', space=vmem, size = 0x400, scoped, tag = 'output window, operand 0, single buffered']
    %11 = vsyncpa [#allocation4], 0
    %12 = vsyncpa [#allocation7], 0
    %13 = vsyncpa [#allocation10], 0
    %14 = vsyncpa [#allocation5], 0
    // Predicated region
    $region2: #{tpu_custom_call.1} parent=1 // pred_check
      _
    $region3: #{tpu_custom_call.1} parent=1 // pred_check_branch
      %16 = sbr.rel (0) target = $region5
    $region4: #{tpu_custom_call.1} parent=1 // pred_region
      %18 = vsyncadd [#allocation4], 0
      %s19 = sshll.u32 %s0, 4
      %s20 = int_to_ptr.hbm [resolvable:$true] %s19
      %s21 = sshll.u32 [#allocation3], 4
      %s22 = int_to_ptr.vmem [resolvable:$true] %s21
      %27 = dma.hbm_to_vmem [thread:$0]  %s20, 256, %s22, [#allocation4], 128, 128, 8
    $region5: #{tpu_custom_call.1} parent=1 // pred_fallthru
      _
    // Predicated region
    $region6: #{tpu_custom_call.1} parent=1 // pred_check
      _
    $region7: #{tpu_custom_call.1} parent=1 // pred_check_branch
      %29 = sbr.rel (0) target = $region9
    $region8: #{tpu_custom_call.1} parent=1 // pred_region
      %31 = vsyncadd [#allocation7], 0
      %s32 = sshll.u32 %s1, 4
      %s33 = int_to_ptr.hbm [resolvable:$true] %s32
      %s34 = sshll.u32 [#allocation6], 4
      %s35 = int_to_ptr.vmem [resolvable:$true] %s34
      %40 = dma.hbm_to_vmem [thread:$0]  %s33, 8192, %s35, [#allocation7], 2048, 2048, 128
    $region9: #{tpu_custom_call.1} parent=1 // pred_fallthru
      _
    // Predicated region
    $region10: #{tpu_custom_call.1} parent=1 // pred_check
      _
    $region11: #{tpu_custom_call.1} parent=1 // pred_check_branch
      %42 = sbr.rel (0) target = $region13
    $region12: #{tpu_custom_call.1} parent=1 // pred_region
      %44 = vsyncadd [#allocation7], 0
      %s45 = sshll.u32 %s2, 4
      %s46 = int_to_ptr.hbm [resolvable:$true] %s45
      %s47 = sshll.u32 [#allocation8], 4
      %s48 = int_to_ptr.vmem [resolvable:$true] %s47
      %53 = dma.hbm_to_vmem [thread:$0]  %s46, 65536, %s48, [#allocation7], 1024, 1024, 64
    $region13: #{tpu_custom_call.1} parent=1 // pred_fallthru
      _
    // Predicated region
    $region14: #{tpu_custom_call.1} parent=1 // pred_check
      _
    $region15: #{tpu_custom_call.1} parent=1 // pred_check_branch
      %55 = sbr.rel (0) target = $region17
    $region16: #{tpu_custom_call.1} parent=1 // pred_region
      %57 = vsyncadd [#allocation10], 0
      %s59 = sshll.u32 %s3, 4
      %s60 = int_to_ptr.hbm [resolvable:$true] %s59
      %s61 = sshll.u32 [#allocation9], 4
      %s62 = int_to_ptr.vmem [resolvable:$true] %s61
      %64 = dma.hbm_to_vmem [thread:$0]  %s60, 256, %s62, [#allocation10]
    $region17: #{tpu_custom_call.1} parent=1 // pred_fallthru
      _
    // Predicated region
    $region18: #{tpu_custom_call.1} parent=1 // pred_check
      _
    $region19: #{tpu_custom_call.1} parent=1 // pred_check_branch
      %66 = sbr.rel (0) target = $region21
    $region20: #{tpu_custom_call.1} parent=1 // pred_region
      _
    $region21: #{tpu_custom_call.1} parent=1 // pred_fallthru
      _
    // Predicated region
    $region22: #{tpu_custom_call.1} parent=1 // pred_check
      _
    $region23: #{tpu_custom_call.1} parent=1 // pred_check_branch
      %68 = sbr.rel (0) target = $region25
    $region24: #{tpu_custom_call.1} parent=1 // pred_region
      %70 = vsyncadd [#allocation10], 0
      %s72 = sshll.u32 %s5, 4
      %s73 = int_to_ptr.hbm [resolvable:$true] %s72
      %s74 = sshll.u32 [#allocation11], 4
      %s75 = int_to_ptr.vmem [resolvable:$true] %s74
      %77 = dma.hbm_to_vmem [thread:$0]  %s73, 16, %s75, [#allocation10]
    $region25: #{tpu_custom_call.1} parent=1 // pred_fallthru
      _
    // Predicated region
    $region26: #{tpu_custom_call.1} parent=1 // pred_check
      _
    $region27: #{tpu_custom_call.1} parent=1 // pred_check_branch
      %79 = sbr.rel (0) target = $region29
    $region28: #{tpu_custom_call.1} parent=1 // pred_region
      %81 = dma.done [#allocation4], 256
    $region29: #{tpu_custom_call.1} parent=1 // pred_fallthru
      _
    // Predicated region
    $region30: #{tpu_custom_call.1} parent=1 // pred_check
      _
    $region31: #{tpu_custom_call.1} parent=1 // pred_check_branch
      %83 = sbr.rel (0) target = $region33
    $region32: #{tpu_custom_call.1} parent=1 // pred_region
      %85 = dma.done [#allocation7], 8192
    $region33: #{tpu_custom_call.1} parent=1 // pred_fallthru
      _
    // Predicated region
    $region34: #{tpu_custom_call.1} parent=1 // pred_check
      _
    $region35: #{tpu_custom_call.1} parent=1 // pred_check_branch
      %87 = sbr.rel (0) target = $region37
    $region36: #{tpu_custom_call.1} parent=1 // pred_region
      %89 = dma.done [#allocation7], 65536
    $region37: #{tpu_custom_call.1} parent=1 // pred_fallthru
      _
    // Predicated region
    $region38: #{tpu_custom_call.1} parent=1 // pred_check
      _
    $region39: #{tpu_custom_call.1} parent=1 // pred_check_branch
      %91 = sbr.rel (0) target = $region41
    $region40: #{tpu_custom_call.1} parent=1 // pred_region
      %93 = dma.done [#allocation10], 256
    $region41: #{tpu_custom_call.1} parent=1 // pred_fallthru
      _
    // Predicated region
    $region42: #{tpu_custom_call.1} parent=1 // pred_check
      _
    $region43: #{tpu_custom_call.1} parent=1 // pred_check_branch
      %95 = sbr.rel (0) target = $region45
    $region44: #{tpu_custom_call.1} parent=1 // pred_region
      %97 = dma.done [#allocation10], 16
    $region45: #{tpu_custom_call.1} parent=1 // pred_fallthru
      _
    %v98 = vld [vmem:[#allocation3] sm:$0xff]
    %v99 = vld [vmem:[#allocation3 + $0x8] sm:$0xff]
    %v100 = vld [vmem:[#allocation6] sm:$0xff]
    %v101 = vld [vmem:[#allocation6 + $0x8] sm:$0xff]
    %v102 = vld [vmem:[#allocation6 + $0x10] sm:$0xff]
    %v103 = vld [vmem:[#allocation6 + $0x18] sm:$0xff]
    %v104 = vld [vmem:[#allocation6 + $0x20] sm:$0xff]
    %v105 = vld [vmem:[#allocation6 + $0x28] sm:$0xff]
    %v106 = vld [vmem:[#allocation6 + $0x30] sm:$0xff]
    %v107 = vld [vmem:[#allocation6 + $0x38] sm:$0xff]
    %v108 = vld [vmem:[#allocation6 + $0x40] sm:$0xff]
    %v109 = vld [vmem:[#allocation6 + $0x48] sm:$0xff]
    %v110 = vld [vmem:[#allocation6 + $0x50] sm:$0xff]
    %v111 = vld [vmem:[#allocation6 + $0x58] sm:$0xff]
    %v112 = vld [vmem:[#allocation6 + $0x60] sm:$0xff]
    %v113 = vld [vmem:[#allocation6 + $0x68] sm:$0xff]
    %v114 = vld [vmem:[#allocation6 + $0x70] sm:$0xff]
    %v115 = vld [vmem:[#allocation6 + $0x78] sm:$0xff]
    %v116 = vld [vmem:[#allocation6 + $0x80] sm:$0xff]
    %v117 = vld [vmem:[#allocation6 + $0x88] sm:$0xff]
    %v118 = vld [vmem:[#allocation6 + $0x90] sm:$0xff]
    %v119 = vld [vmem:[#allocation6 + $0x98] sm:$0xff]
    %v120 = vld [vmem:[#allocation6 + $0xa0] sm:$0xff]
    %v121 = vld [vmem:[#allocation6 + $0xa8] sm:$0xff]
    %v122 = vld [vmem:[#allocation6 + $0xb0] sm:$0xff]
    %v123 = vld [vmem:[#allocation6 + $0xb8] sm:$0xff]
    %v124 = vld [vmem:[#allocation6 + $0xc0] sm:$0xff]
    %v125 = vld [vmem:[#allocation6 + $0xc8] sm:$0xff]
    %v126 = vld [vmem:[#allocation6 + $0xd0] sm:$0xff]
    %v127 = vld [vmem:[#allocation6 + $0xd8] sm:$0xff]
    %v128 = vld [vmem:[#allocation6 + $0xe0] sm:$0xff]
    %v129 = vld [vmem:[#allocation6 + $0xe8] sm:$0xff]
    %v130 = vld [vmem:[#allocation6 + $0xf0] sm:$0xff]
    %v131 = vld [vmem:[#allocation6 + $0xf8] sm:$0xff]
    %v132 = vld [vmem:[#allocation6 + $0x100] sm:$0xff]
    %v133 = vld [vmem:[#allocation6 + $0x108] sm:$0xff]
    %v134 = vld [vmem:[#allocation6 + $0x110] sm:$0xff]
    %v135 = vld [vmem:[#allocation6 + $0x118] sm:$0xff]
    %v136 = vld [vmem:[#allocation6 + $0x120] sm:$0xff]
    %v137 = vld [vmem:[#allocation6 + $0x128] sm:$0xff]
    %v138 = vld [vmem:[#allocation6 + $0x130] sm:$0xff]
    %v139 = vld [vmem:[#allocation6 + $0x138] sm:$0xff]
    %v140 = vld [vmem:[#allocation6 + $0x140] sm:$0xff]
    %v141 = vld [vmem:[#allocation6 + $0x148] sm:$0xff]
    %v142 = vld [vmem:[#allocation6 + $0x150] sm:$0xff]
    %v143 = vld [vmem:[#allocation6 + $0x158] sm:$0xff]
    %v144 = vld [vmem:[#allocation6 + $0x160] sm:$0xff]
    %v145 = vld [vmem:[#allocation6 + $0x168] sm:$0xff]
    %v146 = vld [vmem:[#allocation6 + $0x170] sm:$0xff]
    %v147 = vld [vmem:[#allocation6 + $0x178] sm:$0xff]
    %v148 = vld [vmem:[#allocation6 + $0x180] sm:$0xff]
    %v149 = vld [vmem:[#allocation6 + $0x188] sm:$0xff]
    %v150 = vld [vmem:[#allocation6 + $0x190] sm:$0xff]
    %v151 = vld [vmem:[#allocation6 + $0x198] sm:$0xff]
    %v152 = vld [vmem:[#allocation6 + $0x1a0] sm:$0xff]
    %v153 = vld [vmem:[#allocation6 + $0x1a8] sm:$0xff]
    %v154 = vld [vmem:[#allocation6 + $0x1b0] sm:$0xff]
    %v155 = vld [vmem:[#allocation6 + $0x1b8] sm:$0xff]
    %v156 = vld [vmem:[#allocation6 + $0x1c0] sm:$0xff]
    %v157 = vld [vmem:[#allocation6 + $0x1c8] sm:$0xff]
    %v158 = vld [vmem:[#allocation6 + $0x1d0] sm:$0xff]
    %v159 = vld [vmem:[#allocation6 + $0x1d8] sm:$0xff]
    %v160 = vld [vmem:[#allocation6 + $0x1e0] sm:$0xff]
    %v161 = vld [vmem:[#allocation6 + $0x1e8] sm:$0xff]
    %v162 = vld [vmem:[#allocation6 + $0x1f0] sm:$0xff]
    %v163 = vld [vmem:[#allocation6 + $0x1f8] sm:$0xff]
    %v164 = vld [vmem:[#allocation9] sm:$0xff]
    %v165 = vld [vmem:[#allocation9 + $0x8] sm:$0xff]
    %v168 = vperm.slane %v164, 0
    %v169 = vperm.slane %v164, 1
    %v170 = vperm.slane %v164, 2
    %v171 = vperm.slane %v164, 3
    %v172 = vperm.slane %v164, 4
    %v173 = vperm.slane %v164, 5
    %v174 = vperm.slane %v164, 6
    %v175 = vperm.slane %v164, 7
    %v176 = vperm.slane %v165, 0
    %v177 = vperm.slane %v165, 1
    %v178 = vperm.slane %v165, 2
    %v179 = vperm.slane %v165, 3
    %v180 = vperm.slane %v165, 4
    %v181 = vperm.slane %v165, 5
    %v182 = vperm.slane %v165, 6
    %v183 = vperm.slane %v165, 7
    %vm200 = vcmask 261120
    %v202 = vsel %vm200, %v98, 0
    %v205 = vsel %vm200, %v99, 0
    %207 = vmatpush.msra.mxu0 0.0
    %208 = vmatpush.msra.mxu0 0.0
    %209 = vmatpush.msra.mxu0 0.0
    %210 = vmatpush.msra.mxu0 0.0
    %211 = vmatpush.msra.mxu0 0.0
    %212 = vmatpush.msra.mxu0 0.0
    %213 = vmatpush.msra.mxu0 0.0
    %214 = vmatpush.msra.mxu0 0.0
    %215 = vmatpush.msra.mxu0 0.0
    %216 = vmatpush.msra.mxu0 0.0
    %217 = vmatpush.msra.mxu0 0.0
    %218 = vmatpush.msra.mxu0 0.0
    %219 = vmatpush.msra.mxu0 %v148
    %220 = vmatpush.msra.mxu0 %v132
    %221 = vmatpush.msra.mxu0 %v116
    %222 = vmatpush.msra.mxu0 %v100
    %223 = vmatmul.f32.gmra.mxu0 %v202
    %v224 = vpop.f32.mrf.mxu0
    %v225 = vadd.f32 %v168, %v224
    %226 = vmatmul.f32.gmra.mxu0 %v205
    %v227 = vpop.f32.mrf.mxu0
    %v228 = vadd.f32 %v168, %v227
    %229 = vdwg.mxu0
    %230 = vmatpush.msra.mxu0 0.0
    %231 = vmatpush.msra.mxu0 0.0
    %232 = vmatpush.msra.mxu0 0.0
    %233 = vmatpush.msra.mxu0 0.0
    %234 = vmatpush.msra.mxu0 0.0
    %235 = vmatpush.msra.mxu0 0.0
    %236 = vmatpush.msra.mxu0 0.0
    %237 = vmatpush.msra.mxu0 0.0
    %238 = vmatpush.msra.mxu0 0.0
    %239 = vmatpush.msra.mxu0 0.0
    %240 = vmatpush.msra.mxu0 0.0
    %241 = vmatpush.msra.mxu0 0.0
    %242 = vmatpush.msra.mxu0 %v149
    %243 = vmatpush.msra.mxu0 %v133
    %244 = vmatpush.msra.mxu0 %v117
    %245 = vmatpush.msra.mxu0 %v101
    %246 = vmatmul.f32.gmra.mxu0 %v202
    %v247 = vpop.f32.mrf.mxu0
    %v248 = vadd.f32 %v169, %v247
    %249 = vmatmul.f32.gmra.mxu0 %v205
    %v250 = vpop.f32.mrf.mxu0
    %v251 = vadd.f32 %v169, %v250
    %252 = vdwg.mxu0
    %253 = vmatpush.msra.mxu0 0.0
    %254 = vmatpush.msra.mxu0 0.0
    %255 = vmatpush.msra.mxu0 0.0
    %256 = vmatpush.msra.mxu0 0.0
    %257 = vmatpush.msra.mxu0 0.0
    %258 = vmatpush.msra.mxu0 0.0
    %259 = vmatpush.msra.mxu0 0.0
    %260 = vmatpush.msra.mxu0 0.0
    %261 = vmatpush.msra.mxu0 0.0
    %262 = vmatpush.msra.mxu0 0.0
    %263 = vmatpush.msra.mxu0 0.0
    %264 = vmatpush.msra.mxu0 0.0
    %265 = vmatpush.msra.mxu0 %v150
    %266 = vmatpush.msra.mxu0 %v134
    %267 = vmatpush.msra.mxu0 %v118
    %268 = vmatpush.msra.mxu0 %v102
    %269 = vmatmul.f32.gmra.mxu0 %v202
    %v270 = vpop.f32.mrf.mxu0
    %v271 = vadd.f32 %v170, %v270
    %272 = vmatmul.f32.gmra.mxu0 %v205
    %v273 = vpop.f32.mrf.mxu0
    %v274 = vadd.f32 %v170, %v273
    %275 = vdwg.mxu0
    %276 = vmatpush.msra.mxu0 0.0
    %277 = vmatpush.msra.mxu0 0.0
    %278 = vmatpush.msra.mxu0 0.0
    %279 = vmatpush.msra.mxu0 0.0
    %280 = vmatpush.msra.mxu0 0.0
    %281 = vmatpush.msra.mxu0 0.0
    %282 = vmatpush.msra.mxu0 0.0
    %283 = vmatpush.msra.mxu0 0.0
    %284 = vmatpush.msra.mxu0 0.0
    %285 = vmatpush.msra.mxu0 0.0
    %286 = vmatpush.msra.mxu0 0.0
    %287 = vmatpush.msra.mxu0 0.0
    %288 = vmatpush.msra.mxu0 %v151
    %289 = vmatpush.msra.mxu0 %v135
    %290 = vmatpush.msra.mxu0 %v119
    %291 = vmatpush.msra.mxu0 %v103
    %292 = vmatmul.f32.gmra.mxu0 %v202
    %v293 = vpop.f32.mrf.mxu0
    %v294 = vadd.f32 %v171, %v293
    %295 = vmatmul.f32.gmra.mxu0 %v205
    %v296 = vpop.f32.mrf.mxu0
    %v297 = vadd.f32 %v171, %v296
    %298 = vdwg.mxu0
    %299 = vmatpush.msra.mxu0 0.0
    %300 = vmatpush.msra.mxu0 0.0
    %301 = vmatpush.msra.mxu0 0.0
    %302 = vmatpush.msra.mxu0 0.0
    %303 = vmatpush.msra.mxu0 0.0
    %304 = vmatpush.msra.mxu0 0.0
    %305 = vmatpush.msra.mxu0 0.0
    %306 = vmatpush.msra.mxu0 0.0
    %307 = vmatpush.msra.mxu0 0.0
    %308 = vmatpush.msra.mxu0 0.0
    %309 = vmatpush.msra.mxu0 0.0
    %310 = vmatpush.msra.mxu0 0.0
    %311 = vmatpush.msra.mxu0 %v152
    %312 = vmatpush.msra.mxu0 %v136
    %313 = vmatpush.msra.mxu0 %v120
    %314 = vmatpush.msra.mxu0 %v104
    %315 = vmatmul.f32.gmra.mxu0 %v202
    %v316 = vpop.f32.mrf.mxu0
    %v317 = vadd.f32 %v172, %v316
    %318 = vmatmul.f32.gmra.mxu0 %v205
    %v319 = vpop.f32.mrf.mxu0
    %v320 = vadd.f32 %v172, %v319
    %321 = vdwg.mxu0
    %322 = vmatpush.msra.mxu0 0.0
    %323 = vmatpush.msra.mxu0 0.0
    %324 = vmatpush.msra.mxu0 0.0
    %325 = vmatpush.msra.mxu0 0.0
    %326 = vmatpush.msra.mxu0 0.0
    %327 = vmatpush.msra.mxu0 0.0
    %328 = vmatpush.msra.mxu0 0.0
    %329 = vmatpush.msra.mxu0 0.0
    %330 = vmatpush.msra.mxu0 0.0
    %331 = vmatpush.msra.mxu0 0.0
    %332 = vmatpush.msra.mxu0 0.0
    %333 = vmatpush.msra.mxu0 0.0
    %334 = vmatpush.msra.mxu0 %v153
    %335 = vmatpush.msra.mxu0 %v137
    %336 = vmatpush.msra.mxu0 %v121
    %337 = vmatpush.msra.mxu0 %v105
    %338 = vmatmul.f32.gmra.mxu0 %v202
    %v339 = vpop.f32.mrf.mxu0
    %v340 = vadd.f32 %v173, %v339
    %341 = vmatmul.f32.gmra.mxu0 %v205
    %v342 = vpop.f32.mrf.mxu0
    %v343 = vadd.f32 %v173, %v342
    %344 = vdwg.mxu0
    %345 = vmatpush.msra.mxu0 0.0
    %346 = vmatpush.msra.mxu0 0.0
    %347 = vmatpush.msra.mxu0 0.0
    %348 = vmatpush.msra.mxu0 0.0
    %349 = vmatpush.msra.mxu0 0.0
    %350 = vmatpush.msra.mxu0 0.0
    %351 = vmatpush.msra.mxu0 0.0
    %352 = vmatpush.msra.mxu0 0.0
    %353 = vmatpush.msra.mxu0 0.0
    %354 = vmatpush.msra.mxu0 0.0
    %355 = vmatpush.msra.mxu0 0.0
    %356 = vmatpush.msra.mxu0 0.0
    %357 = vmatpush.msra.mxu0 %v154
    %358 = vmatpush.msra.mxu0 %v138
    %359 = vmatpush.msra.mxu0 %v122
    %360 = vmatpush.msra.mxu0 %v106
    %361 = vmatmul.f32.gmra.mxu0 %v202
    %v362 = vpop.f32.mrf.mxu0
    %v363 = vadd.f32 %v174, %v362
    %364 = vmatmul.f32.gmra.mxu0 %v205
    %v365 = vpop.f32.mrf.mxu0
    %v366 = vadd.f32 %v174, %v365
    %367 = vdwg.mxu0
    %368 = vmatpush.msra.mxu0 0.0
    %369 = vmatpush.msra.mxu0 0.0
    %370 = vmatpush.msra.mxu0 0.0
    %371 = vmatpush.msra.mxu0 0.0
    %372 = vmatpush.msra.mxu0 0.0
    %373 = vmatpush.msra.mxu0 0.0
    %374 = vmatpush.msra.mxu0 0.0
    %375 = vmatpush.msra.mxu0 0.0
    %376 = vmatpush.msra.mxu0 0.0
    %377 = vmatpush.msra.mxu0 0.0
    %378 = vmatpush.msra.mxu0 0.0
    %379 = vmatpush.msra.mxu0 0.0
    %380 = vmatpush.msra.mxu0 %v155
    %381 = vmatpush.msra.mxu0 %v139
    %382 = vmatpush.msra.mxu0 %v123
    %383 = vmatpush.msra.mxu0 %v107
    %384 = vmatmul.f32.gmra.mxu0 %v202
    %v385 = vpop.f32.mrf.mxu0
    %v386 = vadd.f32 %v175, %v385
    %387 = vmatmul.f32.gmra.mxu0 %v205
    %v388 = vpop.f32.mrf.mxu0
    %v389 = vadd.f32 %v175, %v388
    %390 = vdwg.mxu0
    %391 = vmatpush.msra.mxu0 0.0
    %392 = vmatpush.msra.mxu0 0.0
    %393 = vmatpush.msra.mxu0 0.0
    %394 = vmatpush.msra.mxu0 0.0
    %395 = vmatpush.msra.mxu0 0.0
    %396 = vmatpush.msra.mxu0 0.0
    %397 = vmatpush.msra.mxu0 0.0
    %398 = vmatpush.msra.mxu0 0.0
    %399 = vmatpush.msra.mxu0 0.0
    %400 = vmatpush.msra.mxu0 0.0
    %401 = vmatpush.msra.mxu0 0.0
    %402 = vmatpush.msra.mxu0 0.0
    %403 = vmatpush.msra.mxu0 %v156
    %404 = vmatpush.msra.mxu0 %v140
    %405 = vmatpush.msra.mxu0 %v124
    %406 = vmatpush.msra.mxu0 %v108
    %407 = vmatmul.f32.gmra.mxu0 %v202
    %v408 = vpop.f32.mrf.mxu0
    %v409 = vadd.f32 %v176, %v408
    %410 = vmatmul.f32.gmra.mxu0 %v205
    %v411 = vpop.f32.mrf.mxu0
    %v412 = vadd.f32 %v176, %v411
    %413 = vdwg.mxu0
    %414 = vmatpush.msra.mxu0 0.0
    %415 = vmatpush.msra.mxu0 0.0
    %416 = vmatpush.msra.mxu0 0.0
    %417 = vmatpush.msra.mxu0 0.0
    %418 = vmatpush.msra.mxu0 0.0
    %419 = vmatpush.msra.mxu0 0.0
    %420 = vmatpush.msra.mxu0 0.0
    %421 = vmatpush.msra.mxu0 0.0
    %422 = vmatpush.msra.mxu0 0.0
    %423 = vmatpush.msra.mxu0 0.0
    %424 = vmatpush.msra.mxu0 0.0
    %425 = vmatpush.msra.mxu0 0.0
    %426 = vmatpush.msra.mxu0 %v157
    %427 = vmatpush.msra.mxu0 %v141
    %428 = vmatpush.msra.mxu0 %v125
    %429 = vmatpush.msra.mxu0 %v109
    %430 = vmatmul.f32.gmra.mxu0 %v202
    %v431 = vpop.f32.mrf.mxu0
    %v432 = vadd.f32 %v177, %v431
    %433 = vmatmul.f32.gmra.mxu0 %v205
    %v434 = vpop.f32.mrf.mxu0
    %v435 = vadd.f32 %v177, %v434
    %436 = vdwg.mxu0
    %437 = vmatpush.msra.mxu0 0.0
    %438 = vmatpush.msra.mxu0 0.0
    %439 = vmatpush.msra.mxu0 0.0
    %440 = vmatpush.msra.mxu0 0.0
    %441 = vmatpush.msra.mxu0 0.0
    %442 = vmatpush.msra.mxu0 0.0
    %443 = vmatpush.msra.mxu0 0.0
    %444 = vmatpush.msra.mxu0 0.0
    %445 = vmatpush.msra.mxu0 0.0
    %446 = vmatpush.msra.mxu0 0.0
    %447 = vmatpush.msra.mxu0 0.0
    %448 = vmatpush.msra.mxu0 0.0
    %449 = vmatpush.msra.mxu0 %v158
    %450 = vmatpush.msra.mxu0 %v142
    %451 = vmatpush.msra.mxu0 %v126
    %452 = vmatpush.msra.mxu0 %v110
    %453 = vmatmul.f32.gmra.mxu0 %v202
    %v454 = vpop.f32.mrf.mxu0
    %v455 = vadd.f32 %v178, %v454
    %456 = vmatmul.f32.gmra.mxu0 %v205
    %v457 = vpop.f32.mrf.mxu0
    %v458 = vadd.f32 %v178, %v457
    %459 = vdwg.mxu0
    %460 = vmatpush.msra.mxu0 0.0
    %461 = vmatpush.msra.mxu0 0.0
    %462 = vmatpush.msra.mxu0 0.0
    %463 = vmatpush.msra.mxu0 0.0
    %464 = vmatpush.msra.mxu0 0.0
    %465 = vmatpush.msra.mxu0 0.0
    %466 = vmatpush.msra.mxu0 0.0
    %467 = vmatpush.msra.mxu0 0.0
    %468 = vmatpush.msra.mxu0 0.0
    %469 = vmatpush.msra.mxu0 0.0
    %470 = vmatpush.msra.mxu0 0.0
    %471 = vmatpush.msra.mxu0 0.0
    %472 = vmatpush.msra.mxu0 %v159
    %473 = vmatpush.msra.mxu0 %v143
    %474 = vmatpush.msra.mxu0 %v127
    %475 = vmatpush.msra.mxu0 %v111
    %476 = vmatmul.f32.gmra.mxu0 %v202
    %v477 = vpop.f32.mrf.mxu0
    %v478 = vadd.f32 %v179, %v477
    %479 = vmatmul.f32.gmra.mxu0 %v205
    %v480 = vpop.f32.mrf.mxu0
    %v481 = vadd.f32 %v179, %v480
    %482 = vdwg.mxu0
    %483 = vmatpush.msra.mxu0 0.0
    %484 = vmatpush.msra.mxu0 0.0
    %485 = vmatpush.msra.mxu0 0.0
    %486 = vmatpush.msra.mxu0 0.0
    %487 = vmatpush.msra.mxu0 0.0
    %488 = vmatpush.msra.mxu0 0.0
    %489 = vmatpush.msra.mxu0 0.0
    %490 = vmatpush.msra.mxu0 0.0
    %491 = vmatpush.msra.mxu0 0.0
    %492 = vmatpush.msra.mxu0 0.0
    %493 = vmatpush.msra.mxu0 0.0
    %494 = vmatpush.msra.mxu0 0.0
    %495 = vmatpush.msra.mxu0 %v160
    %496 = vmatpush.msra.mxu0 %v144
    %497 = vmatpush.msra.mxu0 %v128
    %498 = vmatpush.msra.mxu0 %v112
    %499 = vmatmul.f32.gmra.mxu0 %v202
    %v500 = vpop.f32.mrf.mxu0
    %v501 = vadd.f32 %v180, %v500
    %502 = vmatmul.f32.gmra.mxu0 %v205
    %v503 = vpop.f32.mrf.mxu0
    %v504 = vadd.f32 %v180, %v503
    %505 = vdwg.mxu0
    %506 = vmatpush.msra.mxu0 0.0
    %507 = vmatpush.msra.mxu0 0.0
    %508 = vmatpush.msra.mxu0 0.0
    %509 = vmatpush.msra.mxu0 0.0
    %510 = vmatpush.msra.mxu0 0.0
    %511 = vmatpush.msra.mxu0 0.0
    %512 = vmatpush.msra.mxu0 0.0
    %513 = vmatpush.msra.mxu0 0.0
    %514 = vmatpush.msra.mxu0 0.0
    %515 = vmatpush.msra.mxu0 0.0
    %516 = vmatpush.msra.mxu0 0.0
    %517 = vmatpush.msra.mxu0 0.0
    %518 = vmatpush.msra.mxu0 %v161
    %519 = vmatpush.msra.mxu0 %v145
    %520 = vmatpush.msra.mxu0 %v129
    %521 = vmatpush.msra.mxu0 %v113
    %522 = vmatmul.f32.gmra.mxu0 %v202
    %v523 = vpop.f32.mrf.mxu0
    %v524 = vadd.f32 %v181, %v523
    %525 = vmatmul.f32.gmra.mxu0 %v205
    %v526 = vpop.f32.mrf.mxu0
    %v527 = vadd.f32 %v181, %v526
    %528 = vdwg.mxu0
    %529 = vmatpush.msra.mxu0 0.0
    %530 = vmatpush.msra.mxu0 0.0
    %531 = vmatpush.msra.mxu0 0.0
    %532 = vmatpush.msra.mxu0 0.0
    %533 = vmatpush.msra.mxu0 0.0
    %534 = vmatpush.msra.mxu0 0.0
    %535 = vmatpush.msra.mxu0 0.0
    %536 = vmatpush.msra.mxu0 0.0
    %537 = vmatpush.msra.mxu0 0.0
    %538 = vmatpush.msra.mxu0 0.0
    %539 = vmatpush.msra.mxu0 0.0
    %540 = vmatpush.msra.mxu0 0.0
    %541 = vmatpush.msra.mxu0 %v162
    %542 = vmatpush.msra.mxu0 %v146
    %543 = vmatpush.msra.mxu0 %v130
    %544 = vmatpush.msra.mxu0 %v114
    %545 = vmatmul.f32.gmra.mxu0 %v202
    %v546 = vpop.f32.mrf.mxu0
    %v547 = vadd.f32 %v182, %v546
    %548 = vmatmul.f32.gmra.mxu0 %v205
    %v549 = vpop.f32.mrf.mxu0
    %v550 = vadd.f32 %v182, %v549
    %551 = vdwg.mxu0
    %552 = vmatpush.msra.mxu0 0.0
    %553 = vmatpush.msra.mxu0 0.0
    %554 = vmatpush.msra.mxu0 0.0
    %555 = vmatpush.msra.mxu0 0.0
    %556 = vmatpush.msra.mxu0 0.0
    %557 = vmatpush.msra.mxu0 0.0
    %558 = vmatpush.msra.mxu0 0.0
    %559 = vmatpush.msra.mxu0 0.0
    %560 = vmatpush.msra.mxu0 0.0
    %561 = vmatpush.msra.mxu0 0.0
    %562 = vmatpush.msra.mxu0 0.0
    %563 = vmatpush.msra.mxu0 0.0
    %564 = vmatpush.msra.mxu0 %v163
    %565 = vmatpush.msra.mxu0 %v147
    %566 = vmatpush.msra.mxu0 %v131
    %567 = vmatpush.msra.mxu0 %v115
    %568 = vmatmul.f32.gmra.mxu0 %v202
    %v569 = vpop.f32.mrf.mxu0
    %v570 = vadd.f32 %v183, %v569
    %571 = vmatmul.f32.gmra.mxu0 %v205
    %v572 = vpop.f32.mrf.mxu0
    %v573 = vadd.f32 %v183, %v572
    %574 = vdwg.mxu0
    %575 = vst [vmem:[#allocation2] sm:$0xff] %v225
    %576 = vst [vmem:[#allocation2 + $0x8] sm:$0xff] %v248
    %577 = vst [vmem:[#allocation2 + $0x10] sm:$0xff] %v271
    %578 = vst [vmem:[#allocation2 + $0x18] sm:$0xff] %v294
    %579 = vst [vmem:[#allocation2 + $0x20] sm:$0xff] %v317
    %580 = vst [vmem:[#allocation2 + $0x28] sm:$0xff] %v340
    %581 = vst [vmem:[#allocation2 + $0x30] sm:$0xff] %v363
    %582 = vst [vmem:[#allocation2 + $0x38] sm:$0xff] %v386
    %583 = vst [vmem:[#allocation2 + $0x40] sm:$0xff] %v409
    %584 = vst [vmem:[#allocation2 + $0x48] sm:$0xff] %v432
    %585 = vst [vmem:[#allocation2 + $0x50] sm:$0xff] %v455
    %586 = vst [vmem:[#allocation2 + $0x58] sm:$0xff] %v478
    %587 = vst [vmem:[#allocation2 + $0x60] sm:$0xff] %v501
    %588 = vst [vmem:[#allocation2 + $0x68] sm:$0xff] %v524
    %589 = vst [vmem:[#allocation2 + $0x70] sm:$0xff] %v547
    %590 = vst [vmem:[#allocation2 + $0x78] sm:$0xff] %v570
    %591 = vst [vmem:[#allocation2 + $0x80] sm:$0xff] %v228
    %592 = vst [vmem:[#allocation2 + $0x88] sm:$0xff] %v251
    %593 = vst [vmem:[#allocation2 + $0x90] sm:$0xff] %v274
    %594 = vst [vmem:[#allocation2 + $0x98] sm:$0xff] %v297
    %595 = vst [vmem:[#allocation2 + $0xa0] sm:$0xff] %v320
    %596 = vst [vmem:[#allocation2 + $0xa8] sm:$0xff] %v343
    %597 = vst [vmem:[#allocation2 + $0xb0] sm:$0xff] %v366
    %598 = vst [vmem:[#allocation2 + $0xb8] sm:$0xff] %v389
    %599 = vst [vmem:[#allocation2 + $0xc0] sm:$0xff] %v412
    %600 = vst [vmem:[#allocation2 + $0xc8] sm:$0xff] %v435
    %601 = vst [vmem:[#allocation2 + $0xd0] sm:$0xff] %v458
    %602 = vst [vmem:[#allocation2 + $0xd8] sm:$0xff] %v481
    %603 = vst [vmem:[#allocation2 + $0xe0] sm:$0xff] %v504
    %604 = vst [vmem:[#allocation2 + $0xe8] sm:$0xff] %v527
    %605 = vst [vmem:[#allocation2 + $0xf0] sm:$0xff] %v550
    %606 = vst [vmem:[#allocation2 + $0xf8] sm:$0xff] %v573
    %v607 = vld [vmem:[#allocation8] sm:$0xff]
    %v608 = vld [vmem:[#allocation8 + $0x8] sm:$0xff]
    %v609 = vld [vmem:[#allocation8 + $0x10] sm:$0xff]
    %v610 = vld [vmem:[#allocation8 + $0x18] sm:$0xff]
    %v611 = vld [vmem:[#allocation8 + $0x20] sm:$0xff]
    %v612 = vld [vmem:[#allocation8 + $0x28] sm:$0xff]
    %v613 = vld [vmem:[#allocation8 + $0x30] sm:$0xff]
    %v614 = vld [vmem:[#allocation8 + $0x38] sm:$0xff]
    %v615 = vld [vmem:[#allocation8 + $0x40] sm:$0xff]
    %v616 = vld [vmem:[#allocation8 + $0x48] sm:$0xff]
    %v617 = vld [vmem:[#allocation8 + $0x50] sm:$0xff]
    %v618 = vld [vmem:[#allocation8 + $0x58] sm:$0xff]
    %v619 = vld [vmem:[#allocation8 + $0x60] sm:$0xff]
    %v620 = vld [vmem:[#allocation8 + $0x68] sm:$0xff]
    %v621 = vld [vmem:[#allocation8 + $0x70] sm:$0xff]
    %v622 = vld [vmem:[#allocation8 + $0x78] sm:$0xff]
    %v623 = vld [vmem:[#allocation8 + $0x80] sm:$0xff]
    %v624 = vld [vmem:[#allocation8 + $0x88] sm:$0xff]
    %v625 = vld [vmem:[#allocation8 + $0x90] sm:$0xff]
    %v626 = vld [vmem:[#allocation8 + $0x98] sm:$0xff]
    %v627 = vld [vmem:[#allocation8 + $0xa0] sm:$0xff]
    %v628 = vld [vmem:[#allocation8 + $0xa8] sm:$0xff]
    %v629 = vld [vmem:[#allocation8 + $0xb0] sm:$0xff]
    %v630 = vld [vmem:[#allocation8 + $0xb8] sm:$0xff]
    %v631 = vld [vmem:[#allocation8 + $0xc0] sm:$0xff]
    %v632 = vld [vmem:[#allocation8 + $0xc8] sm:$0xff]
    %v633 = vld [vmem:[#allocation8 + $0xd0] sm:$0xff]
    %v634 = vld [vmem:[#allocation8 + $0xd8] sm:$0xff]
    %v635 = vld [vmem:[#allocation8 + $0xe0] sm:$0xff]
    %v636 = vld [vmem:[#allocation8 + $0xe8] sm:$0xff]
    %v637 = vld [vmem:[#allocation8 + $0xf0] sm:$0xff]
    %v638 = vld [vmem:[#allocation8 + $0xf8] sm:$0xff]
    %v639 = vld [vmem:[#allocation8 + $0x100] sm:$0xff]
    %v640 = vld [vmem:[#allocation8 + $0x108] sm:$0xff]
    %v641 = vld [vmem:[#allocation8 + $0x110] sm:$0xff]
    %v642 = vld [vmem:[#allocation8 + $0x118] sm:$0xff]
    %v643 = vld [vmem:[#allocation8 + $0x120] sm:$0xff]
    %v644 = vld [vmem:[#allocation8 + $0x128] sm:$0xff]
    %v645 = vld [vmem:[#allocation8 + $0x130] sm:$0xff]
    %v646 = vld [vmem:[#allocation8 + $0x138] sm:$0xff]
    %v647 = vld [vmem:[#allocation8 + $0x140] sm:$0xff]
    %v648 = vld [vmem:[#allocation8 + $0x148] sm:$0xff]
    %v649 = vld [vmem:[#allocation8 + $0x150] sm:$0xff]
    %v650 = vld [vmem:[#allocation8 + $0x158] sm:$0xff]
    %v651 = vld [vmem:[#allocation8 + $0x160] sm:$0xff]
    %v652 = vld [vmem:[#allocation8 + $0x168] sm:$0xff]
    %v653 = vld [vmem:[#allocation8 + $0x170] sm:$0xff]
    %v654 = vld [vmem:[#allocation8 + $0x178] sm:$0xff]
    %v655 = vld [vmem:[#allocation8 + $0x180] sm:$0xff]
    %v656 = vld [vmem:[#allocation8 + $0x188] sm:$0xff]
    %v657 = vld [vmem:[#allocation8 + $0x190] sm:$0xff]
    %v658 = vld [vmem:[#allocation8 + $0x198] sm:$0xff]
    %v659 = vld [vmem:[#allocation8 + $0x1a0] sm:$0xff]
    %v660 = vld [vmem:[#allocation8 + $0x1a8] sm:$0xff]
    %v661 = vld [vmem:[#allocation8 + $0x1b0] sm:$0xff]
    %v662 = vld [vmem:[#allocation8 + $0x1b8] sm:$0xff]
    %v663 = vld [vmem:[#allocation8 + $0x1c0] sm:$0xff]
    %v664 = vld [vmem:[#allocation8 + $0x1c8] sm:$0xff]
    %v665 = vld [vmem:[#allocation8 + $0x1d0] sm:$0xff]
    %v666 = vld [vmem:[#allocation8 + $0x1d8] sm:$0xff]
    %v667 = vld [vmem:[#allocation8 + $0x1e0] sm:$0xff]
    %v668 = vld [vmem:[#allocation8 + $0x1e8] sm:$0xff]
    %v669 = vld [vmem:[#allocation8 + $0x1f0] sm:$0xff]
    %v670 = vld [vmem:[#allocation8 + $0x1f8] sm:$0xff]
    %v671 = vld [vmem:[#allocation8 + $0x200] sm:$0xff]
    %v672 = vld [vmem:[#allocation8 + $0x208] sm:$0xff]
    %v673 = vld [vmem:[#allocation8 + $0x210] sm:$0xff]
    %v674 = vld [vmem:[#allocation8 + $0x218] sm:$0xff]
    %v675 = vld [vmem:[#allocation8 + $0x220] sm:$0xff]
    %v676 = vld [vmem:[#allocation8 + $0x228] sm:$0xff]
    %v677 = vld [vmem:[#allocation8 + $0x230] sm:$0xff]
    %v678 = vld [vmem:[#allocation8 + $0x238] sm:$0xff]
    %v679 = vld [vmem:[#allocation8 + $0x240] sm:$0xff]
    %v680 = vld [vmem:[#allocation8 + $0x248] sm:$0xff]
    %v681 = vld [vmem:[#allocation8 + $0x250] sm:$0xff]
    %v682 = vld [vmem:[#allocation8 + $0x258] sm:$0xff]
    %v683 = vld [vmem:[#allocation8 + $0x260] sm:$0xff]
    %v684 = vld [vmem:[#allocation8 + $0x268] sm:$0xff]
    %v685 = vld [vmem:[#allocation8 + $0x270] sm:$0xff]
    %v686 = vld [vmem:[#allocation8 + $0x278] sm:$0xff]
    %v687 = vld [vmem:[#allocation8 + $0x280] sm:$0xff]
    %v688 = vld [vmem:[#allocation8 + $0x288] sm:$0xff]
    %v689 = vld [vmem:[#allocation8 + $0x290] sm:$0xff]
    %v690 = vld [vmem:[#allocation8 + $0x298] sm:$0xff]
    %v691 = vld [vmem:[#allocation8 + $0x2a0] sm:$0xff]
    %v692 = vld [vmem:[#allocation8 + $0x2a8] sm:$0xff]
    %v693 = vld [vmem:[#allocation8 + $0x2b0] sm:$0xff]
    %v694 = vld [vmem:[#allocation8 + $0x2b8] sm:$0xff]
    %v695 = vld [vmem:[#allocation8 + $0x2c0] sm:$0xff]
    %v696 = vld [vmem:[#allocation8 + $0x2c8] sm:$0xff]
    %v697 = vld [vmem:[#allocation8 + $0x2d0] sm:$0xff]
    %v698 = vld [vmem:[#allocation8 + $0x2d8] sm:$0xff]
    %v699 = vld [vmem:[#allocation8 + $0x2e0] sm:$0xff]
    %v700 = vld [vmem:[#allocation8 + $0x2e8] sm:$0xff]
    %v701 = vld [vmem:[#allocation8 + $0x2f0] sm:$0xff]
    %v702 = vld [vmem:[#allocation8 + $0x2f8] sm:$0xff]
    %v703 = vld [vmem:[#allocation8 + $0x300] sm:$0xff]
    %v704 = vld [vmem:[#allocation8 + $0x308] sm:$0xff]
    %v705 = vld [vmem:[#allocation8 + $0x310] sm:$0xff]
    %v706 = vld [vmem:[#allocation8 + $0x318] sm:$0xff]
    %v707 = vld [vmem:[#allocation8 + $0x320] sm:$0xff]
    %v708 = vld [vmem:[#allocation8 + $0x328] sm:$0xff]
    %v709 = vld [vmem:[#allocation8 + $0x330] sm:$0xff]
    %v710 = vld [vmem:[#allocation8 + $0x338] sm:$0xff]
    %v711 = vld [vmem:[#allocation8 + $0x340] sm:$0xff]
    %v712 = vld [vmem:[#allocation8 + $0x348] sm:$0xff]
    %v713 = vld [vmem:[#allocation8 + $0x350] sm:$0xff]
    %v714 = vld [vmem:[#allocation8 + $0x358] sm:$0xff]
    %v715 = vld [vmem:[#allocation8 + $0x360] sm:$0xff]
    %v716 = vld [vmem:[#allocation8 + $0x368] sm:$0xff]
    %v717 = vld [vmem:[#allocation8 + $0x370] sm:$0xff]
    %v718 = vld [vmem:[#allocation8 + $0x378] sm:$0xff]
    %v719 = vld [vmem:[#allocation8 + $0x380] sm:$0xff]
    %v720 = vld [vmem:[#allocation8 + $0x388] sm:$0xff]
    %v721 = vld [vmem:[#allocation8 + $0x390] sm:$0xff]
    %v722 = vld [vmem:[#allocation8 + $0x398] sm:$0xff]
    %v723 = vld [vmem:[#allocation8 + $0x3a0] sm:$0xff]
    %v724 = vld [vmem:[#allocation8 + $0x3a8] sm:$0xff]
    %v725 = vld [vmem:[#allocation8 + $0x3b0] sm:$0xff]
    %v726 = vld [vmem:[#allocation8 + $0x3b8] sm:$0xff]
    %v727 = vld [vmem:[#allocation8 + $0x3c0] sm:$0xff]
    %v728 = vld [vmem:[#allocation8 + $0x3c8] sm:$0xff]
    %v729 = vld [vmem:[#allocation8 + $0x3d0] sm:$0xff]
    %v730 = vld [vmem:[#allocation8 + $0x3d8] sm:$0xff]
    %v731 = vld [vmem:[#allocation8 + $0x3e0] sm:$0xff]
    %v732 = vld [vmem:[#allocation8 + $0x3e8] sm:$0xff]
    %v733 = vld [vmem:[#allocation8 + $0x3f0] sm:$0xff]
    %v734 = vld [vmem:[#allocation8 + $0x3f8] sm:$0xff]
    %v735 = vld [vmem:[#allocation8 + $0x400] sm:$0xff]
    %v736 = vld [vmem:[#allocation8 + $0x408] sm:$0xff]
    %v737 = vld [vmem:[#allocation8 + $0x410] sm:$0xff]
    %v738 = vld [vmem:[#allocation8 + $0x418] sm:$0xff]
    %v739 = vld [vmem:[#allocation8 + $0x420] sm:$0xff]
    %v740 = vld [vmem:[#allocation8 + $0x428] sm:$0xff]
    %v741 = vld [vmem:[#allocation8 + $0x430] sm:$0xff]
    %v742 = vld [vmem:[#allocation8 + $0x438] sm:$0xff]
    %v743 = vld [vmem:[#allocation8 + $0x440] sm:$0xff]
    %v744 = vld [vmem:[#allocation8 + $0x448] sm:$0xff]
    %v745 = vld [vmem:[#allocation8 + $0x450] sm:$0xff]
    %v746 = vld [vmem:[#allocation8 + $0x458] sm:$0xff]
    %v747 = vld [vmem:[#allocation8 + $0x460] sm:$0xff]
    %v748 = vld [vmem:[#allocation8 + $0x468] sm:$0xff]
    %v749 = vld [vmem:[#allocation8 + $0x470] sm:$0xff]
    %v750 = vld [vmem:[#allocation8 + $0x478] sm:$0xff]
    %v751 = vld [vmem:[#allocation8 + $0x480] sm:$0xff]
    %v752 = vld [vmem:[#allocation8 + $0x488] sm:$0xff]
    %v753 = vld [vmem:[#allocation8 + $0x490] sm:$0xff]
    %v754 = vld [vmem:[#allocation8 + $0x498] sm:$0xff]
    %v755 = vld [vmem:[#allocation8 + $0x4a0] sm:$0xff]
    %v756 = vld [vmem:[#allocation8 + $0x4a8] sm:$0xff]
    %v757 = vld [vmem:[#allocation8 + $0x4b0] sm:$0xff]
    %v758 = vld [vmem:[#allocation8 + $0x4b8] sm:$0xff]
    %v759 = vld [vmem:[#allocation8 + $0x4c0] sm:$0xff]
    %v760 = vld [vmem:[#allocation8 + $0x4c8] sm:$0xff]
    %v761 = vld [vmem:[#allocation8 + $0x4d0] sm:$0xff]
    %v762 = vld [vmem:[#allocation8 + $0x4d8] sm:$0xff]
    %v763 = vld [vmem:[#allocation8 + $0x4e0] sm:$0xff]
    %v764 = vld [vmem:[#allocation8 + $0x4e8] sm:$0xff]
    %v765 = vld [vmem:[#allocation8 + $0x4f0] sm:$0xff]
    %v766 = vld [vmem:[#allocation8 + $0x4f8] sm:$0xff]
    %v767 = vld [vmem:[#allocation8 + $0x500] sm:$0xff]
    %v768 = vld [vmem:[#allocation8 + $0x508] sm:$0xff]
    %v769 = vld [vmem:[#allocation8 + $0x510] sm:$0xff]
    %v770 = vld [vmem:[#allocation8 + $0x518] sm:$0xff]
    %v771 = vld [vmem:[#allocation8 + $0x520] sm:$0xff]
    %v772 = vld [vmem:[#allocation8 + $0x528] sm:$0xff]
    %v773 = vld [vmem:[#allocation8 + $0x530] sm:$0xff]
    %v774 = vld [vmem:[#allocation8 + $0x538] sm:$0xff]
    %v775 = vld [vmem:[#allocation8 + $0x540] sm:$0xff]
    %v776 = vld [vmem:[#allocation8 + $0x548] sm:$0xff]
    %v777 = vld [vmem:[#allocation8 + $0x550] sm:$0xff]
    %v778 = vld [vmem:[#allocation8 + $0x558] sm:$0xff]
    %v779 = vld [vmem:[#allocation8 + $0x560] sm:$0xff]
    %v780 = vld [vmem:[#allocation8 + $0x568] sm:$0xff]
    %v781 = vld [vmem:[#allocation8 + $0x570] sm:$0xff]
    %v782 = vld [vmem:[#allocation8 + $0x578] sm:$0xff]
    %v783 = vld [vmem:[#allocation8 + $0x580] sm:$0xff]
    %v784 = vld [vmem:[#allocation8 + $0x588] sm:$0xff]
    %v785 = vld [vmem:[#allocation8 + $0x590] sm:$0xff]
    %v786 = vld [vmem:[#allocation8 + $0x598] sm:$0xff]
    %v787 = vld [vmem:[#allocation8 + $0x5a0] sm:$0xff]
    %v788 = vld [vmem:[#allocation8 + $0x5a8] sm:$0xff]
    %v789 = vld [vmem:[#allocation8 + $0x5b0] sm:$0xff]
    %v790 = vld [vmem:[#allocation8 + $0x5b8] sm:$0xff]
    %v791 = vld [vmem:[#allocation8 + $0x5c0] sm:$0xff]
    %v792 = vld [vmem:[#allocation8 + $0x5c8] sm:$0xff]
    %v793 = vld [vmem:[#allocation8 + $0x5d0] sm:$0xff]
    %v794 = vld [vmem:[#allocation8 + $0x5d8] sm:$0xff]
    %v795 = vld [vmem:[#allocation8 + $0x5e0] sm:$0xff]
    %v796 = vld [vmem:[#allocation8 + $0x5e8] sm:$0xff]
    %v797 = vld [vmem:[#allocation8 + $0x5f0] sm:$0xff]
    %v798 = vld [vmem:[#allocation8 + $0x5f8] sm:$0xff]
    %v799 = vld [vmem:[#allocation8 + $0x600] sm:$0xff]
    %v800 = vld [vmem:[#allocation8 + $0x608] sm:$0xff]
    %v801 = vld [vmem:[#allocation8 + $0x610] sm:$0xff]
    %v802 = vld [vmem:[#allocation8 + $0x618] sm:$0xff]
    %v803 = vld [vmem:[#allocation8 + $0x620] sm:$0xff]
    %v804 = vld [vmem:[#allocation8 + $0x628] sm:$0xff]
    %v805 = vld [vmem:[#allocation8 + $0x630] sm:$0xff]
    %v806 = vld [vmem:[#allocation8 + $0x638] sm:$0xff]
    %v807 = vld [vmem:[#allocation8 + $0x640] sm:$0xff]
    %v808 = vld [vmem:[#allocation8 + $0x648] sm:$0xff]
    %v809 = vld [vmem:[#allocation8 + $0x650] sm:$0xff]
    %v810 = vld [vmem:[#allocation8 + $0x658] sm:$0xff]
    %v811 = vld [vmem:[#allocation8 + $0x660] sm:$0xff]
    %v812 = vld [vmem:[#allocation8 + $0x668] sm:$0xff]
    %v813 = vld [vmem:[#allocation8 + $0x670] sm:$0xff]
    %v814 = vld [vmem:[#allocation8 + $0x678] sm:$0xff]
    %v815 = vld [vmem:[#allocation8 + $0x680] sm:$0xff]
    %v816 = vld [vmem:[#allocation8 + $0x688] sm:$0xff]
    %v817 = vld [vmem:[#allocation8 + $0x690] sm:$0xff]
    %v818 = vld [vmem:[#allocation8 + $0x698] sm:$0xff]
    %v819 = vld [vmem:[#allocation8 + $0x6a0] sm:$0xff]
    %v820 = vld [vmem:[#allocation8 + $0x6a8] sm:$0xff]
    %v821 = vld [vmem:[#allocation8 + $0x6b0] sm:$0xff]
    %v822 = vld [vmem:[#allocation8 + $0x6b8] sm:$0xff]
    %v823 = vld [vmem:[#allocation8 + $0x6c0] sm:$0xff]
    %v824 = vld [vmem:[#allocation8 + $0x6c8] sm:$0xff]
    %v825 = vld [vmem:[#allocation8 + $0x6d0] sm:$0xff]
    %v826 = vld [vmem:[#allocation8 + $0x6d8] sm:$0xff]
    %v827 = vld [vmem:[#allocation8 + $0x6e0] sm:$0xff]
    %v828 = vld [vmem:[#allocation8 + $0x6e8] sm:$0xff]
    %v829 = vld [vmem:[#allocation8 + $0x6f0] sm:$0xff]
    %v830 = vld [vmem:[#allocation8 + $0x6f8] sm:$0xff]
    %v831 = vld [vmem:[#allocation8 + $0x700] sm:$0xff]
    %v832 = vld [vmem:[#allocation8 + $0x708] sm:$0xff]
    %v833 = vld [vmem:[#allocation8 + $0x710] sm:$0xff]
    %v834 = vld [vmem:[#allocation8 + $0x718] sm:$0xff]
    %v835 = vld [vmem:[#allocation8 + $0x720] sm:$0xff]
    %v836 = vld [vmem:[#allocation8 + $0x728] sm:$0xff]
    %v837 = vld [vmem:[#allocation8 + $0x730] sm:$0xff]
    %v838 = vld [vmem:[#allocation8 + $0x738] sm:$0xff]
    %v839 = vld [vmem:[#allocation8 + $0x740] sm:$0xff]
    %v840 = vld [vmem:[#allocation8 + $0x748] sm:$0xff]
    %v841 = vld [vmem:[#allocation8 + $0x750] sm:$0xff]
    %v842 = vld [vmem:[#allocation8 + $0x758] sm:$0xff]
    %v843 = vld [vmem:[#allocation8 + $0x760] sm:$0xff]
    %v844 = vld [vmem:[#allocation8 + $0x768] sm:$0xff]
    %v845 = vld [vmem:[#allocation8 + $0x770] sm:$0xff]
    %v846 = vld [vmem:[#allocation8 + $0x778] sm:$0xff]
    %v847 = vld [vmem:[#allocation8 + $0x780] sm:$0xff]
    %v848 = vld [vmem:[#allocation8 + $0x788] sm:$0xff]
    %v849 = vld [vmem:[#allocation8 + $0x790] sm:$0xff]
    %v850 = vld [vmem:[#allocation8 + $0x798] sm:$0xff]
    %v851 = vld [vmem:[#allocation8 + $0x7a0] sm:$0xff]
    %v852 = vld [vmem:[#allocation8 + $0x7a8] sm:$0xff]
    %v853 = vld [vmem:[#allocation8 + $0x7b0] sm:$0xff]
    %v854 = vld [vmem:[#allocation8 + $0x7b8] sm:$0xff]
    %v855 = vld [vmem:[#allocation8 + $0x7c0] sm:$0xff]
    %v856 = vld [vmem:[#allocation8 + $0x7c8] sm:$0xff]
    %v857 = vld [vmem:[#allocation8 + $0x7d0] sm:$0xff]
    %v858 = vld [vmem:[#allocation8 + $0x7d8] sm:$0xff]
    %v859 = vld [vmem:[#allocation8 + $0x7e0] sm:$0xff]
    %v860 = vld [vmem:[#allocation8 + $0x7e8] sm:$0xff]
    %v861 = vld [vmem:[#allocation8 + $0x7f0] sm:$0xff]
    %v862 = vld [vmem:[#allocation8 + $0x7f8] sm:$0xff]
    %s863 = scalar_lea.vmem [#allocation8], 2048
    %v864 = vld [vmem:[%s863] sm:$0xff]
    %v865 = vld [vmem:[%s863 + $0x8] sm:$0xff]
    %v866 = vld [vmem:[%s863 + $0x10] sm:$0xff]
    %v867 = vld [vmem:[%s863 + $0x18] sm:$0xff]
    %v868 = vld [vmem:[%s863 + $0x20] sm:$0xff]
    %v869 = vld [vmem:[%s863 + $0x28] sm:$0xff]
    %v870 = vld [vmem:[%s863 + $0x30] sm:$0xff]
    %v871 = vld [vmem:[%s863 + $0x38] sm:$0xff]
    %v872 = vld [vmem:[%s863 + $0x40] sm:$0xff]
    %v873 = vld [vmem:[%s863 + $0x48] sm:$0xff]
    %v874 = vld [vmem:[%s863 + $0x50] sm:$0xff]
    %v875 = vld [vmem:[%s863 + $0x58] sm:$0xff]
    %v876 = vld [vmem:[%s863 + $0x60] sm:$0xff]
    %v877 = vld [vmem:[%s863 + $0x68] sm:$0xff]
    %v878 = vld [vmem:[%s863 + $0x70] sm:$0xff]
    %v879 = vld [vmem:[%s863 + $0x78] sm:$0xff]
    %v880 = vld [vmem:[%s863 + $0x80] sm:$0xff]
    %v881 = vld [vmem:[%s863 + $0x88] sm:$0xff]
    %v882 = vld [vmem:[%s863 + $0x90] sm:$0xff]
    %v883 = vld [vmem:[%s863 + $0x98] sm:$0xff]
    %v884 = vld [vmem:[%s863 + $0xa0] sm:$0xff]
    %v885 = vld [vmem:[%s863 + $0xa8] sm:$0xff]
    %v886 = vld [vmem:[%s863 + $0xb0] sm:$0xff]
    %v887 = vld [vmem:[%s863 + $0xb8] sm:$0xff]
    %v888 = vld [vmem:[%s863 + $0xc0] sm:$0xff]
    %v889 = vld [vmem:[%s863 + $0xc8] sm:$0xff]
    %v890 = vld [vmem:[%s863 + $0xd0] sm:$0xff]
    %v891 = vld [vmem:[%s863 + $0xd8] sm:$0xff]
    %v892 = vld [vmem:[%s863 + $0xe0] sm:$0xff]
    %v893 = vld [vmem:[%s863 + $0xe8] sm:$0xff]
    %v894 = vld [vmem:[%s863 + $0xf0] sm:$0xff]
    %v895 = vld [vmem:[%s863 + $0xf8] sm:$0xff]
    %v896 = vld [vmem:[%s863 + $0x100] sm:$0xff]
    %v897 = vld [vmem:[%s863 + $0x108] sm:$0xff]
    %v898 = vld [vmem:[%s863 + $0x110] sm:$0xff]
    %v899 = vld [vmem:[%s863 + $0x118] sm:$0xff]
    %v900 = vld [vmem:[%s863 + $0x120] sm:$0xff]
    %v901 = vld [vmem:[%s863 + $0x128] sm:$0xff]
    %v902 = vld [vmem:[%s863 + $0x130] sm:$0xff]
    %v903 = vld [vmem:[%s863 + $0x138] sm:$0xff]
    %v904 = vld [vmem:[%s863 + $0x140] sm:$0xff]
    %v905 = vld [vmem:[%s863 + $0x148] sm:$0xff]
    %v906 = vld [vmem:[%s863 + $0x150] sm:$0xff]
    %v907 = vld [vmem:[%s863 + $0x158] sm:$0xff]
    %v908 = vld [vmem:[%s863 + $0x160] sm:$0xff]
    %v909 = vld [vmem:[%s863 + $0x168] sm:$0xff]
    %v910 = vld [vmem:[%s863 + $0x170] sm:$0xff]
    %v911 = vld [vmem:[%s863 + $0x178] sm:$0xff]
    %v912 = vld [vmem:[%s863 + $0x180] sm:$0xff]
    %v913 = vld [vmem:[%s863 + $0x188] sm:$0xff]
    %v914 = vld [vmem:[%s863 + $0x190] sm:$0xff]
    %v915 = vld [vmem:[%s863 + $0x198] sm:$0xff]
    %v916 = vld [vmem:[%s863 + $0x1a0] sm:$0xff]
    %v917 = vld [vmem:[%s863 + $0x1a8] sm:$0xff]
    %v918 = vld [vmem:[%s863 + $0x1b0] sm:$0xff]
    %v919 = vld [vmem:[%s863 + $0x1b8] sm:$0xff]
    %v920 = vld [vmem:[%s863 + $0x1c0] sm:$0xff]
    %v921 = vld [vmem:[%s863 + $0x1c8] sm:$0xff]
    %v922 = vld [vmem:[%s863 + $0x1d0] sm:$0xff]
    %v923 = vld [vmem:[%s863 + $0x1d8] sm:$0xff]
    %v924 = vld [vmem:[%s863 + $0x1e0] sm:$0xff]
    %v925 = vld [vmem:[%s863 + $0x1e8] sm:$0xff]
    %v926 = vld [vmem:[%s863 + $0x1f0] sm:$0xff]
    %v927 = vld [vmem:[%s863 + $0x1f8] sm:$0xff]
    %v928 = vld [vmem:[%s863 + $0x200] sm:$0xff]
    %v929 = vld [vmem:[%s863 + $0x208] sm:$0xff]
    %v930 = vld [vmem:[%s863 + $0x210] sm:$0xff]
    %v931 = vld [vmem:[%s863 + $0x218] sm:$0xff]
    %v932 = vld [vmem:[%s863 + $0x220] sm:$0xff]
    %v933 = vld [vmem:[%s863 + $0x228] sm:$0xff]
    %v934 = vld [vmem:[%s863 + $0x230] sm:$0xff]
    %v935 = vld [vmem:[%s863 + $0x238] sm:$0xff]
    %v936 = vld [vmem:[%s863 + $0x240] sm:$0xff]
    %v937 = vld [vmem:[%s863 + $0x248] sm:$0xff]
    %v938 = vld [vmem:[%s863 + $0x250] sm:$0xff]
    %v939 = vld [vmem:[%s863 + $0x258] sm:$0xff]
    %v940 = vld [vmem:[%s863 + $0x260] sm:$0xff]
    %v941 = vld [vmem:[%s863 + $0x268] sm:$0xff]
    %v942 = vld [vmem:[%s863 + $0x270] sm:$0xff]
    %v943 = vld [vmem:[%s863 + $0x278] sm:$0xff]
    %v944 = vld [vmem:[%s863 + $0x280] sm:$0xff]
    %v945 = vld [vmem:[%s863 + $0x288] sm:$0xff]
    %v946 = vld [vmem:[%s863 + $0x290] sm:$0xff]
    %v947 = vld [vmem:[%s863 + $0x298] sm:$0xff]
    %v948 = vld [vmem:[%s863 + $0x2a0] sm:$0xff]
    %v949 = vld [vmem:[%s863 + $0x2a8] sm:$0xff]
    %v950 = vld [vmem:[%s863 + $0x2b0] sm:$0xff]
    %v951 = vld [vmem:[%s863 + $0x2b8] sm:$0xff]
    %v952 = vld [vmem:[%s863 + $0x2c0] sm:$0xff]
    %v953 = vld [vmem:[%s863 + $0x2c8] sm:$0xff]
    %v954 = vld [vmem:[%s863 + $0x2d0] sm:$0xff]
    %v955 = vld [vmem:[%s863 + $0x2d8] sm:$0xff]
    %v956 = vld [vmem:[%s863 + $0x2e0] sm:$0xff]
    %v957 = vld [vmem:[%s863 + $0x2e8] sm:$0xff]
    %v958 = vld [vmem:[%s863 + $0x2f0] sm:$0xff]
    %v959 = vld [vmem:[%s863 + $0x2f8] sm:$0xff]
    %v960 = vld [vmem:[%s863 + $0x300] sm:$0xff]
    %v961 = vld [vmem:[%s863 + $0x308] sm:$0xff]
    %v962 = vld [vmem:[%s863 + $0x310] sm:$0xff]
    %v963 = vld [vmem:[%s863 + $0x318] sm:$0xff]
    %v964 = vld [vmem:[%s863 + $0x320] sm:$0xff]
    %v965 = vld [vmem:[%s863 + $0x328] sm:$0xff]
    %v966 = vld [vmem:[%s863 + $0x330] sm:$0xff]
    %v967 = vld [vmem:[%s863 + $0x338] sm:$0xff]
    %v968 = vld [vmem:[%s863 + $0x340] sm:$0xff]
    %v969 = vld [vmem:[%s863 + $0x348] sm:$0xff]
    %v970 = vld [vmem:[%s863 + $0x350] sm:$0xff]
    %v971 = vld [vmem:[%s863 + $0x358] sm:$0xff]
    %v972 = vld [vmem:[%s863 + $0x360] sm:$0xff]
    %v973 = vld [vmem:[%s863 + $0x368] sm:$0xff]
    %v974 = vld [vmem:[%s863 + $0x370] sm:$0xff]
    %v975 = vld [vmem:[%s863 + $0x378] sm:$0xff]
    %v976 = vld [vmem:[%s863 + $0x380] sm:$0xff]
    %v977 = vld [vmem:[%s863 + $0x388] sm:$0xff]
    %v978 = vld [vmem:[%s863 + $0x390] sm:$0xff]
    %v979 = vld [vmem:[%s863 + $0x398] sm:$0xff]
    %v980 = vld [vmem:[%s863 + $0x3a0] sm:$0xff]
    %v981 = vld [vmem:[%s863 + $0x3a8] sm:$0xff]
    %v982 = vld [vmem:[%s863 + $0x3b0] sm:$0xff]
    %v983 = vld [vmem:[%s863 + $0x3b8] sm:$0xff]
    %v984 = vld [vmem:[%s863 + $0x3c0] sm:$0xff]
    %v985 = vld [vmem:[%s863 + $0x3c8] sm:$0xff]
    %v986 = vld [vmem:[%s863 + $0x3d0] sm:$0xff]
    %v987 = vld [vmem:[%s863 + $0x3d8] sm:$0xff]
    %v988 = vld [vmem:[%s863 + $0x3e0] sm:$0xff]
    %v989 = vld [vmem:[%s863 + $0x3e8] sm:$0xff]
    %v990 = vld [vmem:[%s863 + $0x3f0] sm:$0xff]
    %v991 = vld [vmem:[%s863 + $0x3f8] sm:$0xff]
    %v992 = vld [vmem:[%s863 + $0x400] sm:$0xff]
    %v993 = vld [vmem:[%s863 + $0x408] sm:$0xff]
    %v994 = vld [vmem:[%s863 + $0x410] sm:$0xff]
    %v995 = vld [vmem:[%s863 + $0x418] sm:$0xff]
    %v996 = vld [vmem:[%s863 + $0x420] sm:$0xff]
    %v997 = vld [vmem:[%s863 + $0x428] sm:$0xff]
    %v998 = vld [vmem:[%s863 + $0x430] sm:$0xff]
    %v999 = vld [vmem:[%s863 + $0x438] sm:$0xff]
    %v1000 = vld [vmem:[%s863 + $0x440] sm:$0xff]
    %v1001 = vld [vmem:[%s863 + $0x448] sm:$0xff]
    %v1002 = vld [vmem:[%s863 + $0x450] sm:$0xff]
    %v1003 = vld [vmem:[%s863 + $0x458] sm:$0xff]
    %v1004 = vld [vmem:[%s863 + $0x460] sm:$0xff]
    %v1005 = vld [vmem:[%s863 + $0x468] sm:$0xff]
    %v1006 = vld [vmem:[%s863 + $0x470] sm:$0xff]
    %v1007 = vld [vmem:[%s863 + $0x478] sm:$0xff]
    %v1008 = vld [vmem:[%s863 + $0x480] sm:$0xff]
    %v1009 = vld [vmem:[%s863 + $0x488] sm:$0xff]
    %v1010 = vld [vmem:[%s863 + $0x490] sm:$0xff]
    %v1011 = vld [vmem:[%s863 + $0x498] sm:$0xff]
    %v1012 = vld [vmem:[%s863 + $0x4a0] sm:$0xff]
    %v1013 = vld [vmem:[%s863 + $0x4a8] sm:$0xff]
    %v1014 = vld [vmem:[%s863 + $0x4b0] sm:$0xff]
    %v1015 = vld [vmem:[%s863 + $0x4b8] sm:$0xff]
    %v1016 = vld [vmem:[%s863 + $0x4c0] sm:$0xff]
    %v1017 = vld [vmem:[%s863 + $0x4c8] sm:$0xff]
    %v1018 = vld [vmem:[%s863 + $0x4d0] sm:$0xff]
    %v1019 = vld [vmem:[%s863 + $0x4d8] sm:$0xff]
    %v1020 = vld [vmem:[%s863 + $0x4e0] sm:$0xff]
    %v1021 = vld [vmem:[%s863 + $0x4e8] sm:$0xff]
    %v1022 = vld [vmem:[%s863 + $0x4f0] sm:$0xff]
    %v1023 = vld [vmem:[%s863 + $0x4f8] sm:$0xff]
    %v1024 = vld [vmem:[%s863 + $0x500] sm:$0xff]
    %v1025 = vld [vmem:[%s863 + $0x508] sm:$0xff]
    %v1026 = vld [vmem:[%s863 + $0x510] sm:$0xff]
    %v1027 = vld [vmem:[%s863 + $0x518] sm:$0xff]
    %v1028 = vld [vmem:[%s863 + $0x520] sm:$0xff]
    %v1029 = vld [vmem:[%s863 + $0x528] sm:$0xff]
    %v1030 = vld [vmem:[%s863 + $0x530] sm:$0xff]
    %v1031 = vld [vmem:[%s863 + $0x538] sm:$0xff]
    %v1032 = vld [vmem:[%s863 + $0x540] sm:$0xff]
    %v1033 = vld [vmem:[%s863 + $0x548] sm:$0xff]
    %v1034 = vld [vmem:[%s863 + $0x550] sm:$0xff]
    %v1035 = vld [vmem:[%s863 + $0x558] sm:$0xff]
    %v1036 = vld [vmem:[%s863 + $0x560] sm:$0xff]
    %v1037 = vld [vmem:[%s863 + $0x568] sm:$0xff]
    %v1038 = vld [vmem:[%s863 + $0x570] sm:$0xff]
    %v1039 = vld [vmem:[%s863 + $0x578] sm:$0xff]
    %v1040 = vld [vmem:[%s863 + $0x580] sm:$0xff]
    %v1041 = vld [vmem:[%s863 + $0x588] sm:$0xff]
    %v1042 = vld [vmem:[%s863 + $0x590] sm:$0xff]
    %v1043 = vld [vmem:[%s863 + $0x598] sm:$0xff]
    %v1044 = vld [vmem:[%s863 + $0x5a0] sm:$0xff]
    %v1045 = vld [vmem:[%s863 + $0x5a8] sm:$0xff]
    %v1046 = vld [vmem:[%s863 + $0x5b0] sm:$0xff]
    %v1047 = vld [vmem:[%s863 + $0x5b8] sm:$0xff]
    %v1048 = vld [vmem:[%s863 + $0x5c0] sm:$0xff]
    %v1049 = vld [vmem:[%s863 + $0x5c8] sm:$0xff]
    %v1050 = vld [vmem:[%s863 + $0x5d0] sm:$0xff]
    %v1051 = vld [vmem:[%s863 + $0x5d8] sm:$0xff]
    %v1052 = vld [vmem:[%s863 + $0x5e0] sm:$0xff]
    %v1053 = vld [vmem:[%s863 + $0x5e8] sm:$0xff]
    %v1054 = vld [vmem:[%s863 + $0x5f0] sm:$0xff]
    %v1055 = vld [vmem:[%s863 + $0x5f8] sm:$0xff]
    %v1056 = vld [vmem:[%s863 + $0x600] sm:$0xff]
    %v1057 = vld [vmem:[%s863 + $0x608] sm:$0xff]
    %v1058 = vld [vmem:[%s863 + $0x610] sm:$0xff]
    %v1059 = vld [vmem:[%s863 + $0x618] sm:$0xff]
    %v1060 = vld [vmem:[%s863 + $0x620] sm:$0xff]
    %v1061 = vld [vmem:[%s863 + $0x628] sm:$0xff]
    %v1062 = vld [vmem:[%s863 + $0x630] sm:$0xff]
    %v1063 = vld [vmem:[%s863 + $0x638] sm:$0xff]
    %v1064 = vld [vmem:[%s863 + $0x640] sm:$0xff]
    %v1065 = vld [vmem:[%s863 + $0x648] sm:$0xff]
    %v1066 = vld [vmem:[%s863 + $0x650] sm:$0xff]
    %v1067 = vld [vmem:[%s863 + $0x658] sm:$0xff]
    %v1068 = vld [vmem:[%s863 + $0x660] sm:$0xff]
    %v1069 = vld [vmem:[%s863 + $0x668] sm:$0xff]
    %v1070 = vld [vmem:[%s863 + $0x670] sm:$0xff]
    %v1071 = vld [vmem:[%s863 + $0x678] sm:$0xff]
    %v1072 = vld [vmem:[%s863 + $0x680] sm:$0xff]
    %v1073 = vld [vmem:[%s863 + $0x688] sm:$0xff]
    %v1074 = vld [vmem:[%s863 + $0x690] sm:$0xff]
    %v1075 = vld [vmem:[%s863 + $0x698] sm:$0xff]
    %v1076 = vld [vmem:[%s863 + $0x6a0] sm:$0xff]
    %v1077 = vld [vmem:[%s863 + $0x6a8] sm:$0xff]
    %v1078 = vld [vmem:[%s863 + $0x6b0] sm:$0xff]
    %v1079 = vld [vmem:[%s863 + $0x6b8] sm:$0xff]
    %v1080 = vld [vmem:[%s863 + $0x6c0] sm:$0xff]
    %v1081 = vld [vmem:[%s863 + $0x6c8] sm:$0xff]
    %v1082 = vld [vmem:[%s863 + $0x6d0] sm:$0xff]
    %v1083 = vld [vmem:[%s863 + $0x6d8] sm:$0xff]
    %v1084 = vld [vmem:[%s863 + $0x6e0] sm:$0xff]
    %v1085 = vld [vmem:[%s863 + $0x6e8] sm:$0xff]
    %v1086 = vld [vmem:[%s863 + $0x6f0] sm:$0xff]
    %v1087 = vld [vmem:[%s863 + $0x6f8] sm:$0xff]
    %v1088 = vld [vmem:[%s863 + $0x700] sm:$0xff]
    %v1089 = vld [vmem:[%s863 + $0x708] sm:$0xff]
    %v1090 = vld [vmem:[%s863 + $0x710] sm:$0xff]
    %v1091 = vld [vmem:[%s863 + $0x718] sm:$0xff]
    %v1092 = vld [vmem:[%s863 + $0x720] sm:$0xff]
    %v1093 = vld [vmem:[%s863 + $0x728] sm:$0xff]
    %v1094 = vld [vmem:[%s863 + $0x730] sm:$0xff]
    %v1095 = vld [vmem:[%s863 + $0x738] sm:$0xff]
    %v1096 = vld [vmem:[%s863 + $0x740] sm:$0xff]
    %v1097 = vld [vmem:[%s863 + $0x748] sm:$0xff]
    %v1098 = vld [vmem:[%s863 + $0x750] sm:$0xff]
    %v1099 = vld [vmem:[%s863 + $0x758] sm:$0xff]
    %v1100 = vld [vmem:[%s863 + $0x760] sm:$0xff]
    %v1101 = vld [vmem:[%s863 + $0x768] sm:$0xff]
    %v1102 = vld [vmem:[%s863 + $0x770] sm:$0xff]
    %v1103 = vld [vmem:[%s863 + $0x778] sm:$0xff]
    %v1104 = vld [vmem:[%s863 + $0x780] sm:$0xff]
    %v1105 = vld [vmem:[%s863 + $0x788] sm:$0xff]
    %v1106 = vld [vmem:[%s863 + $0x790] sm:$0xff]
    %v1107 = vld [vmem:[%s863 + $0x798] sm:$0xff]
    %v1108 = vld [vmem:[%s863 + $0x7a0] sm:$0xff]
    %v1109 = vld [vmem:[%s863 + $0x7a8] sm:$0xff]
    %v1110 = vld [vmem:[%s863 + $0x7b0] sm:$0xff]
    %v1111 = vld [vmem:[%s863 + $0x7b8] sm:$0xff]
    %v1112 = vld [vmem:[%s863 + $0x7c0] sm:$0xff]
    %v1113 = vld [vmem:[%s863 + $0x7c8] sm:$0xff]
    %v1114 = vld [vmem:[%s863 + $0x7d0] sm:$0xff]
    %v1115 = vld [vmem:[%s863 + $0x7d8] sm:$0xff]
    %v1116 = vld [vmem:[%s863 + $0x7e0] sm:$0xff]
    %v1117 = vld [vmem:[%s863 + $0x7e8] sm:$0xff]
    %v1118 = vld [vmem:[%s863 + $0x7f0] sm:$0xff]
    %v1119 = vld [vmem:[%s863 + $0x7f8] sm:$0xff]
    %v1120 = vld [vmem:[#allocation2] sm:$0x3]
    %v1121 = vld [vmem:[#allocation2 + $0x8] sm:$0x3]
    %v1122 = vld [vmem:[#allocation2 + $0x10] sm:$0x3]
    %v1123 = vld [vmem:[#allocation2 + $0x18] sm:$0x3]
    %v1124 = vld [vmem:[#allocation2 + $0x20] sm:$0x3]
    %v1125 = vld [vmem:[#allocation2 + $0x28] sm:$0x3]
    %v1126 = vld [vmem:[#allocation2 + $0x30] sm:$0x3]
    %v1127 = vld [vmem:[#allocation2 + $0x38] sm:$0x3]
    %v1128 = vld [vmem:[#allocation2 + $0xc0] sm:$0xc0]
    %v1129 = vld [vmem:[#allocation2 + $0xc8] sm:$0xc0]
    %v1130 = vld [vmem:[#allocation2 + $0xd0] sm:$0xc0]
    %v1131 = vld [vmem:[#allocation2 + $0xd8] sm:$0xc0]
    %v1132 = vld [vmem:[#allocation2 + $0xe0] sm:$0xc0]
    %v1133 = vld [vmem:[#allocation2 + $0xe8] sm:$0xc0]
    %v1134 = vld [vmem:[#allocation2 + $0xf0] sm:$0xc0]
    %v1135 = vld [vmem:[#allocation2 + $0xf8] sm:$0xc0]
    %1136 = vmatpush.msra.mxu0 %v727
    %1137 = vmatpush.msra.mxu0 %v719
    %1138 = vmatpush.msra.mxu0 %v711
    %1139 = vmatpush.msra.mxu0 %v703
    %1140 = vmatpush.msra.mxu0 %v695
    %1141 = vmatpush.msra.mxu0 %v687
    %1142 = vmatpush.msra.mxu0 %v679
    %1143 = vmatpush.msra.mxu0 %v671
    %1144 = vmatpush.msra.mxu0 %v663
    %1145 = vmatpush.msra.mxu0 %v655
    %1146 = vmatpush.msra.mxu0 %v647
    %1147 = vmatpush.msra.mxu0 %v639
    %1148 = vmatpush.msra.mxu0 %v631
    %1149 = vmatpush.msra.mxu0 %v623
    %1150 = vmatpush.msra.mxu0 %v615
    %1151 = vmatpush.msra.mxu0 %v607
    %1152 = vmatmul.f32.gmra.mxu0 0.0
    %v1153 = vpop.f32.mrf.mxu0
    %v1154 = vadd.f32 0.0, %v1153
    %1155 = vdwg.mxu0
    %1156 = vmatpush.msra.mxu0 %v855
    %1157 = vmatpush.msra.mxu0 %v847
    %1158 = vmatpush.msra.mxu0 %v839
    %1159 = vmatpush.msra.mxu0 %v831
    %1160 = vmatpush.msra.mxu0 %v823
    %1161 = vmatpush.msra.mxu0 %v815
    %1162 = vmatpush.msra.mxu0 %v807
    %1163 = vmatpush.msra.mxu0 %v799
    %1164 = vmatpush.msra.mxu0 %v791
    %1165 = vmatpush.msra.mxu0 %v783
    %1166 = vmatpush.msra.mxu0 %v775
    %1167 = vmatpush.msra.mxu0 %v767
    %1168 = vmatpush.msra.mxu0 %v759
    %1169 = vmatpush.msra.mxu0 %v751
    %1170 = vmatpush.msra.mxu0 %v743
    %1171 = vmatpush.msra.mxu0 %v735
    %1172 = vmatmul.f32.gmra.mxu0 0.0
    %v1173 = vpop.f32.mrf.mxu0
    %v1174 = vadd.f32 %v1154, %v1173
    %1175 = vdwg.mxu0
    %1176 = vmatpush.msra.mxu0 %v728
    %1177 = vmatpush.msra.mxu0 %v720
    %1178 = vmatpush.msra.mxu0 %v712
    %1179 = vmatpush.msra.mxu0 %v704
    %1180 = vmatpush.msra.mxu0 %v696
    %1181 = vmatpush.msra.mxu0 %v688
    %1182 = vmatpush.msra.mxu0 %v680
    %1183 = vmatpush.msra.mxu0 %v672
    %1184 = vmatpush.msra.mxu0 %v664
    %1185 = vmatpush.msra.mxu0 %v656
    %1186 = vmatpush.msra.mxu0 %v648
    %1187 = vmatpush.msra.mxu0 %v640
    %1188 = vmatpush.msra.mxu0 %v632
    %1189 = vmatpush.msra.mxu0 %v624
    %1190 = vmatpush.msra.mxu0 %v616
    %1191 = vmatpush.msra.mxu0 %v608
    %1192 = vmatmul.f32.gmra.mxu0 0.0
    %v1193 = vpop.f32.mrf.mxu0
    %v1194 = vadd.f32 0.0, %v1193
    %1195 = vdwg.mxu0
    %1196 = vmatpush.msra.mxu0 %v856
    %1197 = vmatpush.msra.mxu0 %v848
    %1198 = vmatpush.msra.mxu0 %v840
    %1199 = vmatpush.msra.mxu0 %v832
    %1200 = vmatpush.msra.mxu0 %v824
    %1201 = vmatpush.msra.mxu0 %v816
    %1202 = vmatpush.msra.mxu0 %v808
    %1203 = vmatpush.msra.mxu0 %v800
    %1204 = vmatpush.msra.mxu0 %v792
    %1205 = vmatpush.msra.mxu0 %v784
    %1206 = vmatpush.msra.mxu0 %v776
    %1207 = vmatpush.msra.mxu0 %v768
    %1208 = vmatpush.msra.mxu0 %v760
    %1209 = vmatpush.msra.mxu0 %v752
    %1210 = vmatpush.msra.mxu0 %v744
    %1211 = vmatpush.msra.mxu0 %v736
    %1212 = vmatmul.f32.gmra.mxu0 0.0
    %v1213 = vpop.f32.mrf.mxu0
    %v1214 = vadd.f32 %v1194, %v1213
    %1215 = vdwg.mxu0
    %1216 = vmatpush.msra.mxu0 %v729
    %1217 = vmatpush.msra.mxu0 %v721
    %1218 = vmatpush.msra.mxu0 %v713
    %1219 = vmatpush.msra.mxu0 %v705
    %1220 = vmatpush.msra.mxu0 %v697
    %1221 = vmatpush.msra.mxu0 %v689
    %1222 = vmatpush.msra.mxu0 %v681
    %1223 = vmatpush.msra.mxu0 %v673
    %1224 = vmatpush.msra.mxu0 %v665
    %1225 = vmatpush.msra.mxu0 %v657
    %1226 = vmatpush.msra.mxu0 %v649
    %1227 = vmatpush.msra.mxu0 %v641
    %1228 = vmatpush.msra.mxu0 %v633
    %1229 = vmatpush.msra.mxu0 %v625
    %1230 = vmatpush.msra.mxu0 %v617
    %1231 = vmatpush.msra.mxu0 %v609
    %1232 = vmatmul.f32.gmra.mxu0 0.0
    %v1233 = vpop.f32.mrf.mxu0
    %v1234 = vadd.f32 0.0, %v1233
    %1235 = vdwg.mxu0
    %1236 = vmatpush.msra.mxu0 %v857
    %1237 = vmatpush.msra.mxu0 %v849
    %1238 = vmatpush.msra.mxu0 %v841
    %1239 = vmatpush.msra.mxu0 %v833
    %1240 = vmatpush.msra.mxu0 %v825
    %1241 = vmatpush.msra.mxu0 %v817
    %1242 = vmatpush.msra.mxu0 %v809
    %1243 = vmatpush.msra.mxu0 %v801
    %1244 = vmatpush.msra.mxu0 %v793
    %1245 = vmatpush.msra.mxu0 %v785
    %1246 = vmatpush.msra.mxu0 %v777
    %1247 = vmatpush.msra.mxu0 %v769
    %1248 = vmatpush.msra.mxu0 %v761
    %1249 = vmatpush.msra.mxu0 %v753
    %1250 = vmatpush.msra.mxu0 %v745
    %1251 = vmatpush.msra.mxu0 %v737
    %1252 = vmatmul.f32.gmra.mxu0 0.0
    %v1253 = vpop.f32.mrf.mxu0
    %v1254 = vadd.f32 %v1234, %v1253
    %1255 = vdwg.mxu0
    %1256 = vmatpush.msra.mxu0 %v730
    %1257 = vmatpush.msra.mxu0 %v722
    %1258 = vmatpush.msra.mxu0 %v714
    %1259 = vmatpush.msra.mxu0 %v706
    %1260 = vmatpush.msra.mxu0 %v698
    %1261 = vmatpush.msra.mxu0 %v690
    %1262 = vmatpush.msra.mxu0 %v682
    %1263 = vmatpush.msra.mxu0 %v674
    %1264 = vmatpush.msra.mxu0 %v666
    %1265 = vmatpush.msra.mxu0 %v658
    %1266 = vmatpush.msra.mxu0 %v650
    %1267 = vmatpush.msra.mxu0 %v642
    %1268 = vmatpush.msra.mxu0 %v634
    %1269 = vmatpush.msra.mxu0 %v626
    %1270 = vmatpush.msra.mxu0 %v618
    %1271 = vmatpush.msra.mxu0 %v610
    %1272 = vmatmul.f32.gmra.mxu0 0.0
    %v1273 = vpop.f32.mrf.mxu0
    %v1274 = vadd.f32 0.0, %v1273
    %1275 = vdwg.mxu0
    %1276 = vmatpush.msra.mxu0 %v858
    %1277 = vmatpush.msra.mxu0 %v850
    %1278 = vmatpush.msra.mxu0 %v842
    %1279 = vmatpush.msra.mxu0 %v834
    %1280 = vmatpush.msra.mxu0 %v826
    %1281 = vmatpush.msra.mxu0 %v818
    %1282 = vmatpush.msra.mxu0 %v810
    %1283 = vmatpush.msra.mxu0 %v802
    %1284 = vmatpush.msra.mxu0 %v794
    %1285 = vmatpush.msra.mxu0 %v786
    %1286 = vmatpush.msra.mxu0 %v778
    %1287 = vmatpush.msra.mxu0 %v770
    %1288 = vmatpush.msra.mxu0 %v762
    %1289 = vmatpush.msra.mxu0 %v754
    %1290 = vmatpush.msra.mxu0 %v746
    %1291 = vmatpush.msra.mxu0 %v738
    %1292 = vmatmul.f32.gmra.mxu0 0.0
    %v1293 = vpop.f32.mrf.mxu0
    %v1294 = vadd.f32 %v1274, %v1293
    %1295 = vdwg.mxu0
    %1296 = vmatpush.msra.mxu0 %v731
    %1297 = vmatpush.msra.mxu0 %v723
    %1298 = vmatpush.msra.mxu0 %v715
    %1299 = vmatpush.msra.mxu0 %v707
    %1300 = vmatpush.msra.mxu0 %v699
    %1301 = vmatpush.msra.mxu0 %v691
    %1302 = vmatpush.msra.mxu0 %v683
    %1303 = vmatpush.msra.mxu0 %v675
    %1304 = vmatpush.msra.mxu0 %v667
    %1305 = vmatpush.msra.mxu0 %v659
    %1306 = vmatpush.msra.mxu0 %v651
    %1307 = vmatpush.msra.mxu0 %v643
    %1308 = vmatpush.msra.mxu0 %v635
    %1309 = vmatpush.msra.mxu0 %v627
    %1310 = vmatpush.msra.mxu0 %v619
    %1311 = vmatpush.msra.mxu0 %v611
    %1312 = vmatmul.f32.gmra.mxu0 0.0
    %v1313 = vpop.f32.mrf.mxu0
    %v1314 = vadd.f32 0.0, %v1313
    %1315 = vdwg.mxu0
    %1316 = vmatpush.msra.mxu0 %v859
    %1317 = vmatpush.msra.mxu0 %v851
    %1318 = vmatpush.msra.mxu0 %v843
    %1319 = vmatpush.msra.mxu0 %v835
    %1320 = vmatpush.msra.mxu0 %v827
    %1321 = vmatpush.msra.mxu0 %v819
    %1322 = vmatpush.msra.mxu0 %v811
    %1323 = vmatpush.msra.mxu0 %v803
    %1324 = vmatpush.msra.mxu0 %v795
    %1325 = vmatpush.msra.mxu0 %v787
    %1326 = vmatpush.msra.mxu0 %v779
    %1327 = vmatpush.msra.mxu0 %v771
    %1328 = vmatpush.msra.mxu0 %v763
    %1329 = vmatpush.msra.mxu0 %v755
    %1330 = vmatpush.msra.mxu0 %v747
    %1331 = vmatpush.msra.mxu0 %v739
    %1332 = vmatmul.f32.gmra.mxu0 0.0
    %v1333 = vpop.f32.mrf.mxu0
    %v1334 = vadd.f32 %v1314, %v1333
    %1335 = vdwg.mxu0
    %1336 = vmatpush.msra.mxu0 %v732
    %1337 = vmatpush.msra.mxu0 %v724
    %1338 = vmatpush.msra.mxu0 %v716
    %1339 = vmatpush.msra.mxu0 %v708
    %1340 = vmatpush.msra.mxu0 %v700
    %1341 = vmatpush.msra.mxu0 %v692
    %1342 = vmatpush.msra.mxu0 %v684
    %1343 = vmatpush.msra.mxu0 %v676
    %1344 = vmatpush.msra.mxu0 %v668
    %1345 = vmatpush.msra.mxu0 %v660
    %1346 = vmatpush.msra.mxu0 %v652
    %1347 = vmatpush.msra.mxu0 %v644
    %1348 = vmatpush.msra.mxu0 %v636
    %1349 = vmatpush.msra.mxu0 %v628
    %1350 = vmatpush.msra.mxu0 %v620
    %1351 = vmatpush.msra.mxu0 %v612
    %1352 = vmatmul.f32.gmra.mxu0 0.0
    %v1353 = vpop.f32.mrf.mxu0
    %v1354 = vadd.f32 0.0, %v1353
    %1355 = vdwg.mxu0
    %1356 = vmatpush.msra.mxu0 %v860
    %1357 = vmatpush.msra.mxu0 %v852
    %1358 = vmatpush.msra.mxu0 %v844
    %1359 = vmatpush.msra.mxu0 %v836
    %1360 = vmatpush.msra.mxu0 %v828
    %1361 = vmatpush.msra.mxu0 %v820
    %1362 = vmatpush.msra.mxu0 %v812
    %1363 = vmatpush.msra.mxu0 %v804
    %1364 = vmatpush.msra.mxu0 %v796
    %1365 = vmatpush.msra.mxu0 %v788
    %1366 = vmatpush.msra.mxu0 %v780
    %1367 = vmatpush.msra.mxu0 %v772
    %1368 = vmatpush.msra.mxu0 %v764
    %1369 = vmatpush.msra.mxu0 %v756
    %1370 = vmatpush.msra.mxu0 %v748
    %1371 = vmatpush.msra.mxu0 %v740
    %1372 = vmatmul.f32.gmra.mxu0 0.0
    %v1373 = vpop.f32.mrf.mxu0
    %v1374 = vadd.f32 %v1354, %v1373
    %1375 = vdwg.mxu0
    %1376 = vmatpush.msra.mxu0 %v733
    %1377 = vmatpush.msra.mxu0 %v725
    %1378 = vmatpush.msra.mxu0 %v717
    %1379 = vmatpush.msra.mxu0 %v709
    %1380 = vmatpush.msra.mxu0 %v701
    %1381 = vmatpush.msra.mxu0 %v693
    %1382 = vmatpush.msra.mxu0 %v685
    %1383 = vmatpush.msra.mxu0 %v677
    %1384 = vmatpush.msra.mxu0 %v669
    %1385 = vmatpush.msra.mxu0 %v661
    %1386 = vmatpush.msra.mxu0 %v653
    %1387 = vmatpush.msra.mxu0 %v645
    %1388 = vmatpush.msra.mxu0 %v637
    %1389 = vmatpush.msra.mxu0 %v629
    %1390 = vmatpush.msra.mxu0 %v621
    %1391 = vmatpush.msra.mxu0 %v613
    %1392 = vmatmul.f32.gmra.mxu0 0.0
    %v1393 = vpop.f32.mrf.mxu0
    %v1394 = vadd.f32 0.0, %v1393
    %1395 = vdwg.mxu0
    %1396 = vmatpush.msra.mxu0 %v861
    %1397 = vmatpush.msra.mxu0 %v853
    %1398 = vmatpush.msra.mxu0 %v845
    %1399 = vmatpush.msra.mxu0 %v837
    %1400 = vmatpush.msra.mxu0 %v829
    %1401 = vmatpush.msra.mxu0 %v821
    %1402 = vmatpush.msra.mxu0 %v813
    %1403 = vmatpush.msra.mxu0 %v805
    %1404 = vmatpush.msra.mxu0 %v797
    %1405 = vmatpush.msra.mxu0 %v789
    %1406 = vmatpush.msra.mxu0 %v781
    %1407 = vmatpush.msra.mxu0 %v773
    %1408 = vmatpush.msra.mxu0 %v765
    %1409 = vmatpush.msra.mxu0 %v757
    %1410 = vmatpush.msra.mxu0 %v749
    %1411 = vmatpush.msra.mxu0 %v741
    %1412 = vmatmul.f32.gmra.mxu0 0.0
    %v1413 = vpop.f32.mrf.mxu0
    %v1414 = vadd.f32 %v1394, %v1413
    %1415 = vdwg.mxu0
    %1416 = vmatpush.msra.mxu0 %v734
    %1417 = vmatpush.msra.mxu0 %v726
    %1418 = vmatpush.msra.mxu0 %v718
    %1419 = vmatpush.msra.mxu0 %v710
    %1420 = vmatpush.msra.mxu0 %v702
    %1421 = vmatpush.msra.mxu0 %v694
    %1422 = vmatpush.msra.mxu0 %v686
    %1423 = vmatpush.msra.mxu0 %v678
    %1424 = vmatpush.msra.mxu0 %v670
    %1425 = vmatpush.msra.mxu0 %v662
    %1426 = vmatpush.msra.mxu0 %v654
    %1427 = vmatpush.msra.mxu0 %v646
    %1428 = vmatpush.msra.mxu0 %v638
    %1429 = vmatpush.msra.mxu0 %v630
    %1430 = vmatpush.msra.mxu0 %v622
    %1431 = vmatpush.msra.mxu0 %v614
    %1432 = vmatmul.f32.gmra.mxu0 0.0
    %v1433 = vpop.f32.mrf.mxu0
    %v1434 = vadd.f32 0.0, %v1433
    %1435 = vdwg.mxu0
    %1436 = vmatpush.msra.mxu0 %v862
    %1437 = vmatpush.msra.mxu0 %v854
    %1438 = vmatpush.msra.mxu0 %v846
    %1439 = vmatpush.msra.mxu0 %v838
    %1440 = vmatpush.msra.mxu0 %v830
    %1441 = vmatpush.msra.mxu0 %v822
    %1442 = vmatpush.msra.mxu0 %v814
    %1443 = vmatpush.msra.mxu0 %v806
    %1444 = vmatpush.msra.mxu0 %v798
    %1445 = vmatpush.msra.mxu0 %v790
    %1446 = vmatpush.msra.mxu0 %v782
    %1447 = vmatpush.msra.mxu0 %v774
    %1448 = vmatpush.msra.mxu0 %v766
    %1449 = vmatpush.msra.mxu0 %v758
    %1450 = vmatpush.msra.mxu0 %v750
    %1451 = vmatpush.msra.mxu0 %v742
    %1452 = vmatmul.f32.gmra.mxu0 0.0
    %v1453 = vpop.f32.mrf.mxu0
    %v1454 = vadd.f32 %v1434, %v1453
    %1455 = vdwg.mxu0
    %v1456 = vadd.f32 %v1120, %v1174
    %v1457 = vadd.f32 %v1121, %v1214
    %v1458 = vadd.f32 %v1122, %v1254
    %v1459 = vadd.f32 %v1123, %v1294
    %v1460 = vadd.f32 %v1124, %v1334
    %v1461 = vadd.f32 %v1125, %v1374
    %v1462 = vadd.f32 %v1126, %v1414
    %v1463 = vadd.f32 %v1127, %v1454
    %1464 = vmatpush.msra.mxu0 %v984
    %1465 = vmatpush.msra.mxu0 %v976
    %1466 = vmatpush.msra.mxu0 %v968
    %1467 = vmatpush.msra.mxu0 %v960
    %1468 = vmatpush.msra.mxu0 %v952
    %1469 = vmatpush.msra.mxu0 %v944
    %1470 = vmatpush.msra.mxu0 %v936
    %1471 = vmatpush.msra.mxu0 %v928
    %1472 = vmatpush.msra.mxu0 %v920
    %1473 = vmatpush.msra.mxu0 %v912
    %1474 = vmatpush.msra.mxu0 %v904
    %1475 = vmatpush.msra.mxu0 %v896
    %1476 = vmatpush.msra.mxu0 %v888
    %1477 = vmatpush.msra.mxu0 %v880
    %1478 = vmatpush.msra.mxu0 %v872
    %1479 = vmatpush.msra.mxu0 %v864
    %1480 = vmatmul.f32.gmra.mxu0 0.0
    %v1481 = vpop.f32.mrf.mxu0
    %v1482 = vadd.f32 0.0, %v1481
    %1483 = vdwg.mxu0
    %1484 = vmatpush.msra.mxu0 %v1112
    %1485 = vmatpush.msra.mxu0 %v1104
    %1486 = vmatpush.msra.mxu0 %v1096
    %1487 = vmatpush.msra.mxu0 %v1088
    %1488 = vmatpush.msra.mxu0 %v1080
    %1489 = vmatpush.msra.mxu0 %v1072
    %1490 = vmatpush.msra.mxu0 %v1064
    %1491 = vmatpush.msra.mxu0 %v1056
    %1492 = vmatpush.msra.mxu0 %v1048
    %1493 = vmatpush.msra.mxu0 %v1040
    %1494 = vmatpush.msra.mxu0 %v1032
    %1495 = vmatpush.msra.mxu0 %v1024
    %1496 = vmatpush.msra.mxu0 %v1016
    %1497 = vmatpush.msra.mxu0 %v1008
    %1498 = vmatpush.msra.mxu0 %v1000
    %1499 = vmatpush.msra.mxu0 %v992
    %1500 = vmatmul.f32.gmra.mxu0 0.0
    %v1501 = vpop.f32.mrf.mxu0
    %v1502 = vadd.f32 %v1482, %v1501
    %1503 = vdwg.mxu0
    %1504 = vmatpush.msra.mxu0 %v985
    %1505 = vmatpush.msra.mxu0 %v977
    %1506 = vmatpush.msra.mxu0 %v969
    %1507 = vmatpush.msra.mxu0 %v961
    %1508 = vmatpush.msra.mxu0 %v953
    %1509 = vmatpush.msra.mxu0 %v945
    %1510 = vmatpush.msra.mxu0 %v937
    %1511 = vmatpush.msra.mxu0 %v929
    %1512 = vmatpush.msra.mxu0 %v921
    %1513 = vmatpush.msra.mxu0 %v913
    %1514 = vmatpush.msra.mxu0 %v905
    %1515 = vmatpush.msra.mxu0 %v897
    %1516 = vmatpush.msra.mxu0 %v889
    %1517 = vmatpush.msra.mxu0 %v881
    %1518 = vmatpush.msra.mxu0 %v873
    %1519 = vmatpush.msra.mxu0 %v865
    %1520 = vmatmul.f32.gmra.mxu0 0.0
    %v1521 = vpop.f32.mrf.mxu0
    %v1522 = vadd.f32 0.0, %v1521
    %1523 = vdwg.mxu0
    %1524 = vmatpush.msra.mxu0 %v1113
    %1525 = vmatpush.msra.mxu0 %v1105
    %1526 = vmatpush.msra.mxu0 %v1097
    %1527 = vmatpush.msra.mxu0 %v1089
    %1528 = vmatpush.msra.mxu0 %v1081
    %1529 = vmatpush.msra.mxu0 %v1073
    %1530 = vmatpush.msra.mxu0 %v1065
    %1531 = vmatpush.msra.mxu0 %v1057
    %1532 = vmatpush.msra.mxu0 %v1049
    %1533 = vmatpush.msra.mxu0 %v1041
    %1534 = vmatpush.msra.mxu0 %v1033
    %1535 = vmatpush.msra.mxu0 %v1025
    %1536 = vmatpush.msra.mxu0 %v1017
    %1537 = vmatpush.msra.mxu0 %v1009
    %1538 = vmatpush.msra.mxu0 %v1001
    %1539 = vmatpush.msra.mxu0 %v993
    %1540 = vmatmul.f32.gmra.mxu0 0.0
    %v1541 = vpop.f32.mrf.mxu0
    %v1542 = vadd.f32 %v1522, %v1541
    %1543 = vdwg.mxu0
    %1544 = vmatpush.msra.mxu0 %v986
    %1545 = vmatpush.msra.mxu0 %v978
    %1546 = vmatpush.msra.mxu0 %v970
    %1547 = vmatpush.msra.mxu0 %v962
    %1548 = vmatpush.msra.mxu0 %v954
    %1549 = vmatpush.msra.mxu0 %v946
    %1550 = vmatpush.msra.mxu0 %v938
    %1551 = vmatpush.msra.mxu0 %v930
    %1552 = vmatpush.msra.mxu0 %v922
    %1553 = vmatpush.msra.mxu0 %v914
    %1554 = vmatpush.msra.mxu0 %v906
    %1555 = vmatpush.msra.mxu0 %v898
    %1556 = vmatpush.msra.mxu0 %v890
    %1557 = vmatpush.msra.mxu0 %v882
    %1558 = vmatpush.msra.mxu0 %v874
    %1559 = vmatpush.msra.mxu0 %v866
    %1560 = vmatmul.f32.gmra.mxu0 0.0
    %v1561 = vpop.f32.mrf.mxu0
    %v1562 = vadd.f32 0.0, %v1561
    %1563 = vdwg.mxu0
    %1564 = vmatpush.msra.mxu0 %v1114
    %1565 = vmatpush.msra.mxu0 %v1106
    %1566 = vmatpush.msra.mxu0 %v1098
    %1567 = vmatpush.msra.mxu0 %v1090
    %1568 = vmatpush.msra.mxu0 %v1082
    %1569 = vmatpush.msra.mxu0 %v1074
    %1570 = vmatpush.msra.mxu0 %v1066
    %1571 = vmatpush.msra.mxu0 %v1058
    %1572 = vmatpush.msra.mxu0 %v1050
    %1573 = vmatpush.msra.mxu0 %v1042
    %1574 = vmatpush.msra.mxu0 %v1034
    %1575 = vmatpush.msra.mxu0 %v1026
    %1576 = vmatpush.msra.mxu0 %v1018
    %1577 = vmatpush.msra.mxu0 %v1010
    %1578 = vmatpush.msra.mxu0 %v1002
    %1579 = vmatpush.msra.mxu0 %v994
    %1580 = vmatmul.f32.gmra.mxu0 0.0
    %v1581 = vpop.f32.mrf.mxu0
    %v1582 = vadd.f32 %v1562, %v1581
    %1583 = vdwg.mxu0
    %1584 = vmatpush.msra.mxu0 %v987
    %1585 = vmatpush.msra.mxu0 %v979
    %1586 = vmatpush.msra.mxu0 %v971
    %1587 = vmatpush.msra.mxu0 %v963
    %1588 = vmatpush.msra.mxu0 %v955
    %1589 = vmatpush.msra.mxu0 %v947
    %1590 = vmatpush.msra.mxu0 %v939
    %1591 = vmatpush.msra.mxu0 %v931
    %1592 = vmatpush.msra.mxu0 %v923
    %1593 = vmatpush.msra.mxu0 %v915
    %1594 = vmatpush.msra.mxu0 %v907
    %1595 = vmatpush.msra.mxu0 %v899
    %1596 = vmatpush.msra.mxu0 %v891
    %1597 = vmatpush.msra.mxu0 %v883
    %1598 = vmatpush.msra.mxu0 %v875
    %1599 = vmatpush.msra.mxu0 %v867
    %1600 = vmatmul.f32.gmra.mxu0 0.0
    %v1601 = vpop.f32.mrf.mxu0
    %v1602 = vadd.f32 0.0, %v1601
    %1603 = vdwg.mxu0
    %1604 = vmatpush.msra.mxu0 %v1115
    %1605 = vmatpush.msra.mxu0 %v1107
    %1606 = vmatpush.msra.mxu0 %v1099
    %1607 = vmatpush.msra.mxu0 %v1091
    %1608 = vmatpush.msra.mxu0 %v1083
    %1609 = vmatpush.msra.mxu0 %v1075
    %1610 = vmatpush.msra.mxu0 %v1067
    %1611 = vmatpush.msra.mxu0 %v1059
    %1612 = vmatpush.msra.mxu0 %v1051
    %1613 = vmatpush.msra.mxu0 %v1043
    %1614 = vmatpush.msra.mxu0 %v1035
    %1615 = vmatpush.msra.mxu0 %v1027
    %1616 = vmatpush.msra.mxu0 %v1019
    %1617 = vmatpush.msra.mxu0 %v1011
    %1618 = vmatpush.msra.mxu0 %v1003
    %1619 = vmatpush.msra.mxu0 %v995
    %1620 = vmatmul.f32.gmra.mxu0 0.0
    %v1621 = vpop.f32.mrf.mxu0
    %v1622 = vadd.f32 %v1602, %v1621
    %1623 = vdwg.mxu0
    %1624 = vmatpush.msra.mxu0 %v988
    %1625 = vmatpush.msra.mxu0 %v980
    %1626 = vmatpush.msra.mxu0 %v972
    %1627 = vmatpush.msra.mxu0 %v964
    %1628 = vmatpush.msra.mxu0 %v956
    %1629 = vmatpush.msra.mxu0 %v948
    %1630 = vmatpush.msra.mxu0 %v940
    %1631 = vmatpush.msra.mxu0 %v932
    %1632 = vmatpush.msra.mxu0 %v924
    %1633 = vmatpush.msra.mxu0 %v916
    %1634 = vmatpush.msra.mxu0 %v908
    %1635 = vmatpush.msra.mxu0 %v900
    %1636 = vmatpush.msra.mxu0 %v892
    %1637 = vmatpush.msra.mxu0 %v884
    %1638 = vmatpush.msra.mxu0 %v876
    %1639 = vmatpush.msra.mxu0 %v868
    %1640 = vmatmul.f32.gmra.mxu0 0.0
    %v1641 = vpop.f32.mrf.mxu0
    %v1642 = vadd.f32 0.0, %v1641
    %1643 = vdwg.mxu0
    %1644 = vmatpush.msra.mxu0 %v1116
    %1645 = vmatpush.msra.mxu0 %v1108
    %1646 = vmatpush.msra.mxu0 %v1100
    %1647 = vmatpush.msra.mxu0 %v1092
    %1648 = vmatpush.msra.mxu0 %v1084
    %1649 = vmatpush.msra.mxu0 %v1076
    %1650 = vmatpush.msra.mxu0 %v1068
    %1651 = vmatpush.msra.mxu0 %v1060
    %1652 = vmatpush.msra.mxu0 %v1052
    %1653 = vmatpush.msra.mxu0 %v1044
    %1654 = vmatpush.msra.mxu0 %v1036
    %1655 = vmatpush.msra.mxu0 %v1028
    %1656 = vmatpush.msra.mxu0 %v1020
    %1657 = vmatpush.msra.mxu0 %v1012
    %1658 = vmatpush.msra.mxu0 %v1004
    %1659 = vmatpush.msra.mxu0 %v996
    %1660 = vmatmul.f32.gmra.mxu0 0.0
    %v1661 = vpop.f32.mrf.mxu0
    %v1662 = vadd.f32 %v1642, %v1661
    %1663 = vdwg.mxu0
    %1664 = vmatpush.msra.mxu0 %v989
    %1665 = vmatpush.msra.mxu0 %v981
    %1666 = vmatpush.msra.mxu0 %v973
    %1667 = vmatpush.msra.mxu0 %v965
    %1668 = vmatpush.msra.mxu0 %v957
    %1669 = vmatpush.msra.mxu0 %v949
    %1670 = vmatpush.msra.mxu0 %v941
    %1671 = vmatpush.msra.mxu0 %v933
    %1672 = vmatpush.msra.mxu0 %v925
    %1673 = vmatpush.msra.mxu0 %v917
    %1674 = vmatpush.msra.mxu0 %v909
    %1675 = vmatpush.msra.mxu0 %v901
    %1676 = vmatpush.msra.mxu0 %v893
    %1677 = vmatpush.msra.mxu0 %v885
    %1678 = vmatpush.msra.mxu0 %v877
    %1679 = vmatpush.msra.mxu0 %v869
    %1680 = vmatmul.f32.gmra.mxu0 0.0
    %v1681 = vpop.f32.mrf.mxu0
    %v1682 = vadd.f32 0.0, %v1681
    %1683 = vdwg.mxu0
    %1684 = vmatpush.msra.mxu0 %v1117
    %1685 = vmatpush.msra.mxu0 %v1109
    %1686 = vmatpush.msra.mxu0 %v1101
    %1687 = vmatpush.msra.mxu0 %v1093
    %1688 = vmatpush.msra.mxu0 %v1085
    %1689 = vmatpush.msra.mxu0 %v1077
    %1690 = vmatpush.msra.mxu0 %v1069
    %1691 = vmatpush.msra.mxu0 %v1061
    %1692 = vmatpush.msra.mxu0 %v1053
    %1693 = vmatpush.msra.mxu0 %v1045
    %1694 = vmatpush.msra.mxu0 %v1037
    %1695 = vmatpush.msra.mxu0 %v1029
    %1696 = vmatpush.msra.mxu0 %v1021
    %1697 = vmatpush.msra.mxu0 %v1013
    %1698 = vmatpush.msra.mxu0 %v1005
    %1699 = vmatpush.msra.mxu0 %v997
    %1700 = vmatmul.f32.gmra.mxu0 0.0
    %v1701 = vpop.f32.mrf.mxu0
    %v1702 = vadd.f32 %v1682, %v1701
    %1703 = vdwg.mxu0
    %1704 = vmatpush.msra.mxu0 %v990
    %1705 = vmatpush.msra.mxu0 %v982
    %1706 = vmatpush.msra.mxu0 %v974
    %1707 = vmatpush.msra.mxu0 %v966
    %1708 = vmatpush.msra.mxu0 %v958
    %1709 = vmatpush.msra.mxu0 %v950
    %1710 = vmatpush.msra.mxu0 %v942
    %1711 = vmatpush.msra.mxu0 %v934
    %1712 = vmatpush.msra.mxu0 %v926
    %1713 = vmatpush.msra.mxu0 %v918
    %1714 = vmatpush.msra.mxu0 %v910
    %1715 = vmatpush.msra.mxu0 %v902
    %1716 = vmatpush.msra.mxu0 %v894
    %1717 = vmatpush.msra.mxu0 %v886
    %1718 = vmatpush.msra.mxu0 %v878
    %1719 = vmatpush.msra.mxu0 %v870
    %1720 = vmatmul.f32.gmra.mxu0 0.0
    %v1721 = vpop.f32.mrf.mxu0
    %v1722 = vadd.f32 0.0, %v1721
    %1723 = vdwg.mxu0
    %1724 = vmatpush.msra.mxu0 %v1118
    %1725 = vmatpush.msra.mxu0 %v1110
    %1726 = vmatpush.msra.mxu0 %v1102
    %1727 = vmatpush.msra.mxu0 %v1094
    %1728 = vmatpush.msra.mxu0 %v1086
    %1729 = vmatpush.msra.mxu0 %v1078
    %1730 = vmatpush.msra.mxu0 %v1070
    %1731 = vmatpush.msra.mxu0 %v1062
    %1732 = vmatpush.msra.mxu0 %v1054
    %1733 = vmatpush.msra.mxu0 %v1046
    %1734 = vmatpush.msra.mxu0 %v1038
    %1735 = vmatpush.msra.mxu0 %v1030
    %1736 = vmatpush.msra.mxu0 %v1022
    %1737 = vmatpush.msra.mxu0 %v1014
    %1738 = vmatpush.msra.mxu0 %v1006
    %1739 = vmatpush.msra.mxu0 %v998
    %1740 = vmatmul.f32.gmra.mxu0 0.0
    %v1741 = vpop.f32.mrf.mxu0
    %v1742 = vadd.f32 %v1722, %v1741
    %1743 = vdwg.mxu0
    %1744 = vmatpush.msra.mxu0 %v991
    %1745 = vmatpush.msra.mxu0 %v983
    %1746 = vmatpush.msra.mxu0 %v975
    %1747 = vmatpush.msra.mxu0 %v967
    %1748 = vmatpush.msra.mxu0 %v959
    %1749 = vmatpush.msra.mxu0 %v951
    %1750 = vmatpush.msra.mxu0 %v943
    %1751 = vmatpush.msra.mxu0 %v935
    %1752 = vmatpush.msra.mxu0 %v927
    %1753 = vmatpush.msra.mxu0 %v919
    %1754 = vmatpush.msra.mxu0 %v911
    %1755 = vmatpush.msra.mxu0 %v903
    %1756 = vmatpush.msra.mxu0 %v895
    %1757 = vmatpush.msra.mxu0 %v887
    %1758 = vmatpush.msra.mxu0 %v879
    %1759 = vmatpush.msra.mxu0 %v871
    %1760 = vmatmul.f32.gmra.mxu0 0.0
    %v1761 = vpop.f32.mrf.mxu0
    %v1762 = vadd.f32 0.0, %v1761
    %1763 = vdwg.mxu0
    %1764 = vmatpush.msra.mxu0 %v1119
    %1765 = vmatpush.msra.mxu0 %v1111
    %1766 = vmatpush.msra.mxu0 %v1103
    %1767 = vmatpush.msra.mxu0 %v1095
    %1768 = vmatpush.msra.mxu0 %v1087
    %1769 = vmatpush.msra.mxu0 %v1079
    %1770 = vmatpush.msra.mxu0 %v1071
    %1771 = vmatpush.msra.mxu0 %v1063
    %1772 = vmatpush.msra.mxu0 %v1055
    %1773 = vmatpush.msra.mxu0 %v1047
    %1774 = vmatpush.msra.mxu0 %v1039
    %1775 = vmatpush.msra.mxu0 %v1031
    %1776 = vmatpush.msra.mxu0 %v1023
    %1777 = vmatpush.msra.mxu0 %v1015
    %1778 = vmatpush.msra.mxu0 %v1007
    %1779 = vmatpush.msra.mxu0 %v999
    %1780 = vmatmul.f32.gmra.mxu0 0.0
    %v1781 = vpop.f32.mrf.mxu0
    %v1782 = vadd.f32 %v1762, %v1781
    %1783 = vdwg.mxu0
    %v1792 = vrot.slane %v1502, 2
    %v1793 = vrot.slane %v1542, 2
    %v1794 = vrot.slane %v1582, 2
    %v1795 = vrot.slane %v1622, 2
    %v1796 = vrot.slane %v1662, 2
    %v1797 = vrot.slane %v1702, 2
    %v1798 = vrot.slane %v1742, 2
    %v1799 = vrot.slane %v1782, 2
    %v1808 = vadd.f32 %v1128, %v1792
    %v1809 = vadd.f32 %v1129, %v1793
    %v1810 = vadd.f32 %v1130, %v1794
    %v1811 = vadd.f32 %v1131, %v1795
    %v1812 = vadd.f32 %v1132, %v1796
    %v1813 = vadd.f32 %v1133, %v1797
    %v1814 = vadd.f32 %v1134, %v1798
    %v1815 = vadd.f32 %v1135, %v1799
    %v1816 = vxor.u32 %v1456, 2147483648
    %v1817 = vxor.u32 %v1457, 2147483648
    %v1818 = vmul.f32 %v1816, 1.442695
    %v1819 = vpow.pop %v1818
    %v1820 = vmul.f32 %v1817, 1.442695
    %v1821 = vpow.pop %v1820
    %v1822 = vadd.f32 %v1819, 1.0
    %v1823 = vadd.f32 %v1821, 1.0
    %v1824 = vrcp.pop %v1822
    %v1825 = vmul.f32 %v1822, %v1824
    %v1826 = vsub.f32 1.0, %v1825
    %v1827 = vmul.f32 %v1824, %v1826
    %v1828 = vadd.f32 %v1824, %v1827
    %vm1829 = vweird.f32 %v1822
    %vm1830 = vweird.f32 %v1824
    %vm1831 = vmor %vm1829, %vm1830
    %v1832 = vsel %vm1831, %v1824, %v1828
    %v1833 = vand.u32 2147483647, %v1822
    %vm1834 = vcmp.eq.f32.partialorder %v1833, 8.507059e+37
    %v1835 = vand.u32 %v1822, 2147483648
    %v1836 = vor.u32 1.1754944e-38, %v1835
    %v1837 = vsel %vm1834, %v1836, %v1832
    %v1838 = vmul.f32 1.0, %v1837
    %v1839 = vrcp.pop %v1823
    %v1840 = vmul.f32 %v1823, %v1839
    %v1841 = vsub.f32 1.0, %v1840
    %v1842 = vmul.f32 %v1839, %v1841
    %v1843 = vadd.f32 %v1839, %v1842
    %vm1844 = vweird.f32 %v1823
    %vm1845 = vweird.f32 %v1839
    %vm1846 = vmor %vm1844, %vm1845
    %v1847 = vsel %vm1846, %v1839, %v1843
    %v1848 = vand.u32 2147483647, %v1823
    %vm1849 = vcmp.eq.f32.partialorder %v1848, 8.507059e+37
    %v1850 = vand.u32 %v1823, 2147483648
    %v1851 = vor.u32 1.1754944e-38, %v1850
    %v1852 = vsel %vm1849, %v1851, %v1847
    %v1853 = vmul.f32 1.0, %v1852
    %v1854 = vxor.u32 %v1458, 2147483648
    %v1855 = vxor.u32 %v1459, 2147483648
    %v1856 = vmul.f32 %v1854, 1.442695
    %v1857 = vpow.pop %v1856
    %v1858 = vmul.f32 %v1855, 1.442695
    %v1859 = vpow.pop %v1858
    %v1860 = vadd.f32 %v1857, 1.0
    %v1861 = vadd.f32 %v1859, 1.0
    %v1862 = vrcp.pop %v1860
    %v1863 = vmul.f32 %v1860, %v1862
    %v1864 = vsub.f32 1.0, %v1863
    %v1865 = vmul.f32 %v1862, %v1864
    %v1866 = vadd.f32 %v1862, %v1865
    %vm1867 = vweird.f32 %v1860
    %vm1868 = vweird.f32 %v1862
    %vm1869 = vmor %vm1867, %vm1868
    %v1870 = vsel %vm1869, %v1862, %v1866
    %v1871 = vand.u32 2147483647, %v1860
    %vm1872 = vcmp.eq.f32.partialorder %v1871, 8.507059e+37
    %v1873 = vand.u32 %v1860, 2147483648
    %v1874 = vor.u32 1.1754944e-38, %v1873
    %v1875 = vsel %vm1872, %v1874, %v1870
    %v1876 = vmul.f32 1.0, %v1875
    %v1877 = vrcp.pop %v1861
    %v1878 = vmul.f32 %v1861, %v1877
    %v1879 = vsub.f32 1.0, %v1878
    %v1880 = vmul.f32 %v1877, %v1879
    %v1881 = vadd.f32 %v1877, %v1880
    %vm1882 = vweird.f32 %v1861
    %vm1883 = vweird.f32 %v1877
    %vm1884 = vmor %vm1882, %vm1883
    %v1885 = vsel %vm1884, %v1877, %v1881
    %v1886 = vand.u32 2147483647, %v1861
    %vm1887 = vcmp.eq.f32.partialorder %v1886, 8.507059e+37
    %v1888 = vand.u32 %v1861, 2147483648
    %v1889 = vor.u32 1.1754944e-38, %v1888
    %v1890 = vsel %vm1887, %v1889, %v1885
    %v1891 = vmul.f32 1.0, %v1890
    %v1892 = vtanh.pop %v1460
    %v1893 = vtanh.pop %v1461
    %v1894 = vxor.u32 %v1462, 2147483648
    %v1895 = vxor.u32 %v1463, 2147483648
    %v1896 = vmul.f32 %v1894, 1.442695
    %v1897 = vpow.pop %v1896
    %v1898 = vmul.f32 %v1895, 1.442695
    %v1899 = vpow.pop %v1898
    %v1900 = vadd.f32 %v1897, 1.0
    %v1901 = vadd.f32 %v1899, 1.0
    %v1902 = vrcp.pop %v1900
    %v1903 = vmul.f32 %v1900, %v1902
    %v1904 = vsub.f32 1.0, %v1903
    %v1905 = vmul.f32 %v1902, %v1904
    %v1906 = vadd.f32 %v1902, %v1905
    %vm1907 = vweird.f32 %v1900
    %vm1908 = vweird.f32 %v1902
    %vm1909 = vmor %vm1907, %vm1908
    %v1910 = vsel %vm1909, %v1902, %v1906
    %v1911 = vand.u32 2147483647, %v1900
    %vm1912 = vcmp.eq.f32.partialorder %v1911, 8.507059e+37
    %v1913 = vand.u32 %v1900, 2147483648
    %v1914 = vor.u32 1.1754944e-38, %v1913
    %v1915 = vsel %vm1912, %v1914, %v1910
    %v1916 = vmul.f32 1.0, %v1915
    %v1917 = vrcp.pop %v1901
    %v1918 = vmul.f32 %v1901, %v1917
    %v1919 = vsub.f32 1.0, %v1918
    %v1920 = vmul.f32 %v1917, %v1919
    %v1921 = vadd.f32 %v1917, %v1920
    %vm1922 = vweird.f32 %v1901
    %vm1923 = vweird.f32 %v1917
    %vm1924 = vmor %vm1922, %vm1923
    %v1925 = vsel %vm1924, %v1917, %v1921
    %v1926 = vand.u32 2147483647, %v1901
    %vm1927 = vcmp.eq.f32.partialorder %v1926, 8.507059e+37
    %v1928 = vand.u32 %v1901, 2147483648
    %v1929 = vor.u32 1.1754944e-38, %v1928
    %v1930 = vsel %vm1927, %v1929, %v1925
    %v1931 = vmul.f32 1.0, %v1930
    %v1932 = vmul.f32 %v1876, 0.0
    %v1933 = vmul.f32 %v1891, 0.0
    %v1934 = vmul.f32 %v1838, %v1892
    %v1935 = vmul.f32 %v1853, %v1893
    %v1936 = vadd.f32 %v1932, %v1934
    %v1937 = vadd.f32 %v1933, %v1935
    %v1938 = vtanh.pop %v1936
    %v1939 = vtanh.pop %v1937
    %v1940 = vmul.f32 %v1916, %v1938
    %v1941 = vmul.f32 %v1931, %v1939
    %v1942 = vxor.u32 %v1808, 2147483648
    %v1943 = vxor.u32 %v1809, 2147483648
    %v1944 = vmul.f32 %v1942, 1.442695
    %v1945 = vpow.pop %v1944
    %v1946 = vmul.f32 %v1943, 1.442695
    %v1947 = vpow.pop %v1946
    %v1948 = vadd.f32 %v1945, 1.0
    %v1949 = vadd.f32 %v1947, 1.0
    %v1950 = vrcp.pop %v1948
    %v1951 = vmul.f32 %v1948, %v1950
    %v1952 = vsub.f32 1.0, %v1951
    %v1953 = vmul.f32 %v1950, %v1952
    %v1954 = vadd.f32 %v1950, %v1953
    %vm1955 = vweird.f32 %v1948
    %vm1956 = vweird.f32 %v1950
    %vm1957 = vmor %vm1955, %vm1956
    %v1958 = vsel %vm1957, %v1950, %v1954
    %v1959 = vand.u32 2147483647, %v1948
    %vm1960 = vcmp.eq.f32.partialorder %v1959, 8.507059e+37
    %v1961 = vand.u32 %v1948, 2147483648
    %v1962 = vor.u32 1.1754944e-38, %v1961
    %v1963 = vsel %vm1960, %v1962, %v1958
    %v1964 = vmul.f32 1.0, %v1963
    %v1965 = vrcp.pop %v1949
    %v1966 = vmul.f32 %v1949, %v1965
    %v1967 = vsub.f32 1.0, %v1966
    %v1968 = vmul.f32 %v1965, %v1967
    %v1969 = vadd.f32 %v1965, %v1968
    %vm1970 = vweird.f32 %v1949
    %vm1971 = vweird.f32 %v1965
    %vm1972 = vmor %vm1970, %vm1971
    %v1973 = vsel %vm1972, %v1965, %v1969
    %v1974 = vand.u32 2147483647, %v1949
    %vm1975 = vcmp.eq.f32.partialorder %v1974, 8.507059e+37
    %v1976 = vand.u32 %v1949, 2147483648
    %v1977 = vor.u32 1.1754944e-38, %v1976
    %v1978 = vsel %vm1975, %v1977, %v1973
    %v1979 = vmul.f32 1.0, %v1978
    %v1980 = vxor.u32 %v1810, 2147483648
    %v1981 = vxor.u32 %v1811, 2147483648
    %v1982 = vmul.f32 %v1980, 1.442695
    %v1983 = vpow.pop %v1982
    %v1984 = vmul.f32 %v1981, 1.442695
    %v1985 = vpow.pop %v1984
    %v1986 = vadd.f32 %v1983, 1.0
    %v1987 = vadd.f32 %v1985, 1.0
    %v1988 = vrcp.pop %v1986
    %v1989 = vmul.f32 %v1986, %v1988
    %v1990 = vsub.f32 1.0, %v1989
    %v1991 = vmul.f32 %v1988, %v1990
    %v1992 = vadd.f32 %v1988, %v1991
    %vm1993 = vweird.f32 %v1986
    %vm1994 = vweird.f32 %v1988
    %vm1995 = vmor %vm1993, %vm1994
    %v1996 = vsel %vm1995, %v1988, %v1992
    %v1997 = vand.u32 2147483647, %v1986
    %vm1998 = vcmp.eq.f32.partialorder %v1997, 8.507059e+37
    %v1999 = vand.u32 %v1986, 2147483648
    %v2000 = vor.u32 1.1754944e-38, %v1999
    %v2001 = vsel %vm1998, %v2000, %v1996
    %v2002 = vmul.f32 1.0, %v2001
    %v2003 = vrcp.pop %v1987
    %v2004 = vmul.f32 %v1987, %v2003
    %v2005 = vsub.f32 1.0, %v2004
    %v2006 = vmul.f32 %v2003, %v2005
    %v2007 = vadd.f32 %v2003, %v2006
    %vm2008 = vweird.f32 %v1987
    %vm2009 = vweird.f32 %v2003
    %vm2010 = vmor %vm2008, %vm2009
    %v2011 = vsel %vm2010, %v2003, %v2007
    %v2012 = vand.u32 2147483647, %v1987
    %vm2013 = vcmp.eq.f32.partialorder %v2012, 8.507059e+37
    %v2014 = vand.u32 %v1987, 2147483648
    %v2015 = vor.u32 1.1754944e-38, %v2014
    %v2016 = vsel %vm2013, %v2015, %v2011
    %v2017 = vmul.f32 1.0, %v2016
    %v2018 = vtanh.pop %v1812
    %v2019 = vtanh.pop %v1813
    %v2020 = vxor.u32 %v1814, 2147483648
    %v2021 = vxor.u32 %v1815, 2147483648
    %v2022 = vmul.f32 %v2020, 1.442695
    %v2023 = vpow.pop %v2022
    %v2024 = vmul.f32 %v2021, 1.442695
    %v2025 = vpow.pop %v2024
    %v2026 = vadd.f32 %v2023, 1.0
    %v2027 = vadd.f32 %v2025, 1.0
    %v2028 = vrcp.pop %v2026
    %v2029 = vmul.f32 %v2026, %v2028
    %v2030 = vsub.f32 1.0, %v2029
    %v2031 = vmul.f32 %v2028, %v2030
    %v2032 = vadd.f32 %v2028, %v2031
    %vm2033 = vweird.f32 %v2026
    %vm2034 = vweird.f32 %v2028
    %vm2035 = vmor %vm2033, %vm2034
    %v2036 = vsel %vm2035, %v2028, %v2032
    %v2037 = vand.u32 2147483647, %v2026
    %vm2038 = vcmp.eq.f32.partialorder %v2037, 8.507059e+37
    %v2039 = vand.u32 %v2026, 2147483648
    %v2040 = vor.u32 1.1754944e-38, %v2039
    %v2041 = vsel %vm2038, %v2040, %v2036
    %v2042 = vmul.f32 1.0, %v2041
    %v2043 = vrcp.pop %v2027
    %v2044 = vmul.f32 %v2027, %v2043
    %v2045 = vsub.f32 1.0, %v2044
    %v2046 = vmul.f32 %v2043, %v2045
    %v2047 = vadd.f32 %v2043, %v2046
    %vm2048 = vweird.f32 %v2027
    %vm2049 = vweird.f32 %v2043
    %vm2050 = vmor %vm2048, %vm2049
    %v2051 = vsel %vm2050, %v2043, %v2047
    %v2052 = vand.u32 2147483647, %v2027
    %vm2053 = vcmp.eq.f32.partialorder %v2052, 8.507059e+37
    %v2054 = vand.u32 %v2027, 2147483648
    %v2055 = vor.u32 1.1754944e-38, %v2054
    %v2056 = vsel %vm2053, %v2055, %v2051
    %v2057 = vmul.f32 1.0, %v2056
    %v2058 = vmul.f32 %v2002, 0.0
    %v2059 = vmul.f32 %v2017, 0.0
    %v2060 = vmul.f32 %v1964, %v2018
    %v2061 = vmul.f32 %v1979, %v2019
    %v2062 = vadd.f32 %v2058, %v2060
    %v2063 = vadd.f32 %v2059, %v2061
    %v2064 = vtanh.pop %v2062
    %v2065 = vtanh.pop %v2063
    %v2066 = vmul.f32 %v2042, %v2064
    %v2067 = vmul.f32 %v2057, %v2065
    %v2068 = vld [vmem:[#allocation2] sm:$0xc]
    %v2069 = vld [vmem:[#allocation2 + $0x8] sm:$0xc]
    %v2070 = vld [vmem:[#allocation2 + $0x10] sm:$0xc]
    %v2071 = vld [vmem:[#allocation2 + $0x18] sm:$0xc]
    %v2072 = vld [vmem:[#allocation2 + $0x20] sm:$0xc]
    %v2073 = vld [vmem:[#allocation2 + $0x28] sm:$0xc]
    %v2074 = vld [vmem:[#allocation2 + $0x30] sm:$0xc]
    %v2075 = vld [vmem:[#allocation2 + $0x38] sm:$0xc]
    %v2076 = vld [vmem:[#allocation2 + $0xc0] sm:$0x30]
    %v2077 = vld [vmem:[#allocation2 + $0xc8] sm:$0x30]
    %v2078 = vld [vmem:[#allocation2 + $0xd0] sm:$0x30]
    %v2079 = vld [vmem:[#allocation2 + $0xd8] sm:$0x30]
    %v2080 = vld [vmem:[#allocation2 + $0xe0] sm:$0x30]
    %v2081 = vld [vmem:[#allocation2 + $0xe8] sm:$0x30]
    %v2082 = vld [vmem:[#allocation2 + $0xf0] sm:$0x30]
    %v2083 = vld [vmem:[#allocation2 + $0xf8] sm:$0x30]
    %2084 = vmatpush.msra.mxu0 %v727
    %2085 = vmatpush.msra.mxu0 %v719
    %2086 = vmatpush.msra.mxu0 %v711
    %2087 = vmatpush.msra.mxu0 %v703
    %2088 = vmatpush.msra.mxu0 %v695
    %2089 = vmatpush.msra.mxu0 %v687
    %2090 = vmatpush.msra.mxu0 %v679
    %2091 = vmatpush.msra.mxu0 %v671
    %2092 = vmatpush.msra.mxu0 %v663
    %2093 = vmatpush.msra.mxu0 %v655
    %2094 = vmatpush.msra.mxu0 %v647
    %2095 = vmatpush.msra.mxu0 %v639
    %2096 = vmatpush.msra.mxu0 %v631
    %2097 = vmatpush.msra.mxu0 %v623
    %2098 = vmatpush.msra.mxu0 %v615
    %2099 = vmatpush.msra.mxu0 %v607
    %2100 = vmatmul.f32.gmra.mxu0 %v1940
    %v2101 = vpop.f32.mrf.mxu0
    %v2102 = vadd.f32 0.0, %v2101
    %2103 = vdwg.mxu0
    %2104 = vmatpush.msra.mxu0 %v855
    %2105 = vmatpush.msra.mxu0 %v847
    %2106 = vmatpush.msra.mxu0 %v839
    %2107 = vmatpush.msra.mxu0 %v831
    %2108 = vmatpush.msra.mxu0 %v823
    %2109 = vmatpush.msra.mxu0 %v815
    %2110 = vmatpush.msra.mxu0 %v807
    %2111 = vmatpush.msra.mxu0 %v799
    %2112 = vmatpush.msra.mxu0 %v791
    %2113 = vmatpush.msra.mxu0 %v783
    %2114 = vmatpush.msra.mxu0 %v775
    %2115 = vmatpush.msra.mxu0 %v767
    %2116 = vmatpush.msra.mxu0 %v759
    %2117 = vmatpush.msra.mxu0 %v751
    %2118 = vmatpush.msra.mxu0 %v743
    %2119 = vmatpush.msra.mxu0 %v735
    %2120 = vmatmul.f32.gmra.mxu0 %v1941
    %v2121 = vpop.f32.mrf.mxu0
    %v2122 = vadd.f32 %v2102, %v2121
    %2123 = vdwg.mxu0
    %2124 = vmatpush.msra.mxu0 %v728
    %2125 = vmatpush.msra.mxu0 %v720
    %2126 = vmatpush.msra.mxu0 %v712
    %2127 = vmatpush.msra.mxu0 %v704
    %2128 = vmatpush.msra.mxu0 %v696
    %2129 = vmatpush.msra.mxu0 %v688
    %2130 = vmatpush.msra.mxu0 %v680
    %2131 = vmatpush.msra.mxu0 %v672
    %2132 = vmatpush.msra.mxu0 %v664
    %2133 = vmatpush.msra.mxu0 %v656
    %2134 = vmatpush.msra.mxu0 %v648
    %2135 = vmatpush.msra.mxu0 %v640
    %2136 = vmatpush.msra.mxu0 %v632
    %2137 = vmatpush.msra.mxu0 %v624
    %2138 = vmatpush.msra.mxu0 %v616
    %2139 = vmatpush.msra.mxu0 %v608
    %2140 = vmatmul.f32.gmra.mxu0 %v1940
    %v2141 = vpop.f32.mrf.mxu0
    %v2142 = vadd.f32 0.0, %v2141
    %2143 = vdwg.mxu0
    %2144 = vmatpush.msra.mxu0 %v856
    %2145 = vmatpush.msra.mxu0 %v848
    %2146 = vmatpush.msra.mxu0 %v840
    %2147 = vmatpush.msra.mxu0 %v832
    %2148 = vmatpush.msra.mxu0 %v824
    %2149 = vmatpush.msra.mxu0 %v816
    %2150 = vmatpush.msra.mxu0 %v808
    %2151 = vmatpush.msra.mxu0 %v800
    %2152 = vmatpush.msra.mxu0 %v792
    %2153 = vmatpush.msra.mxu0 %v784
    %2154 = vmatpush.msra.mxu0 %v776
    %2155 = vmatpush.msra.mxu0 %v768
    %2156 = vmatpush.msra.mxu0 %v760
    %2157 = vmatpush.msra.mxu0 %v752
    %2158 = vmatpush.msra.mxu0 %v744
    %2159 = vmatpush.msra.mxu0 %v736
    %2160 = vmatmul.f32.gmra.mxu0 %v1941
    %v2161 = vpop.f32.mrf.mxu0
    %v2162 = vadd.f32 %v2142, %v2161
    %2163 = vdwg.mxu0
    %2164 = vmatpush.msra.mxu0 %v729
    %2165 = vmatpush.msra.mxu0 %v721
    %2166 = vmatpush.msra.mxu0 %v713
    %2167 = vmatpush.msra.mxu0 %v705
    %2168 = vmatpush.msra.mxu0 %v697
    %2169 = vmatpush.msra.mxu0 %v689
    %2170 = vmatpush.msra.mxu0 %v681
    %2171 = vmatpush.msra.mxu0 %v673
    %2172 = vmatpush.msra.mxu0 %v665
    %2173 = vmatpush.msra.mxu0 %v657
    %2174 = vmatpush.msra.mxu0 %v649
    %2175 = vmatpush.msra.mxu0 %v641
    %2176 = vmatpush.msra.mxu0 %v633
    %2177 = vmatpush.msra.mxu0 %v625
    %2178 = vmatpush.msra.mxu0 %v617
    %2179 = vmatpush.msra.mxu0 %v609
    %2180 = vmatmul.f32.gmra.mxu0 %v1940
    %v2181 = vpop.f32.mrf.mxu0
    %v2182 = vadd.f32 0.0, %v2181
    %2183 = vdwg.mxu0
    %2184 = vmatpush.msra.mxu0 %v857
    %2185 = vmatpush.msra.mxu0 %v849
    %2186 = vmatpush.msra.mxu0 %v841
    %2187 = vmatpush.msra.mxu0 %v833
    %2188 = vmatpush.msra.mxu0 %v825
    %2189 = vmatpush.msra.mxu0 %v817
    %2190 = vmatpush.msra.mxu0 %v809
    %2191 = vmatpush.msra.mxu0 %v801
    %2192 = vmatpush.msra.mxu0 %v793
    %2193 = vmatpush.msra.mxu0 %v785
    %2194 = vmatpush.msra.mxu0 %v777
    %2195 = vmatpush.msra.mxu0 %v769
    %2196 = vmatpush.msra.mxu0 %v761
    %2197 = vmatpush.msra.mxu0 %v753
    %2198 = vmatpush.msra.mxu0 %v745
    %2199 = vmatpush.msra.mxu0 %v737
    %2200 = vmatmul.f32.gmra.mxu0 %v1941
    %v2201 = vpop.f32.mrf.mxu0
    %v2202 = vadd.f32 %v2182, %v2201
    %2203 = vdwg.mxu0
    %2204 = vmatpush.msra.mxu0 %v730
    %2205 = vmatpush.msra.mxu0 %v722
    %2206 = vmatpush.msra.mxu0 %v714
    %2207 = vmatpush.msra.mxu0 %v706
    %2208 = vmatpush.msra.mxu0 %v698
    %2209 = vmatpush.msra.mxu0 %v690
    %2210 = vmatpush.msra.mxu0 %v682
    %2211 = vmatpush.msra.mxu0 %v674
    %2212 = vmatpush.msra.mxu0 %v666
    %2213 = vmatpush.msra.mxu0 %v658
    %2214 = vmatpush.msra.mxu0 %v650
    %2215 = vmatpush.msra.mxu0 %v642
    %2216 = vmatpush.msra.mxu0 %v634
    %2217 = vmatpush.msra.mxu0 %v626
    %2218 = vmatpush.msra.mxu0 %v618
    %2219 = vmatpush.msra.mxu0 %v610
    %2220 = vmatmul.f32.gmra.mxu0 %v1940
    %v2221 = vpop.f32.mrf.mxu0
    %v2222 = vadd.f32 0.0, %v2221
    %2223 = vdwg.mxu0
    %2224 = vmatpush.msra.mxu0 %v858
    %2225 = vmatpush.msra.mxu0 %v850
    %2226 = vmatpush.msra.mxu0 %v842
    %2227 = vmatpush.msra.mxu0 %v834
    %2228 = vmatpush.msra.mxu0 %v826
    %2229 = vmatpush.msra.mxu0 %v818
    %2230 = vmatpush.msra.mxu0 %v810
    %2231 = vmatpush.msra.mxu0 %v802
    %2232 = vmatpush.msra.mxu0 %v794
    %2233 = vmatpush.msra.mxu0 %v786
    %2234 = vmatpush.msra.mxu0 %v778
    %2235 = vmatpush.msra.mxu0 %v770
    %2236 = vmatpush.msra.mxu0 %v762
    %2237 = vmatpush.msra.mxu0 %v754
    %2238 = vmatpush.msra.mxu0 %v746
    %2239 = vmatpush.msra.mxu0 %v738
    %2240 = vmatmul.f32.gmra.mxu0 %v1941
    %v2241 = vpop.f32.mrf.mxu0
    %v2242 = vadd.f32 %v2222, %v2241
    %2243 = vdwg.mxu0
    %2244 = vmatpush.msra.mxu0 %v731
    %2245 = vmatpush.msra.mxu0 %v723
    %2246 = vmatpush.msra.mxu0 %v715
    %2247 = vmatpush.msra.mxu0 %v707
    %2248 = vmatpush.msra.mxu0 %v699
    %2249 = vmatpush.msra.mxu0 %v691
    %2250 = vmatpush.msra.mxu0 %v683
    %2251 = vmatpush.msra.mxu0 %v675
    %2252 = vmatpush.msra.mxu0 %v667
    %2253 = vmatpush.msra.mxu0 %v659
    %2254 = vmatpush.msra.mxu0 %v651
    %2255 = vmatpush.msra.mxu0 %v643
    %2256 = vmatpush.msra.mxu0 %v635
    %2257 = vmatpush.msra.mxu0 %v627
    %2258 = vmatpush.msra.mxu0 %v619
    %2259 = vmatpush.msra.mxu0 %v611
    %2260 = vmatmul.f32.gmra.mxu0 %v1940
    %v2261 = vpop.f32.mrf.mxu0
    %v2262 = vadd.f32 0.0, %v2261
    %2263 = vdwg.mxu0
    %2264 = vmatpush.msra.mxu0 %v859
    %2265 = vmatpush.msra.mxu0 %v851
    %2266 = vmatpush.msra.mxu0 %v843
    %2267 = vmatpush.msra.mxu0 %v835
    %2268 = vmatpush.msra.mxu0 %v827
    %2269 = vmatpush.msra.mxu0 %v819
    %2270 = vmatpush.msra.mxu0 %v811
    %2271 = vmatpush.msra.mxu0 %v803
    %2272 = vmatpush.msra.mxu0 %v795
    %2273 = vmatpush.msra.mxu0 %v787
    %2274 = vmatpush.msra.mxu0 %v779
    %2275 = vmatpush.msra.mxu0 %v771
    %2276 = vmatpush.msra.mxu0 %v763
    %2277 = vmatpush.msra.mxu0 %v755
    %2278 = vmatpush.msra.mxu0 %v747
    %2279 = vmatpush.msra.mxu0 %v739
    %2280 = vmatmul.f32.gmra.mxu0 %v1941
    %v2281 = vpop.f32.mrf.mxu0
    %v2282 = vadd.f32 %v2262, %v2281
    %2283 = vdwg.mxu0
    %2284 = vmatpush.msra.mxu0 %v732
    %2285 = vmatpush.msra.mxu0 %v724
    %2286 = vmatpush.msra.mxu0 %v716
    %2287 = vmatpush.msra.mxu0 %v708
    %2288 = vmatpush.msra.mxu0 %v700
    %2289 = vmatpush.msra.mxu0 %v692
    %2290 = vmatpush.msra.mxu0 %v684
    %2291 = vmatpush.msra.mxu0 %v676
    %2292 = vmatpush.msra.mxu0 %v668
    %2293 = vmatpush.msra.mxu0 %v660
    %2294 = vmatpush.msra.mxu0 %v652
    %2295 = vmatpush.msra.mxu0 %v644
    %2296 = vmatpush.msra.mxu0 %v636
    %2297 = vmatpush.msra.mxu0 %v628
    %2298 = vmatpush.msra.mxu0 %v620
    %2299 = vmatpush.msra.mxu0 %v612
    %2300 = vmatmul.f32.gmra.mxu0 %v1940
    %v2301 = vpop.f32.mrf.mxu0
    %v2302 = vadd.f32 0.0, %v2301
    %2303 = vdwg.mxu0
    %2304 = vmatpush.msra.mxu0 %v860
    %2305 = vmatpush.msra.mxu0 %v852
    %2306 = vmatpush.msra.mxu0 %v844
    %2307 = vmatpush.msra.mxu0 %v836
    %2308 = vmatpush.msra.mxu0 %v828
    %2309 = vmatpush.msra.mxu0 %v820
    %2310 = vmatpush.msra.mxu0 %v812
    %2311 = vmatpush.msra.mxu0 %v804
    %2312 = vmatpush.msra.mxu0 %v796
    %2313 = vmatpush.msra.mxu0 %v788
    %2314 = vmatpush.msra.mxu0 %v780
    %2315 = vmatpush.msra.mxu0 %v772
    %2316 = vmatpush.msra.mxu0 %v764
    %2317 = vmatpush.msra.mxu0 %v756
    %2318 = vmatpush.msra.mxu0 %v748
    %2319 = vmatpush.msra.mxu0 %v740
    %2320 = vmatmul.f32.gmra.mxu0 %v1941
    %v2321 = vpop.f32.mrf.mxu0
    %v2322 = vadd.f32 %v2302, %v2321
    %2323 = vdwg.mxu0
    %2324 = vmatpush.msra.mxu0 %v733
    %2325 = vmatpush.msra.mxu0 %v725
    %2326 = vmatpush.msra.mxu0 %v717
    %2327 = vmatpush.msra.mxu0 %v709
    %2328 = vmatpush.msra.mxu0 %v701
    %2329 = vmatpush.msra.mxu0 %v693
    %2330 = vmatpush.msra.mxu0 %v685
    %2331 = vmatpush.msra.mxu0 %v677
    %2332 = vmatpush.msra.mxu0 %v669
    %2333 = vmatpush.msra.mxu0 %v661
    %2334 = vmatpush.msra.mxu0 %v653
    %2335 = vmatpush.msra.mxu0 %v645
    %2336 = vmatpush.msra.mxu0 %v637
    %2337 = vmatpush.msra.mxu0 %v629
    %2338 = vmatpush.msra.mxu0 %v621
    %2339 = vmatpush.msra.mxu0 %v613
    %2340 = vmatmul.f32.gmra.mxu0 %v1940
    %v2341 = vpop.f32.mrf.mxu0
    %v2342 = vadd.f32 0.0, %v2341
    %2343 = vdwg.mxu0
    %2344 = vmatpush.msra.mxu0 %v861
    %2345 = vmatpush.msra.mxu0 %v853
    %2346 = vmatpush.msra.mxu0 %v845
    %2347 = vmatpush.msra.mxu0 %v837
    %2348 = vmatpush.msra.mxu0 %v829
    %2349 = vmatpush.msra.mxu0 %v821
    %2350 = vmatpush.msra.mxu0 %v813
    %2351 = vmatpush.msra.mxu0 %v805
    %2352 = vmatpush.msra.mxu0 %v797
    %2353 = vmatpush.msra.mxu0 %v789
    %2354 = vmatpush.msra.mxu0 %v781
    %2355 = vmatpush.msra.mxu0 %v773
    %2356 = vmatpush.msra.mxu0 %v765
    %2357 = vmatpush.msra.mxu0 %v757
    %2358 = vmatpush.msra.mxu0 %v749
    %2359 = vmatpush.msra.mxu0 %v741
    %2360 = vmatmul.f32.gmra.mxu0 %v1941
    %v2361 = vpop.f32.mrf.mxu0
    %v2362 = vadd.f32 %v2342, %v2361
    %2363 = vdwg.mxu0
    %2364 = vmatpush.msra.mxu0 %v734
    %2365 = vmatpush.msra.mxu0 %v726
    %2366 = vmatpush.msra.mxu0 %v718
    %2367 = vmatpush.msra.mxu0 %v710
    %2368 = vmatpush.msra.mxu0 %v702
    %2369 = vmatpush.msra.mxu0 %v694
    %2370 = vmatpush.msra.mxu0 %v686
    %2371 = vmatpush.msra.mxu0 %v678
    %2372 = vmatpush.msra.mxu0 %v670
    %2373 = vmatpush.msra.mxu0 %v662
    %2374 = vmatpush.msra.mxu0 %v654
    %2375 = vmatpush.msra.mxu0 %v646
    %2376 = vmatpush.msra.mxu0 %v638
    %2377 = vmatpush.msra.mxu0 %v630
    %2378 = vmatpush.msra.mxu0 %v622
    %2379 = vmatpush.msra.mxu0 %v614
    %2380 = vmatmul.f32.gmra.mxu0 %v1940
    %v2381 = vpop.f32.mrf.mxu0
    %v2382 = vadd.f32 0.0, %v2381
    %2383 = vdwg.mxu0
    %2384 = vmatpush.msra.mxu0 %v862
    %2385 = vmatpush.msra.mxu0 %v854
    %2386 = vmatpush.msra.mxu0 %v846
    %2387 = vmatpush.msra.mxu0 %v838
    %2388 = vmatpush.msra.mxu0 %v830
    %2389 = vmatpush.msra.mxu0 %v822
    %2390 = vmatpush.msra.mxu0 %v814
    %2391 = vmatpush.msra.mxu0 %v806
    %2392 = vmatpush.msra.mxu0 %v798
    %2393 = vmatpush.msra.mxu0 %v790
    %2394 = vmatpush.msra.mxu0 %v782
    %2395 = vmatpush.msra.mxu0 %v774
    %2396 = vmatpush.msra.mxu0 %v766
    %2397 = vmatpush.msra.mxu0 %v758
    %2398 = vmatpush.msra.mxu0 %v750
    %2399 = vmatpush.msra.mxu0 %v742
    %2400 = vmatmul.f32.gmra.mxu0 %v1941
    %v2401 = vpop.f32.mrf.mxu0
    %v2402 = vadd.f32 %v2382, %v2401
    %2403 = vdwg.mxu0
    %v2412 = vrot.slane %v2122, 6
    %v2413 = vrot.slane %v2162, 6
    %v2414 = vrot.slane %v2202, 6
    %v2415 = vrot.slane %v2242, 6
    %v2416 = vrot.slane %v2282, 6
    %v2417 = vrot.slane %v2322, 6
    %v2418 = vrot.slane %v2362, 6
    %v2419 = vrot.slane %v2402, 6
    %v2428 = vadd.f32 %v2068, %v2412
    %v2429 = vadd.f32 %v2069, %v2413
    %v2430 = vadd.f32 %v2070, %v2414
    %v2431 = vadd.f32 %v2071, %v2415
    %v2432 = vadd.f32 %v2072, %v2416
    %v2433 = vadd.f32 %v2073, %v2417
    %v2434 = vadd.f32 %v2074, %v2418
    %v2435 = vadd.f32 %v2075, %v2419
    %v2438 = vrot.slane %v2066, 6
    %v2439 = vrot.slane %v2067, 6
    %2442 = vmatpush.msra.mxu0 %v984
    %2443 = vmatpush.msra.mxu0 %v976
    %2444 = vmatpush.msra.mxu0 %v968
    %2445 = vmatpush.msra.mxu0 %v960
    %2446 = vmatpush.msra.mxu0 %v952
    %2447 = vmatpush.msra.mxu0 %v944
    %2448 = vmatpush.msra.mxu0 %v936
    %2449 = vmatpush.msra.mxu0 %v928
    %2450 = vmatpush.msra.mxu0 %v920
    %2451 = vmatpush.msra.mxu0 %v912
    %2452 = vmatpush.msra.mxu0 %v904
    %2453 = vmatpush.msra.mxu0 %v896
    %2454 = vmatpush.msra.mxu0 %v888
    %2455 = vmatpush.msra.mxu0 %v880
    %2456 = vmatpush.msra.mxu0 %v872
    %2457 = vmatpush.msra.mxu0 %v864
    %2458 = vmatmul.f32.gmra.mxu0 %v2438
    %v2459 = vpop.f32.mrf.mxu0
    %v2460 = vadd.f32 0.0, %v2459
    %2461 = vdwg.mxu0
    %2462 = vmatpush.msra.mxu0 %v1112
    %2463 = vmatpush.msra.mxu0 %v1104
    %2464 = vmatpush.msra.mxu0 %v1096
    %2465 = vmatpush.msra.mxu0 %v1088
    %2466 = vmatpush.msra.mxu0 %v1080
    %2467 = vmatpush.msra.mxu0 %v1072
    %2468 = vmatpush.msra.mxu0 %v1064
    %2469 = vmatpush.msra.mxu0 %v1056
    %2470 = vmatpush.msra.mxu0 %v1048
    %2471 = vmatpush.msra.mxu0 %v1040
    %2472 = vmatpush.msra.mxu0 %v1032
    %2473 = vmatpush.msra.mxu0 %v1024
    %2474 = vmatpush.msra.mxu0 %v1016
    %2475 = vmatpush.msra.mxu0 %v1008
    %2476 = vmatpush.msra.mxu0 %v1000
    %2477 = vmatpush.msra.mxu0 %v992
    %2478 = vmatmul.f32.gmra.mxu0 %v2439
    %v2479 = vpop.f32.mrf.mxu0
    %v2480 = vadd.f32 %v2460, %v2479
    %2481 = vdwg.mxu0
    %2482 = vmatpush.msra.mxu0 %v985
    %2483 = vmatpush.msra.mxu0 %v977
    %2484 = vmatpush.msra.mxu0 %v969
    %2485 = vmatpush.msra.mxu0 %v961
    %2486 = vmatpush.msra.mxu0 %v953
    %2487 = vmatpush.msra.mxu0 %v945
    %2488 = vmatpush.msra.mxu0 %v937
    %2489 = vmatpush.msra.mxu0 %v929
    %2490 = vmatpush.msra.mxu0 %v921
    %2491 = vmatpush.msra.mxu0 %v913
    %2492 = vmatpush.msra.mxu0 %v905
    %2493 = vmatpush.msra.mxu0 %v897
    %2494 = vmatpush.msra.mxu0 %v889
    %2495 = vmatpush.msra.mxu0 %v881
    %2496 = vmatpush.msra.mxu0 %v873
    %2497 = vmatpush.msra.mxu0 %v865
    %2498 = vmatmul.f32.gmra.mxu0 %v2438
    %v2499 = vpop.f32.mrf.mxu0
    %v2500 = vadd.f32 0.0, %v2499
    %2501 = vdwg.mxu0
    %2502 = vmatpush.msra.mxu0 %v1113
    %2503 = vmatpush.msra.mxu0 %v1105
    %2504 = vmatpush.msra.mxu0 %v1097
    %2505 = vmatpush.msra.mxu0 %v1089
    %2506 = vmatpush.msra.mxu0 %v1081
    %2507 = vmatpush.msra.mxu0 %v1073
    %2508 = vmatpush.msra.mxu0 %v1065
    %2509 = vmatpush.msra.mxu0 %v1057
    %2510 = vmatpush.msra.mxu0 %v1049
    %2511 = vmatpush.msra.mxu0 %v1041
    %2512 = vmatpush.msra.mxu0 %v1033
    %2513 = vmatpush.msra.mxu0 %v1025
    %2514 = vmatpush.msra.mxu0 %v1017
    %2515 = vmatpush.msra.mxu0 %v1009
    %2516 = vmatpush.msra.mxu0 %v1001
    %2517 = vmatpush.msra.mxu0 %v993
    %2518 = vmatmul.f32.gmra.mxu0 %v2439
    %v2519 = vpop.f32.mrf.mxu0
    %v2520 = vadd.f32 %v2500, %v2519
    %2521 = vdwg.mxu0
    %2522 = vmatpush.msra.mxu0 %v986
    %2523 = vmatpush.msra.mxu0 %v978
    %2524 = vmatpush.msra.mxu0 %v970
    %2525 = vmatpush.msra.mxu0 %v962
    %2526 = vmatpush.msra.mxu0 %v954
    %2527 = vmatpush.msra.mxu0 %v946
    %2528 = vmatpush.msra.mxu0 %v938
    %2529 = vmatpush.msra.mxu0 %v930
    %2530 = vmatpush.msra.mxu0 %v922
    %2531 = vmatpush.msra.mxu0 %v914
    %2532 = vmatpush.msra.mxu0 %v906
    %2533 = vmatpush.msra.mxu0 %v898
    %2534 = vmatpush.msra.mxu0 %v890
    %2535 = vmatpush.msra.mxu0 %v882
    %2536 = vmatpush.msra.mxu0 %v874
    %2537 = vmatpush.msra.mxu0 %v866
    %2538 = vmatmul.f32.gmra.mxu0 %v2438
    %v2539 = vpop.f32.mrf.mxu0
    %v2540 = vadd.f32 0.0, %v2539
    %2541 = vdwg.mxu0
    %2542 = vmatpush.msra.mxu0 %v1114
    %2543 = vmatpush.msra.mxu0 %v1106
    %2544 = vmatpush.msra.mxu0 %v1098
    %2545 = vmatpush.msra.mxu0 %v1090
    %2546 = vmatpush.msra.mxu0 %v1082
    %2547 = vmatpush.msra.mxu0 %v1074
    %2548 = vmatpush.msra.mxu0 %v1066
    %2549 = vmatpush.msra.mxu0 %v1058
    %2550 = vmatpush.msra.mxu0 %v1050
    %2551 = vmatpush.msra.mxu0 %v1042
    %2552 = vmatpush.msra.mxu0 %v1034
    %2553 = vmatpush.msra.mxu0 %v1026
    %2554 = vmatpush.msra.mxu0 %v1018
    %2555 = vmatpush.msra.mxu0 %v1010
    %2556 = vmatpush.msra.mxu0 %v1002
    %2557 = vmatpush.msra.mxu0 %v994
    %2558 = vmatmul.f32.gmra.mxu0 %v2439
    %v2559 = vpop.f32.mrf.mxu0
    %v2560 = vadd.f32 %v2540, %v2559
    %2561 = vdwg.mxu0
    %2562 = vmatpush.msra.mxu0 %v987
    %2563 = vmatpush.msra.mxu0 %v979
    %2564 = vmatpush.msra.mxu0 %v971
    %2565 = vmatpush.msra.mxu0 %v963
    %2566 = vmatpush.msra.mxu0 %v955
    %2567 = vmatpush.msra.mxu0 %v947
    %2568 = vmatpush.msra.mxu0 %v939
    %2569 = vmatpush.msra.mxu0 %v931
    %2570 = vmatpush.msra.mxu0 %v923
    %2571 = vmatpush.msra.mxu0 %v915
    %2572 = vmatpush.msra.mxu0 %v907
    %2573 = vmatpush.msra.mxu0 %v899
    %2574 = vmatpush.msra.mxu0 %v891
    %2575 = vmatpush.msra.mxu0 %v883
    %2576 = vmatpush.msra.mxu0 %v875
    %2577 = vmatpush.msra.mxu0 %v867
    %2578 = vmatmul.f32.gmra.mxu0 %v2438
    %v2579 = vpop.f32.mrf.mxu0
    %v2580 = vadd.f32 0.0, %v2579
    %2581 = vdwg.mxu0
    %2582 = vmatpush.msra.mxu0 %v1115
    %2583 = vmatpush.msra.mxu0 %v1107
    %2584 = vmatpush.msra.mxu0 %v1099
    %2585 = vmatpush.msra.mxu0 %v1091
    %2586 = vmatpush.msra.mxu0 %v1083
    %2587 = vmatpush.msra.mxu0 %v1075
    %2588 = vmatpush.msra.mxu0 %v1067
    %2589 = vmatpush.msra.mxu0 %v1059
    %2590 = vmatpush.msra.mxu0 %v1051
    %2591 = vmatpush.msra.mxu0 %v1043
    %2592 = vmatpush.msra.mxu0 %v1035
    %2593 = vmatpush.msra.mxu0 %v1027
    %2594 = vmatpush.msra.mxu0 %v1019
    %2595 = vmatpush.msra.mxu0 %v1011
    %2596 = vmatpush.msra.mxu0 %v1003
    %2597 = vmatpush.msra.mxu0 %v995
    %2598 = vmatmul.f32.gmra.mxu0 %v2439
    %v2599 = vpop.f32.mrf.mxu0
    %v2600 = vadd.f32 %v2580, %v2599
    %2601 = vdwg.mxu0
    %2602 = vmatpush.msra.mxu0 %v988
    %2603 = vmatpush.msra.mxu0 %v980
    %2604 = vmatpush.msra.mxu0 %v972
    %2605 = vmatpush.msra.mxu0 %v964
    %2606 = vmatpush.msra.mxu0 %v956
    %2607 = vmatpush.msra.mxu0 %v948
    %2608 = vmatpush.msra.mxu0 %v940
    %2609 = vmatpush.msra.mxu0 %v932
    %2610 = vmatpush.msra.mxu0 %v924
    %2611 = vmatpush.msra.mxu0 %v916
    %2612 = vmatpush.msra.mxu0 %v908
    %2613 = vmatpush.msra.mxu0 %v900
    %2614 = vmatpush.msra.mxu0 %v892
    %2615 = vmatpush.msra.mxu0 %v884
    %2616 = vmatpush.msra.mxu0 %v876
    %2617 = vmatpush.msra.mxu0 %v868
    %2618 = vmatmul.f32.gmra.mxu0 %v2438
    %v2619 = vpop.f32.mrf.mxu0
    %v2620 = vadd.f32 0.0, %v2619
    %2621 = vdwg.mxu0
    %2622 = vmatpush.msra.mxu0 %v1116
    %2623 = vmatpush.msra.mxu0 %v1108
    %2624 = vmatpush.msra.mxu0 %v1100
    %2625 = vmatpush.msra.mxu0 %v1092
    %2626 = vmatpush.msra.mxu0 %v1084
    %2627 = vmatpush.msra.mxu0 %v1076
    %2628 = vmatpush.msra.mxu0 %v1068
    %2629 = vmatpush.msra.mxu0 %v1060
    %2630 = vmatpush.msra.mxu0 %v1052
    %2631 = vmatpush.msra.mxu0 %v1044
    %2632 = vmatpush.msra.mxu0 %v1036
    %2633 = vmatpush.msra.mxu0 %v1028
    %2634 = vmatpush.msra.mxu0 %v1020
    %2635 = vmatpush.msra.mxu0 %v1012
    %2636 = vmatpush.msra.mxu0 %v1004
    %2637 = vmatpush.msra.mxu0 %v996
    %2638 = vmatmul.f32.gmra.mxu0 %v2439
    %v2639 = vpop.f32.mrf.mxu0
    %v2640 = vadd.f32 %v2620, %v2639
    %2641 = vdwg.mxu0
    %2642 = vmatpush.msra.mxu0 %v989
    %2643 = vmatpush.msra.mxu0 %v981
    %2644 = vmatpush.msra.mxu0 %v973
    %2645 = vmatpush.msra.mxu0 %v965
    %2646 = vmatpush.msra.mxu0 %v957
    %2647 = vmatpush.msra.mxu0 %v949
    %2648 = vmatpush.msra.mxu0 %v941
    %2649 = vmatpush.msra.mxu0 %v933
    %2650 = vmatpush.msra.mxu0 %v925
    %2651 = vmatpush.msra.mxu0 %v917
    %2652 = vmatpush.msra.mxu0 %v909
    %2653 = vmatpush.msra.mxu0 %v901
    %2654 = vmatpush.msra.mxu0 %v893
    %2655 = vmatpush.msra.mxu0 %v885
    %2656 = vmatpush.msra.mxu0 %v877
    %2657 = vmatpush.msra.mxu0 %v869
    %2658 = vmatmul.f32.gmra.mxu0 %v2438
    %v2659 = vpop.f32.mrf.mxu0
    %v2660 = vadd.f32 0.0, %v2659
    %2661 = vdwg.mxu0
    %2662 = vmatpush.msra.mxu0 %v1117
    %2663 = vmatpush.msra.mxu0 %v1109
    %2664 = vmatpush.msra.mxu0 %v1101
    %2665 = vmatpush.msra.mxu0 %v1093
    %2666 = vmatpush.msra.mxu0 %v1085
    %2667 = vmatpush.msra.mxu0 %v1077
    %2668 = vmatpush.msra.mxu0 %v1069
    %2669 = vmatpush.msra.mxu0 %v1061
    %2670 = vmatpush.msra.mxu0 %v1053
    %2671 = vmatpush.msra.mxu0 %v1045
    %2672 = vmatpush.msra.mxu0 %v1037
    %2673 = vmatpush.msra.mxu0 %v1029
    %2674 = vmatpush.msra.mxu0 %v1021
    %2675 = vmatpush.msra.mxu0 %v1013
    %2676 = vmatpush.msra.mxu0 %v1005
    %2677 = vmatpush.msra.mxu0 %v997
    %2678 = vmatmul.f32.gmra.mxu0 %v2439
    %v2679 = vpop.f32.mrf.mxu0
    %v2680 = vadd.f32 %v2660, %v2679
    %2681 = vdwg.mxu0
    %2682 = vmatpush.msra.mxu0 %v990
    %2683 = vmatpush.msra.mxu0 %v982
    %2684 = vmatpush.msra.mxu0 %v974
    %2685 = vmatpush.msra.mxu0 %v966
    %2686 = vmatpush.msra.mxu0 %v958
    %2687 = vmatpush.msra.mxu0 %v950
    %2688 = vmatpush.msra.mxu0 %v942
    %2689 = vmatpush.msra.mxu0 %v934
    %2690 = vmatpush.msra.mxu0 %v926
    %2691 = vmatpush.msra.mxu0 %v918
    %2692 = vmatpush.msra.mxu0 %v910
    %2693 = vmatpush.msra.mxu0 %v902
    %2694 = vmatpush.msra.mxu0 %v894
    %2695 = vmatpush.msra.mxu0 %v886
    %2696 = vmatpush.msra.mxu0 %v878
    %2697 = vmatpush.msra.mxu0 %v870
    %2698 = vmatmul.f32.gmra.mxu0 %v2438
    %v2699 = vpop.f32.mrf.mxu0
    %v2700 = vadd.f32 0.0, %v2699
    %2701 = vdwg.mxu0
    %2702 = vmatpush.msra.mxu0 %v1118
    %2703 = vmatpush.msra.mxu0 %v1110
    %2704 = vmatpush.msra.mxu0 %v1102
    %2705 = vmatpush.msra.mxu0 %v1094
    %2706 = vmatpush.msra.mxu0 %v1086
    %2707 = vmatpush.msra.mxu0 %v1078
    %2708 = vmatpush.msra.mxu0 %v1070
    %2709 = vmatpush.msra.mxu0 %v1062
    %2710 = vmatpush.msra.mxu0 %v1054
    %2711 = vmatpush.msra.mxu0 %v1046
    %2712 = vmatpush.msra.mxu0 %v1038
    %2713 = vmatpush.msra.mxu0 %v1030
    %2714 = vmatpush.msra.mxu0 %v1022
    %2715 = vmatpush.msra.mxu0 %v1014
    %2716 = vmatpush.msra.mxu0 %v1006
    %2717 = vmatpush.msra.mxu0 %v998
    %2718 = vmatmul.f32.gmra.mxu0 %v2439
    %v2719 = vpop.f32.mrf.mxu0
    %v2720 = vadd.f32 %v2700, %v2719
    %2721 = vdwg.mxu0
    %2722 = vmatpush.msra.mxu0 %v991
    %2723 = vmatpush.msra.mxu0 %v983
    %2724 = vmatpush.msra.mxu0 %v975
    %2725 = vmatpush.msra.mxu0 %v967
    %2726 = vmatpush.msra.mxu0 %v959
    %2727 = vmatpush.msra.mxu0 %v951
    %2728 = vmatpush.msra.mxu0 %v943
    %2729 = vmatpush.msra.mxu0 %v935
    %2730 = vmatpush.msra.mxu0 %v927
    %2731 = vmatpush.msra.mxu0 %v919
    %2732 = vmatpush.msra.mxu0 %v911
    %2733 = vmatpush.msra.mxu0 %v903
    %2734 = vmatpush.msra.mxu0 %v895
    %2735 = vmatpush.msra.mxu0 %v887
    %2736 = vmatpush.msra.mxu0 %v879
    %2737 = vmatpush.msra.mxu0 %v871
    %2738 = vmatmul.f32.gmra.mxu0 %v2438
    %v2739 = vpop.f32.mrf.mxu0
    %v2740 = vadd.f32 0.0, %v2739
    %2741 = vdwg.mxu0
    %2742 = vmatpush.msra.mxu0 %v1119
    %2743 = vmatpush.msra.mxu0 %v1111
    %2744 = vmatpush.msra.mxu0 %v1103
    %2745 = vmatpush.msra.mxu0 %v1095
    %2746 = vmatpush.msra.mxu0 %v1087
    %2747 = vmatpush.msra.mxu0 %v1079
    %2748 = vmatpush.msra.mxu0 %v1071
    %2749 = vmatpush.msra.mxu0 %v1063
    %2750 = vmatpush.msra.mxu0 %v1055
    %2751 = vmatpush.msra.mxu0 %v1047
    %2752 = vmatpush.msra.mxu0 %v1039
    %2753 = vmatpush.msra.mxu0 %v1031
    %2754 = vmatpush.msra.mxu0 %v1023
    %2755 = vmatpush.msra.mxu0 %v1015
    %2756 = vmatpush.msra.mxu0 %v1007
    %2757 = vmatpush.msra.mxu0 %v999
    %2758 = vmatmul.f32.gmra.mxu0 %v2439
    %v2759 = vpop.f32.mrf.mxu0
    %v2760 = vadd.f32 %v2740, %v2759
    %2761 = vdwg.mxu0
    %v2770 = vrot.slane %v2480, 4
    %v2771 = vrot.slane %v2520, 4
    %v2772 = vrot.slane %v2560, 4
    %v2773 = vrot.slane %v2600, 4
    %v2774 = vrot.slane %v2640, 4
    %v2775 = vrot.slane %v2680, 4
    %v2776 = vrot.slane %v2720, 4
    %v2777 = vrot.slane %v2760, 4
    %v2786 = vadd.f32 %v2076, %v2770
    %v2787 = vadd.f32 %v2077, %v2771
    %v2788 = vadd.f32 %v2078, %v2772
    %v2789 = vadd.f32 %v2079, %v2773
    %v2790 = vadd.f32 %v2080, %v2774
    %v2791 = vadd.f32 %v2081, %v2775
    %v2792 = vadd.f32 %v2082, %v2776
    %v2793 = vadd.f32 %v2083, %v2777
    %v2794 = vxor.u32 %v2428, 2147483648
    %v2795 = vxor.u32 %v2429, 2147483648
    %v2796 = vmul.f32 %v2794, 1.442695
    %v2797 = vpow.pop %v2796
    %v2798 = vmul.f32 %v2795, 1.442695
    %v2799 = vpow.pop %v2798
    %v2800 = vadd.f32 %v2797, 1.0
    %v2801 = vadd.f32 %v2799, 1.0
    %v2802 = vrcp.pop %v2800
    %v2803 = vmul.f32 %v2800, %v2802
    %v2804 = vsub.f32 1.0, %v2803
    %v2805 = vmul.f32 %v2802, %v2804
    %v2806 = vadd.f32 %v2802, %v2805
    %vm2807 = vweird.f32 %v2800
    %vm2808 = vweird.f32 %v2802
    %vm2809 = vmor %vm2807, %vm2808
    %v2810 = vsel %vm2809, %v2802, %v2806
    %v2811 = vand.u32 2147483647, %v2800
    %vm2812 = vcmp.eq.f32.partialorder %v2811, 8.507059e+37
    %v2813 = vand.u32 %v2800, 2147483648
    %v2814 = vor.u32 1.1754944e-38, %v2813
    %v2815 = vsel %vm2812, %v2814, %v2810
    %v2816 = vmul.f32 1.0, %v2815
    %v2817 = vrcp.pop %v2801
    %v2818 = vmul.f32 %v2801, %v2817
    %v2819 = vsub.f32 1.0, %v2818
    %v2820 = vmul.f32 %v2817, %v2819
    %v2821 = vadd.f32 %v2817, %v2820
    %vm2822 = vweird.f32 %v2801
    %vm2823 = vweird.f32 %v2817
    %vm2824 = vmor %vm2822, %vm2823
    %v2825 = vsel %vm2824, %v2817, %v2821
    %v2826 = vand.u32 2147483647, %v2801
    %vm2827 = vcmp.eq.f32.partialorder %v2826, 8.507059e+37
    %v2828 = vand.u32 %v2801, 2147483648
    %v2829 = vor.u32 1.1754944e-38, %v2828
    %v2830 = vsel %vm2827, %v2829, %v2825
    %v2831 = vmul.f32 1.0, %v2830
    %v2832 = vxor.u32 %v2430, 2147483648
    %v2833 = vxor.u32 %v2431, 2147483648
    %v2834 = vmul.f32 %v2832, 1.442695
    %v2835 = vpow.pop %v2834
    %v2836 = vmul.f32 %v2833, 1.442695
    %v2837 = vpow.pop %v2836
    %v2838 = vadd.f32 %v2835, 1.0
    %v2839 = vadd.f32 %v2837, 1.0
    %v2840 = vrcp.pop %v2838
    %v2841 = vmul.f32 %v2838, %v2840
    %v2842 = vsub.f32 1.0, %v2841
    %v2843 = vmul.f32 %v2840, %v2842
    %v2844 = vadd.f32 %v2840, %v2843
    %vm2845 = vweird.f32 %v2838
    %vm2846 = vweird.f32 %v2840
    %vm2847 = vmor %vm2845, %vm2846
    %v2848 = vsel %vm2847, %v2840, %v2844
    %v2849 = vand.u32 2147483647, %v2838
    %vm2850 = vcmp.eq.f32.partialorder %v2849, 8.507059e+37
    %v2851 = vand.u32 %v2838, 2147483648
    %v2852 = vor.u32 1.1754944e-38, %v2851
    %v2853 = vsel %vm2850, %v2852, %v2848
    %v2854 = vmul.f32 1.0, %v2853
    %v2855 = vrcp.pop %v2839
    %v2856 = vmul.f32 %v2839, %v2855
    %v2857 = vsub.f32 1.0, %v2856
    %v2858 = vmul.f32 %v2855, %v2857
    %v2859 = vadd.f32 %v2855, %v2858
    %vm2860 = vweird.f32 %v2839
    %vm2861 = vweird.f32 %v2855
    %vm2862 = vmor %vm2860, %vm2861
    %v2863 = vsel %vm2862, %v2855, %v2859
    %v2864 = vand.u32 2147483647, %v2839
    %vm2865 = vcmp.eq.f32.partialorder %v2864, 8.507059e+37
    %v2866 = vand.u32 %v2839, 2147483648
    %v2867 = vor.u32 1.1754944e-38, %v2866
    %v2868 = vsel %vm2865, %v2867, %v2863
    %v2869 = vmul.f32 1.0, %v2868
    %v2870 = vtanh.pop %v2432
    %v2871 = vtanh.pop %v2433
    %v2872 = vxor.u32 %v2434, 2147483648
    %v2873 = vxor.u32 %v2435, 2147483648
    %v2874 = vmul.f32 %v2872, 1.442695
    %v2875 = vpow.pop %v2874
    %v2876 = vmul.f32 %v2873, 1.442695
    %v2877 = vpow.pop %v2876
    %v2878 = vadd.f32 %v2875, 1.0
    %v2879 = vadd.f32 %v2877, 1.0
    %v2880 = vrcp.pop %v2878
    %v2881 = vmul.f32 %v2878, %v2880
    %v2882 = vsub.f32 1.0, %v2881
    %v2883 = vmul.f32 %v2880, %v2882
    %v2884 = vadd.f32 %v2880, %v2883
    %vm2885 = vweird.f32 %v2878
    %vm2886 = vweird.f32 %v2880
    %vm2887 = vmor %vm2885, %vm2886
    %v2888 = vsel %vm2887, %v2880, %v2884
    %v2889 = vand.u32 2147483647, %v2878
    %vm2890 = vcmp.eq.f32.partialorder %v2889, 8.507059e+37
    %v2891 = vand.u32 %v2878, 2147483648
    %v2892 = vor.u32 1.1754944e-38, %v2891
    %v2893 = vsel %vm2890, %v2892, %v2888
    %v2894 = vmul.f32 1.0, %v2893
    %v2895 = vrcp.pop %v2879
    %v2896 = vmul.f32 %v2879, %v2895
    %v2897 = vsub.f32 1.0, %v2896
    %v2898 = vmul.f32 %v2895, %v2897
    %v2899 = vadd.f32 %v2895, %v2898
    %vm2900 = vweird.f32 %v2879
    %vm2901 = vweird.f32 %v2895
    %vm2902 = vmor %vm2900, %vm2901
    %v2903 = vsel %vm2902, %v2895, %v2899
    %v2904 = vand.u32 2147483647, %v2879
    %vm2905 = vcmp.eq.f32.partialorder %v2904, 8.507059e+37
    %v2906 = vand.u32 %v2879, 2147483648
    %v2907 = vor.u32 1.1754944e-38, %v2906
    %v2908 = vsel %vm2905, %v2907, %v2903
    %v2909 = vmul.f32 1.0, %v2908
    %v2912 = vrot.slane %v1936, 6
    %v2913 = vrot.slane %v1937, 6
    %v2916 = vmul.f32 %v2854, %v2912
    %v2917 = vmul.f32 %v2869, %v2913
    %v2918 = vmul.f32 %v2816, %v2870
    %v2919 = vmul.f32 %v2831, %v2871
    %v2920 = vadd.f32 %v2916, %v2918
    %v2921 = vadd.f32 %v2917, %v2919
    %v2922 = vtanh.pop %v2920
    %v2923 = vtanh.pop %v2921
    %v2924 = vmul.f32 %v2894, %v2922
    %v2925 = vmul.f32 %v2909, %v2923
    %v2926 = vxor.u32 %v2786, 2147483648
    %v2927 = vxor.u32 %v2787, 2147483648
    %v2928 = vmul.f32 %v2926, 1.442695
    %v2929 = vpow.pop %v2928
    %v2930 = vmul.f32 %v2927, 1.442695
    %v2931 = vpow.pop %v2930
    %v2932 = vadd.f32 %v2929, 1.0
    %v2933 = vadd.f32 %v2931, 1.0
    %v2934 = vrcp.pop %v2932
    %v2935 = vmul.f32 %v2932, %v2934
    %v2936 = vsub.f32 1.0, %v2935
    %v2937 = vmul.f32 %v2934, %v2936
    %v2938 = vadd.f32 %v2934, %v2937
    %vm2939 = vweird.f32 %v2932
    %vm2940 = vweird.f32 %v2934
    %vm2941 = vmor %vm2939, %vm2940
    %v2942 = vsel %vm2941, %v2934, %v2938
    %v2943 = vand.u32 2147483647, %v2932
    %vm2944 = vcmp.eq.f32.partialorder %v2943, 8.507059e+37
    %v2945 = vand.u32 %v2932, 2147483648
    %v2946 = vor.u32 1.1754944e-38, %v2945
    %v2947 = vsel %vm2944, %v2946, %v2942
    %v2948 = vmul.f32 1.0, %v2947
    %v2949 = vrcp.pop %v2933
    %v2950 = vmul.f32 %v2933, %v2949
    %v2951 = vsub.f32 1.0, %v2950
    %v2952 = vmul.f32 %v2949, %v2951
    %v2953 = vadd.f32 %v2949, %v2952
    %vm2954 = vweird.f32 %v2933
    %vm2955 = vweird.f32 %v2949
    %vm2956 = vmor %vm2954, %vm2955
    %v2957 = vsel %vm2956, %v2949, %v2953
    %v2958 = vand.u32 2147483647, %v2933
    %vm2959 = vcmp.eq.f32.partialorder %v2958, 8.507059e+37
    %v2960 = vand.u32 %v2933, 2147483648
    %v2961 = vor.u32 1.1754944e-38, %v2960
    %v2962 = vsel %vm2959, %v2961, %v2957
    %v2963 = vmul.f32 1.0, %v2962
    %v2964 = vxor.u32 %v2788, 2147483648
    %v2965 = vxor.u32 %v2789, 2147483648
    %v2966 = vmul.f32 %v2964, 1.442695
    %v2967 = vpow.pop %v2966
    %v2968 = vmul.f32 %v2965, 1.442695
    %v2969 = vpow.pop %v2968
    %v2970 = vadd.f32 %v2967, 1.0
    %v2971 = vadd.f32 %v2969, 1.0
    %v2972 = vrcp.pop %v2970
    %v2973 = vmul.f32 %v2970, %v2972
    %v2974 = vsub.f32 1.0, %v2973
    %v2975 = vmul.f32 %v2972, %v2974
    %v2976 = vadd.f32 %v2972, %v2975
    %vm2977 = vweird.f32 %v2970
    %vm2978 = vweird.f32 %v2972
    %vm2979 = vmor %vm2977, %vm2978
    %v2980 = vsel %vm2979, %v2972, %v2976
    %v2981 = vand.u32 2147483647, %v2970
    %vm2982 = vcmp.eq.f32.partialorder %v2981, 8.507059e+37
    %v2983 = vand.u32 %v2970, 2147483648
    %v2984 = vor.u32 1.1754944e-38, %v2983
    %v2985 = vsel %vm2982, %v2984, %v2980
    %v2986 = vmul.f32 1.0, %v2985
    %v2987 = vrcp.pop %v2971
    %v2988 = vmul.f32 %v2971, %v2987
    %v2989 = vsub.f32 1.0, %v2988
    %v2990 = vmul.f32 %v2987, %v2989
    %v2991 = vadd.f32 %v2987, %v2990
    %vm2992 = vweird.f32 %v2971
    %vm2993 = vweird.f32 %v2987
    %vm2994 = vmor %vm2992, %vm2993
    %v2995 = vsel %vm2994, %v2987, %v2991
    %v2996 = vand.u32 2147483647, %v2971
    %vm2997 = vcmp.eq.f32.partialorder %v2996, 8.507059e+37
    %v2998 = vand.u32 %v2971, 2147483648
    %v2999 = vor.u32 1.1754944e-38, %v2998
    %v3000 = vsel %vm2997, %v2999, %v2995
    %v3001 = vmul.f32 1.0, %v3000
    %v3002 = vtanh.pop %v2790
    %v3003 = vtanh.pop %v2791
    %v3004 = vxor.u32 %v2792, 2147483648
    %v3005 = vxor.u32 %v2793, 2147483648
    %v3006 = vmul.f32 %v3004, 1.442695
    %v3007 = vpow.pop %v3006
    %v3008 = vmul.f32 %v3005, 1.442695
    %v3009 = vpow.pop %v3008
    %v3010 = vadd.f32 %v3007, 1.0
    %v3011 = vadd.f32 %v3009, 1.0
    %v3012 = vrcp.pop %v3010
    %v3013 = vmul.f32 %v3010, %v3012
    %v3014 = vsub.f32 1.0, %v3013
    %v3015 = vmul.f32 %v3012, %v3014
    %v3016 = vadd.f32 %v3012, %v3015
    %vm3017 = vweird.f32 %v3010
    %vm3018 = vweird.f32 %v3012
    %vm3019 = vmor %vm3017, %vm3018
    %v3020 = vsel %vm3019, %v3012, %v3016
    %v3021 = vand.u32 2147483647, %v3010
    %vm3022 = vcmp.eq.f32.partialorder %v3021, 8.507059e+37
    %v3023 = vand.u32 %v3010, 2147483648
    %v3024 = vor.u32 1.1754944e-38, %v3023
    %v3025 = vsel %vm3022, %v3024, %v3020
    %v3026 = vmul.f32 1.0, %v3025
    %v3027 = vrcp.pop %v3011
    %v3028 = vmul.f32 %v3011, %v3027
    %v3029 = vsub.f32 1.0, %v3028
    %v3030 = vmul.f32 %v3027, %v3029
    %v3031 = vadd.f32 %v3027, %v3030
    %vm3032 = vweird.f32 %v3011
    %vm3033 = vweird.f32 %v3027
    %vm3034 = vmor %vm3032, %vm3033
    %v3035 = vsel %vm3034, %v3027, %v3031
    %v3036 = vand.u32 2147483647, %v3011
    %vm3037 = vcmp.eq.f32.partialorder %v3036, 8.507059e+37
    %v3038 = vand.u32 %v3011, 2147483648
    %v3039 = vor.u32 1.1754944e-38, %v3038
    %v3040 = vsel %vm3037, %v3039, %v3035
    %v3041 = vmul.f32 1.0, %v3040
    %v3044 = vrot.slane %v2062, 2
    %v3045 = vrot.slane %v2063, 2
    %v3048 = vmul.f32 %v2986, %v3044
    %v3049 = vmul.f32 %v3001, %v3045
    %v3050 = vmul.f32 %v2948, %v3002
    %v3051 = vmul.f32 %v2963, %v3003
    %v3052 = vadd.f32 %v3048, %v3050
    %v3053 = vadd.f32 %v3049, %v3051
    %v3054 = vtanh.pop %v3052
    %v3055 = vtanh.pop %v3053
    %v3056 = vmul.f32 %v3026, %v3054
    %v3057 = vmul.f32 %v3041, %v3055
    %v3058 = vld [vmem:[#allocation2] sm:$0x30]
    %v3059 = vld [vmem:[#allocation2 + $0x8] sm:$0x30]
    %v3060 = vld [vmem:[#allocation2 + $0x10] sm:$0x30]
    %v3061 = vld [vmem:[#allocation2 + $0x18] sm:$0x30]
    %v3062 = vld [vmem:[#allocation2 + $0x20] sm:$0x30]
    %v3063 = vld [vmem:[#allocation2 + $0x28] sm:$0x30]
    %v3064 = vld [vmem:[#allocation2 + $0x30] sm:$0x30]
    %v3065 = vld [vmem:[#allocation2 + $0x38] sm:$0x30]
    %v3066 = vld [vmem:[#allocation2 + $0xc0] sm:$0xc]
    %v3067 = vld [vmem:[#allocation2 + $0xc8] sm:$0xc]
    %v3068 = vld [vmem:[#allocation2 + $0xd0] sm:$0xc]
    %v3069 = vld [vmem:[#allocation2 + $0xd8] sm:$0xc]
    %v3070 = vld [vmem:[#allocation2 + $0xe0] sm:$0xc]
    %v3071 = vld [vmem:[#allocation2 + $0xe8] sm:$0xc]
    %v3072 = vld [vmem:[#allocation2 + $0xf0] sm:$0xc]
    %v3073 = vld [vmem:[#allocation2 + $0xf8] sm:$0xc]
    %v3076 = vrot.slane %v2924, 2
    %v3077 = vrot.slane %v2925, 2
    %3080 = vmatpush.msra.mxu0 %v727
    %3081 = vmatpush.msra.mxu0 %v719
    %3082 = vmatpush.msra.mxu0 %v711
    %3083 = vmatpush.msra.mxu0 %v703
    %3084 = vmatpush.msra.mxu0 %v695
    %3085 = vmatpush.msra.mxu0 %v687
    %3086 = vmatpush.msra.mxu0 %v679
    %3087 = vmatpush.msra.mxu0 %v671
    %3088 = vmatpush.msra.mxu0 %v663
    %3089 = vmatpush.msra.mxu0 %v655
    %3090 = vmatpush.msra.mxu0 %v647
    %3091 = vmatpush.msra.mxu0 %v639
    %3092 = vmatpush.msra.mxu0 %v631
    %3093 = vmatpush.msra.mxu0 %v623
    %3094 = vmatpush.msra.mxu0 %v615
    %3095 = vmatpush.msra.mxu0 %v607
    %3096 = vmatmul.f32.gmra.mxu0 %v3076
    %v3097 = vpop.f32.mrf.mxu0
    %v3098 = vadd.f32 0.0, %v3097
    %3099 = vdwg.mxu0
    %3100 = vmatpush.msra.mxu0 %v855
    %3101 = vmatpush.msra.mxu0 %v847
    %3102 = vmatpush.msra.mxu0 %v839
    %3103 = vmatpush.msra.mxu0 %v831
    %3104 = vmatpush.msra.mxu0 %v823
    %3105 = vmatpush.msra.mxu0 %v815
    %3106 = vmatpush.msra.mxu0 %v807
    %3107 = vmatpush.msra.mxu0 %v799
    %3108 = vmatpush.msra.mxu0 %v791
    %3109 = vmatpush.msra.mxu0 %v783
    %3110 = vmatpush.msra.mxu0 %v775
    %3111 = vmatpush.msra.mxu0 %v767
    %3112 = vmatpush.msra.mxu0 %v759
    %3113 = vmatpush.msra.mxu0 %v751
    %3114 = vmatpush.msra.mxu0 %v743
    %3115 = vmatpush.msra.mxu0 %v735
    %3116 = vmatmul.f32.gmra.mxu0 %v3077
    %v3117 = vpop.f32.mrf.mxu0
    %v3118 = vadd.f32 %v3098, %v3117
    %3119 = vdwg.mxu0
    %3120 = vmatpush.msra.mxu0 %v728
    %3121 = vmatpush.msra.mxu0 %v720
    %3122 = vmatpush.msra.mxu0 %v712
    %3123 = vmatpush.msra.mxu0 %v704
    %3124 = vmatpush.msra.mxu0 %v696
    %3125 = vmatpush.msra.mxu0 %v688
    %3126 = vmatpush.msra.mxu0 %v680
    %3127 = vmatpush.msra.mxu0 %v672
    %3128 = vmatpush.msra.mxu0 %v664
    %3129 = vmatpush.msra.mxu0 %v656
    %3130 = vmatpush.msra.mxu0 %v648
    %3131 = vmatpush.msra.mxu0 %v640
    %3132 = vmatpush.msra.mxu0 %v632
    %3133 = vmatpush.msra.mxu0 %v624
    %3134 = vmatpush.msra.mxu0 %v616
    %3135 = vmatpush.msra.mxu0 %v608
    %3136 = vmatmul.f32.gmra.mxu0 %v3076
    %v3137 = vpop.f32.mrf.mxu0
    %v3138 = vadd.f32 0.0, %v3137
    %3139 = vdwg.mxu0
    %3140 = vmatpush.msra.mxu0 %v856
    %3141 = vmatpush.msra.mxu0 %v848
    %3142 = vmatpush.msra.mxu0 %v840
    %3143 = vmatpush.msra.mxu0 %v832
    %3144 = vmatpush.msra.mxu0 %v824
    %3145 = vmatpush.msra.mxu0 %v816
    %3146 = vmatpush.msra.mxu0 %v808
    %3147 = vmatpush.msra.mxu0 %v800
    %3148 = vmatpush.msra.mxu0 %v792
    %3149 = vmatpush.msra.mxu0 %v784
    %3150 = vmatpush.msra.mxu0 %v776
    %3151 = vmatpush.msra.mxu0 %v768
    %3152 = vmatpush.msra.mxu0 %v760
    %3153 = vmatpush.msra.mxu0 %v752
    %3154 = vmatpush.msra.mxu0 %v744
    %3155 = vmatpush.msra.mxu0 %v736
    %3156 = vmatmul.f32.gmra.mxu0 %v3077
    %v3157 = vpop.f32.mrf.mxu0
    %v3158 = vadd.f32 %v3138, %v3157
    %3159 = vdwg.mxu0
    %3160 = vmatpush.msra.mxu0 %v729
    %3161 = vmatpush.msra.mxu0 %v721
    %3162 = vmatpush.msra.mxu0 %v713
    %3163 = vmatpush.msra.mxu0 %v705
    %3164 = vmatpush.msra.mxu0 %v697
    %3165 = vmatpush.msra.mxu0 %v689
    %3166 = vmatpush.msra.mxu0 %v681
    %3167 = vmatpush.msra.mxu0 %v673
    %3168 = vmatpush.msra.mxu0 %v665
    %3169 = vmatpush.msra.mxu0 %v657
    %3170 = vmatpush.msra.mxu0 %v649
    %3171 = vmatpush.msra.mxu0 %v641
    %3172 = vmatpush.msra.mxu0 %v633
    %3173 = vmatpush.msra.mxu0 %v625
    %3174 = vmatpush.msra.mxu0 %v617
    %3175 = vmatpush.msra.mxu0 %v609
    %3176 = vmatmul.f32.gmra.mxu0 %v3076
    %v3177 = vpop.f32.mrf.mxu0
    %v3178 = vadd.f32 0.0, %v3177
    %3179 = vdwg.mxu0
    %3180 = vmatpush.msra.mxu0 %v857
    %3181 = vmatpush.msra.mxu0 %v849
    %3182 = vmatpush.msra.mxu0 %v841
    %3183 = vmatpush.msra.mxu0 %v833
    %3184 = vmatpush.msra.mxu0 %v825
    %3185 = vmatpush.msra.mxu0 %v817
    %3186 = vmatpush.msra.mxu0 %v809
    %3187 = vmatpush.msra.mxu0 %v801
    %3188 = vmatpush.msra.mxu0 %v793
    %3189 = vmatpush.msra.mxu0 %v785
    %3190 = vmatpush.msra.mxu0 %v777
    %3191 = vmatpush.msra.mxu0 %v769
    %3192 = vmatpush.msra.mxu0 %v761
    %3193 = vmatpush.msra.mxu0 %v753
    %3194 = vmatpush.msra.mxu0 %v745
    %3195 = vmatpush.msra.mxu0 %v737
    %3196 = vmatmul.f32.gmra.mxu0 %v3077
    %v3197 = vpop.f32.mrf.mxu0
    %v3198 = vadd.f32 %v3178, %v3197
    %3199 = vdwg.mxu0
    %3200 = vmatpush.msra.mxu0 %v730
    %3201 = vmatpush.msra.mxu0 %v722
    %3202 = vmatpush.msra.mxu0 %v714
    %3203 = vmatpush.msra.mxu0 %v706
    %3204 = vmatpush.msra.mxu0 %v698
    %3205 = vmatpush.msra.mxu0 %v690
    %3206 = vmatpush.msra.mxu0 %v682
    %3207 = vmatpush.msra.mxu0 %v674
    %3208 = vmatpush.msra.mxu0 %v666
    %3209 = vmatpush.msra.mxu0 %v658
    %3210 = vmatpush.msra.mxu0 %v650
    %3211 = vmatpush.msra.mxu0 %v642
    %3212 = vmatpush.msra.mxu0 %v634
    %3213 = vmatpush.msra.mxu0 %v626
    %3214 = vmatpush.msra.mxu0 %v618
    %3215 = vmatpush.msra.mxu0 %v610
    %3216 = vmatmul.f32.gmra.mxu0 %v3076
    %v3217 = vpop.f32.mrf.mxu0
    %v3218 = vadd.f32 0.0, %v3217
    %3219 = vdwg.mxu0
    %3220 = vmatpush.msra.mxu0 %v858
    %3221 = vmatpush.msra.mxu0 %v850
    %3222 = vmatpush.msra.mxu0 %v842
    %3223 = vmatpush.msra.mxu0 %v834
    %3224 = vmatpush.msra.mxu0 %v826
    %3225 = vmatpush.msra.mxu0 %v818
    %3226 = vmatpush.msra.mxu0 %v810
    %3227 = vmatpush.msra.mxu0 %v802
    %3228 = vmatpush.msra.mxu0 %v794
    %3229 = vmatpush.msra.mxu0 %v786
    %3230 = vmatpush.msra.mxu0 %v778
    %3231 = vmatpush.msra.mxu0 %v770
    %3232 = vmatpush.msra.mxu0 %v762
    %3233 = vmatpush.msra.mxu0 %v754
    %3234 = vmatpush.msra.mxu0 %v746
    %3235 = vmatpush.msra.mxu0 %v738
    %3236 = vmatmul.f32.gmra.mxu0 %v3077
    %v3237 = vpop.f32.mrf.mxu0
    %v3238 = vadd.f32 %v3218, %v3237
    %3239 = vdwg.mxu0
    %3240 = vmatpush.msra.mxu0 %v731
    %3241 = vmatpush.msra.mxu0 %v723
    %3242 = vmatpush.msra.mxu0 %v715
    %3243 = vmatpush.msra.mxu0 %v707
    %3244 = vmatpush.msra.mxu0 %v699
    %3245 = vmatpush.msra.mxu0 %v691
    %3246 = vmatpush.msra.mxu0 %v683
    %3247 = vmatpush.msra.mxu0 %v675
    %3248 = vmatpush.msra.mxu0 %v667
    %3249 = vmatpush.msra.mxu0 %v659
    %3250 = vmatpush.msra.mxu0 %v651
    %3251 = vmatpush.msra.mxu0 %v643
    %3252 = vmatpush.msra.mxu0 %v635
    %3253 = vmatpush.msra.mxu0 %v627
    %3254 = vmatpush.msra.mxu0 %v619
    %3255 = vmatpush.msra.mxu0 %v611
    %3256 = vmatmul.f32.gmra.mxu0 %v3076
    %v3257 = vpop.f32.mrf.mxu0
    %v3258 = vadd.f32 0.0, %v3257
    %3259 = vdwg.mxu0
    %3260 = vmatpush.msra.mxu0 %v859
    %3261 = vmatpush.msra.mxu0 %v851
    %3262 = vmatpush.msra.mxu0 %v843
    %3263 = vmatpush.msra.mxu0 %v835
    %3264 = vmatpush.msra.mxu0 %v827
    %3265 = vmatpush.msra.mxu0 %v819
    %3266 = vmatpush.msra.mxu0 %v811
    %3267 = vmatpush.msra.mxu0 %v803
    %3268 = vmatpush.msra.mxu0 %v795
    %3269 = vmatpush.msra.mxu0 %v787
    %3270 = vmatpush.msra.mxu0 %v779
    %3271 = vmatpush.msra.mxu0 %v771
    %3272 = vmatpush.msra.mxu0 %v763
    %3273 = vmatpush.msra.mxu0 %v755
    %3274 = vmatpush.msra.mxu0 %v747
    %3275 = vmatpush.msra.mxu0 %v739
    %3276 = vmatmul.f32.gmra.mxu0 %v3077
    %v3277 = vpop.f32.mrf.mxu0
    %v3278 = vadd.f32 %v3258, %v3277
    %3279 = vdwg.mxu0
    %3280 = vmatpush.msra.mxu0 %v732
    %3281 = vmatpush.msra.mxu0 %v724
    %3282 = vmatpush.msra.mxu0 %v716
    %3283 = vmatpush.msra.mxu0 %v708
    %3284 = vmatpush.msra.mxu0 %v700
    %3285 = vmatpush.msra.mxu0 %v692
    %3286 = vmatpush.msra.mxu0 %v684
    %3287 = vmatpush.msra.mxu0 %v676
    %3288 = vmatpush.msra.mxu0 %v668
    %3289 = vmatpush.msra.mxu0 %v660
    %3290 = vmatpush.msra.mxu0 %v652
    %3291 = vmatpush.msra.mxu0 %v644
    %3292 = vmatpush.msra.mxu0 %v636
    %3293 = vmatpush.msra.mxu0 %v628
    %3294 = vmatpush.msra.mxu0 %v620
    %3295 = vmatpush.msra.mxu0 %v612
    %3296 = vmatmul.f32.gmra.mxu0 %v3076
    %v3297 = vpop.f32.mrf.mxu0
    %v3298 = vadd.f32 0.0, %v3297
    %3299 = vdwg.mxu0
    %3300 = vmatpush.msra.mxu0 %v860
    %3301 = vmatpush.msra.mxu0 %v852
    %3302 = vmatpush.msra.mxu0 %v844
    %3303 = vmatpush.msra.mxu0 %v836
    %3304 = vmatpush.msra.mxu0 %v828
    %3305 = vmatpush.msra.mxu0 %v820
    %3306 = vmatpush.msra.mxu0 %v812
    %3307 = vmatpush.msra.mxu0 %v804
    %3308 = vmatpush.msra.mxu0 %v796
    %3309 = vmatpush.msra.mxu0 %v788
    %3310 = vmatpush.msra.mxu0 %v780
    %3311 = vmatpush.msra.mxu0 %v772
    %3312 = vmatpush.msra.mxu0 %v764
    %3313 = vmatpush.msra.mxu0 %v756
    %3314 = vmatpush.msra.mxu0 %v748
    %3315 = vmatpush.msra.mxu0 %v740
    %3316 = vmatmul.f32.gmra.mxu0 %v3077
    %v3317 = vpop.f32.mrf.mxu0
    %v3318 = vadd.f32 %v3298, %v3317
    %3319 = vdwg.mxu0
    %3320 = vmatpush.msra.mxu0 %v733
    %3321 = vmatpush.msra.mxu0 %v725
    %3322 = vmatpush.msra.mxu0 %v717
    %3323 = vmatpush.msra.mxu0 %v709
    %3324 = vmatpush.msra.mxu0 %v701
    %3325 = vmatpush.msra.mxu0 %v693
    %3326 = vmatpush.msra.mxu0 %v685
    %3327 = vmatpush.msra.mxu0 %v677
    %3328 = vmatpush.msra.mxu0 %v669
    %3329 = vmatpush.msra.mxu0 %v661
    %3330 = vmatpush.msra.mxu0 %v653
    %3331 = vmatpush.msra.mxu0 %v645
    %3332 = vmatpush.msra.mxu0 %v637
    %3333 = vmatpush.msra.mxu0 %v629
    %3334 = vmatpush.msra.mxu0 %v621
    %3335 = vmatpush.msra.mxu0 %v613
    %3336 = vmatmul.f32.gmra.mxu0 %v3076
    %v3337 = vpop.f32.mrf.mxu0
    %v3338 = vadd.f32 0.0, %v3337
    %3339 = vdwg.mxu0
    %3340 = vmatpush.msra.mxu0 %v861
    %3341 = vmatpush.msra.mxu0 %v853
    %3342 = vmatpush.msra.mxu0 %v845
    %3343 = vmatpush.msra.mxu0 %v837
    %3344 = vmatpush.msra.mxu0 %v829
    %3345 = vmatpush.msra.mxu0 %v821
    %3346 = vmatpush.msra.mxu0 %v813
    %3347 = vmatpush.msra.mxu0 %v805
    %3348 = vmatpush.msra.mxu0 %v797
    %3349 = vmatpush.msra.mxu0 %v789
    %3350 = vmatpush.msra.mxu0 %v781
    %3351 = vmatpush.msra.mxu0 %v773
    %3352 = vmatpush.msra.mxu0 %v765
    %3353 = vmatpush.msra.mxu0 %v757
    %3354 = vmatpush.msra.mxu0 %v749
    %3355 = vmatpush.msra.mxu0 %v741
    %3356 = vmatmul.f32.gmra.mxu0 %v3077
    %v3357 = vpop.f32.mrf.mxu0
    %v3358 = vadd.f32 %v3338, %v3357
    %3359 = vdwg.mxu0
    %3360 = vmatpush.msra.mxu0 %v734
    %3361 = vmatpush.msra.mxu0 %v726
    %3362 = vmatpush.msra.mxu0 %v718
    %3363 = vmatpush.msra.mxu0 %v710
    %3364 = vmatpush.msra.mxu0 %v702
    %3365 = vmatpush.msra.mxu0 %v694
    %3366 = vmatpush.msra.mxu0 %v686
    %3367 = vmatpush.msra.mxu0 %v678
    %3368 = vmatpush.msra.mxu0 %v670
    %3369 = vmatpush.msra.mxu0 %v662
    %3370 = vmatpush.msra.mxu0 %v654
    %3371 = vmatpush.msra.mxu0 %v646
    %3372 = vmatpush.msra.mxu0 %v638
    %3373 = vmatpush.msra.mxu0 %v630
    %3374 = vmatpush.msra.mxu0 %v622
    %3375 = vmatpush.msra.mxu0 %v614
    %3376 = vmatmul.f32.gmra.mxu0 %v3076
    %v3377 = vpop.f32.mrf.mxu0
    %v3378 = vadd.f32 0.0, %v3377
    %3379 = vdwg.mxu0
    %3380 = vmatpush.msra.mxu0 %v862
    %3381 = vmatpush.msra.mxu0 %v854
    %3382 = vmatpush.msra.mxu0 %v846
    %3383 = vmatpush.msra.mxu0 %v838
    %3384 = vmatpush.msra.mxu0 %v830
    %3385 = vmatpush.msra.mxu0 %v822
    %3386 = vmatpush.msra.mxu0 %v814
    %3387 = vmatpush.msra.mxu0 %v806
    %3388 = vmatpush.msra.mxu0 %v798
    %3389 = vmatpush.msra.mxu0 %v790
    %3390 = vmatpush.msra.mxu0 %v782
    %3391 = vmatpush.msra.mxu0 %v774
    %3392 = vmatpush.msra.mxu0 %v766
    %3393 = vmatpush.msra.mxu0 %v758
    %3394 = vmatpush.msra.mxu0 %v750
    %3395 = vmatpush.msra.mxu0 %v742
    %3396 = vmatmul.f32.gmra.mxu0 %v3077
    %v3397 = vpop.f32.mrf.mxu0
    %v3398 = vadd.f32 %v3378, %v3397
    %3399 = vdwg.mxu0
    %v3408 = vrot.slane %v3118, 4
    %v3409 = vrot.slane %v3158, 4
    %v3410 = vrot.slane %v3198, 4
    %v3411 = vrot.slane %v3238, 4
    %v3412 = vrot.slane %v3278, 4
    %v3413 = vrot.slane %v3318, 4
    %v3414 = vrot.slane %v3358, 4
    %v3415 = vrot.slane %v3398, 4
    %v3424 = vadd.f32 %v3058, %v3408
    %v3425 = vadd.f32 %v3059, %v3409
    %v3426 = vadd.f32 %v3060, %v3410
    %v3427 = vadd.f32 %v3061, %v3411
    %v3428 = vadd.f32 %v3062, %v3412
    %v3429 = vadd.f32 %v3063, %v3413
    %v3430 = vadd.f32 %v3064, %v3414
    %v3431 = vadd.f32 %v3065, %v3415
    %v3434 = vrot.slane %v3056, 4
    %v3435 = vrot.slane %v3057, 4
    %3438 = vmatpush.msra.mxu0 %v984
    %3439 = vmatpush.msra.mxu0 %v976
    %3440 = vmatpush.msra.mxu0 %v968
    %3441 = vmatpush.msra.mxu0 %v960
    %3442 = vmatpush.msra.mxu0 %v952
    %3443 = vmatpush.msra.mxu0 %v944
    %3444 = vmatpush.msra.mxu0 %v936
    %3445 = vmatpush.msra.mxu0 %v928
    %3446 = vmatpush.msra.mxu0 %v920
    %3447 = vmatpush.msra.mxu0 %v912
    %3448 = vmatpush.msra.mxu0 %v904
    %3449 = vmatpush.msra.mxu0 %v896
    %3450 = vmatpush.msra.mxu0 %v888
    %3451 = vmatpush.msra.mxu0 %v880
    %3452 = vmatpush.msra.mxu0 %v872
    %3453 = vmatpush.msra.mxu0 %v864
    %3454 = vmatmul.f32.gmra.mxu0 %v3434
    %v3455 = vpop.f32.mrf.mxu0
    %v3456 = vadd.f32 0.0, %v3455
    %3457 = vdwg.mxu0
    %3458 = vmatpush.msra.mxu0 %v1112
    %3459 = vmatpush.msra.mxu0 %v1104
    %3460 = vmatpush.msra.mxu0 %v1096
    %3461 = vmatpush.msra.mxu0 %v1088
    %3462 = vmatpush.msra.mxu0 %v1080
    %3463 = vmatpush.msra.mxu0 %v1072
    %3464 = vmatpush.msra.mxu0 %v1064
    %3465 = vmatpush.msra.mxu0 %v1056
    %3466 = vmatpush.msra.mxu0 %v1048
    %3467 = vmatpush.msra.mxu0 %v1040
    %3468 = vmatpush.msra.mxu0 %v1032
    %3469 = vmatpush.msra.mxu0 %v1024
    %3470 = vmatpush.msra.mxu0 %v1016
    %3471 = vmatpush.msra.mxu0 %v1008
    %3472 = vmatpush.msra.mxu0 %v1000
    %3473 = vmatpush.msra.mxu0 %v992
    %3474 = vmatmul.f32.gmra.mxu0 %v3435
    %v3475 = vpop.f32.mrf.mxu0
    %v3476 = vadd.f32 %v3456, %v3475
    %3477 = vdwg.mxu0
    %3478 = vmatpush.msra.mxu0 %v985
    %3479 = vmatpush.msra.mxu0 %v977
    %3480 = vmatpush.msra.mxu0 %v969
    %3481 = vmatpush.msra.mxu0 %v961
    %3482 = vmatpush.msra.mxu0 %v953
    %3483 = vmatpush.msra.mxu0 %v945
    %3484 = vmatpush.msra.mxu0 %v937
    %3485 = vmatpush.msra.mxu0 %v929
    %3486 = vmatpush.msra.mxu0 %v921
    %3487 = vmatpush.msra.mxu0 %v913
    %3488 = vmatpush.msra.mxu0 %v905
    %3489 = vmatpush.msra.mxu0 %v897
    %3490 = vmatpush.msra.mxu0 %v889
    %3491 = vmatpush.msra.mxu0 %v881
    %3492 = vmatpush.msra.mxu0 %v873
    %3493 = vmatpush.msra.mxu0 %v865
    %3494 = vmatmul.f32.gmra.mxu0 %v3434
    %v3495 = vpop.f32.mrf.mxu0
    %v3496 = vadd.f32 0.0, %v3495
    %3497 = vdwg.mxu0
    %3498 = vmatpush.msra.mxu0 %v1113
    %3499 = vmatpush.msra.mxu0 %v1105
    %3500 = vmatpush.msra.mxu0 %v1097
    %3501 = vmatpush.msra.mxu0 %v1089
    %3502 = vmatpush.msra.mxu0 %v1081
    %3503 = vmatpush.msra.mxu0 %v1073
    %3504 = vmatpush.msra.mxu0 %v1065
    %3505 = vmatpush.msra.mxu0 %v1057
    %3506 = vmatpush.msra.mxu0 %v1049
    %3507 = vmatpush.msra.mxu0 %v1041
    %3508 = vmatpush.msra.mxu0 %v1033
    %3509 = vmatpush.msra.mxu0 %v1025
    %3510 = vmatpush.msra.mxu0 %v1017
    %3511 = vmatpush.msra.mxu0 %v1009
    %3512 = vmatpush.msra.mxu0 %v1001
    %3513 = vmatpush.msra.mxu0 %v993
    %3514 = vmatmul.f32.gmra.mxu0 %v3435
    %v3515 = vpop.f32.mrf.mxu0
    %v3516 = vadd.f32 %v3496, %v3515
    %3517 = vdwg.mxu0
    %3518 = vmatpush.msra.mxu0 %v986
    %3519 = vmatpush.msra.mxu0 %v978
    %3520 = vmatpush.msra.mxu0 %v970
    %3521 = vmatpush.msra.mxu0 %v962
    %3522 = vmatpush.msra.mxu0 %v954
    %3523 = vmatpush.msra.mxu0 %v946
    %3524 = vmatpush.msra.mxu0 %v938
    %3525 = vmatpush.msra.mxu0 %v930
    %3526 = vmatpush.msra.mxu0 %v922
    %3527 = vmatpush.msra.mxu0 %v914
    %3528 = vmatpush.msra.mxu0 %v906
    %3529 = vmatpush.msra.mxu0 %v898
    %3530 = vmatpush.msra.mxu0 %v890
    %3531 = vmatpush.msra.mxu0 %v882
    %3532 = vmatpush.msra.mxu0 %v874
    %3533 = vmatpush.msra.mxu0 %v866
    %3534 = vmatmul.f32.gmra.mxu0 %v3434
    %v3535 = vpop.f32.mrf.mxu0
    %v3536 = vadd.f32 0.0, %v3535
    %3537 = vdwg.mxu0
    %3538 = vmatpush.msra.mxu0 %v1114
    %3539 = vmatpush.msra.mxu0 %v1106
    %3540 = vmatpush.msra.mxu0 %v1098
    %3541 = vmatpush.msra.mxu0 %v1090
    %3542 = vmatpush.msra.mxu0 %v1082
    %3543 = vmatpush.msra.mxu0 %v1074
    %3544 = vmatpush.msra.mxu0 %v1066
    %3545 = vmatpush.msra.mxu0 %v1058
    %3546 = vmatpush.msra.mxu0 %v1050
    %3547 = vmatpush.msra.mxu0 %v1042
    %3548 = vmatpush.msra.mxu0 %v1034
    %3549 = vmatpush.msra.mxu0 %v1026
    %3550 = vmatpush.msra.mxu0 %v1018
    %3551 = vmatpush.msra.mxu0 %v1010
    %3552 = vmatpush.msra.mxu0 %v1002
    %3553 = vmatpush.msra.mxu0 %v994
    %3554 = vmatmul.f32.gmra.mxu0 %v3435
    %v3555 = vpop.f32.mrf.mxu0
    %v3556 = vadd.f32 %v3536, %v3555
    %3557 = vdwg.mxu0
    %3558 = vmatpush.msra.mxu0 %v987
    %3559 = vmatpush.msra.mxu0 %v979
    %3560 = vmatpush.msra.mxu0 %v971
    %3561 = vmatpush.msra.mxu0 %v963
    %3562 = vmatpush.msra.mxu0 %v955
    %3563 = vmatpush.msra.mxu0 %v947
    %3564 = vmatpush.msra.mxu0 %v939
    %3565 = vmatpush.msra.mxu0 %v931
    %3566 = vmatpush.msra.mxu0 %v923
    %3567 = vmatpush.msra.mxu0 %v915
    %3568 = vmatpush.msra.mxu0 %v907
    %3569 = vmatpush.msra.mxu0 %v899
    %3570 = vmatpush.msra.mxu0 %v891
    %3571 = vmatpush.msra.mxu0 %v883
    %3572 = vmatpush.msra.mxu0 %v875
    %3573 = vmatpush.msra.mxu0 %v867
    %3574 = vmatmul.f32.gmra.mxu0 %v3434
    %v3575 = vpop.f32.mrf.mxu0
    %v3576 = vadd.f32 0.0, %v3575
    %3577 = vdwg.mxu0
    %3578 = vmatpush.msra.mxu0 %v1115
    %3579 = vmatpush.msra.mxu0 %v1107
    %3580 = vmatpush.msra.mxu0 %v1099
    %3581 = vmatpush.msra.mxu0 %v1091
    %3582 = vmatpush.msra.mxu0 %v1083
    %3583 = vmatpush.msra.mxu0 %v1075
    %3584 = vmatpush.msra.mxu0 %v1067
    %3585 = vmatpush.msra.mxu0 %v1059
    %3586 = vmatpush.msra.mxu0 %v1051
    %3587 = vmatpush.msra.mxu0 %v1043
    %3588 = vmatpush.msra.mxu0 %v1035
    %3589 = vmatpush.msra.mxu0 %v1027
    %3590 = vmatpush.msra.mxu0 %v1019
    %3591 = vmatpush.msra.mxu0 %v1011
    %3592 = vmatpush.msra.mxu0 %v1003
    %3593 = vmatpush.msra.mxu0 %v995
    %3594 = vmatmul.f32.gmra.mxu0 %v3435
    %v3595 = vpop.f32.mrf.mxu0
    %v3596 = vadd.f32 %v3576, %v3595
    %3597 = vdwg.mxu0
    %3598 = vmatpush.msra.mxu0 %v988
    %3599 = vmatpush.msra.mxu0 %v980
    %3600 = vmatpush.msra.mxu0 %v972
    %3601 = vmatpush.msra.mxu0 %v964
    %3602 = vmatpush.msra.mxu0 %v956
    %3603 = vmatpush.msra.mxu0 %v948
    %3604 = vmatpush.msra.mxu0 %v940
    %3605 = vmatpush.msra.mxu0 %v932
    %3606 = vmatpush.msra.mxu0 %v924
    %3607 = vmatpush.msra.mxu0 %v916
    %3608 = vmatpush.msra.mxu0 %v908
    %3609 = vmatpush.msra.mxu0 %v900
    %3610 = vmatpush.msra.mxu0 %v892
    %3611 = vmatpush.msra.mxu0 %v884
    %3612 = vmatpush.msra.mxu0 %v876
    %3613 = vmatpush.msra.mxu0 %v868
    %3614 = vmatmul.f32.gmra.mxu0 %v3434
    %v3615 = vpop.f32.mrf.mxu0
    %v3616 = vadd.f32 0.0, %v3615
    %3617 = vdwg.mxu0
    %3618 = vmatpush.msra.mxu0 %v1116
    %3619 = vmatpush.msra.mxu0 %v1108
    %3620 = vmatpush.msra.mxu0 %v1100
    %3621 = vmatpush.msra.mxu0 %v1092
    %3622 = vmatpush.msra.mxu0 %v1084
    %3623 = vmatpush.msra.mxu0 %v1076
    %3624 = vmatpush.msra.mxu0 %v1068
    %3625 = vmatpush.msra.mxu0 %v1060
    %3626 = vmatpush.msra.mxu0 %v1052
    %3627 = vmatpush.msra.mxu0 %v1044
    %3628 = vmatpush.msra.mxu0 %v1036
    %3629 = vmatpush.msra.mxu0 %v1028
    %3630 = vmatpush.msra.mxu0 %v1020
    %3631 = vmatpush.msra.mxu0 %v1012
    %3632 = vmatpush.msra.mxu0 %v1004
    %3633 = vmatpush.msra.mxu0 %v996
    %3634 = vmatmul.f32.gmra.mxu0 %v3435
    %v3635 = vpop.f32.mrf.mxu0
    %v3636 = vadd.f32 %v3616, %v3635
    %3637 = vdwg.mxu0
    %3638 = vmatpush.msra.mxu0 %v989
    %3639 = vmatpush.msra.mxu0 %v981
    %3640 = vmatpush.msra.mxu0 %v973
    %3641 = vmatpush.msra.mxu0 %v965
    %3642 = vmatpush.msra.mxu0 %v957
    %3643 = vmatpush.msra.mxu0 %v949
    %3644 = vmatpush.msra.mxu0 %v941
    %3645 = vmatpush.msra.mxu0 %v933
    %3646 = vmatpush.msra.mxu0 %v925
    %3647 = vmatpush.msra.mxu0 %v917
    %3648 = vmatpush.msra.mxu0 %v909
    %3649 = vmatpush.msra.mxu0 %v901
    %3650 = vmatpush.msra.mxu0 %v893
    %3651 = vmatpush.msra.mxu0 %v885
    %3652 = vmatpush.msra.mxu0 %v877
    %3653 = vmatpush.msra.mxu0 %v869
    %3654 = vmatmul.f32.gmra.mxu0 %v3434
    %v3655 = vpop.f32.mrf.mxu0
    %v3656 = vadd.f32 0.0, %v3655
    %3657 = vdwg.mxu0
    %3658 = vmatpush.msra.mxu0 %v1117
    %3659 = vmatpush.msra.mxu0 %v1109
    %3660 = vmatpush.msra.mxu0 %v1101
    %3661 = vmatpush.msra.mxu0 %v1093
    %3662 = vmatpush.msra.mxu0 %v1085
    %3663 = vmatpush.msra.mxu0 %v1077
    %3664 = vmatpush.msra.mxu0 %v1069
    %3665 = vmatpush.msra.mxu0 %v1061
    %3666 = vmatpush.msra.mxu0 %v1053
    %3667 = vmatpush.msra.mxu0 %v1045
    %3668 = vmatpush.msra.mxu0 %v1037
    %3669 = vmatpush.msra.mxu0 %v1029
    %3670 = vmatpush.msra.mxu0 %v1021
    %3671 = vmatpush.msra.mxu0 %v1013
    %3672 = vmatpush.msra.mxu0 %v1005
    %3673 = vmatpush.msra.mxu0 %v997
    %3674 = vmatmul.f32.gmra.mxu0 %v3435
    %v3675 = vpop.f32.mrf.mxu0
    %v3676 = vadd.f32 %v3656, %v3675
    %3677 = vdwg.mxu0
    %3678 = vmatpush.msra.mxu0 %v990
    %3679 = vmatpush.msra.mxu0 %v982
    %3680 = vmatpush.msra.mxu0 %v974
    %3681 = vmatpush.msra.mxu0 %v966
    %3682 = vmatpush.msra.mxu0 %v958
    %3683 = vmatpush.msra.mxu0 %v950
    %3684 = vmatpush.msra.mxu0 %v942
    %3685 = vmatpush.msra.mxu0 %v934
    %3686 = vmatpush.msra.mxu0 %v926
    %3687 = vmatpush.msra.mxu0 %v918
    %3688 = vmatpush.msra.mxu0 %v910
    %3689 = vmatpush.msra.mxu0 %v902
    %3690 = vmatpush.msra.mxu0 %v894
    %3691 = vmatpush.msra.mxu0 %v886
    %3692 = vmatpush.msra.mxu0 %v878
    %3693 = vmatpush.msra.mxu0 %v870
    %3694 = vmatmul.f32.gmra.mxu0 %v3434
    %v3695 = vpop.f32.mrf.mxu0
    %v3696 = vadd.f32 0.0, %v3695
    %3697 = vdwg.mxu0
    %3698 = vmatpush.msra.mxu0 %v1118
    %3699 = vmatpush.msra.mxu0 %v1110
    %3700 = vmatpush.msra.mxu0 %v1102
    %3701 = vmatpush.msra.mxu0 %v1094
    %3702 = vmatpush.msra.mxu0 %v1086
    %3703 = vmatpush.msra.mxu0 %v1078
    %3704 = vmatpush.msra.mxu0 %v1070
    %3705 = vmatpush.msra.mxu0 %v1062
    %3706 = vmatpush.msra.mxu0 %v1054
    %3707 = vmatpush.msra.mxu0 %v1046
    %3708 = vmatpush.msra.mxu0 %v1038
    %3709 = vmatpush.msra.mxu0 %v1030
    %3710 = vmatpush.msra.mxu0 %v1022
    %3711 = vmatpush.msra.mxu0 %v1014
    %3712 = vmatpush.msra.mxu0 %v1006
    %3713 = vmatpush.msra.mxu0 %v998
    %3714 = vmatmul.f32.gmra.mxu0 %v3435
    %v3715 = vpop.f32.mrf.mxu0
    %v3716 = vadd.f32 %v3696, %v3715
    %3717 = vdwg.mxu0
    %3718 = vmatpush.msra.mxu0 %v991
    %3719 = vmatpush.msra.mxu0 %v983
    %3720 = vmatpush.msra.mxu0 %v975
    %3721 = vmatpush.msra.mxu0 %v967
    %3722 = vmatpush.msra.mxu0 %v959
    %3723 = vmatpush.msra.mxu0 %v951
    %3724 = vmatpush.msra.mxu0 %v943
    %3725 = vmatpush.msra.mxu0 %v935
    %3726 = vmatpush.msra.mxu0 %v927
    %3727 = vmatpush.msra.mxu0 %v919
    %3728 = vmatpush.msra.mxu0 %v911
    %3729 = vmatpush.msra.mxu0 %v903
    %3730 = vmatpush.msra.mxu0 %v895
    %3731 = vmatpush.msra.mxu0 %v887
    %3732 = vmatpush.msra.mxu0 %v879
    %3733 = vmatpush.msra.mxu0 %v871
    %3734 = vmatmul.f32.gmra.mxu0 %v3434
    %v3735 = vpop.f32.mrf.mxu0
    %v3736 = vadd.f32 0.0, %v3735
    %3737 = vdwg.mxu0
    %3738 = vmatpush.msra.mxu0 %v1119
    %3739 = vmatpush.msra.mxu0 %v1111
    %3740 = vmatpush.msra.mxu0 %v1103
    %3741 = vmatpush.msra.mxu0 %v1095
    %3742 = vmatpush.msra.mxu0 %v1087
    %3743 = vmatpush.msra.mxu0 %v1079
    %3744 = vmatpush.msra.mxu0 %v1071
    %3745 = vmatpush.msra.mxu0 %v1063
    %3746 = vmatpush.msra.mxu0 %v1055
    %3747 = vmatpush.msra.mxu0 %v1047
    %3748 = vmatpush.msra.mxu0 %v1039
    %3749 = vmatpush.msra.mxu0 %v1031
    %3750 = vmatpush.msra.mxu0 %v1023
    %3751 = vmatpush.msra.mxu0 %v1015
    %3752 = vmatpush.msra.mxu0 %v1007
    %3753 = vmatpush.msra.mxu0 %v999
    %3754 = vmatmul.f32.gmra.mxu0 %v3435
    %v3755 = vpop.f32.mrf.mxu0
    %v3756 = vadd.f32 %v3736, %v3755
    %3757 = vdwg.mxu0
    %v3766 = vrot.slane %v3476, 6
    %v3767 = vrot.slane %v3516, 6
    %v3768 = vrot.slane %v3556, 6
    %v3769 = vrot.slane %v3596, 6
    %v3770 = vrot.slane %v3636, 6
    %v3771 = vrot.slane %v3676, 6
    %v3772 = vrot.slane %v3716, 6
    %v3773 = vrot.slane %v3756, 6
    %v3782 = vadd.f32 %v3066, %v3766
    %v3783 = vadd.f32 %v3067, %v3767
    %v3784 = vadd.f32 %v3068, %v3768
    %v3785 = vadd.f32 %v3069, %v3769
    %v3786 = vadd.f32 %v3070, %v3770
    %v3787 = vadd.f32 %v3071, %v3771
    %v3788 = vadd.f32 %v3072, %v3772
    %v3789 = vadd.f32 %v3073, %v3773
    %v3790 = vxor.u32 %v3424, 2147483648
    %v3791 = vxor.u32 %v3425, 2147483648
    %v3792 = vmul.f32 %v3790, 1.442695
    %v3793 = vpow.pop %v3792
    %v3794 = vmul.f32 %v3791, 1.442695
    %v3795 = vpow.pop %v3794
    %v3796 = vadd.f32 %v3793, 1.0
    %v3797 = vadd.f32 %v3795, 1.0
    %v3798 = vrcp.pop %v3796
    %v3799 = vmul.f32 %v3796, %v3798
    %v3800 = vsub.f32 1.0, %v3799
    %v3801 = vmul.f32 %v3798, %v3800
    %v3802 = vadd.f32 %v3798, %v3801
    %vm3803 = vweird.f32 %v3796
    %vm3804 = vweird.f32 %v3798
    %vm3805 = vmor %vm3803, %vm3804
    %v3806 = vsel %vm3805, %v3798, %v3802
    %v3807 = vand.u32 2147483647, %v3796
    %vm3808 = vcmp.eq.f32.partialorder %v3807, 8.507059e+37
    %v3809 = vand.u32 %v3796, 2147483648
    %v3810 = vor.u32 1.1754944e-38, %v3809
    %v3811 = vsel %vm3808, %v3810, %v3806
    %v3812 = vmul.f32 1.0, %v3811
    %v3813 = vrcp.pop %v3797
    %v3814 = vmul.f32 %v3797, %v3813
    %v3815 = vsub.f32 1.0, %v3814
    %v3816 = vmul.f32 %v3813, %v3815
    %v3817 = vadd.f32 %v3813, %v3816
    %vm3818 = vweird.f32 %v3797
    %vm3819 = vweird.f32 %v3813
    %vm3820 = vmor %vm3818, %vm3819
    %v3821 = vsel %vm3820, %v3813, %v3817
    %v3822 = vand.u32 2147483647, %v3797
    %vm3823 = vcmp.eq.f32.partialorder %v3822, 8.507059e+37
    %v3824 = vand.u32 %v3797, 2147483648
    %v3825 = vor.u32 1.1754944e-38, %v3824
    %v3826 = vsel %vm3823, %v3825, %v3821
    %v3827 = vmul.f32 1.0, %v3826
    %v3828 = vxor.u32 %v3426, 2147483648
    %v3829 = vxor.u32 %v3427, 2147483648
    %v3830 = vmul.f32 %v3828, 1.442695
    %v3831 = vpow.pop %v3830
    %v3832 = vmul.f32 %v3829, 1.442695
    %v3833 = vpow.pop %v3832
    %v3834 = vadd.f32 %v3831, 1.0
    %v3835 = vadd.f32 %v3833, 1.0
    %v3836 = vrcp.pop %v3834
    %v3837 = vmul.f32 %v3834, %v3836
    %v3838 = vsub.f32 1.0, %v3837
    %v3839 = vmul.f32 %v3836, %v3838
    %v3840 = vadd.f32 %v3836, %v3839
    %vm3841 = vweird.f32 %v3834
    %vm3842 = vweird.f32 %v3836
    %vm3843 = vmor %vm3841, %vm3842
    %v3844 = vsel %vm3843, %v3836, %v3840
    %v3845 = vand.u32 2147483647, %v3834
    %vm3846 = vcmp.eq.f32.partialorder %v3845, 8.507059e+37
    %v3847 = vand.u32 %v3834, 2147483648
    %v3848 = vor.u32 1.1754944e-38, %v3847
    %v3849 = vsel %vm3846, %v3848, %v3844
    %v3850 = vmul.f32 1.0, %v3849
    %v3851 = vrcp.pop %v3835
    %v3852 = vmul.f32 %v3835, %v3851
    %v3853 = vsub.f32 1.0, %v3852
    %v3854 = vmul.f32 %v3851, %v3853
    %v3855 = vadd.f32 %v3851, %v3854
    %vm3856 = vweird.f32 %v3835
    %vm3857 = vweird.f32 %v3851
    %vm3858 = vmor %vm3856, %vm3857
    %v3859 = vsel %vm3858, %v3851, %v3855
    %v3860 = vand.u32 2147483647, %v3835
    %vm3861 = vcmp.eq.f32.partialorder %v3860, 8.507059e+37
    %v3862 = vand.u32 %v3835, 2147483648
    %v3863 = vor.u32 1.1754944e-38, %v3862
    %v3864 = vsel %vm3861, %v3863, %v3859
    %v3865 = vmul.f32 1.0, %v3864
    %v3866 = vtanh.pop %v3428
    %v3867 = vtanh.pop %v3429
    %v3868 = vxor.u32 %v3430, 2147483648
    %v3869 = vxor.u32 %v3431, 2147483648
    %v3870 = vmul.f32 %v3868, 1.442695
    %v3871 = vpow.pop %v3870
    %v3872 = vmul.f32 %v3869, 1.442695
    %v3873 = vpow.pop %v3872
    %v3874 = vadd.f32 %v3871, 1.0
    %v3875 = vadd.f32 %v3873, 1.0
    %v3876 = vrcp.pop %v3874
    %v3877 = vmul.f32 %v3874, %v3876
    %v3878 = vsub.f32 1.0, %v3877
    %v3879 = vmul.f32 %v3876, %v3878
    %v3880 = vadd.f32 %v3876, %v3879
    %vm3881 = vweird.f32 %v3874
    %vm3882 = vweird.f32 %v3876
    %vm3883 = vmor %vm3881, %vm3882
    %v3884 = vsel %vm3883, %v3876, %v3880
    %v3885 = vand.u32 2147483647, %v3874
    %vm3886 = vcmp.eq.f32.partialorder %v3885, 8.507059e+37
    %v3887 = vand.u32 %v3874, 2147483648
    %v3888 = vor.u32 1.1754944e-38, %v3887
    %v3889 = vsel %vm3886, %v3888, %v3884
    %v3890 = vmul.f32 1.0, %v3889
    %v3891 = vrcp.pop %v3875
    %v3892 = vmul.f32 %v3875, %v3891
    %v3893 = vsub.f32 1.0, %v3892
    %v3894 = vmul.f32 %v3891, %v3893
    %v3895 = vadd.f32 %v3891, %v3894
    %vm3896 = vweird.f32 %v3875
    %vm3897 = vweird.f32 %v3891
    %vm3898 = vmor %vm3896, %vm3897
    %v3899 = vsel %vm3898, %v3891, %v3895
    %v3900 = vand.u32 2147483647, %v3875
    %vm3901 = vcmp.eq.f32.partialorder %v3900, 8.507059e+37
    %v3902 = vand.u32 %v3875, 2147483648
    %v3903 = vor.u32 1.1754944e-38, %v3902
    %v3904 = vsel %vm3901, %v3903, %v3899
    %v3905 = vmul.f32 1.0, %v3904
    %v3908 = vrot.slane %v2920, 6
    %v3909 = vrot.slane %v2921, 6
    %v3912 = vmul.f32 %v3850, %v3908
    %v3913 = vmul.f32 %v3865, %v3909
    %v3914 = vmul.f32 %v3812, %v3866
    %v3915 = vmul.f32 %v3827, %v3867
    %v3916 = vadd.f32 %v3912, %v3914
    %v3917 = vadd.f32 %v3913, %v3915
    %v3918 = vtanh.pop %v3916
    %v3919 = vtanh.pop %v3917
    %v3920 = vmul.f32 %v3890, %v3918
    %v3921 = vmul.f32 %v3905, %v3919
    %v3922 = vxor.u32 %v3782, 2147483648
    %v3923 = vxor.u32 %v3783, 2147483648
    %v3924 = vmul.f32 %v3922, 1.442695
    %v3925 = vpow.pop %v3924
    %v3926 = vmul.f32 %v3923, 1.442695
    %v3927 = vpow.pop %v3926
    %v3928 = vadd.f32 %v3925, 1.0
    %v3929 = vadd.f32 %v3927, 1.0
    %v3930 = vrcp.pop %v3928
    %v3931 = vmul.f32 %v3928, %v3930
    %v3932 = vsub.f32 1.0, %v3931
    %v3933 = vmul.f32 %v3930, %v3932
    %v3934 = vadd.f32 %v3930, %v3933
    %vm3935 = vweird.f32 %v3928
    %vm3936 = vweird.f32 %v3930
    %vm3937 = vmor %vm3935, %vm3936
    %v3938 = vsel %vm3937, %v3930, %v3934
    %v3939 = vand.u32 2147483647, %v3928
    %vm3940 = vcmp.eq.f32.partialorder %v3939, 8.507059e+37
    %v3941 = vand.u32 %v3928, 2147483648
    %v3942 = vor.u32 1.1754944e-38, %v3941
    %v3943 = vsel %vm3940, %v3942, %v3938
    %v3944 = vmul.f32 1.0, %v3943
    %v3945 = vrcp.pop %v3929
    %v3946 = vmul.f32 %v3929, %v3945
    %v3947 = vsub.f32 1.0, %v3946
    %v3948 = vmul.f32 %v3945, %v3947
    %v3949 = vadd.f32 %v3945, %v3948
    %vm3950 = vweird.f32 %v3929
    %vm3951 = vweird.f32 %v3945
    %vm3952 = vmor %vm3950, %vm3951
    %v3953 = vsel %vm3952, %v3945, %v3949
    %v3954 = vand.u32 2147483647, %v3929
    %vm3955 = vcmp.eq.f32.partialorder %v3954, 8.507059e+37
    %v3956 = vand.u32 %v3929, 2147483648
    %v3957 = vor.u32 1.1754944e-38, %v3956
    %v3958 = vsel %vm3955, %v3957, %v3953
    %v3959 = vmul.f32 1.0, %v3958
    %v3960 = vxor.u32 %v3784, 2147483648
    %v3961 = vxor.u32 %v3785, 2147483648
    %v3962 = vmul.f32 %v3960, 1.442695
    %v3963 = vpow.pop %v3962
    %v3964 = vmul.f32 %v3961, 1.442695
    %v3965 = vpow.pop %v3964
    %v3966 = vadd.f32 %v3963, 1.0
    %v3967 = vadd.f32 %v3965, 1.0
    %v3968 = vrcp.pop %v3966
    %v3969 = vmul.f32 %v3966, %v3968
    %v3970 = vsub.f32 1.0, %v3969
    %v3971 = vmul.f32 %v3968, %v3970
    %v3972 = vadd.f32 %v3968, %v3971
    %vm3973 = vweird.f32 %v3966
    %vm3974 = vweird.f32 %v3968
    %vm3975 = vmor %vm3973, %vm3974
    %v3976 = vsel %vm3975, %v3968, %v3972
    %v3977 = vand.u32 2147483647, %v3966
    %vm3978 = vcmp.eq.f32.partialorder %v3977, 8.507059e+37
    %v3979 = vand.u32 %v3966, 2147483648
    %v3980 = vor.u32 1.1754944e-38, %v3979
    %v3981 = vsel %vm3978, %v3980, %v3976
    %v3982 = vmul.f32 1.0, %v3981
    %v3983 = vrcp.pop %v3967
    %v3984 = vmul.f32 %v3967, %v3983
    %v3985 = vsub.f32 1.0, %v3984
    %v3986 = vmul.f32 %v3983, %v3985
    %v3987 = vadd.f32 %v3983, %v3986
    %vm3988 = vweird.f32 %v3967
    %vm3989 = vweird.f32 %v3983
    %vm3990 = vmor %vm3988, %vm3989
    %v3991 = vsel %vm3990, %v3983, %v3987
    %v3992 = vand.u32 2147483647, %v3967
    %vm3993 = vcmp.eq.f32.partialorder %v3992, 8.507059e+37
    %v3994 = vand.u32 %v3967, 2147483648
    %v3995 = vor.u32 1.1754944e-38, %v3994
    %v3996 = vsel %vm3993, %v3995, %v3991
    %v3997 = vmul.f32 1.0, %v3996
    %v3998 = vtanh.pop %v3786
    %v3999 = vtanh.pop %v3787
    %v4000 = vxor.u32 %v3788, 2147483648
    %v4001 = vxor.u32 %v3789, 2147483648
    %v4002 = vmul.f32 %v4000, 1.442695
    %v4003 = vpow.pop %v4002
    %v4004 = vmul.f32 %v4001, 1.442695
    %v4005 = vpow.pop %v4004
    %v4006 = vadd.f32 %v4003, 1.0
    %v4007 = vadd.f32 %v4005, 1.0
    %v4008 = vrcp.pop %v4006
    %v4009 = vmul.f32 %v4006, %v4008
    %v4010 = vsub.f32 1.0, %v4009
    %v4011 = vmul.f32 %v4008, %v4010
    %v4012 = vadd.f32 %v4008, %v4011
    %vm4013 = vweird.f32 %v4006
    %vm4014 = vweird.f32 %v4008
    %vm4015 = vmor %vm4013, %vm4014
    %v4016 = vsel %vm4015, %v4008, %v4012
    %v4017 = vand.u32 2147483647, %v4006
    %vm4018 = vcmp.eq.f32.partialorder %v4017, 8.507059e+37
    %v4019 = vand.u32 %v4006, 2147483648
    %v4020 = vor.u32 1.1754944e-38, %v4019
    %v4021 = vsel %vm4018, %v4020, %v4016
    %v4022 = vmul.f32 1.0, %v4021
    %v4023 = vrcp.pop %v4007
    %v4024 = vmul.f32 %v4007, %v4023
    %v4025 = vsub.f32 1.0, %v4024
    %v4026 = vmul.f32 %v4023, %v4025
    %v4027 = vadd.f32 %v4023, %v4026
    %vm4028 = vweird.f32 %v4007
    %vm4029 = vweird.f32 %v4023
    %vm4030 = vmor %vm4028, %vm4029
    %v4031 = vsel %vm4030, %v4023, %v4027
    %v4032 = vand.u32 2147483647, %v4007
    %vm4033 = vcmp.eq.f32.partialorder %v4032, 8.507059e+37
    %v4034 = vand.u32 %v4007, 2147483648
    %v4035 = vor.u32 1.1754944e-38, %v4034
    %v4036 = vsel %vm4033, %v4035, %v4031
    %v4037 = vmul.f32 1.0, %v4036
    %v4040 = vrot.slane %v3052, 2
    %v4041 = vrot.slane %v3053, 2
    %v4044 = vmul.f32 %v3982, %v4040
    %v4045 = vmul.f32 %v3997, %v4041
    %v4046 = vmul.f32 %v3944, %v3998
    %v4047 = vmul.f32 %v3959, %v3999
    %v4048 = vadd.f32 %v4044, %v4046
    %v4049 = vadd.f32 %v4045, %v4047
    %v4050 = vtanh.pop %v4048
    %v4051 = vtanh.pop %v4049
    %v4052 = vmul.f32 %v4022, %v4050
    %v4053 = vmul.f32 %v4037, %v4051
    %v4054 = vld [vmem:[#allocation2] sm:$0xc0]
    %v4055 = vld [vmem:[#allocation2 + $0x8] sm:$0xc0]
    %v4056 = vld [vmem:[#allocation2 + $0x10] sm:$0xc0]
    %v4057 = vld [vmem:[#allocation2 + $0x18] sm:$0xc0]
    %v4058 = vld [vmem:[#allocation2 + $0x20] sm:$0xc0]
    %v4059 = vld [vmem:[#allocation2 + $0x28] sm:$0xc0]
    %v4060 = vld [vmem:[#allocation2 + $0x30] sm:$0xc0]
    %v4061 = vld [vmem:[#allocation2 + $0x38] sm:$0xc0]
    %v4062 = vld [vmem:[#allocation2 + $0xc0] sm:$0x3]
    %v4063 = vld [vmem:[#allocation2 + $0xc8] sm:$0x3]
    %v4064 = vld [vmem:[#allocation2 + $0xd0] sm:$0x3]
    %v4065 = vld [vmem:[#allocation2 + $0xd8] sm:$0x3]
    %v4066 = vld [vmem:[#allocation2 + $0xe0] sm:$0x3]
    %v4067 = vld [vmem:[#allocation2 + $0xe8] sm:$0x3]
    %v4068 = vld [vmem:[#allocation2 + $0xf0] sm:$0x3]
    %v4069 = vld [vmem:[#allocation2 + $0xf8] sm:$0x3]
    %v4072 = vrot.slane %v3920, 4
    %v4073 = vrot.slane %v3921, 4
    %4076 = vmatpush.msra.mxu0 %v727
    %4077 = vmatpush.msra.mxu0 %v719
    %4078 = vmatpush.msra.mxu0 %v711
    %4079 = vmatpush.msra.mxu0 %v703
    %4080 = vmatpush.msra.mxu0 %v695
    %4081 = vmatpush.msra.mxu0 %v687
    %4082 = vmatpush.msra.mxu0 %v679
    %4083 = vmatpush.msra.mxu0 %v671
    %4084 = vmatpush.msra.mxu0 %v663
    %4085 = vmatpush.msra.mxu0 %v655
    %4086 = vmatpush.msra.mxu0 %v647
    %4087 = vmatpush.msra.mxu0 %v639
    %4088 = vmatpush.msra.mxu0 %v631
    %4089 = vmatpush.msra.mxu0 %v623
    %4090 = vmatpush.msra.mxu0 %v615
    %4091 = vmatpush.msra.mxu0 %v607
    %4092 = vmatmul.f32.gmra.mxu0 %v4072
    %v4093 = vpop.f32.mrf.mxu0
    %v4094 = vadd.f32 0.0, %v4093
    %4095 = vdwg.mxu0
    %4096 = vmatpush.msra.mxu0 %v855
    %4097 = vmatpush.msra.mxu0 %v847
    %4098 = vmatpush.msra.mxu0 %v839
    %4099 = vmatpush.msra.mxu0 %v831
    %4100 = vmatpush.msra.mxu0 %v823
    %4101 = vmatpush.msra.mxu0 %v815
    %4102 = vmatpush.msra.mxu0 %v807
    %4103 = vmatpush.msra.mxu0 %v799
    %4104 = vmatpush.msra.mxu0 %v791
    %4105 = vmatpush.msra.mxu0 %v783
    %4106 = vmatpush.msra.mxu0 %v775
    %4107 = vmatpush.msra.mxu0 %v767
    %4108 = vmatpush.msra.mxu0 %v759
    %4109 = vmatpush.msra.mxu0 %v751
    %4110 = vmatpush.msra.mxu0 %v743
    %4111 = vmatpush.msra.mxu0 %v735
    %4112 = vmatmul.f32.gmra.mxu0 %v4073
    %v4113 = vpop.f32.mrf.mxu0
    %v4114 = vadd.f32 %v4094, %v4113
    %4115 = vdwg.mxu0
    %4116 = vmatpush.msra.mxu0 %v728
    %4117 = vmatpush.msra.mxu0 %v720
    %4118 = vmatpush.msra.mxu0 %v712
    %4119 = vmatpush.msra.mxu0 %v704
    %4120 = vmatpush.msra.mxu0 %v696
    %4121 = vmatpush.msra.mxu0 %v688
    %4122 = vmatpush.msra.mxu0 %v680
    %4123 = vmatpush.msra.mxu0 %v672
    %4124 = vmatpush.msra.mxu0 %v664
    %4125 = vmatpush.msra.mxu0 %v656
    %4126 = vmatpush.msra.mxu0 %v648
    %4127 = vmatpush.msra.mxu0 %v640
    %4128 = vmatpush.msra.mxu0 %v632
    %4129 = vmatpush.msra.mxu0 %v624
    %4130 = vmatpush.msra.mxu0 %v616
    %4131 = vmatpush.msra.mxu0 %v608
    %4132 = vmatmul.f32.gmra.mxu0 %v4072
    %v4133 = vpop.f32.mrf.mxu0
    %v4134 = vadd.f32 0.0, %v4133
    %4135 = vdwg.mxu0
    %4136 = vmatpush.msra.mxu0 %v856
    %4137 = vmatpush.msra.mxu0 %v848
    %4138 = vmatpush.msra.mxu0 %v840
    %4139 = vmatpush.msra.mxu0 %v832
    %4140 = vmatpush.msra.mxu0 %v824
    %4141 = vmatpush.msra.mxu0 %v816
    %4142 = vmatpush.msra.mxu0 %v808
    %4143 = vmatpush.msra.mxu0 %v800
    %4144 = vmatpush.msra.mxu0 %v792
    %4145 = vmatpush.msra.mxu0 %v784
    %4146 = vmatpush.msra.mxu0 %v776
    %4147 = vmatpush.msra.mxu0 %v768
    %4148 = vmatpush.msra.mxu0 %v760
    %4149 = vmatpush.msra.mxu0 %v752
    %4150 = vmatpush.msra.mxu0 %v744
    %4151 = vmatpush.msra.mxu0 %v736
    %4152 = vmatmul.f32.gmra.mxu0 %v4073
    %v4153 = vpop.f32.mrf.mxu0
    %v4154 = vadd.f32 %v4134, %v4153
    %4155 = vdwg.mxu0
    %4156 = vmatpush.msra.mxu0 %v729
    %4157 = vmatpush.msra.mxu0 %v721
    %4158 = vmatpush.msra.mxu0 %v713
    %4159 = vmatpush.msra.mxu0 %v705
    %4160 = vmatpush.msra.mxu0 %v697
    %4161 = vmatpush.msra.mxu0 %v689
    %4162 = vmatpush.msra.mxu0 %v681
    %4163 = vmatpush.msra.mxu0 %v673
    %4164 = vmatpush.msra.mxu0 %v665
    %4165 = vmatpush.msra.mxu0 %v657
    %4166 = vmatpush.msra.mxu0 %v649
    %4167 = vmatpush.msra.mxu0 %v641
    %4168 = vmatpush.msra.mxu0 %v633
    %4169 = vmatpush.msra.mxu0 %v625
    %4170 = vmatpush.msra.mxu0 %v617
    %4171 = vmatpush.msra.mxu0 %v609
    %4172 = vmatmul.f32.gmra.mxu0 %v4072
    %v4173 = vpop.f32.mrf.mxu0
    %v4174 = vadd.f32 0.0, %v4173
    %4175 = vdwg.mxu0
    %4176 = vmatpush.msra.mxu0 %v857
    %4177 = vmatpush.msra.mxu0 %v849
    %4178 = vmatpush.msra.mxu0 %v841
    %4179 = vmatpush.msra.mxu0 %v833
    %4180 = vmatpush.msra.mxu0 %v825
    %4181 = vmatpush.msra.mxu0 %v817
    %4182 = vmatpush.msra.mxu0 %v809
    %4183 = vmatpush.msra.mxu0 %v801
    %4184 = vmatpush.msra.mxu0 %v793
    %4185 = vmatpush.msra.mxu0 %v785
    %4186 = vmatpush.msra.mxu0 %v777
    %4187 = vmatpush.msra.mxu0 %v769
    %4188 = vmatpush.msra.mxu0 %v761
    %4189 = vmatpush.msra.mxu0 %v753
    %4190 = vmatpush.msra.mxu0 %v745
    %4191 = vmatpush.msra.mxu0 %v737
    %4192 = vmatmul.f32.gmra.mxu0 %v4073
    %v4193 = vpop.f32.mrf.mxu0
    %v4194 = vadd.f32 %v4174, %v4193
    %4195 = vdwg.mxu0
    %4196 = vmatpush.msra.mxu0 %v730
    %4197 = vmatpush.msra.mxu0 %v722
    %4198 = vmatpush.msra.mxu0 %v714
    %4199 = vmatpush.msra.mxu0 %v706
    %4200 = vmatpush.msra.mxu0 %v698
    %4201 = vmatpush.msra.mxu0 %v690
    %4202 = vmatpush.msra.mxu0 %v682
    %4203 = vmatpush.msra.mxu0 %v674
    %4204 = vmatpush.msra.mxu0 %v666
    %4205 = vmatpush.msra.mxu0 %v658
    %4206 = vmatpush.msra.mxu0 %v650
    %4207 = vmatpush.msra.mxu0 %v642
    %4208 = vmatpush.msra.mxu0 %v634
    %4209 = vmatpush.msra.mxu0 %v626
    %4210 = vmatpush.msra.mxu0 %v618
    %4211 = vmatpush.msra.mxu0 %v610
    %4212 = vmatmul.f32.gmra.mxu0 %v4072
    %v4213 = vpop.f32.mrf.mxu0
    %v4214 = vadd.f32 0.0, %v4213
    %4215 = vdwg.mxu0
    %4216 = vmatpush.msra.mxu0 %v858
    %4217 = vmatpush.msra.mxu0 %v850
    %4218 = vmatpush.msra.mxu0 %v842
    %4219 = vmatpush.msra.mxu0 %v834
    %4220 = vmatpush.msra.mxu0 %v826
    %4221 = vmatpush.msra.mxu0 %v818
    %4222 = vmatpush.msra.mxu0 %v810
    %4223 = vmatpush.msra.mxu0 %v802
    %4224 = vmatpush.msra.mxu0 %v794
    %4225 = vmatpush.msra.mxu0 %v786
    %4226 = vmatpush.msra.mxu0 %v778
    %4227 = vmatpush.msra.mxu0 %v770
    %4228 = vmatpush.msra.mxu0 %v762
    %4229 = vmatpush.msra.mxu0 %v754
    %4230 = vmatpush.msra.mxu0 %v746
    %4231 = vmatpush.msra.mxu0 %v738
    %4232 = vmatmul.f32.gmra.mxu0 %v4073
    %v4233 = vpop.f32.mrf.mxu0
    %v4234 = vadd.f32 %v4214, %v4233
    %4235 = vdwg.mxu0
    %4236 = vmatpush.msra.mxu0 %v731
    %4237 = vmatpush.msra.mxu0 %v723
    %4238 = vmatpush.msra.mxu0 %v715
    %4239 = vmatpush.msra.mxu0 %v707
    %4240 = vmatpush.msra.mxu0 %v699
    %4241 = vmatpush.msra.mxu0 %v691
    %4242 = vmatpush.msra.mxu0 %v683
    %4243 = vmatpush.msra.mxu0 %v675
    %4244 = vmatpush.msra.mxu0 %v667
    %4245 = vmatpush.msra.mxu0 %v659
    %4246 = vmatpush.msra.mxu0 %v651
    %4247 = vmatpush.msra.mxu0 %v643
    %4248 = vmatpush.msra.mxu0 %v635
    %4249 = vmatpush.msra.mxu0 %v627
    %4250 = vmatpush.msra.mxu0 %v619
    %4251 = vmatpush.msra.mxu0 %v611
    %4252 = vmatmul.f32.gmra.mxu0 %v4072
    %v4253 = vpop.f32.mrf.mxu0
    %v4254 = vadd.f32 0.0, %v4253
    %4255 = vdwg.mxu0
    %4256 = vmatpush.msra.mxu0 %v859
    %4257 = vmatpush.msra.mxu0 %v851
    %4258 = vmatpush.msra.mxu0 %v843
    %4259 = vmatpush.msra.mxu0 %v835
    %4260 = vmatpush.msra.mxu0 %v827
    %4261 = vmatpush.msra.mxu0 %v819
    %4262 = vmatpush.msra.mxu0 %v811
    %4263 = vmatpush.msra.mxu0 %v803
    %4264 = vmatpush.msra.mxu0 %v795
    %4265 = vmatpush.msra.mxu0 %v787
    %4266 = vmatpush.msra.mxu0 %v779
    %4267 = vmatpush.msra.mxu0 %v771
    %4268 = vmatpush.msra.mxu0 %v763
    %4269 = vmatpush.msra.mxu0 %v755
    %4270 = vmatpush.msra.mxu0 %v747
    %4271 = vmatpush.msra.mxu0 %v739
    %4272 = vmatmul.f32.gmra.mxu0 %v4073
    %v4273 = vpop.f32.mrf.mxu0
    %v4274 = vadd.f32 %v4254, %v4273
    %4275 = vdwg.mxu0
    %4276 = vmatpush.msra.mxu0 %v732
    %4277 = vmatpush.msra.mxu0 %v724
    %4278 = vmatpush.msra.mxu0 %v716
    %4279 = vmatpush.msra.mxu0 %v708
    %4280 = vmatpush.msra.mxu0 %v700
    %4281 = vmatpush.msra.mxu0 %v692
    %4282 = vmatpush.msra.mxu0 %v684
    %4283 = vmatpush.msra.mxu0 %v676
    %4284 = vmatpush.msra.mxu0 %v668
    %4285 = vmatpush.msra.mxu0 %v660
    %4286 = vmatpush.msra.mxu0 %v652
    %4287 = vmatpush.msra.mxu0 %v644
    %4288 = vmatpush.msra.mxu0 %v636
    %4289 = vmatpush.msra.mxu0 %v628
    %4290 = vmatpush.msra.mxu0 %v620
    %4291 = vmatpush.msra.mxu0 %v612
    %4292 = vmatmul.f32.gmra.mxu0 %v4072
    %v4293 = vpop.f32.mrf.mxu0
    %v4294 = vadd.f32 0.0, %v4293
    %4295 = vdwg.mxu0
    %4296 = vmatpush.msra.mxu0 %v860
    %4297 = vmatpush.msra.mxu0 %v852
    %4298 = vmatpush.msra.mxu0 %v844
    %4299 = vmatpush.msra.mxu0 %v836
    %4300 = vmatpush.msra.mxu0 %v828
    %4301 = vmatpush.msra.mxu0 %v820
    %4302 = vmatpush.msra.mxu0 %v812
    %4303 = vmatpush.msra.mxu0 %v804
    %4304 = vmatpush.msra.mxu0 %v796
    %4305 = vmatpush.msra.mxu0 %v788
    %4306 = vmatpush.msra.mxu0 %v780
    %4307 = vmatpush.msra.mxu0 %v772
    %4308 = vmatpush.msra.mxu0 %v764
    %4309 = vmatpush.msra.mxu0 %v756
    %4310 = vmatpush.msra.mxu0 %v748
    %4311 = vmatpush.msra.mxu0 %v740
    %4312 = vmatmul.f32.gmra.mxu0 %v4073
    %v4313 = vpop.f32.mrf.mxu0
    %v4314 = vadd.f32 %v4294, %v4313
    %4315 = vdwg.mxu0
    %4316 = vmatpush.msra.mxu0 %v733
    %4317 = vmatpush.msra.mxu0 %v725
    %4318 = vmatpush.msra.mxu0 %v717
    %4319 = vmatpush.msra.mxu0 %v709
    %4320 = vmatpush.msra.mxu0 %v701
    %4321 = vmatpush.msra.mxu0 %v693
    %4322 = vmatpush.msra.mxu0 %v685
    %4323 = vmatpush.msra.mxu0 %v677
    %4324 = vmatpush.msra.mxu0 %v669
    %4325 = vmatpush.msra.mxu0 %v661
    %4326 = vmatpush.msra.mxu0 %v653
    %4327 = vmatpush.msra.mxu0 %v645
    %4328 = vmatpush.msra.mxu0 %v637
    %4329 = vmatpush.msra.mxu0 %v629
    %4330 = vmatpush.msra.mxu0 %v621
    %4331 = vmatpush.msra.mxu0 %v613
    %4332 = vmatmul.f32.gmra.mxu0 %v4072
    %v4333 = vpop.f32.mrf.mxu0
    %v4334 = vadd.f32 0.0, %v4333
    %4335 = vdwg.mxu0
    %4336 = vmatpush.msra.mxu0 %v861
    %4337 = vmatpush.msra.mxu0 %v853
    %4338 = vmatpush.msra.mxu0 %v845
    %4339 = vmatpush.msra.mxu0 %v837
    %4340 = vmatpush.msra.mxu0 %v829
    %4341 = vmatpush.msra.mxu0 %v821
    %4342 = vmatpush.msra.mxu0 %v813
    %4343 = vmatpush.msra.mxu0 %v805
    %4344 = vmatpush.msra.mxu0 %v797
    %4345 = vmatpush.msra.mxu0 %v789
    %4346 = vmatpush.msra.mxu0 %v781
    %4347 = vmatpush.msra.mxu0 %v773
    %4348 = vmatpush.msra.mxu0 %v765
    %4349 = vmatpush.msra.mxu0 %v757
    %4350 = vmatpush.msra.mxu0 %v749
    %4351 = vmatpush.msra.mxu0 %v741
    %4352 = vmatmul.f32.gmra.mxu0 %v4073
    %v4353 = vpop.f32.mrf.mxu0
    %v4354 = vadd.f32 %v4334, %v4353
    %4355 = vdwg.mxu0
    %4356 = vmatpush.msra.mxu0 %v734
    %4357 = vmatpush.msra.mxu0 %v726
    %4358 = vmatpush.msra.mxu0 %v718
    %4359 = vmatpush.msra.mxu0 %v710
    %4360 = vmatpush.msra.mxu0 %v702
    %4361 = vmatpush.msra.mxu0 %v694
    %4362 = vmatpush.msra.mxu0 %v686
    %4363 = vmatpush.msra.mxu0 %v678
    %4364 = vmatpush.msra.mxu0 %v670
    %4365 = vmatpush.msra.mxu0 %v662
    %4366 = vmatpush.msra.mxu0 %v654
    %4367 = vmatpush.msra.mxu0 %v646
    %4368 = vmatpush.msra.mxu0 %v638
    %4369 = vmatpush.msra.mxu0 %v630
    %4370 = vmatpush.msra.mxu0 %v622
    %4371 = vmatpush.msra.mxu0 %v614
    %4372 = vmatmul.f32.gmra.mxu0 %v4072
    %v4373 = vpop.f32.mrf.mxu0
    %v4374 = vadd.f32 0.0, %v4373
    %4375 = vdwg.mxu0
    %4376 = vmatpush.msra.mxu0 %v862
    %4377 = vmatpush.msra.mxu0 %v854
    %4378 = vmatpush.msra.mxu0 %v846
    %4379 = vmatpush.msra.mxu0 %v838
    %4380 = vmatpush.msra.mxu0 %v830
    %4381 = vmatpush.msra.mxu0 %v822
    %4382 = vmatpush.msra.mxu0 %v814
    %4383 = vmatpush.msra.mxu0 %v806
    %4384 = vmatpush.msra.mxu0 %v798
    %4385 = vmatpush.msra.mxu0 %v790
    %4386 = vmatpush.msra.mxu0 %v782
    %4387 = vmatpush.msra.mxu0 %v774
    %4388 = vmatpush.msra.mxu0 %v766
    %4389 = vmatpush.msra.mxu0 %v758
    %4390 = vmatpush.msra.mxu0 %v750
    %4391 = vmatpush.msra.mxu0 %v742
    %4392 = vmatmul.f32.gmra.mxu0 %v4073
    %v4393 = vpop.f32.mrf.mxu0
    %v4394 = vadd.f32 %v4374, %v4393
    %4395 = vdwg.mxu0
    %v4404 = vrot.slane %v4114, 2
    %v4405 = vrot.slane %v4154, 2
    %v4406 = vrot.slane %v4194, 2
    %v4407 = vrot.slane %v4234, 2
    %v4408 = vrot.slane %v4274, 2
    %v4409 = vrot.slane %v4314, 2
    %v4410 = vrot.slane %v4354, 2
    %v4411 = vrot.slane %v4394, 2
    %v4420 = vadd.f32 %v4054, %v4404
    %v4421 = vadd.f32 %v4055, %v4405
    %v4422 = vadd.f32 %v4056, %v4406
    %v4423 = vadd.f32 %v4057, %v4407
    %v4424 = vadd.f32 %v4058, %v4408
    %v4425 = vadd.f32 %v4059, %v4409
    %v4426 = vadd.f32 %v4060, %v4410
    %v4427 = vadd.f32 %v4061, %v4411
    %v4430 = vrot.slane %v4052, 2
    %v4431 = vrot.slane %v4053, 2
    %4434 = vmatpush.msra.mxu0 %v984
    %4435 = vmatpush.msra.mxu0 %v976
    %4436 = vmatpush.msra.mxu0 %v968
    %4437 = vmatpush.msra.mxu0 %v960
    %4438 = vmatpush.msra.mxu0 %v952
    %4439 = vmatpush.msra.mxu0 %v944
    %4440 = vmatpush.msra.mxu0 %v936
    %4441 = vmatpush.msra.mxu0 %v928
    %4442 = vmatpush.msra.mxu0 %v920
    %4443 = vmatpush.msra.mxu0 %v912
    %4444 = vmatpush.msra.mxu0 %v904
    %4445 = vmatpush.msra.mxu0 %v896
    %4446 = vmatpush.msra.mxu0 %v888
    %4447 = vmatpush.msra.mxu0 %v880
    %4448 = vmatpush.msra.mxu0 %v872
    %4449 = vmatpush.msra.mxu0 %v864
    %4450 = vmatmul.f32.gmra.mxu0 %v4430
    %v4451 = vpop.f32.mrf.mxu0
    %v4452 = vadd.f32 0.0, %v4451
    %4453 = vdwg.mxu0
    %4454 = vmatpush.msra.mxu0 %v1112
    %4455 = vmatpush.msra.mxu0 %v1104
    %4456 = vmatpush.msra.mxu0 %v1096
    %4457 = vmatpush.msra.mxu0 %v1088
    %4458 = vmatpush.msra.mxu0 %v1080
    %4459 = vmatpush.msra.mxu0 %v1072
    %4460 = vmatpush.msra.mxu0 %v1064
    %4461 = vmatpush.msra.mxu0 %v1056
    %4462 = vmatpush.msra.mxu0 %v1048
    %4463 = vmatpush.msra.mxu0 %v1040
    %4464 = vmatpush.msra.mxu0 %v1032
    %4465 = vmatpush.msra.mxu0 %v1024
    %4466 = vmatpush.msra.mxu0 %v1016
    %4467 = vmatpush.msra.mxu0 %v1008
    %4468 = vmatpush.msra.mxu0 %v1000
    %4469 = vmatpush.msra.mxu0 %v992
    %4470 = vmatmul.f32.gmra.mxu0 %v4431
    %v4471 = vpop.f32.mrf.mxu0
    %v4472 = vadd.f32 %v4452, %v4471
    %4473 = vdwg.mxu0
    %4474 = vmatpush.msra.mxu0 %v985
    %4475 = vmatpush.msra.mxu0 %v977
    %4476 = vmatpush.msra.mxu0 %v969
    %4477 = vmatpush.msra.mxu0 %v961
    %4478 = vmatpush.msra.mxu0 %v953
    %4479 = vmatpush.msra.mxu0 %v945
    %4480 = vmatpush.msra.mxu0 %v937
    %4481 = vmatpush.msra.mxu0 %v929
    %4482 = vmatpush.msra.mxu0 %v921
    %4483 = vmatpush.msra.mxu0 %v913
    %4484 = vmatpush.msra.mxu0 %v905
    %4485 = vmatpush.msra.mxu0 %v897
    %4486 = vmatpush.msra.mxu0 %v889
    %4487 = vmatpush.msra.mxu0 %v881
    %4488 = vmatpush.msra.mxu0 %v873
    %4489 = vmatpush.msra.mxu0 %v865
    %4490 = vmatmul.f32.gmra.mxu0 %v4430
    %v4491 = vpop.f32.mrf.mxu0
    %v4492 = vadd.f32 0.0, %v4491
    %4493 = vdwg.mxu0
    %4494 = vmatpush.msra.mxu0 %v1113
    %4495 = vmatpush.msra.mxu0 %v1105
    %4496 = vmatpush.msra.mxu0 %v1097
    %4497 = vmatpush.msra.mxu0 %v1089
    %4498 = vmatpush.msra.mxu0 %v1081
    %4499 = vmatpush.msra.mxu0 %v1073
    %4500 = vmatpush.msra.mxu0 %v1065
    %4501 = vmatpush.msra.mxu0 %v1057
    %4502 = vmatpush.msra.mxu0 %v1049
    %4503 = vmatpush.msra.mxu0 %v1041
    %4504 = vmatpush.msra.mxu0 %v1033
    %4505 = vmatpush.msra.mxu0 %v1025
    %4506 = vmatpush.msra.mxu0 %v1017
    %4507 = vmatpush.msra.mxu0 %v1009
    %4508 = vmatpush.msra.mxu0 %v1001
    %4509 = vmatpush.msra.mxu0 %v993
    %4510 = vmatmul.f32.gmra.mxu0 %v4431
    %v4511 = vpop.f32.mrf.mxu0
    %v4512 = vadd.f32 %v4492, %v4511
    %4513 = vdwg.mxu0
    %4514 = vmatpush.msra.mxu0 %v986
    %4515 = vmatpush.msra.mxu0 %v978
    %4516 = vmatpush.msra.mxu0 %v970
    %4517 = vmatpush.msra.mxu0 %v962
    %4518 = vmatpush.msra.mxu0 %v954
    %4519 = vmatpush.msra.mxu0 %v946
    %4520 = vmatpush.msra.mxu0 %v938
    %4521 = vmatpush.msra.mxu0 %v930
    %4522 = vmatpush.msra.mxu0 %v922
    %4523 = vmatpush.msra.mxu0 %v914
    %4524 = vmatpush.msra.mxu0 %v906
    %4525 = vmatpush.msra.mxu0 %v898
    %4526 = vmatpush.msra.mxu0 %v890
    %4527 = vmatpush.msra.mxu0 %v882
    %4528 = vmatpush.msra.mxu0 %v874
    %4529 = vmatpush.msra.mxu0 %v866
    %4530 = vmatmul.f32.gmra.mxu0 %v4430
    %v4531 = vpop.f32.mrf.mxu0
    %v4532 = vadd.f32 0.0, %v4531
    %4533 = vdwg.mxu0
    %4534 = vmatpush.msra.mxu0 %v1114
    %4535 = vmatpush.msra.mxu0 %v1106
    %4536 = vmatpush.msra.mxu0 %v1098
    %4537 = vmatpush.msra.mxu0 %v1090
    %4538 = vmatpush.msra.mxu0 %v1082
    %4539 = vmatpush.msra.mxu0 %v1074
    %4540 = vmatpush.msra.mxu0 %v1066
    %4541 = vmatpush.msra.mxu0 %v1058
    %4542 = vmatpush.msra.mxu0 %v1050
    %4543 = vmatpush.msra.mxu0 %v1042
    %4544 = vmatpush.msra.mxu0 %v1034
    %4545 = vmatpush.msra.mxu0 %v1026
    %4546 = vmatpush.msra.mxu0 %v1018
    %4547 = vmatpush.msra.mxu0 %v1010
    %4548 = vmatpush.msra.mxu0 %v1002
    %4549 = vmatpush.msra.mxu0 %v994
    %4550 = vmatmul.f32.gmra.mxu0 %v4431
    %v4551 = vpop.f32.mrf.mxu0
    %v4552 = vadd.f32 %v4532, %v4551
    %4553 = vdwg.mxu0
    %4554 = vmatpush.msra.mxu0 %v987
    %4555 = vmatpush.msra.mxu0 %v979
    %4556 = vmatpush.msra.mxu0 %v971
    %4557 = vmatpush.msra.mxu0 %v963
    %4558 = vmatpush.msra.mxu0 %v955
    %4559 = vmatpush.msra.mxu0 %v947
    %4560 = vmatpush.msra.mxu0 %v939
    %4561 = vmatpush.msra.mxu0 %v931
    %4562 = vmatpush.msra.mxu0 %v923
    %4563 = vmatpush.msra.mxu0 %v915
    %4564 = vmatpush.msra.mxu0 %v907
    %4565 = vmatpush.msra.mxu0 %v899
    %4566 = vmatpush.msra.mxu0 %v891
    %4567 = vmatpush.msra.mxu0 %v883
    %4568 = vmatpush.msra.mxu0 %v875
    %4569 = vmatpush.msra.mxu0 %v867
    %4570 = vmatmul.f32.gmra.mxu0 %v4430
    %v4571 = vpop.f32.mrf.mxu0
    %v4572 = vadd.f32 0.0, %v4571
    %4573 = vdwg.mxu0
    %4574 = vmatpush.msra.mxu0 %v1115
    %4575 = vmatpush.msra.mxu0 %v1107
    %4576 = vmatpush.msra.mxu0 %v1099
    %4577 = vmatpush.msra.mxu0 %v1091
    %4578 = vmatpush.msra.mxu0 %v1083
    %4579 = vmatpush.msra.mxu0 %v1075
    %4580 = vmatpush.msra.mxu0 %v1067
    %4581 = vmatpush.msra.mxu0 %v1059
    %4582 = vmatpush.msra.mxu0 %v1051
    %4583 = vmatpush.msra.mxu0 %v1043
    %4584 = vmatpush.msra.mxu0 %v1035
    %4585 = vmatpush.msra.mxu0 %v1027
    %4586 = vmatpush.msra.mxu0 %v1019
    %4587 = vmatpush.msra.mxu0 %v1011
    %4588 = vmatpush.msra.mxu0 %v1003
    %4589 = vmatpush.msra.mxu0 %v995
    %4590 = vmatmul.f32.gmra.mxu0 %v4431
    %v4591 = vpop.f32.mrf.mxu0
    %v4592 = vadd.f32 %v4572, %v4591
    %4593 = vdwg.mxu0
    %4594 = vmatpush.msra.mxu0 %v988
    %4595 = vmatpush.msra.mxu0 %v980
    %4596 = vmatpush.msra.mxu0 %v972
    %4597 = vmatpush.msra.mxu0 %v964
    %4598 = vmatpush.msra.mxu0 %v956
    %4599 = vmatpush.msra.mxu0 %v948
    %4600 = vmatpush.msra.mxu0 %v940
    %4601 = vmatpush.msra.mxu0 %v932
    %4602 = vmatpush.msra.mxu0 %v924
    %4603 = vmatpush.msra.mxu0 %v916
    %4604 = vmatpush.msra.mxu0 %v908
    %4605 = vmatpush.msra.mxu0 %v900
    %4606 = vmatpush.msra.mxu0 %v892
    %4607 = vmatpush.msra.mxu0 %v884
    %4608 = vmatpush.msra.mxu0 %v876
    %4609 = vmatpush.msra.mxu0 %v868
    %4610 = vmatmul.f32.gmra.mxu0 %v4430
    %v4611 = vpop.f32.mrf.mxu0
    %v4612 = vadd.f32 0.0, %v4611
    %4613 = vdwg.mxu0
    %4614 = vmatpush.msra.mxu0 %v1116
    %4615 = vmatpush.msra.mxu0 %v1108
    %4616 = vmatpush.msra.mxu0 %v1100
    %4617 = vmatpush.msra.mxu0 %v1092
    %4618 = vmatpush.msra.mxu0 %v1084
    %4619 = vmatpush.msra.mxu0 %v1076
    %4620 = vmatpush.msra.mxu0 %v1068
    %4621 = vmatpush.msra.mxu0 %v1060
    %4622 = vmatpush.msra.mxu0 %v1052
    %4623 = vmatpush.msra.mxu0 %v1044
    %4624 = vmatpush.msra.mxu0 %v1036
    %4625 = vmatpush.msra.mxu0 %v1028
    %4626 = vmatpush.msra.mxu0 %v1020
    %4627 = vmatpush.msra.mxu0 %v1012
    %4628 = vmatpush.msra.mxu0 %v1004
    %4629 = vmatpush.msra.mxu0 %v996
    %4630 = vmatmul.f32.gmra.mxu0 %v4431
    %v4631 = vpop.f32.mrf.mxu0
    %v4632 = vadd.f32 %v4612, %v4631
    %4633 = vdwg.mxu0
    %4634 = vmatpush.msra.mxu0 %v989
    %4635 = vmatpush.msra.mxu0 %v981
    %4636 = vmatpush.msra.mxu0 %v973
    %4637 = vmatpush.msra.mxu0 %v965
    %4638 = vmatpush.msra.mxu0 %v957
    %4639 = vmatpush.msra.mxu0 %v949
    %4640 = vmatpush.msra.mxu0 %v941
    %4641 = vmatpush.msra.mxu0 %v933
    %4642 = vmatpush.msra.mxu0 %v925
    %4643 = vmatpush.msra.mxu0 %v917
    %4644 = vmatpush.msra.mxu0 %v909
    %4645 = vmatpush.msra.mxu0 %v901
    %4646 = vmatpush.msra.mxu0 %v893
    %4647 = vmatpush.msra.mxu0 %v885
    %4648 = vmatpush.msra.mxu0 %v877
    %4649 = vmatpush.msra.mxu0 %v869
    %4650 = vmatmul.f32.gmra.mxu0 %v4430
    %v4651 = vpop.f32.mrf.mxu0
    %v4652 = vadd.f32 0.0, %v4651
    %4653 = vdwg.mxu0
    %4654 = vmatpush.msra.mxu0 %v1117
    %4655 = vmatpush.msra.mxu0 %v1109
    %4656 = vmatpush.msra.mxu0 %v1101
    %4657 = vmatpush.msra.mxu0 %v1093
    %4658 = vmatpush.msra.mxu0 %v1085
    %4659 = vmatpush.msra.mxu0 %v1077
    %4660 = vmatpush.msra.mxu0 %v1069
    %4661 = vmatpush.msra.mxu0 %v1061
    %4662 = vmatpush.msra.mxu0 %v1053
    %4663 = vmatpush.msra.mxu0 %v1045
    %4664 = vmatpush.msra.mxu0 %v1037
    %4665 = vmatpush.msra.mxu0 %v1029
    %4666 = vmatpush.msra.mxu0 %v1021
    %4667 = vmatpush.msra.mxu0 %v1013
    %4668 = vmatpush.msra.mxu0 %v1005
    %4669 = vmatpush.msra.mxu0 %v997
    %4670 = vmatmul.f32.gmra.mxu0 %v4431
    %v4671 = vpop.f32.mrf.mxu0
    %v4672 = vadd.f32 %v4652, %v4671
    %4673 = vdwg.mxu0
    %4674 = vmatpush.msra.mxu0 %v990
    %4675 = vmatpush.msra.mxu0 %v982
    %4676 = vmatpush.msra.mxu0 %v974
    %4677 = vmatpush.msra.mxu0 %v966
    %4678 = vmatpush.msra.mxu0 %v958
    %4679 = vmatpush.msra.mxu0 %v950
    %4680 = vmatpush.msra.mxu0 %v942
    %4681 = vmatpush.msra.mxu0 %v934
    %4682 = vmatpush.msra.mxu0 %v926
    %4683 = vmatpush.msra.mxu0 %v918
    %4684 = vmatpush.msra.mxu0 %v910
    %4685 = vmatpush.msra.mxu0 %v902
    %4686 = vmatpush.msra.mxu0 %v894
    %4687 = vmatpush.msra.mxu0 %v886
    %4688 = vmatpush.msra.mxu0 %v878
    %4689 = vmatpush.msra.mxu0 %v870
    %4690 = vmatmul.f32.gmra.mxu0 %v4430
    %v4691 = vpop.f32.mrf.mxu0
    %v4692 = vadd.f32 0.0, %v4691
    %4693 = vdwg.mxu0
    %4694 = vmatpush.msra.mxu0 %v1118
    %4695 = vmatpush.msra.mxu0 %v1110
    %4696 = vmatpush.msra.mxu0 %v1102
    %4697 = vmatpush.msra.mxu0 %v1094
    %4698 = vmatpush.msra.mxu0 %v1086
    %4699 = vmatpush.msra.mxu0 %v1078
    %4700 = vmatpush.msra.mxu0 %v1070
    %4701 = vmatpush.msra.mxu0 %v1062
    %4702 = vmatpush.msra.mxu0 %v1054
    %4703 = vmatpush.msra.mxu0 %v1046
    %4704 = vmatpush.msra.mxu0 %v1038
    %4705 = vmatpush.msra.mxu0 %v1030
    %4706 = vmatpush.msra.mxu0 %v1022
    %4707 = vmatpush.msra.mxu0 %v1014
    %4708 = vmatpush.msra.mxu0 %v1006
    %4709 = vmatpush.msra.mxu0 %v998
    %4710 = vmatmul.f32.gmra.mxu0 %v4431
    %v4711 = vpop.f32.mrf.mxu0
    %v4712 = vadd.f32 %v4692, %v4711
    %4713 = vdwg.mxu0
    %4714 = vmatpush.msra.mxu0 %v991
    %4715 = vmatpush.msra.mxu0 %v983
    %4716 = vmatpush.msra.mxu0 %v975
    %4717 = vmatpush.msra.mxu0 %v967
    %4718 = vmatpush.msra.mxu0 %v959
    %4719 = vmatpush.msra.mxu0 %v951
    %4720 = vmatpush.msra.mxu0 %v943
    %4721 = vmatpush.msra.mxu0 %v935
    %4722 = vmatpush.msra.mxu0 %v927
    %4723 = vmatpush.msra.mxu0 %v919
    %4724 = vmatpush.msra.mxu0 %v911
    %4725 = vmatpush.msra.mxu0 %v903
    %4726 = vmatpush.msra.mxu0 %v895
    %4727 = vmatpush.msra.mxu0 %v887
    %4728 = vmatpush.msra.mxu0 %v879
    %4729 = vmatpush.msra.mxu0 %v871
    %4730 = vmatmul.f32.gmra.mxu0 %v4430
    %v4731 = vpop.f32.mrf.mxu0
    %v4732 = vadd.f32 0.0, %v4731
    %4733 = vdwg.mxu0
    %4734 = vmatpush.msra.mxu0 %v1119
    %4735 = vmatpush.msra.mxu0 %v1111
    %4736 = vmatpush.msra.mxu0 %v1103
    %4737 = vmatpush.msra.mxu0 %v1095
    %4738 = vmatpush.msra.mxu0 %v1087
    %4739 = vmatpush.msra.mxu0 %v1079
    %4740 = vmatpush.msra.mxu0 %v1071
    %4741 = vmatpush.msra.mxu0 %v1063
    %4742 = vmatpush.msra.mxu0 %v1055
    %4743 = vmatpush.msra.mxu0 %v1047
    %4744 = vmatpush.msra.mxu0 %v1039
    %4745 = vmatpush.msra.mxu0 %v1031
    %4746 = vmatpush.msra.mxu0 %v1023
    %4747 = vmatpush.msra.mxu0 %v1015
    %4748 = vmatpush.msra.mxu0 %v1007
    %4749 = vmatpush.msra.mxu0 %v999
    %4750 = vmatmul.f32.gmra.mxu0 %v4431
    %v4751 = vpop.f32.mrf.mxu0
    %v4752 = vadd.f32 %v4732, %v4751
    %4753 = vdwg.mxu0
    %v4754 = vadd.f32 %v4062, %v4472
    %v4755 = vadd.f32 %v4063, %v4512
    %v4756 = vadd.f32 %v4064, %v4552
    %v4757 = vadd.f32 %v4065, %v4592
    %v4758 = vadd.f32 %v4066, %v4632
    %v4759 = vadd.f32 %v4067, %v4672
    %v4760 = vadd.f32 %v4068, %v4712
    %v4761 = vadd.f32 %v4069, %v4752
    %v4762 = vxor.u32 %v4420, 2147483648
    %v4763 = vxor.u32 %v4421, 2147483648
    %v4764 = vmul.f32 %v4762, 1.442695
    %v4765 = vpow.pop %v4764
    %v4766 = vmul.f32 %v4763, 1.442695
    %v4767 = vpow.pop %v4766
    %v4768 = vadd.f32 %v4765, 1.0
    %v4769 = vadd.f32 %v4767, 1.0
    %v4770 = vrcp.pop %v4768
    %v4771 = vmul.f32 %v4768, %v4770
    %v4772 = vsub.f32 1.0, %v4771
    %v4773 = vmul.f32 %v4770, %v4772
    %v4774 = vadd.f32 %v4770, %v4773
    %vm4775 = vweird.f32 %v4768
    %vm4776 = vweird.f32 %v4770
    %vm4777 = vmor %vm4775, %vm4776
    %v4778 = vsel %vm4777, %v4770, %v4774
    %v4779 = vand.u32 2147483647, %v4768
    %vm4780 = vcmp.eq.f32.partialorder %v4779, 8.507059e+37
    %v4781 = vand.u32 %v4768, 2147483648
    %v4782 = vor.u32 1.1754944e-38, %v4781
    %v4783 = vsel %vm4780, %v4782, %v4778
    %v4784 = vmul.f32 1.0, %v4783
    %v4785 = vrcp.pop %v4769
    %v4786 = vmul.f32 %v4769, %v4785
    %v4787 = vsub.f32 1.0, %v4786
    %v4788 = vmul.f32 %v4785, %v4787
    %v4789 = vadd.f32 %v4785, %v4788
    %vm4790 = vweird.f32 %v4769
    %vm4791 = vweird.f32 %v4785
    %vm4792 = vmor %vm4790, %vm4791
    %v4793 = vsel %vm4792, %v4785, %v4789
    %v4794 = vand.u32 2147483647, %v4769
    %vm4795 = vcmp.eq.f32.partialorder %v4794, 8.507059e+37
    %v4796 = vand.u32 %v4769, 2147483648
    %v4797 = vor.u32 1.1754944e-38, %v4796
    %v4798 = vsel %vm4795, %v4797, %v4793
    %v4799 = vmul.f32 1.0, %v4798
    %v4800 = vxor.u32 %v4422, 2147483648
    %v4801 = vxor.u32 %v4423, 2147483648
    %v4802 = vmul.f32 %v4800, 1.442695
    %v4803 = vpow.pop %v4802
    %v4804 = vmul.f32 %v4801, 1.442695
    %v4805 = vpow.pop %v4804
    %v4806 = vadd.f32 %v4803, 1.0
    %v4807 = vadd.f32 %v4805, 1.0
    %v4808 = vrcp.pop %v4806
    %v4809 = vmul.f32 %v4806, %v4808
    %v4810 = vsub.f32 1.0, %v4809
    %v4811 = vmul.f32 %v4808, %v4810
    %v4812 = vadd.f32 %v4808, %v4811
    %vm4813 = vweird.f32 %v4806
    %vm4814 = vweird.f32 %v4808
    %vm4815 = vmor %vm4813, %vm4814
    %v4816 = vsel %vm4815, %v4808, %v4812
    %v4817 = vand.u32 2147483647, %v4806
    %vm4818 = vcmp.eq.f32.partialorder %v4817, 8.507059e+37
    %v4819 = vand.u32 %v4806, 2147483648
    %v4820 = vor.u32 1.1754944e-38, %v4819
    %v4821 = vsel %vm4818, %v4820, %v4816
    %v4822 = vmul.f32 1.0, %v4821
    %v4823 = vrcp.pop %v4807
    %v4824 = vmul.f32 %v4807, %v4823
    %v4825 = vsub.f32 1.0, %v4824
    %v4826 = vmul.f32 %v4823, %v4825
    %v4827 = vadd.f32 %v4823, %v4826
    %vm4828 = vweird.f32 %v4807
    %vm4829 = vweird.f32 %v4823
    %vm4830 = vmor %vm4828, %vm4829
    %v4831 = vsel %vm4830, %v4823, %v4827
    %v4832 = vand.u32 2147483647, %v4807
    %vm4833 = vcmp.eq.f32.partialorder %v4832, 8.507059e+37
    %v4834 = vand.u32 %v4807, 2147483648
    %v4835 = vor.u32 1.1754944e-38, %v4834
    %v4836 = vsel %vm4833, %v4835, %v4831
    %v4837 = vmul.f32 1.0, %v4836
    %v4838 = vtanh.pop %v4424
    %v4839 = vtanh.pop %v4425
    %v4840 = vxor.u32 %v4426, 2147483648
    %v4841 = vxor.u32 %v4427, 2147483648
    %v4842 = vmul.f32 %v4840, 1.442695
    %v4843 = vpow.pop %v4842
    %v4844 = vmul.f32 %v4841, 1.442695
    %v4845 = vpow.pop %v4844
    %v4846 = vadd.f32 %v4843, 1.0
    %v4847 = vadd.f32 %v4845, 1.0
    %v4848 = vrcp.pop %v4846
    %v4849 = vmul.f32 %v4846, %v4848
    %v4850 = vsub.f32 1.0, %v4849
    %v4851 = vmul.f32 %v4848, %v4850
    %v4852 = vadd.f32 %v4848, %v4851
    %vm4853 = vweird.f32 %v4846
    %vm4854 = vweird.f32 %v4848
    %vm4855 = vmor %vm4853, %vm4854
    %v4856 = vsel %vm4855, %v4848, %v4852
    %v4857 = vand.u32 2147483647, %v4846
    %vm4858 = vcmp.eq.f32.partialorder %v4857, 8.507059e+37
    %v4859 = vand.u32 %v4846, 2147483648
    %v4860 = vor.u32 1.1754944e-38, %v4859
    %v4861 = vsel %vm4858, %v4860, %v4856
    %v4862 = vmul.f32 1.0, %v4861
    %v4863 = vrcp.pop %v4847
    %v4864 = vmul.f32 %v4847, %v4863
    %v4865 = vsub.f32 1.0, %v4864
    %v4866 = vmul.f32 %v4863, %v4865
    %v4867 = vadd.f32 %v4863, %v4866
    %vm4868 = vweird.f32 %v4847
    %vm4869 = vweird.f32 %v4863
    %vm4870 = vmor %vm4868, %vm4869
    %v4871 = vsel %vm4870, %v4863, %v4867
    %v4872 = vand.u32 2147483647, %v4847
    %vm4873 = vcmp.eq.f32.partialorder %v4872, 8.507059e+37
    %v4874 = vand.u32 %v4847, 2147483648
    %v4875 = vor.u32 1.1754944e-38, %v4874
    %v4876 = vsel %vm4873, %v4875, %v4871
    %v4877 = vmul.f32 1.0, %v4876
    %v4880 = vrot.slane %v3916, 6
    %v4881 = vrot.slane %v3917, 6
    %v4884 = vmul.f32 %v4822, %v4880
    %v4885 = vmul.f32 %v4837, %v4881
    %v4886 = vmul.f32 %v4784, %v4838
    %v4887 = vmul.f32 %v4799, %v4839
    %v4888 = vadd.f32 %v4884, %v4886
    %v4889 = vadd.f32 %v4885, %v4887
    %v4890 = vtanh.pop %v4888
    %v4891 = vtanh.pop %v4889
    %v4892 = vmul.f32 %v4862, %v4890
    %v4893 = vmul.f32 %v4877, %v4891
    %v4894 = vxor.u32 %v4754, 2147483648
    %v4895 = vxor.u32 %v4755, 2147483648
    %v4896 = vmul.f32 %v4894, 1.442695
    %v4897 = vpow.pop %v4896
    %v4898 = vmul.f32 %v4895, 1.442695
    %v4899 = vpow.pop %v4898
    %v4900 = vadd.f32 %v4897, 1.0
    %v4901 = vadd.f32 %v4899, 1.0
    %v4902 = vrcp.pop %v4900
    %v4903 = vmul.f32 %v4900, %v4902
    %v4904 = vsub.f32 1.0, %v4903
    %v4905 = vmul.f32 %v4902, %v4904
    %v4906 = vadd.f32 %v4902, %v4905
    %vm4907 = vweird.f32 %v4900
    %vm4908 = vweird.f32 %v4902
    %vm4909 = vmor %vm4907, %vm4908
    %v4910 = vsel %vm4909, %v4902, %v4906
    %v4911 = vand.u32 2147483647, %v4900
    %vm4912 = vcmp.eq.f32.partialorder %v4911, 8.507059e+37
    %v4913 = vand.u32 %v4900, 2147483648
    %v4914 = vor.u32 1.1754944e-38, %v4913
    %v4915 = vsel %vm4912, %v4914, %v4910
    %v4916 = vmul.f32 1.0, %v4915
    %v4917 = vrcp.pop %v4901
    %v4918 = vmul.f32 %v4901, %v4917
    %v4919 = vsub.f32 1.0, %v4918
    %v4920 = vmul.f32 %v4917, %v4919
    %v4921 = vadd.f32 %v4917, %v4920
    %vm4922 = vweird.f32 %v4901
    %vm4923 = vweird.f32 %v4917
    %vm4924 = vmor %vm4922, %vm4923
    %v4925 = vsel %vm4924, %v4917, %v4921
    %v4926 = vand.u32 2147483647, %v4901
    %vm4927 = vcmp.eq.f32.partialorder %v4926, 8.507059e+37
    %v4928 = vand.u32 %v4901, 2147483648
    %v4929 = vor.u32 1.1754944e-38, %v4928
    %v4930 = vsel %vm4927, %v4929, %v4925
    %v4931 = vmul.f32 1.0, %v4930
    %v4932 = vxor.u32 %v4756, 2147483648
    %v4933 = vxor.u32 %v4757, 2147483648
    %v4934 = vmul.f32 %v4932, 1.442695
    %v4935 = vpow.pop %v4934
    %v4936 = vmul.f32 %v4933, 1.442695
    %v4937 = vpow.pop %v4936
    %v4938 = vadd.f32 %v4935, 1.0
    %v4939 = vadd.f32 %v4937, 1.0
    %v4940 = vrcp.pop %v4938
    %v4941 = vmul.f32 %v4938, %v4940
    %v4942 = vsub.f32 1.0, %v4941
    %v4943 = vmul.f32 %v4940, %v4942
    %v4944 = vadd.f32 %v4940, %v4943
    %vm4945 = vweird.f32 %v4938
    %vm4946 = vweird.f32 %v4940
    %vm4947 = vmor %vm4945, %vm4946
    %v4948 = vsel %vm4947, %v4940, %v4944
    %v4949 = vand.u32 2147483647, %v4938
    %vm4950 = vcmp.eq.f32.partialorder %v4949, 8.507059e+37
    %v4951 = vand.u32 %v4938, 2147483648
    %v4952 = vor.u32 1.1754944e-38, %v4951
    %v4953 = vsel %vm4950, %v4952, %v4948
    %v4954 = vmul.f32 1.0, %v4953
    %v4955 = vrcp.pop %v4939
    %v4956 = vmul.f32 %v4939, %v4955
    %v4957 = vsub.f32 1.0, %v4956
    %v4958 = vmul.f32 %v4955, %v4957
    %v4959 = vadd.f32 %v4955, %v4958
    %vm4960 = vweird.f32 %v4939
    %vm4961 = vweird.f32 %v4955
    %vm4962 = vmor %vm4960, %vm4961
    %v4963 = vsel %vm4962, %v4955, %v4959
    %v4964 = vand.u32 2147483647, %v4939
    %vm4965 = vcmp.eq.f32.partialorder %v4964, 8.507059e+37
    %v4966 = vand.u32 %v4939, 2147483648
    %v4967 = vor.u32 1.1754944e-38, %v4966
    %v4968 = vsel %vm4965, %v4967, %v4963
    %v4969 = vmul.f32 1.0, %v4968
    %v4970 = vtanh.pop %v4758
    %v4971 = vtanh.pop %v4759
    %v4972 = vxor.u32 %v4760, 2147483648
    %v4973 = vxor.u32 %v4761, 2147483648
    %v4974 = vmul.f32 %v4972, 1.442695
    %v4975 = vpow.pop %v4974
    %v4976 = vmul.f32 %v4973, 1.442695
    %v4977 = vpow.pop %v4976
    %v4978 = vadd.f32 %v4975, 1.0
    %v4979 = vadd.f32 %v4977, 1.0
    %v4980 = vrcp.pop %v4978
    %v4981 = vmul.f32 %v4978, %v4980
    %v4982 = vsub.f32 1.0, %v4981
    %v4983 = vmul.f32 %v4980, %v4982
    %v4984 = vadd.f32 %v4980, %v4983
    %vm4985 = vweird.f32 %v4978
    %vm4986 = vweird.f32 %v4980
    %vm4987 = vmor %vm4985, %vm4986
    %v4988 = vsel %vm4987, %v4980, %v4984
    %v4989 = vand.u32 2147483647, %v4978
    %vm4990 = vcmp.eq.f32.partialorder %v4989, 8.507059e+37
    %v4991 = vand.u32 %v4978, 2147483648
    %v4992 = vor.u32 1.1754944e-38, %v4991
    %v4993 = vsel %vm4990, %v4992, %v4988
    %v4994 = vmul.f32 1.0, %v4993
    %v4995 = vrcp.pop %v4979
    %v4996 = vmul.f32 %v4979, %v4995
    %v4997 = vsub.f32 1.0, %v4996
    %v4998 = vmul.f32 %v4995, %v4997
    %v4999 = vadd.f32 %v4995, %v4998
    %vm5000 = vweird.f32 %v4979
    %vm5001 = vweird.f32 %v4995
    %vm5002 = vmor %vm5000, %vm5001
    %v5003 = vsel %vm5002, %v4995, %v4999
    %v5004 = vand.u32 2147483647, %v4979
    %vm5005 = vcmp.eq.f32.partialorder %v5004, 8.507059e+37
    %v5006 = vand.u32 %v4979, 2147483648
    %v5007 = vor.u32 1.1754944e-38, %v5006
    %v5008 = vsel %vm5005, %v5007, %v5003
    %v5009 = vmul.f32 1.0, %v5008
    %v5012 = vrot.slane %v4048, 2
    %v5013 = vrot.slane %v4049, 2
    %v5016 = vmul.f32 %v4954, %v5012
    %v5017 = vmul.f32 %v4969, %v5013
    %v5018 = vmul.f32 %v4916, %v4970
    %v5019 = vmul.f32 %v4931, %v4971
    %v5020 = vadd.f32 %v5016, %v5018
    %v5021 = vadd.f32 %v5017, %v5019
    %v5022 = vtanh.pop %v5020
    %v5023 = vtanh.pop %v5021
    %v5024 = vmul.f32 %v4994, %v5022
    %v5025 = vmul.f32 %v5009, %v5023
    %v5026 = vld [vmem:[#allocation2 + $0x80] sm:$0x3]
    %v5027 = vld [vmem:[#allocation2 + $0x88] sm:$0x3]
    %v5028 = vld [vmem:[#allocation2 + $0x90] sm:$0x3]
    %v5029 = vld [vmem:[#allocation2 + $0x98] sm:$0x3]
    %v5030 = vld [vmem:[#allocation2 + $0xa0] sm:$0x3]
    %v5031 = vld [vmem:[#allocation2 + $0xa8] sm:$0x3]
    %v5032 = vld [vmem:[#allocation2 + $0xb0] sm:$0x3]
    %v5033 = vld [vmem:[#allocation2 + $0xb8] sm:$0x3]
    %v5034 = vld [vmem:[#allocation2 + $0x40] sm:$0xc0]
    %v5035 = vld [vmem:[#allocation2 + $0x48] sm:$0xc0]
    %v5036 = vld [vmem:[#allocation2 + $0x50] sm:$0xc0]
    %v5037 = vld [vmem:[#allocation2 + $0x58] sm:$0xc0]
    %v5038 = vld [vmem:[#allocation2 + $0x60] sm:$0xc0]
    %v5039 = vld [vmem:[#allocation2 + $0x68] sm:$0xc0]
    %v5040 = vld [vmem:[#allocation2 + $0x70] sm:$0xc0]
    %v5041 = vld [vmem:[#allocation2 + $0x78] sm:$0xc0]
    %v5044 = vrot.slane %v4892, 6
    %v5045 = vrot.slane %v4893, 6
    %5048 = vmatpush.msra.mxu0 %v727
    %5049 = vmatpush.msra.mxu0 %v719
    %5050 = vmatpush.msra.mxu0 %v711
    %5051 = vmatpush.msra.mxu0 %v703
    %5052 = vmatpush.msra.mxu0 %v695
    %5053 = vmatpush.msra.mxu0 %v687
    %5054 = vmatpush.msra.mxu0 %v679
    %5055 = vmatpush.msra.mxu0 %v671
    %5056 = vmatpush.msra.mxu0 %v663
    %5057 = vmatpush.msra.mxu0 %v655
    %5058 = vmatpush.msra.mxu0 %v647
    %5059 = vmatpush.msra.mxu0 %v639
    %5060 = vmatpush.msra.mxu0 %v631
    %5061 = vmatpush.msra.mxu0 %v623
    %5062 = vmatpush.msra.mxu0 %v615
    %5063 = vmatpush.msra.mxu0 %v607
    %5064 = vmatmul.f32.gmra.mxu0 %v5044
    %v5065 = vpop.f32.mrf.mxu0
    %v5066 = vadd.f32 0.0, %v5065
    %5067 = vdwg.mxu0
    %5068 = vmatpush.msra.mxu0 %v855
    %5069 = vmatpush.msra.mxu0 %v847
    %5070 = vmatpush.msra.mxu0 %v839
    %5071 = vmatpush.msra.mxu0 %v831
    %5072 = vmatpush.msra.mxu0 %v823
    %5073 = vmatpush.msra.mxu0 %v815
    %5074 = vmatpush.msra.mxu0 %v807
    %5075 = vmatpush.msra.mxu0 %v799
    %5076 = vmatpush.msra.mxu0 %v791
    %5077 = vmatpush.msra.mxu0 %v783
    %5078 = vmatpush.msra.mxu0 %v775
    %5079 = vmatpush.msra.mxu0 %v767
    %5080 = vmatpush.msra.mxu0 %v759
    %5081 = vmatpush.msra.mxu0 %v751
    %5082 = vmatpush.msra.mxu0 %v743
    %5083 = vmatpush.msra.mxu0 %v735
    %5084 = vmatmul.f32.gmra.mxu0 %v5045
    %v5085 = vpop.f32.mrf.mxu0
    %v5086 = vadd.f32 %v5066, %v5085
    %5087 = vdwg.mxu0
    %5088 = vmatpush.msra.mxu0 %v728
    %5089 = vmatpush.msra.mxu0 %v720
    %5090 = vmatpush.msra.mxu0 %v712
    %5091 = vmatpush.msra.mxu0 %v704
    %5092 = vmatpush.msra.mxu0 %v696
    %5093 = vmatpush.msra.mxu0 %v688
    %5094 = vmatpush.msra.mxu0 %v680
    %5095 = vmatpush.msra.mxu0 %v672
    %5096 = vmatpush.msra.mxu0 %v664
    %5097 = vmatpush.msra.mxu0 %v656
    %5098 = vmatpush.msra.mxu0 %v648
    %5099 = vmatpush.msra.mxu0 %v640
    %5100 = vmatpush.msra.mxu0 %v632
    %5101 = vmatpush.msra.mxu0 %v624
    %5102 = vmatpush.msra.mxu0 %v616
    %5103 = vmatpush.msra.mxu0 %v608
    %5104 = vmatmul.f32.gmra.mxu0 %v5044
    %v5105 = vpop.f32.mrf.mxu0
    %v5106 = vadd.f32 0.0, %v5105
    %5107 = vdwg.mxu0
    %5108 = vmatpush.msra.mxu0 %v856
    %5109 = vmatpush.msra.mxu0 %v848
    %5110 = vmatpush.msra.mxu0 %v840
    %5111 = vmatpush.msra.mxu0 %v832
    %5112 = vmatpush.msra.mxu0 %v824
    %5113 = vmatpush.msra.mxu0 %v816
    %5114 = vmatpush.msra.mxu0 %v808
    %5115 = vmatpush.msra.mxu0 %v800
    %5116 = vmatpush.msra.mxu0 %v792
    %5117 = vmatpush.msra.mxu0 %v784
    %5118 = vmatpush.msra.mxu0 %v776
    %5119 = vmatpush.msra.mxu0 %v768
    %5120 = vmatpush.msra.mxu0 %v760
    %5121 = vmatpush.msra.mxu0 %v752
    %5122 = vmatpush.msra.mxu0 %v744
    %5123 = vmatpush.msra.mxu0 %v736
    %5124 = vmatmul.f32.gmra.mxu0 %v5045
    %v5125 = vpop.f32.mrf.mxu0
    %v5126 = vadd.f32 %v5106, %v5125
    %5127 = vdwg.mxu0
    %5128 = vmatpush.msra.mxu0 %v729
    %5129 = vmatpush.msra.mxu0 %v721
    %5130 = vmatpush.msra.mxu0 %v713
    %5131 = vmatpush.msra.mxu0 %v705
    %5132 = vmatpush.msra.mxu0 %v697
    %5133 = vmatpush.msra.mxu0 %v689
    %5134 = vmatpush.msra.mxu0 %v681
    %5135 = vmatpush.msra.mxu0 %v673
    %5136 = vmatpush.msra.mxu0 %v665
    %5137 = vmatpush.msra.mxu0 %v657
    %5138 = vmatpush.msra.mxu0 %v649
    %5139 = vmatpush.msra.mxu0 %v641
    %5140 = vmatpush.msra.mxu0 %v633
    %5141 = vmatpush.msra.mxu0 %v625
    %5142 = vmatpush.msra.mxu0 %v617
    %5143 = vmatpush.msra.mxu0 %v609
    %5144 = vmatmul.f32.gmra.mxu0 %v5044
    %v5145 = vpop.f32.mrf.mxu0
    %v5146 = vadd.f32 0.0, %v5145
    %5147 = vdwg.mxu0
    %5148 = vmatpush.msra.mxu0 %v857
    %5149 = vmatpush.msra.mxu0 %v849
    %5150 = vmatpush.msra.mxu0 %v841
    %5151 = vmatpush.msra.mxu0 %v833
    %5152 = vmatpush.msra.mxu0 %v825
    %5153 = vmatpush.msra.mxu0 %v817
    %5154 = vmatpush.msra.mxu0 %v809
    %5155 = vmatpush.msra.mxu0 %v801
    %5156 = vmatpush.msra.mxu0 %v793
    %5157 = vmatpush.msra.mxu0 %v785
    %5158 = vmatpush.msra.mxu0 %v777
    %5159 = vmatpush.msra.mxu0 %v769
    %5160 = vmatpush.msra.mxu0 %v761
    %5161 = vmatpush.msra.mxu0 %v753
    %5162 = vmatpush.msra.mxu0 %v745
    %5163 = vmatpush.msra.mxu0 %v737
    %5164 = vmatmul.f32.gmra.mxu0 %v5045
    %v5165 = vpop.f32.mrf.mxu0
    %v5166 = vadd.f32 %v5146, %v5165
    %5167 = vdwg.mxu0
    %5168 = vmatpush.msra.mxu0 %v730
    %5169 = vmatpush.msra.mxu0 %v722
    %5170 = vmatpush.msra.mxu0 %v714
    %5171 = vmatpush.msra.mxu0 %v706
    %5172 = vmatpush.msra.mxu0 %v698
    %5173 = vmatpush.msra.mxu0 %v690
    %5174 = vmatpush.msra.mxu0 %v682
    %5175 = vmatpush.msra.mxu0 %v674
    %5176 = vmatpush.msra.mxu0 %v666
    %5177 = vmatpush.msra.mxu0 %v658
    %5178 = vmatpush.msra.mxu0 %v650
    %5179 = vmatpush.msra.mxu0 %v642
    %5180 = vmatpush.msra.mxu0 %v634
    %5181 = vmatpush.msra.mxu0 %v626
    %5182 = vmatpush.msra.mxu0 %v618
    %5183 = vmatpush.msra.mxu0 %v610
    %5184 = vmatmul.f32.gmra.mxu0 %v5044
    %v5185 = vpop.f32.mrf.mxu0
    %v5186 = vadd.f32 0.0, %v5185
    %5187 = vdwg.mxu0
    %5188 = vmatpush.msra.mxu0 %v858
    %5189 = vmatpush.msra.mxu0 %v850
    %5190 = vmatpush.msra.mxu0 %v842
    %5191 = vmatpush.msra.mxu0 %v834
    %5192 = vmatpush.msra.mxu0 %v826
    %5193 = vmatpush.msra.mxu0 %v818
    %5194 = vmatpush.msra.mxu0 %v810
    %5195 = vmatpush.msra.mxu0 %v802
    %5196 = vmatpush.msra.mxu0 %v794
    %5197 = vmatpush.msra.mxu0 %v786
    %5198 = vmatpush.msra.mxu0 %v778
    %5199 = vmatpush.msra.mxu0 %v770
    %5200 = vmatpush.msra.mxu0 %v762
    %5201 = vmatpush.msra.mxu0 %v754
    %5202 = vmatpush.msra.mxu0 %v746
    %5203 = vmatpush.msra.mxu0 %v738
    %5204 = vmatmul.f32.gmra.mxu0 %v5045
    %v5205 = vpop.f32.mrf.mxu0
    %v5206 = vadd.f32 %v5186, %v5205
    %5207 = vdwg.mxu0
    %5208 = vmatpush.msra.mxu0 %v731
    %5209 = vmatpush.msra.mxu0 %v723
    %5210 = vmatpush.msra.mxu0 %v715
    %5211 = vmatpush.msra.mxu0 %v707
    %5212 = vmatpush.msra.mxu0 %v699
    %5213 = vmatpush.msra.mxu0 %v691
    %5214 = vmatpush.msra.mxu0 %v683
    %5215 = vmatpush.msra.mxu0 %v675
    %5216 = vmatpush.msra.mxu0 %v667
    %5217 = vmatpush.msra.mxu0 %v659
    %5218 = vmatpush.msra.mxu0 %v651
    %5219 = vmatpush.msra.mxu0 %v643
    %5220 = vmatpush.msra.mxu0 %v635
    %5221 = vmatpush.msra.mxu0 %v627
    %5222 = vmatpush.msra.mxu0 %v619
    %5223 = vmatpush.msra.mxu0 %v611
    %5224 = vmatmul.f32.gmra.mxu0 %v5044
    %v5225 = vpop.f32.mrf.mxu0
    %v5226 = vadd.f32 0.0, %v5225
    %5227 = vdwg.mxu0
    %5228 = vmatpush.msra.mxu0 %v859
    %5229 = vmatpush.msra.mxu0 %v851
    %5230 = vmatpush.msra.mxu0 %v843
    %5231 = vmatpush.msra.mxu0 %v835
    %5232 = vmatpush.msra.mxu0 %v827
    %5233 = vmatpush.msra.mxu0 %v819
    %5234 = vmatpush.msra.mxu0 %v811
    %5235 = vmatpush.msra.mxu0 %v803
    %5236 = vmatpush.msra.mxu0 %v795
    %5237 = vmatpush.msra.mxu0 %v787
    %5238 = vmatpush.msra.mxu0 %v779
    %5239 = vmatpush.msra.mxu0 %v771
    %5240 = vmatpush.msra.mxu0 %v763
    %5241 = vmatpush.msra.mxu0 %v755
    %5242 = vmatpush.msra.mxu0 %v747
    %5243 = vmatpush.msra.mxu0 %v739
    %5244 = vmatmul.f32.gmra.mxu0 %v5045
    %v5245 = vpop.f32.mrf.mxu0
    %v5246 = vadd.f32 %v5226, %v5245
    %5247 = vdwg.mxu0
    %5248 = vmatpush.msra.mxu0 %v732
    %5249 = vmatpush.msra.mxu0 %v724
    %5250 = vmatpush.msra.mxu0 %v716
    %5251 = vmatpush.msra.mxu0 %v708
    %5252 = vmatpush.msra.mxu0 %v700
    %5253 = vmatpush.msra.mxu0 %v692
    %5254 = vmatpush.msra.mxu0 %v684
    %5255 = vmatpush.msra.mxu0 %v676
    %5256 = vmatpush.msra.mxu0 %v668
    %5257 = vmatpush.msra.mxu0 %v660
    %5258 = vmatpush.msra.mxu0 %v652
    %5259 = vmatpush.msra.mxu0 %v644
    %5260 = vmatpush.msra.mxu0 %v636
    %5261 = vmatpush.msra.mxu0 %v628
    %5262 = vmatpush.msra.mxu0 %v620
    %5263 = vmatpush.msra.mxu0 %v612
    %5264 = vmatmul.f32.gmra.mxu0 %v5044
    %v5265 = vpop.f32.mrf.mxu0
    %v5266 = vadd.f32 0.0, %v5265
    %5267 = vdwg.mxu0
    %5268 = vmatpush.msra.mxu0 %v860
    %5269 = vmatpush.msra.mxu0 %v852
    %5270 = vmatpush.msra.mxu0 %v844
    %5271 = vmatpush.msra.mxu0 %v836
    %5272 = vmatpush.msra.mxu0 %v828
    %5273 = vmatpush.msra.mxu0 %v820
    %5274 = vmatpush.msra.mxu0 %v812
    %5275 = vmatpush.msra.mxu0 %v804
    %5276 = vmatpush.msra.mxu0 %v796
    %5277 = vmatpush.msra.mxu0 %v788
    %5278 = vmatpush.msra.mxu0 %v780
    %5279 = vmatpush.msra.mxu0 %v772
    %5280 = vmatpush.msra.mxu0 %v764
    %5281 = vmatpush.msra.mxu0 %v756
    %5282 = vmatpush.msra.mxu0 %v748
    %5283 = vmatpush.msra.mxu0 %v740
    %5284 = vmatmul.f32.gmra.mxu0 %v5045
    %v5285 = vpop.f32.mrf.mxu0
    %v5286 = vadd.f32 %v5266, %v5285
    %5287 = vdwg.mxu0
    %5288 = vmatpush.msra.mxu0 %v733
    %5289 = vmatpush.msra.mxu0 %v725
    %5290 = vmatpush.msra.mxu0 %v717
    %5291 = vmatpush.msra.mxu0 %v709
    %5292 = vmatpush.msra.mxu0 %v701
    %5293 = vmatpush.msra.mxu0 %v693
    %5294 = vmatpush.msra.mxu0 %v685
    %5295 = vmatpush.msra.mxu0 %v677
    %5296 = vmatpush.msra.mxu0 %v669
    %5297 = vmatpush.msra.mxu0 %v661
    %5298 = vmatpush.msra.mxu0 %v653
    %5299 = vmatpush.msra.mxu0 %v645
    %5300 = vmatpush.msra.mxu0 %v637
    %5301 = vmatpush.msra.mxu0 %v629
    %5302 = vmatpush.msra.mxu0 %v621
    %5303 = vmatpush.msra.mxu0 %v613
    %5304 = vmatmul.f32.gmra.mxu0 %v5044
    %v5305 = vpop.f32.mrf.mxu0
    %v5306 = vadd.f32 0.0, %v5305
    %5307 = vdwg.mxu0
    %5308 = vmatpush.msra.mxu0 %v861
    %5309 = vmatpush.msra.mxu0 %v853
    %5310 = vmatpush.msra.mxu0 %v845
    %5311 = vmatpush.msra.mxu0 %v837
    %5312 = vmatpush.msra.mxu0 %v829
    %5313 = vmatpush.msra.mxu0 %v821
    %5314 = vmatpush.msra.mxu0 %v813
    %5315 = vmatpush.msra.mxu0 %v805
    %5316 = vmatpush.msra.mxu0 %v797
    %5317 = vmatpush.msra.mxu0 %v789
    %5318 = vmatpush.msra.mxu0 %v781
    %5319 = vmatpush.msra.mxu0 %v773
    %5320 = vmatpush.msra.mxu0 %v765
    %5321 = vmatpush.msra.mxu0 %v757
    %5322 = vmatpush.msra.mxu0 %v749
    %5323 = vmatpush.msra.mxu0 %v741
    %5324 = vmatmul.f32.gmra.mxu0 %v5045
    %v5325 = vpop.f32.mrf.mxu0
    %v5326 = vadd.f32 %v5306, %v5325
    %5327 = vdwg.mxu0
    %5328 = vmatpush.msra.mxu0 %v734
    %5329 = vmatpush.msra.mxu0 %v726
    %5330 = vmatpush.msra.mxu0 %v718
    %5331 = vmatpush.msra.mxu0 %v710
    %5332 = vmatpush.msra.mxu0 %v702
    %5333 = vmatpush.msra.mxu0 %v694
    %5334 = vmatpush.msra.mxu0 %v686
    %5335 = vmatpush.msra.mxu0 %v678
    %5336 = vmatpush.msra.mxu0 %v670
    %5337 = vmatpush.msra.mxu0 %v662
    %5338 = vmatpush.msra.mxu0 %v654
    %5339 = vmatpush.msra.mxu0 %v646
    %5340 = vmatpush.msra.mxu0 %v638
    %5341 = vmatpush.msra.mxu0 %v630
    %5342 = vmatpush.msra.mxu0 %v622
    %5343 = vmatpush.msra.mxu0 %v614
    %5344 = vmatmul.f32.gmra.mxu0 %v5044
    %v5345 = vpop.f32.mrf.mxu0
    %v5346 = vadd.f32 0.0, %v5345
    %5347 = vdwg.mxu0
    %5348 = vmatpush.msra.mxu0 %v862
    %5349 = vmatpush.msra.mxu0 %v854
    %5350 = vmatpush.msra.mxu0 %v846
    %5351 = vmatpush.msra.mxu0 %v838
    %5352 = vmatpush.msra.mxu0 %v830
    %5353 = vmatpush.msra.mxu0 %v822
    %5354 = vmatpush.msra.mxu0 %v814
    %5355 = vmatpush.msra.mxu0 %v806
    %5356 = vmatpush.msra.mxu0 %v798
    %5357 = vmatpush.msra.mxu0 %v790
    %5358 = vmatpush.msra.mxu0 %v782
    %5359 = vmatpush.msra.mxu0 %v774
    %5360 = vmatpush.msra.mxu0 %v766
    %5361 = vmatpush.msra.mxu0 %v758
    %5362 = vmatpush.msra.mxu0 %v750
    %5363 = vmatpush.msra.mxu0 %v742
    %5364 = vmatmul.f32.gmra.mxu0 %v5045
    %v5365 = vpop.f32.mrf.mxu0
    %v5366 = vadd.f32 %v5346, %v5365
    %5367 = vdwg.mxu0
    %v5368 = vadd.f32 %v5026, %v5086
    %v5369 = vadd.f32 %v5027, %v5126
    %v5370 = vadd.f32 %v5028, %v5166
    %v5371 = vadd.f32 %v5029, %v5206
    %v5372 = vadd.f32 %v5030, %v5246
    %v5373 = vadd.f32 %v5031, %v5286
    %v5374 = vadd.f32 %v5032, %v5326
    %v5375 = vadd.f32 %v5033, %v5366
    %5376 = vmatpush.msra.mxu0 %v984
    %5377 = vmatpush.msra.mxu0 %v976
    %5378 = vmatpush.msra.mxu0 %v968
    %5379 = vmatpush.msra.mxu0 %v960
    %5380 = vmatpush.msra.mxu0 %v952
    %5381 = vmatpush.msra.mxu0 %v944
    %5382 = vmatpush.msra.mxu0 %v936
    %5383 = vmatpush.msra.mxu0 %v928
    %5384 = vmatpush.msra.mxu0 %v920
    %5385 = vmatpush.msra.mxu0 %v912
    %5386 = vmatpush.msra.mxu0 %v904
    %5387 = vmatpush.msra.mxu0 %v896
    %5388 = vmatpush.msra.mxu0 %v888
    %5389 = vmatpush.msra.mxu0 %v880
    %5390 = vmatpush.msra.mxu0 %v872
    %5391 = vmatpush.msra.mxu0 %v864
    %5392 = vmatmul.f32.gmra.mxu0 %v5024
    %v5393 = vpop.f32.mrf.mxu0
    %v5394 = vadd.f32 0.0, %v5393
    %5395 = vdwg.mxu0
    %5396 = vmatpush.msra.mxu0 %v1112
    %5397 = vmatpush.msra.mxu0 %v1104
    %5398 = vmatpush.msra.mxu0 %v1096
    %5399 = vmatpush.msra.mxu0 %v1088
    %5400 = vmatpush.msra.mxu0 %v1080
    %5401 = vmatpush.msra.mxu0 %v1072
    %5402 = vmatpush.msra.mxu0 %v1064
    %5403 = vmatpush.msra.mxu0 %v1056
    %5404 = vmatpush.msra.mxu0 %v1048
    %5405 = vmatpush.msra.mxu0 %v1040
    %5406 = vmatpush.msra.mxu0 %v1032
    %5407 = vmatpush.msra.mxu0 %v1024
    %5408 = vmatpush.msra.mxu0 %v1016
    %5409 = vmatpush.msra.mxu0 %v1008
    %5410 = vmatpush.msra.mxu0 %v1000
    %5411 = vmatpush.msra.mxu0 %v992
    %5412 = vmatmul.f32.gmra.mxu0 %v5025
    %v5413 = vpop.f32.mrf.mxu0
    %v5414 = vadd.f32 %v5394, %v5413
    %5415 = vdwg.mxu0
    %5416 = vmatpush.msra.mxu0 %v985
    %5417 = vmatpush.msra.mxu0 %v977
    %5418 = vmatpush.msra.mxu0 %v969
    %5419 = vmatpush.msra.mxu0 %v961
    %5420 = vmatpush.msra.mxu0 %v953
    %5421 = vmatpush.msra.mxu0 %v945
    %5422 = vmatpush.msra.mxu0 %v937
    %5423 = vmatpush.msra.mxu0 %v929
    %5424 = vmatpush.msra.mxu0 %v921
    %5425 = vmatpush.msra.mxu0 %v913
    %5426 = vmatpush.msra.mxu0 %v905
    %5427 = vmatpush.msra.mxu0 %v897
    %5428 = vmatpush.msra.mxu0 %v889
    %5429 = vmatpush.msra.mxu0 %v881
    %5430 = vmatpush.msra.mxu0 %v873
    %5431 = vmatpush.msra.mxu0 %v865
    %5432 = vmatmul.f32.gmra.mxu0 %v5024
    %v5433 = vpop.f32.mrf.mxu0
    %v5434 = vadd.f32 0.0, %v5433
    %5435 = vdwg.mxu0
    %5436 = vmatpush.msra.mxu0 %v1113
    %5437 = vmatpush.msra.mxu0 %v1105
    %5438 = vmatpush.msra.mxu0 %v1097
    %5439 = vmatpush.msra.mxu0 %v1089
    %5440 = vmatpush.msra.mxu0 %v1081
    %5441 = vmatpush.msra.mxu0 %v1073
    %5442 = vmatpush.msra.mxu0 %v1065
    %5443 = vmatpush.msra.mxu0 %v1057
    %5444 = vmatpush.msra.mxu0 %v1049
    %5445 = vmatpush.msra.mxu0 %v1041
    %5446 = vmatpush.msra.mxu0 %v1033
    %5447 = vmatpush.msra.mxu0 %v1025
    %5448 = vmatpush.msra.mxu0 %v1017
    %5449 = vmatpush.msra.mxu0 %v1009
    %5450 = vmatpush.msra.mxu0 %v1001
    %5451 = vmatpush.msra.mxu0 %v993
    %5452 = vmatmul.f32.gmra.mxu0 %v5025
    %v5453 = vpop.f32.mrf.mxu0
    %v5454 = vadd.f32 %v5434, %v5453
    %5455 = vdwg.mxu0
    %5456 = vmatpush.msra.mxu0 %v986
    %5457 = vmatpush.msra.mxu0 %v978
    %5458 = vmatpush.msra.mxu0 %v970
    %5459 = vmatpush.msra.mxu0 %v962
    %5460 = vmatpush.msra.mxu0 %v954
    %5461 = vmatpush.msra.mxu0 %v946
    %5462 = vmatpush.msra.mxu0 %v938
    %5463 = vmatpush.msra.mxu0 %v930
    %5464 = vmatpush.msra.mxu0 %v922
    %5465 = vmatpush.msra.mxu0 %v914
    %5466 = vmatpush.msra.mxu0 %v906
    %5467 = vmatpush.msra.mxu0 %v898
    %5468 = vmatpush.msra.mxu0 %v890
    %5469 = vmatpush.msra.mxu0 %v882
    %5470 = vmatpush.msra.mxu0 %v874
    %5471 = vmatpush.msra.mxu0 %v866
    %5472 = vmatmul.f32.gmra.mxu0 %v5024
    %v5473 = vpop.f32.mrf.mxu0
    %v5474 = vadd.f32 0.0, %v5473
    %5475 = vdwg.mxu0
    %5476 = vmatpush.msra.mxu0 %v1114
    %5477 = vmatpush.msra.mxu0 %v1106
    %5478 = vmatpush.msra.mxu0 %v1098
    %5479 = vmatpush.msra.mxu0 %v1090
    %5480 = vmatpush.msra.mxu0 %v1082
    %5481 = vmatpush.msra.mxu0 %v1074
    %5482 = vmatpush.msra.mxu0 %v1066
    %5483 = vmatpush.msra.mxu0 %v1058
    %5484 = vmatpush.msra.mxu0 %v1050
    %5485 = vmatpush.msra.mxu0 %v1042
    %5486 = vmatpush.msra.mxu0 %v1034
    %5487 = vmatpush.msra.mxu0 %v1026
    %5488 = vmatpush.msra.mxu0 %v1018
    %5489 = vmatpush.msra.mxu0 %v1010
    %5490 = vmatpush.msra.mxu0 %v1002
    %5491 = vmatpush.msra.mxu0 %v994
    %5492 = vmatmul.f32.gmra.mxu0 %v5025
    %v5493 = vpop.f32.mrf.mxu0
    %v5494 = vadd.f32 %v5474, %v5493
    %5495 = vdwg.mxu0
    %5496 = vmatpush.msra.mxu0 %v987
    %5497 = vmatpush.msra.mxu0 %v979
    %5498 = vmatpush.msra.mxu0 %v971
    %5499 = vmatpush.msra.mxu0 %v963
    %5500 = vmatpush.msra.mxu0 %v955
    %5501 = vmatpush.msra.mxu0 %v947
    %5502 = vmatpush.msra.mxu0 %v939
    %5503 = vmatpush.msra.mxu0 %v931
    %5504 = vmatpush.msra.mxu0 %v923
    %5505 = vmatpush.msra.mxu0 %v915
    %5506 = vmatpush.msra.mxu0 %v907
    %5507 = vmatpush.msra.mxu0 %v899
    %5508 = vmatpush.msra.mxu0 %v891
    %5509 = vmatpush.msra.mxu0 %v883
    %5510 = vmatpush.msra.mxu0 %v875
    %5511 = vmatpush.msra.mxu0 %v867
    %5512 = vmatmul.f32.gmra.mxu0 %v5024
    %v5513 = vpop.f32.mrf.mxu0
    %v5514 = vadd.f32 0.0, %v5513
    %5515 = vdwg.mxu0
    %5516 = vmatpush.msra.mxu0 %v1115
    %5517 = vmatpush.msra.mxu0 %v1107
    %5518 = vmatpush.msra.mxu0 %v1099
    %5519 = vmatpush.msra.mxu0 %v1091
    %5520 = vmatpush.msra.mxu0 %v1083
    %5521 = vmatpush.msra.mxu0 %v1075
    %5522 = vmatpush.msra.mxu0 %v1067
    %5523 = vmatpush.msra.mxu0 %v1059
    %5524 = vmatpush.msra.mxu0 %v1051
    %5525 = vmatpush.msra.mxu0 %v1043
    %5526 = vmatpush.msra.mxu0 %v1035
    %5527 = vmatpush.msra.mxu0 %v1027
    %5528 = vmatpush.msra.mxu0 %v1019
    %5529 = vmatpush.msra.mxu0 %v1011
    %5530 = vmatpush.msra.mxu0 %v1003
    %5531 = vmatpush.msra.mxu0 %v995
    %5532 = vmatmul.f32.gmra.mxu0 %v5025
    %v5533 = vpop.f32.mrf.mxu0
    %v5534 = vadd.f32 %v5514, %v5533
    %5535 = vdwg.mxu0
    %5536 = vmatpush.msra.mxu0 %v988
    %5537 = vmatpush.msra.mxu0 %v980
    %5538 = vmatpush.msra.mxu0 %v972
    %5539 = vmatpush.msra.mxu0 %v964
    %5540 = vmatpush.msra.mxu0 %v956
    %5541 = vmatpush.msra.mxu0 %v948
    %5542 = vmatpush.msra.mxu0 %v940
    %5543 = vmatpush.msra.mxu0 %v932
    %5544 = vmatpush.msra.mxu0 %v924
    %5545 = vmatpush.msra.mxu0 %v916
    %5546 = vmatpush.msra.mxu0 %v908
    %5547 = vmatpush.msra.mxu0 %v900
    %5548 = vmatpush.msra.mxu0 %v892
    %5549 = vmatpush.msra.mxu0 %v884
    %5550 = vmatpush.msra.mxu0 %v876
    %5551 = vmatpush.msra.mxu0 %v868
    %5552 = vmatmul.f32.gmra.mxu0 %v5024
    %v5553 = vpop.f32.mrf.mxu0
    %v5554 = vadd.f32 0.0, %v5553
    %5555 = vdwg.mxu0
    %5556 = vmatpush.msra.mxu0 %v1116
    %5557 = vmatpush.msra.mxu0 %v1108
    %5558 = vmatpush.msra.mxu0 %v1100
    %5559 = vmatpush.msra.mxu0 %v1092
    %5560 = vmatpush.msra.mxu0 %v1084
    %5561 = vmatpush.msra.mxu0 %v1076
    %5562 = vmatpush.msra.mxu0 %v1068
    %5563 = vmatpush.msra.mxu0 %v1060
    %5564 = vmatpush.msra.mxu0 %v1052
    %5565 = vmatpush.msra.mxu0 %v1044
    %5566 = vmatpush.msra.mxu0 %v1036
    %5567 = vmatpush.msra.mxu0 %v1028
    %5568 = vmatpush.msra.mxu0 %v1020
    %5569 = vmatpush.msra.mxu0 %v1012
    %5570 = vmatpush.msra.mxu0 %v1004
    %5571 = vmatpush.msra.mxu0 %v996
    %5572 = vmatmul.f32.gmra.mxu0 %v5025
    %v5573 = vpop.f32.mrf.mxu0
    %v5574 = vadd.f32 %v5554, %v5573
    %5575 = vdwg.mxu0
    %5576 = vmatpush.msra.mxu0 %v989
    %5577 = vmatpush.msra.mxu0 %v981
    %5578 = vmatpush.msra.mxu0 %v973
    %5579 = vmatpush.msra.mxu0 %v965
    %5580 = vmatpush.msra.mxu0 %v957
    %5581 = vmatpush.msra.mxu0 %v949
    %5582 = vmatpush.msra.mxu0 %v941
    %5583 = vmatpush.msra.mxu0 %v933
    %5584 = vmatpush.msra.mxu0 %v925
    %5585 = vmatpush.msra.mxu0 %v917
    %5586 = vmatpush.msra.mxu0 %v909
    %5587 = vmatpush.msra.mxu0 %v901
    %5588 = vmatpush.msra.mxu0 %v893
    %5589 = vmatpush.msra.mxu0 %v885
    %5590 = vmatpush.msra.mxu0 %v877
    %5591 = vmatpush.msra.mxu0 %v869
    %5592 = vmatmul.f32.gmra.mxu0 %v5024
    %v5593 = vpop.f32.mrf.mxu0
    %v5594 = vadd.f32 0.0, %v5593
    %5595 = vdwg.mxu0
    %5596 = vmatpush.msra.mxu0 %v1117
    %5597 = vmatpush.msra.mxu0 %v1109
    %5598 = vmatpush.msra.mxu0 %v1101
    %5599 = vmatpush.msra.mxu0 %v1093
    %5600 = vmatpush.msra.mxu0 %v1085
    %5601 = vmatpush.msra.mxu0 %v1077
    %5602 = vmatpush.msra.mxu0 %v1069
    %5603 = vmatpush.msra.mxu0 %v1061
    %5604 = vmatpush.msra.mxu0 %v1053
    %5605 = vmatpush.msra.mxu0 %v1045
    %5606 = vmatpush.msra.mxu0 %v1037
    %5607 = vmatpush.msra.mxu0 %v1029
    %5608 = vmatpush.msra.mxu0 %v1021
    %5609 = vmatpush.msra.mxu0 %v1013
    %5610 = vmatpush.msra.mxu0 %v1005
    %5611 = vmatpush.msra.mxu0 %v997
    %5612 = vmatmul.f32.gmra.mxu0 %v5025
    %v5613 = vpop.f32.mrf.mxu0
    %v5614 = vadd.f32 %v5594, %v5613
    %5615 = vdwg.mxu0
    %5616 = vmatpush.msra.mxu0 %v990
    %5617 = vmatpush.msra.mxu0 %v982
    %5618 = vmatpush.msra.mxu0 %v974
    %5619 = vmatpush.msra.mxu0 %v966
    %5620 = vmatpush.msra.mxu0 %v958
    %5621 = vmatpush.msra.mxu0 %v950
    %5622 = vmatpush.msra.mxu0 %v942
    %5623 = vmatpush.msra.mxu0 %v934
    %5624 = vmatpush.msra.mxu0 %v926
    %5625 = vmatpush.msra.mxu0 %v918
    %5626 = vmatpush.msra.mxu0 %v910
    %5627 = vmatpush.msra.mxu0 %v902
    %5628 = vmatpush.msra.mxu0 %v894
    %5629 = vmatpush.msra.mxu0 %v886
    %5630 = vmatpush.msra.mxu0 %v878
    %5631 = vmatpush.msra.mxu0 %v870
    %5632 = vmatmul.f32.gmra.mxu0 %v5024
    %v5633 = vpop.f32.mrf.mxu0
    %v5634 = vadd.f32 0.0, %v5633
    %5635 = vdwg.mxu0
    %5636 = vmatpush.msra.mxu0 %v1118
    %5637 = vmatpush.msra.mxu0 %v1110
    %5638 = vmatpush.msra.mxu0 %v1102
    %5639 = vmatpush.msra.mxu0 %v1094
    %5640 = vmatpush.msra.mxu0 %v1086
    %5641 = vmatpush.msra.mxu0 %v1078
    %5642 = vmatpush.msra.mxu0 %v1070
    %5643 = vmatpush.msra.mxu0 %v1062
    %5644 = vmatpush.msra.mxu0 %v1054
    %5645 = vmatpush.msra.mxu0 %v1046
    %5646 = vmatpush.msra.mxu0 %v1038
    %5647 = vmatpush.msra.mxu0 %v1030
    %5648 = vmatpush.msra.mxu0 %v1022
    %5649 = vmatpush.msra.mxu0 %v1014
    %5650 = vmatpush.msra.mxu0 %v1006
    %5651 = vmatpush.msra.mxu0 %v998
    %5652 = vmatmul.f32.gmra.mxu0 %v5025
    %v5653 = vpop.f32.mrf.mxu0
    %v5654 = vadd.f32 %v5634, %v5653
    %5655 = vdwg.mxu0
    %5656 = vmatpush.msra.mxu0 %v991
    %5657 = vmatpush.msra.mxu0 %v983
    %5658 = vmatpush.msra.mxu0 %v975
    %5659 = vmatpush.msra.mxu0 %v967
    %5660 = vmatpush.msra.mxu0 %v959
    %5661 = vmatpush.msra.mxu0 %v951
    %5662 = vmatpush.msra.mxu0 %v943
    %5663 = vmatpush.msra.mxu0 %v935
    %5664 = vmatpush.msra.mxu0 %v927
    %5665 = vmatpush.msra.mxu0 %v919
    %5666 = vmatpush.msra.mxu0 %v911
    %5667 = vmatpush.msra.mxu0 %v903
    %5668 = vmatpush.msra.mxu0 %v895
    %5669 = vmatpush.msra.mxu0 %v887
    %5670 = vmatpush.msra.mxu0 %v879
    %5671 = vmatpush.msra.mxu0 %v871
    %5672 = vmatmul.f32.gmra.mxu0 %v5024
    %v5673 = vpop.f32.mrf.mxu0
    %v5674 = vadd.f32 0.0, %v5673
    %5675 = vdwg.mxu0
    %5676 = vmatpush.msra.mxu0 %v1119
    %5677 = vmatpush.msra.mxu0 %v1111
    %5678 = vmatpush.msra.mxu0 %v1103
    %5679 = vmatpush.msra.mxu0 %v1095
    %5680 = vmatpush.msra.mxu0 %v1087
    %5681 = vmatpush.msra.mxu0 %v1079
    %5682 = vmatpush.msra.mxu0 %v1071
    %5683 = vmatpush.msra.mxu0 %v1063
    %5684 = vmatpush.msra.mxu0 %v1055
    %5685 = vmatpush.msra.mxu0 %v1047
    %5686 = vmatpush.msra.mxu0 %v1039
    %5687 = vmatpush.msra.mxu0 %v1031
    %5688 = vmatpush.msra.mxu0 %v1023
    %5689 = vmatpush.msra.mxu0 %v1015
    %5690 = vmatpush.msra.mxu0 %v1007
    %5691 = vmatpush.msra.mxu0 %v999
    %5692 = vmatmul.f32.gmra.mxu0 %v5025
    %v5693 = vpop.f32.mrf.mxu0
    %v5694 = vadd.f32 %v5674, %v5693
    %5695 = vdwg.mxu0
    %v5704 = vrot.slane %v5414, 2
    %v5705 = vrot.slane %v5454, 2
    %v5706 = vrot.slane %v5494, 2
    %v5707 = vrot.slane %v5534, 2
    %v5708 = vrot.slane %v5574, 2
    %v5709 = vrot.slane %v5614, 2
    %v5710 = vrot.slane %v5654, 2
    %v5711 = vrot.slane %v5694, 2
    %v5720 = vadd.f32 %v5034, %v5704
    %v5721 = vadd.f32 %v5035, %v5705
    %v5722 = vadd.f32 %v5036, %v5706
    %v5723 = vadd.f32 %v5037, %v5707
    %v5724 = vadd.f32 %v5038, %v5708
    %v5725 = vadd.f32 %v5039, %v5709
    %v5726 = vadd.f32 %v5040, %v5710
    %v5727 = vadd.f32 %v5041, %v5711
    %v5728 = vxor.u32 %v5368, 2147483648
    %v5729 = vxor.u32 %v5369, 2147483648
    %v5730 = vmul.f32 %v5728, 1.442695
    %v5731 = vpow.pop %v5730
    %v5732 = vmul.f32 %v5729, 1.442695
    %v5733 = vpow.pop %v5732
    %v5734 = vadd.f32 %v5731, 1.0
    %v5735 = vadd.f32 %v5733, 1.0
    %v5736 = vrcp.pop %v5734
    %v5737 = vmul.f32 %v5734, %v5736
    %v5738 = vsub.f32 1.0, %v5737
    %v5739 = vmul.f32 %v5736, %v5738
    %v5740 = vadd.f32 %v5736, %v5739
    %vm5741 = vweird.f32 %v5734
    %vm5742 = vweird.f32 %v5736
    %vm5743 = vmor %vm5741, %vm5742
    %v5744 = vsel %vm5743, %v5736, %v5740
    %v5745 = vand.u32 2147483647, %v5734
    %vm5746 = vcmp.eq.f32.partialorder %v5745, 8.507059e+37
    %v5747 = vand.u32 %v5734, 2147483648
    %v5748 = vor.u32 1.1754944e-38, %v5747
    %v5749 = vsel %vm5746, %v5748, %v5744
    %v5750 = vmul.f32 1.0, %v5749
    %v5751 = vrcp.pop %v5735
    %v5752 = vmul.f32 %v5735, %v5751
    %v5753 = vsub.f32 1.0, %v5752
    %v5754 = vmul.f32 %v5751, %v5753
    %v5755 = vadd.f32 %v5751, %v5754
    %vm5756 = vweird.f32 %v5735
    %vm5757 = vweird.f32 %v5751
    %vm5758 = vmor %vm5756, %vm5757
    %v5759 = vsel %vm5758, %v5751, %v5755
    %v5760 = vand.u32 2147483647, %v5735
    %vm5761 = vcmp.eq.f32.partialorder %v5760, 8.507059e+37
    %v5762 = vand.u32 %v5735, 2147483648
    %v5763 = vor.u32 1.1754944e-38, %v5762
    %v5764 = vsel %vm5761, %v5763, %v5759
    %v5765 = vmul.f32 1.0, %v5764
    %v5766 = vxor.u32 %v5370, 2147483648
    %v5767 = vxor.u32 %v5371, 2147483648
    %v5768 = vmul.f32 %v5766, 1.442695
    %v5769 = vpow.pop %v5768
    %v5770 = vmul.f32 %v5767, 1.442695
    %v5771 = vpow.pop %v5770
    %v5772 = vadd.f32 %v5769, 1.0
    %v5773 = vadd.f32 %v5771, 1.0
    %v5774 = vrcp.pop %v5772
    %v5775 = vmul.f32 %v5772, %v5774
    %v5776 = vsub.f32 1.0, %v5775
    %v5777 = vmul.f32 %v5774, %v5776
    %v5778 = vadd.f32 %v5774, %v5777
    %vm5779 = vweird.f32 %v5772
    %vm5780 = vweird.f32 %v5774
    %vm5781 = vmor %vm5779, %vm5780
    %v5782 = vsel %vm5781, %v5774, %v5778
    %v5783 = vand.u32 2147483647, %v5772
    %vm5784 = vcmp.eq.f32.partialorder %v5783, 8.507059e+37
    %v5785 = vand.u32 %v5772, 2147483648
    %v5786 = vor.u32 1.1754944e-38, %v5785
    %v5787 = vsel %vm5784, %v5786, %v5782
    %v5788 = vmul.f32 1.0, %v5787
    %v5789 = vrcp.pop %v5773
    %v5790 = vmul.f32 %v5773, %v5789
    %v5791 = vsub.f32 1.0, %v5790
    %v5792 = vmul.f32 %v5789, %v5791
    %v5793 = vadd.f32 %v5789, %v5792
    %vm5794 = vweird.f32 %v5773
    %vm5795 = vweird.f32 %v5789
    %vm5796 = vmor %vm5794, %vm5795
    %v5797 = vsel %vm5796, %v5789, %v5793
    %v5798 = vand.u32 2147483647, %v5773
    %vm5799 = vcmp.eq.f32.partialorder %v5798, 8.507059e+37
    %v5800 = vand.u32 %v5773, 2147483648
    %v5801 = vor.u32 1.1754944e-38, %v5800
    %v5802 = vsel %vm5799, %v5801, %v5797
    %v5803 = vmul.f32 1.0, %v5802
    %v5804 = vtanh.pop %v5372
    %v5805 = vtanh.pop %v5373
    %v5806 = vxor.u32 %v5374, 2147483648
    %v5807 = vxor.u32 %v5375, 2147483648
    %v5808 = vmul.f32 %v5806, 1.442695
    %v5809 = vpow.pop %v5808
    %v5810 = vmul.f32 %v5807, 1.442695
    %v5811 = vpow.pop %v5810
    %v5812 = vadd.f32 %v5809, 1.0
    %v5813 = vadd.f32 %v5811, 1.0
    %v5814 = vrcp.pop %v5812
    %v5815 = vmul.f32 %v5812, %v5814
    %v5816 = vsub.f32 1.0, %v5815
    %v5817 = vmul.f32 %v5814, %v5816
    %v5818 = vadd.f32 %v5814, %v5817
    %vm5819 = vweird.f32 %v5812
    %vm5820 = vweird.f32 %v5814
    %vm5821 = vmor %vm5819, %vm5820
    %v5822 = vsel %vm5821, %v5814, %v5818
    %v5823 = vand.u32 2147483647, %v5812
    %vm5824 = vcmp.eq.f32.partialorder %v5823, 8.507059e+37
    %v5825 = vand.u32 %v5812, 2147483648
    %v5826 = vor.u32 1.1754944e-38, %v5825
    %v5827 = vsel %vm5824, %v5826, %v5822
    %v5828 = vmul.f32 1.0, %v5827
    %v5829 = vrcp.pop %v5813
    %v5830 = vmul.f32 %v5813, %v5829
    %v5831 = vsub.f32 1.0, %v5830
    %v5832 = vmul.f32 %v5829, %v5831
    %v5833 = vadd.f32 %v5829, %v5832
    %vm5834 = vweird.f32 %v5813
    %vm5835 = vweird.f32 %v5829
    %vm5836 = vmor %vm5834, %vm5835
    %v5837 = vsel %vm5836, %v5829, %v5833
    %v5838 = vand.u32 2147483647, %v5813
    %vm5839 = vcmp.eq.f32.partialorder %v5838, 8.507059e+37
    %v5840 = vand.u32 %v5813, 2147483648
    %v5841 = vor.u32 1.1754944e-38, %v5840
    %v5842 = vsel %vm5839, %v5841, %v5837
    %v5843 = vmul.f32 1.0, %v5842
    %v5846 = vrot.slane %v4888, 6
    %v5847 = vrot.slane %v4889, 6
    %v5850 = vmul.f32 %v5788, %v5846
    %v5851 = vmul.f32 %v5803, %v5847
    %v5852 = vmul.f32 %v5750, %v5804
    %v5853 = vmul.f32 %v5765, %v5805
    %v5854 = vadd.f32 %v5850, %v5852
    %v5855 = vadd.f32 %v5851, %v5853
    %v5856 = vtanh.pop %v5854
    %v5857 = vtanh.pop %v5855
    %v5858 = vmul.f32 %v5828, %v5856
    %v5859 = vmul.f32 %v5843, %v5857
    %v5860 = vxor.u32 %v5720, 2147483648
    %v5861 = vxor.u32 %v5721, 2147483648
    %v5862 = vmul.f32 %v5860, 1.442695
    %v5863 = vpow.pop %v5862
    %v5864 = vmul.f32 %v5861, 1.442695
    %v5865 = vpow.pop %v5864
    %v5866 = vadd.f32 %v5863, 1.0
    %v5867 = vadd.f32 %v5865, 1.0
    %v5868 = vrcp.pop %v5866
    %v5869 = vmul.f32 %v5866, %v5868
    %v5870 = vsub.f32 1.0, %v5869
    %v5871 = vmul.f32 %v5868, %v5870
    %v5872 = vadd.f32 %v5868, %v5871
    %vm5873 = vweird.f32 %v5866
    %vm5874 = vweird.f32 %v5868
    %vm5875 = vmor %vm5873, %vm5874
    %v5876 = vsel %vm5875, %v5868, %v5872
    %v5877 = vand.u32 2147483647, %v5866
    %vm5878 = vcmp.eq.f32.partialorder %v5877, 8.507059e+37
    %v5879 = vand.u32 %v5866, 2147483648
    %v5880 = vor.u32 1.1754944e-38, %v5879
    %v5881 = vsel %vm5878, %v5880, %v5876
    %v5882 = vmul.f32 1.0, %v5881
    %v5883 = vrcp.pop %v5867
    %v5884 = vmul.f32 %v5867, %v5883
    %v5885 = vsub.f32 1.0, %v5884
    %v5886 = vmul.f32 %v5883, %v5885
    %v5887 = vadd.f32 %v5883, %v5886
    %vm5888 = vweird.f32 %v5867
    %vm5889 = vweird.f32 %v5883
    %vm5890 = vmor %vm5888, %vm5889
    %v5891 = vsel %vm5890, %v5883, %v5887
    %v5892 = vand.u32 2147483647, %v5867
    %vm5893 = vcmp.eq.f32.partialorder %v5892, 8.507059e+37
    %v5894 = vand.u32 %v5867, 2147483648
    %v5895 = vor.u32 1.1754944e-38, %v5894
    %v5896 = vsel %vm5893, %v5895, %v5891
    %v5897 = vmul.f32 1.0, %v5896
    %v5898 = vxor.u32 %v5722, 2147483648
    %v5899 = vxor.u32 %v5723, 2147483648
    %v5900 = vmul.f32 %v5898, 1.442695
    %v5901 = vpow.pop %v5900
    %v5902 = vmul.f32 %v5899, 1.442695
    %v5903 = vpow.pop %v5902
    %v5904 = vadd.f32 %v5901, 1.0
    %v5905 = vadd.f32 %v5903, 1.0
    %v5906 = vrcp.pop %v5904
    %v5907 = vmul.f32 %v5904, %v5906
    %v5908 = vsub.f32 1.0, %v5907
    %v5909 = vmul.f32 %v5906, %v5908
    %v5910 = vadd.f32 %v5906, %v5909
    %vm5911 = vweird.f32 %v5904
    %vm5912 = vweird.f32 %v5906
    %vm5913 = vmor %vm5911, %vm5912
    %v5914 = vsel %vm5913, %v5906, %v5910
    %v5915 = vand.u32 2147483647, %v5904
    %vm5916 = vcmp.eq.f32.partialorder %v5915, 8.507059e+37
    %v5917 = vand.u32 %v5904, 2147483648
    %v5918 = vor.u32 1.1754944e-38, %v5917
    %v5919 = vsel %vm5916, %v5918, %v5914
    %v5920 = vmul.f32 1.0, %v5919
    %v5921 = vrcp.pop %v5905
    %v5922 = vmul.f32 %v5905, %v5921
    %v5923 = vsub.f32 1.0, %v5922
    %v5924 = vmul.f32 %v5921, %v5923
    %v5925 = vadd.f32 %v5921, %v5924
    %vm5926 = vweird.f32 %v5905
    %vm5927 = vweird.f32 %v5921
    %vm5928 = vmor %vm5926, %vm5927
    %v5929 = vsel %vm5928, %v5921, %v5925
    %v5930 = vand.u32 2147483647, %v5905
    %vm5931 = vcmp.eq.f32.partialorder %v5930, 8.507059e+37
    %v5932 = vand.u32 %v5905, 2147483648
    %v5933 = vor.u32 1.1754944e-38, %v5932
    %v5934 = vsel %vm5931, %v5933, %v5929
    %v5935 = vmul.f32 1.0, %v5934
    %v5936 = vtanh.pop %v5724
    %v5937 = vtanh.pop %v5725
    %v5938 = vxor.u32 %v5726, 2147483648
    %v5939 = vxor.u32 %v5727, 2147483648
    %v5940 = vmul.f32 %v5938, 1.442695
    %v5941 = vpow.pop %v5940
    %v5942 = vmul.f32 %v5939, 1.442695
    %v5943 = vpow.pop %v5942
    %v5944 = vadd.f32 %v5941, 1.0
    %v5945 = vadd.f32 %v5943, 1.0
    %v5946 = vrcp.pop %v5944
    %v5947 = vmul.f32 %v5944, %v5946
    %v5948 = vsub.f32 1.0, %v5947
    %v5949 = vmul.f32 %v5946, %v5948
    %v5950 = vadd.f32 %v5946, %v5949
    %vm5951 = vweird.f32 %v5944
    %vm5952 = vweird.f32 %v5946
    %vm5953 = vmor %vm5951, %vm5952
    %v5954 = vsel %vm5953, %v5946, %v5950
    %v5955 = vand.u32 2147483647, %v5944
    %vm5956 = vcmp.eq.f32.partialorder %v5955, 8.507059e+37
    %v5957 = vand.u32 %v5944, 2147483648
    %v5958 = vor.u32 1.1754944e-38, %v5957
    %v5959 = vsel %vm5956, %v5958, %v5954
    %v5960 = vmul.f32 1.0, %v5959
    %v5961 = vrcp.pop %v5945
    %v5962 = vmul.f32 %v5945, %v5961
    %v5963 = vsub.f32 1.0, %v5962
    %v5964 = vmul.f32 %v5961, %v5963
    %v5965 = vadd.f32 %v5961, %v5964
    %vm5966 = vweird.f32 %v5945
    %vm5967 = vweird.f32 %v5961
    %vm5968 = vmor %vm5966, %vm5967
    %v5969 = vsel %vm5968, %v5961, %v5965
    %v5970 = vand.u32 2147483647, %v5945
    %vm5971 = vcmp.eq.f32.partialorder %v5970, 8.507059e+37
    %v5972 = vand.u32 %v5945, 2147483648
    %v5973 = vor.u32 1.1754944e-38, %v5972
    %v5974 = vsel %vm5971, %v5973, %v5969
    %v5975 = vmul.f32 1.0, %v5974
    %v5978 = vrot.slane %v5020, 2
    %v5979 = vrot.slane %v5021, 2
    %v5982 = vmul.f32 %v5920, %v5978
    %v5983 = vmul.f32 %v5935, %v5979
    %v5984 = vmul.f32 %v5882, %v5936
    %v5985 = vmul.f32 %v5897, %v5937
    %v5986 = vadd.f32 %v5982, %v5984
    %v5987 = vadd.f32 %v5983, %v5985
    %v5988 = vtanh.pop %v5986
    %v5989 = vtanh.pop %v5987
    %v5990 = vmul.f32 %v5960, %v5988
    %v5991 = vmul.f32 %v5975, %v5989
    %v5992 = vld [vmem:[#allocation2 + $0x80] sm:$0xc]
    %v5993 = vld [vmem:[#allocation2 + $0x88] sm:$0xc]
    %v5994 = vld [vmem:[#allocation2 + $0x90] sm:$0xc]
    %v5995 = vld [vmem:[#allocation2 + $0x98] sm:$0xc]
    %v5996 = vld [vmem:[#allocation2 + $0xa0] sm:$0xc]
    %v5997 = vld [vmem:[#allocation2 + $0xa8] sm:$0xc]
    %v5998 = vld [vmem:[#allocation2 + $0xb0] sm:$0xc]
    %v5999 = vld [vmem:[#allocation2 + $0xb8] sm:$0xc]
    %v6000 = vld [vmem:[#allocation2 + $0x40] sm:$0x30]
    %v6001 = vld [vmem:[#allocation2 + $0x48] sm:$0x30]
    %v6002 = vld [vmem:[#allocation2 + $0x50] sm:$0x30]
    %v6003 = vld [vmem:[#allocation2 + $0x58] sm:$0x30]
    %v6004 = vld [vmem:[#allocation2 + $0x60] sm:$0x30]
    %v6005 = vld [vmem:[#allocation2 + $0x68] sm:$0x30]
    %v6006 = vld [vmem:[#allocation2 + $0x70] sm:$0x30]
    %v6007 = vld [vmem:[#allocation2 + $0x78] sm:$0x30]
    %6008 = vmatpush.msra.mxu0 %v727
    %6009 = vmatpush.msra.mxu0 %v719
    %6010 = vmatpush.msra.mxu0 %v711
    %6011 = vmatpush.msra.mxu0 %v703
    %6012 = vmatpush.msra.mxu0 %v695
    %6013 = vmatpush.msra.mxu0 %v687
    %6014 = vmatpush.msra.mxu0 %v679
    %6015 = vmatpush.msra.mxu0 %v671
    %6016 = vmatpush.msra.mxu0 %v663
    %6017 = vmatpush.msra.mxu0 %v655
    %6018 = vmatpush.msra.mxu0 %v647
    %6019 = vmatpush.msra.mxu0 %v639
    %6020 = vmatpush.msra.mxu0 %v631
    %6021 = vmatpush.msra.mxu0 %v623
    %6022 = vmatpush.msra.mxu0 %v615
    %6023 = vmatpush.msra.mxu0 %v607
    %6024 = vmatmul.f32.gmra.mxu0 %v5858
    %v6025 = vpop.f32.mrf.mxu0
    %v6026 = vadd.f32 0.0, %v6025
    %6027 = vdwg.mxu0
    %6028 = vmatpush.msra.mxu0 %v855
    %6029 = vmatpush.msra.mxu0 %v847
    %6030 = vmatpush.msra.mxu0 %v839
    %6031 = vmatpush.msra.mxu0 %v831
    %6032 = vmatpush.msra.mxu0 %v823
    %6033 = vmatpush.msra.mxu0 %v815
    %6034 = vmatpush.msra.mxu0 %v807
    %6035 = vmatpush.msra.mxu0 %v799
    %6036 = vmatpush.msra.mxu0 %v791
    %6037 = vmatpush.msra.mxu0 %v783
    %6038 = vmatpush.msra.mxu0 %v775
    %6039 = vmatpush.msra.mxu0 %v767
    %6040 = vmatpush.msra.mxu0 %v759
    %6041 = vmatpush.msra.mxu0 %v751
    %6042 = vmatpush.msra.mxu0 %v743
    %6043 = vmatpush.msra.mxu0 %v735
    %6044 = vmatmul.f32.gmra.mxu0 %v5859
    %v6045 = vpop.f32.mrf.mxu0
    %v6046 = vadd.f32 %v6026, %v6045
    %6047 = vdwg.mxu0
    %6048 = vmatpush.msra.mxu0 %v728
    %6049 = vmatpush.msra.mxu0 %v720
    %6050 = vmatpush.msra.mxu0 %v712
    %6051 = vmatpush.msra.mxu0 %v704
    %6052 = vmatpush.msra.mxu0 %v696
    %6053 = vmatpush.msra.mxu0 %v688
    %6054 = vmatpush.msra.mxu0 %v680
    %6055 = vmatpush.msra.mxu0 %v672
    %6056 = vmatpush.msra.mxu0 %v664
    %6057 = vmatpush.msra.mxu0 %v656
    %6058 = vmatpush.msra.mxu0 %v648
    %6059 = vmatpush.msra.mxu0 %v640
    %6060 = vmatpush.msra.mxu0 %v632
    %6061 = vmatpush.msra.mxu0 %v624
    %6062 = vmatpush.msra.mxu0 %v616
    %6063 = vmatpush.msra.mxu0 %v608
    %6064 = vmatmul.f32.gmra.mxu0 %v5858
    %v6065 = vpop.f32.mrf.mxu0
    %v6066 = vadd.f32 0.0, %v6065
    %6067 = vdwg.mxu0
    %6068 = vmatpush.msra.mxu0 %v856
    %6069 = vmatpush.msra.mxu0 %v848
    %6070 = vmatpush.msra.mxu0 %v840
    %6071 = vmatpush.msra.mxu0 %v832
    %6072 = vmatpush.msra.mxu0 %v824
    %6073 = vmatpush.msra.mxu0 %v816
    %6074 = vmatpush.msra.mxu0 %v808
    %6075 = vmatpush.msra.mxu0 %v800
    %6076 = vmatpush.msra.mxu0 %v792
    %6077 = vmatpush.msra.mxu0 %v784
    %6078 = vmatpush.msra.mxu0 %v776
    %6079 = vmatpush.msra.mxu0 %v768
    %6080 = vmatpush.msra.mxu0 %v760
    %6081 = vmatpush.msra.mxu0 %v752
    %6082 = vmatpush.msra.mxu0 %v744
    %6083 = vmatpush.msra.mxu0 %v736
    %6084 = vmatmul.f32.gmra.mxu0 %v5859
    %v6085 = vpop.f32.mrf.mxu0
    %v6086 = vadd.f32 %v6066, %v6085
    %6087 = vdwg.mxu0
    %6088 = vmatpush.msra.mxu0 %v729
    %6089 = vmatpush.msra.mxu0 %v721
    %6090 = vmatpush.msra.mxu0 %v713
    %6091 = vmatpush.msra.mxu0 %v705
    %6092 = vmatpush.msra.mxu0 %v697
    %6093 = vmatpush.msra.mxu0 %v689
    %6094 = vmatpush.msra.mxu0 %v681
    %6095 = vmatpush.msra.mxu0 %v673
    %6096 = vmatpush.msra.mxu0 %v665
    %6097 = vmatpush.msra.mxu0 %v657
    %6098 = vmatpush.msra.mxu0 %v649
    %6099 = vmatpush.msra.mxu0 %v641
    %6100 = vmatpush.msra.mxu0 %v633
    %6101 = vmatpush.msra.mxu0 %v625
    %6102 = vmatpush.msra.mxu0 %v617
    %6103 = vmatpush.msra.mxu0 %v609
    %6104 = vmatmul.f32.gmra.mxu0 %v5858
    %v6105 = vpop.f32.mrf.mxu0
    %v6106 = vadd.f32 0.0, %v6105
    %6107 = vdwg.mxu0
    %6108 = vmatpush.msra.mxu0 %v857
    %6109 = vmatpush.msra.mxu0 %v849
    %6110 = vmatpush.msra.mxu0 %v841
    %6111 = vmatpush.msra.mxu0 %v833
    %6112 = vmatpush.msra.mxu0 %v825
    %6113 = vmatpush.msra.mxu0 %v817
    %6114 = vmatpush.msra.mxu0 %v809
    %6115 = vmatpush.msra.mxu0 %v801
    %6116 = vmatpush.msra.mxu0 %v793
    %6117 = vmatpush.msra.mxu0 %v785
    %6118 = vmatpush.msra.mxu0 %v777
    %6119 = vmatpush.msra.mxu0 %v769
    %6120 = vmatpush.msra.mxu0 %v761
    %6121 = vmatpush.msra.mxu0 %v753
    %6122 = vmatpush.msra.mxu0 %v745
    %6123 = vmatpush.msra.mxu0 %v737
    %6124 = vmatmul.f32.gmra.mxu0 %v5859
    %v6125 = vpop.f32.mrf.mxu0
    %v6126 = vadd.f32 %v6106, %v6125
    %6127 = vdwg.mxu0
    %6128 = vmatpush.msra.mxu0 %v730
    %6129 = vmatpush.msra.mxu0 %v722
    %6130 = vmatpush.msra.mxu0 %v714
    %6131 = vmatpush.msra.mxu0 %v706
    %6132 = vmatpush.msra.mxu0 %v698
    %6133 = vmatpush.msra.mxu0 %v690
    %6134 = vmatpush.msra.mxu0 %v682
    %6135 = vmatpush.msra.mxu0 %v674
    %6136 = vmatpush.msra.mxu0 %v666
    %6137 = vmatpush.msra.mxu0 %v658
    %6138 = vmatpush.msra.mxu0 %v650
    %6139 = vmatpush.msra.mxu0 %v642
    %6140 = vmatpush.msra.mxu0 %v634
    %6141 = vmatpush.msra.mxu0 %v626
    %6142 = vmatpush.msra.mxu0 %v618
    %6143 = vmatpush.msra.mxu0 %v610
    %6144 = vmatmul.f32.gmra.mxu0 %v5858
    %v6145 = vpop.f32.mrf.mxu0
    %v6146 = vadd.f32 0.0, %v6145
    %6147 = vdwg.mxu0
    %6148 = vmatpush.msra.mxu0 %v858
    %6149 = vmatpush.msra.mxu0 %v850
    %6150 = vmatpush.msra.mxu0 %v842
    %6151 = vmatpush.msra.mxu0 %v834
    %6152 = vmatpush.msra.mxu0 %v826
    %6153 = vmatpush.msra.mxu0 %v818
    %6154 = vmatpush.msra.mxu0 %v810
    %6155 = vmatpush.msra.mxu0 %v802
    %6156 = vmatpush.msra.mxu0 %v794
    %6157 = vmatpush.msra.mxu0 %v786
    %6158 = vmatpush.msra.mxu0 %v778
    %6159 = vmatpush.msra.mxu0 %v770
    %6160 = vmatpush.msra.mxu0 %v762
    %6161 = vmatpush.msra.mxu0 %v754
    %6162 = vmatpush.msra.mxu0 %v746
    %6163 = vmatpush.msra.mxu0 %v738
    %6164 = vmatmul.f32.gmra.mxu0 %v5859
    %v6165 = vpop.f32.mrf.mxu0
    %v6166 = vadd.f32 %v6146, %v6165
    %6167 = vdwg.mxu0
    %6168 = vmatpush.msra.mxu0 %v731
    %6169 = vmatpush.msra.mxu0 %v723
    %6170 = vmatpush.msra.mxu0 %v715
    %6171 = vmatpush.msra.mxu0 %v707
    %6172 = vmatpush.msra.mxu0 %v699
    %6173 = vmatpush.msra.mxu0 %v691
    %6174 = vmatpush.msra.mxu0 %v683
    %6175 = vmatpush.msra.mxu0 %v675
    %6176 = vmatpush.msra.mxu0 %v667
    %6177 = vmatpush.msra.mxu0 %v659
    %6178 = vmatpush.msra.mxu0 %v651
    %6179 = vmatpush.msra.mxu0 %v643
    %6180 = vmatpush.msra.mxu0 %v635
    %6181 = vmatpush.msra.mxu0 %v627
    %6182 = vmatpush.msra.mxu0 %v619
    %6183 = vmatpush.msra.mxu0 %v611
    %6184 = vmatmul.f32.gmra.mxu0 %v5858
    %v6185 = vpop.f32.mrf.mxu0
    %v6186 = vadd.f32 0.0, %v6185
    %6187 = vdwg.mxu0
    %6188 = vmatpush.msra.mxu0 %v859
    %6189 = vmatpush.msra.mxu0 %v851
    %6190 = vmatpush.msra.mxu0 %v843
    %6191 = vmatpush.msra.mxu0 %v835
    %6192 = vmatpush.msra.mxu0 %v827
    %6193 = vmatpush.msra.mxu0 %v819
    %6194 = vmatpush.msra.mxu0 %v811
    %6195 = vmatpush.msra.mxu0 %v803
    %6196 = vmatpush.msra.mxu0 %v795
    %6197 = vmatpush.msra.mxu0 %v787
    %6198 = vmatpush.msra.mxu0 %v779
    %6199 = vmatpush.msra.mxu0 %v771
    %6200 = vmatpush.msra.mxu0 %v763
    %6201 = vmatpush.msra.mxu0 %v755
    %6202 = vmatpush.msra.mxu0 %v747
    %6203 = vmatpush.msra.mxu0 %v739
    %6204 = vmatmul.f32.gmra.mxu0 %v5859
    %v6205 = vpop.f32.mrf.mxu0
    %v6206 = vadd.f32 %v6186, %v6205
    %6207 = vdwg.mxu0
    %6208 = vmatpush.msra.mxu0 %v732
    %6209 = vmatpush.msra.mxu0 %v724
    %6210 = vmatpush.msra.mxu0 %v716
    %6211 = vmatpush.msra.mxu0 %v708
    %6212 = vmatpush.msra.mxu0 %v700
    %6213 = vmatpush.msra.mxu0 %v692
    %6214 = vmatpush.msra.mxu0 %v684
    %6215 = vmatpush.msra.mxu0 %v676
    %6216 = vmatpush.msra.mxu0 %v668
    %6217 = vmatpush.msra.mxu0 %v660
    %6218 = vmatpush.msra.mxu0 %v652
    %6219 = vmatpush.msra.mxu0 %v644
    %6220 = vmatpush.msra.mxu0 %v636
    %6221 = vmatpush.msra.mxu0 %v628
    %6222 = vmatpush.msra.mxu0 %v620
    %6223 = vmatpush.msra.mxu0 %v612
    %6224 = vmatmul.f32.gmra.mxu0 %v5858
    %v6225 = vpop.f32.mrf.mxu0
    %v6226 = vadd.f32 0.0, %v6225
    %6227 = vdwg.mxu0
    %6228 = vmatpush.msra.mxu0 %v860
    %6229 = vmatpush.msra.mxu0 %v852
    %6230 = vmatpush.msra.mxu0 %v844
    %6231 = vmatpush.msra.mxu0 %v836
    %6232 = vmatpush.msra.mxu0 %v828
    %6233 = vmatpush.msra.mxu0 %v820
    %6234 = vmatpush.msra.mxu0 %v812
    %6235 = vmatpush.msra.mxu0 %v804
    %6236 = vmatpush.msra.mxu0 %v796
    %6237 = vmatpush.msra.mxu0 %v788
    %6238 = vmatpush.msra.mxu0 %v780
    %6239 = vmatpush.msra.mxu0 %v772
    %6240 = vmatpush.msra.mxu0 %v764
    %6241 = vmatpush.msra.mxu0 %v756
    %6242 = vmatpush.msra.mxu0 %v748
    %6243 = vmatpush.msra.mxu0 %v740
    %6244 = vmatmul.f32.gmra.mxu0 %v5859
    %v6245 = vpop.f32.mrf.mxu0
    %v6246 = vadd.f32 %v6226, %v6245
    %6247 = vdwg.mxu0
    %6248 = vmatpush.msra.mxu0 %v733
    %6249 = vmatpush.msra.mxu0 %v725
    %6250 = vmatpush.msra.mxu0 %v717
    %6251 = vmatpush.msra.mxu0 %v709
    %6252 = vmatpush.msra.mxu0 %v701
    %6253 = vmatpush.msra.mxu0 %v693
    %6254 = vmatpush.msra.mxu0 %v685
    %6255 = vmatpush.msra.mxu0 %v677
    %6256 = vmatpush.msra.mxu0 %v669
    %6257 = vmatpush.msra.mxu0 %v661
    %6258 = vmatpush.msra.mxu0 %v653
    %6259 = vmatpush.msra.mxu0 %v645
    %6260 = vmatpush.msra.mxu0 %v637
    %6261 = vmatpush.msra.mxu0 %v629
    %6262 = vmatpush.msra.mxu0 %v621
    %6263 = vmatpush.msra.mxu0 %v613
    %6264 = vmatmul.f32.gmra.mxu0 %v5858
    %v6265 = vpop.f32.mrf.mxu0
    %v6266 = vadd.f32 0.0, %v6265
    %6267 = vdwg.mxu0
    %6268 = vmatpush.msra.mxu0 %v861
    %6269 = vmatpush.msra.mxu0 %v853
    %6270 = vmatpush.msra.mxu0 %v845
    %6271 = vmatpush.msra.mxu0 %v837
    %6272 = vmatpush.msra.mxu0 %v829
    %6273 = vmatpush.msra.mxu0 %v821
    %6274 = vmatpush.msra.mxu0 %v813
    %6275 = vmatpush.msra.mxu0 %v805
    %6276 = vmatpush.msra.mxu0 %v797
    %6277 = vmatpush.msra.mxu0 %v789
    %6278 = vmatpush.msra.mxu0 %v781
    %6279 = vmatpush.msra.mxu0 %v773
    %6280 = vmatpush.msra.mxu0 %v765
    %6281 = vmatpush.msra.mxu0 %v757
    %6282 = vmatpush.msra.mxu0 %v749
    %6283 = vmatpush.msra.mxu0 %v741
    %6284 = vmatmul.f32.gmra.mxu0 %v5859
    %v6285 = vpop.f32.mrf.mxu0
    %v6286 = vadd.f32 %v6266, %v6285
    %6287 = vdwg.mxu0
    %6288 = vmatpush.msra.mxu0 %v734
    %6289 = vmatpush.msra.mxu0 %v726
    %6290 = vmatpush.msra.mxu0 %v718
    %6291 = vmatpush.msra.mxu0 %v710
    %6292 = vmatpush.msra.mxu0 %v702
    %6293 = vmatpush.msra.mxu0 %v694
    %6294 = vmatpush.msra.mxu0 %v686
    %6295 = vmatpush.msra.mxu0 %v678
    %6296 = vmatpush.msra.mxu0 %v670
    %6297 = vmatpush.msra.mxu0 %v662
    %6298 = vmatpush.msra.mxu0 %v654
    %6299 = vmatpush.msra.mxu0 %v646
    %6300 = vmatpush.msra.mxu0 %v638
    %6301 = vmatpush.msra.mxu0 %v630
    %6302 = vmatpush.msra.mxu0 %v622
    %6303 = vmatpush.msra.mxu0 %v614
    %6304 = vmatmul.f32.gmra.mxu0 %v5858
    %v6305 = vpop.f32.mrf.mxu0
    %v6306 = vadd.f32 0.0, %v6305
    %6307 = vdwg.mxu0
    %6308 = vmatpush.msra.mxu0 %v862
    %6309 = vmatpush.msra.mxu0 %v854
    %6310 = vmatpush.msra.mxu0 %v846
    %6311 = vmatpush.msra.mxu0 %v838
    %6312 = vmatpush.msra.mxu0 %v830
    %6313 = vmatpush.msra.mxu0 %v822
    %6314 = vmatpush.msra.mxu0 %v814
    %6315 = vmatpush.msra.mxu0 %v806
    %6316 = vmatpush.msra.mxu0 %v798
    %6317 = vmatpush.msra.mxu0 %v790
    %6318 = vmatpush.msra.mxu0 %v782
    %6319 = vmatpush.msra.mxu0 %v774
    %6320 = vmatpush.msra.mxu0 %v766
    %6321 = vmatpush.msra.mxu0 %v758
    %6322 = vmatpush.msra.mxu0 %v750
    %6323 = vmatpush.msra.mxu0 %v742
    %6324 = vmatmul.f32.gmra.mxu0 %v5859
    %v6325 = vpop.f32.mrf.mxu0
    %v6326 = vadd.f32 %v6306, %v6325
    %6327 = vdwg.mxu0
    %v6336 = vrot.slane %v6046, 6
    %v6337 = vrot.slane %v6086, 6
    %v6338 = vrot.slane %v6126, 6
    %v6339 = vrot.slane %v6166, 6
    %v6340 = vrot.slane %v6206, 6
    %v6341 = vrot.slane %v6246, 6
    %v6342 = vrot.slane %v6286, 6
    %v6343 = vrot.slane %v6326, 6
    %v6352 = vadd.f32 %v5992, %v6336
    %v6353 = vadd.f32 %v5993, %v6337
    %v6354 = vadd.f32 %v5994, %v6338
    %v6355 = vadd.f32 %v5995, %v6339
    %v6356 = vadd.f32 %v5996, %v6340
    %v6357 = vadd.f32 %v5997, %v6341
    %v6358 = vadd.f32 %v5998, %v6342
    %v6359 = vadd.f32 %v5999, %v6343
    %v6362 = vrot.slane %v5990, 6
    %v6363 = vrot.slane %v5991, 6
    %6366 = vmatpush.msra.mxu0 %v984
    %6367 = vmatpush.msra.mxu0 %v976
    %6368 = vmatpush.msra.mxu0 %v968
    %6369 = vmatpush.msra.mxu0 %v960
    %6370 = vmatpush.msra.mxu0 %v952
    %6371 = vmatpush.msra.mxu0 %v944
    %6372 = vmatpush.msra.mxu0 %v936
    %6373 = vmatpush.msra.mxu0 %v928
    %6374 = vmatpush.msra.mxu0 %v920
    %6375 = vmatpush.msra.mxu0 %v912
    %6376 = vmatpush.msra.mxu0 %v904
    %6377 = vmatpush.msra.mxu0 %v896
    %6378 = vmatpush.msra.mxu0 %v888
    %6379 = vmatpush.msra.mxu0 %v880
    %6380 = vmatpush.msra.mxu0 %v872
    %6381 = vmatpush.msra.mxu0 %v864
    %6382 = vmatmul.f32.gmra.mxu0 %v6362
    %v6383 = vpop.f32.mrf.mxu0
    %v6384 = vadd.f32 0.0, %v6383
    %6385 = vdwg.mxu0
    %6386 = vmatpush.msra.mxu0 %v1112
    %6387 = vmatpush.msra.mxu0 %v1104
    %6388 = vmatpush.msra.mxu0 %v1096
    %6389 = vmatpush.msra.mxu0 %v1088
    %6390 = vmatpush.msra.mxu0 %v1080
    %6391 = vmatpush.msra.mxu0 %v1072
    %6392 = vmatpush.msra.mxu0 %v1064
    %6393 = vmatpush.msra.mxu0 %v1056
    %6394 = vmatpush.msra.mxu0 %v1048
    %6395 = vmatpush.msra.mxu0 %v1040
    %6396 = vmatpush.msra.mxu0 %v1032
    %6397 = vmatpush.msra.mxu0 %v1024
    %6398 = vmatpush.msra.mxu0 %v1016
    %6399 = vmatpush.msra.mxu0 %v1008
    %6400 = vmatpush.msra.mxu0 %v1000
    %6401 = vmatpush.msra.mxu0 %v992
    %6402 = vmatmul.f32.gmra.mxu0 %v6363
    %v6403 = vpop.f32.mrf.mxu0
    %v6404 = vadd.f32 %v6384, %v6403
    %6405 = vdwg.mxu0
    %6406 = vmatpush.msra.mxu0 %v985
    %6407 = vmatpush.msra.mxu0 %v977
    %6408 = vmatpush.msra.mxu0 %v969
    %6409 = vmatpush.msra.mxu0 %v961
    %6410 = vmatpush.msra.mxu0 %v953
    %6411 = vmatpush.msra.mxu0 %v945
    %6412 = vmatpush.msra.mxu0 %v937
    %6413 = vmatpush.msra.mxu0 %v929
    %6414 = vmatpush.msra.mxu0 %v921
    %6415 = vmatpush.msra.mxu0 %v913
    %6416 = vmatpush.msra.mxu0 %v905
    %6417 = vmatpush.msra.mxu0 %v897
    %6418 = vmatpush.msra.mxu0 %v889
    %6419 = vmatpush.msra.mxu0 %v881
    %6420 = vmatpush.msra.mxu0 %v873
    %6421 = vmatpush.msra.mxu0 %v865
    %6422 = vmatmul.f32.gmra.mxu0 %v6362
    %v6423 = vpop.f32.mrf.mxu0
    %v6424 = vadd.f32 0.0, %v6423
    %6425 = vdwg.mxu0
    %6426 = vmatpush.msra.mxu0 %v1113
    %6427 = vmatpush.msra.mxu0 %v1105
    %6428 = vmatpush.msra.mxu0 %v1097
    %6429 = vmatpush.msra.mxu0 %v1089
    %6430 = vmatpush.msra.mxu0 %v1081
    %6431 = vmatpush.msra.mxu0 %v1073
    %6432 = vmatpush.msra.mxu0 %v1065
    %6433 = vmatpush.msra.mxu0 %v1057
    %6434 = vmatpush.msra.mxu0 %v1049
    %6435 = vmatpush.msra.mxu0 %v1041
    %6436 = vmatpush.msra.mxu0 %v1033
    %6437 = vmatpush.msra.mxu0 %v1025
    %6438 = vmatpush.msra.mxu0 %v1017
    %6439 = vmatpush.msra.mxu0 %v1009
    %6440 = vmatpush.msra.mxu0 %v1001
    %6441 = vmatpush.msra.mxu0 %v993
    %6442 = vmatmul.f32.gmra.mxu0 %v6363
    %v6443 = vpop.f32.mrf.mxu0
    %v6444 = vadd.f32 %v6424, %v6443
    %6445 = vdwg.mxu0
    %6446 = vmatpush.msra.mxu0 %v986
    %6447 = vmatpush.msra.mxu0 %v978
    %6448 = vmatpush.msra.mxu0 %v970
    %6449 = vmatpush.msra.mxu0 %v962
    %6450 = vmatpush.msra.mxu0 %v954
    %6451 = vmatpush.msra.mxu0 %v946
    %6452 = vmatpush.msra.mxu0 %v938
    %6453 = vmatpush.msra.mxu0 %v930
    %6454 = vmatpush.msra.mxu0 %v922
    %6455 = vmatpush.msra.mxu0 %v914
    %6456 = vmatpush.msra.mxu0 %v906
    %6457 = vmatpush.msra.mxu0 %v898
    %6458 = vmatpush.msra.mxu0 %v890
    %6459 = vmatpush.msra.mxu0 %v882
    %6460 = vmatpush.msra.mxu0 %v874
    %6461 = vmatpush.msra.mxu0 %v866
    %6462 = vmatmul.f32.gmra.mxu0 %v6362
    %v6463 = vpop.f32.mrf.mxu0
    %v6464 = vadd.f32 0.0, %v6463
    %6465 = vdwg.mxu0
    %6466 = vmatpush.msra.mxu0 %v1114
    %6467 = vmatpush.msra.mxu0 %v1106
    %6468 = vmatpush.msra.mxu0 %v1098
    %6469 = vmatpush.msra.mxu0 %v1090
    %6470 = vmatpush.msra.mxu0 %v1082
    %6471 = vmatpush.msra.mxu0 %v1074
    %6472 = vmatpush.msra.mxu0 %v1066
    %6473 = vmatpush.msra.mxu0 %v1058
    %6474 = vmatpush.msra.mxu0 %v1050
    %6475 = vmatpush.msra.mxu0 %v1042
    %6476 = vmatpush.msra.mxu0 %v1034
    %6477 = vmatpush.msra.mxu0 %v1026
    %6478 = vmatpush.msra.mxu0 %v1018
    %6479 = vmatpush.msra.mxu0 %v1010
    %6480 = vmatpush.msra.mxu0 %v1002
    %6481 = vmatpush.msra.mxu0 %v994
    %6482 = vmatmul.f32.gmra.mxu0 %v6363
    %v6483 = vpop.f32.mrf.mxu0
    %v6484 = vadd.f32 %v6464, %v6483
    %6485 = vdwg.mxu0
    %6486 = vmatpush.msra.mxu0 %v987
    %6487 = vmatpush.msra.mxu0 %v979
    %6488 = vmatpush.msra.mxu0 %v971
    %6489 = vmatpush.msra.mxu0 %v963
    %6490 = vmatpush.msra.mxu0 %v955
    %6491 = vmatpush.msra.mxu0 %v947
    %6492 = vmatpush.msra.mxu0 %v939
    %6493 = vmatpush.msra.mxu0 %v931
    %6494 = vmatpush.msra.mxu0 %v923
    %6495 = vmatpush.msra.mxu0 %v915
    %6496 = vmatpush.msra.mxu0 %v907
    %6497 = vmatpush.msra.mxu0 %v899
    %6498 = vmatpush.msra.mxu0 %v891
    %6499 = vmatpush.msra.mxu0 %v883
    %6500 = vmatpush.msra.mxu0 %v875
    %6501 = vmatpush.msra.mxu0 %v867
    %6502 = vmatmul.f32.gmra.mxu0 %v6362
    %v6503 = vpop.f32.mrf.mxu0
    %v6504 = vadd.f32 0.0, %v6503
    %6505 = vdwg.mxu0
    %6506 = vmatpush.msra.mxu0 %v1115
    %6507 = vmatpush.msra.mxu0 %v1107
    %6508 = vmatpush.msra.mxu0 %v1099
    %6509 = vmatpush.msra.mxu0 %v1091
    %6510 = vmatpush.msra.mxu0 %v1083
    %6511 = vmatpush.msra.mxu0 %v1075
    %6512 = vmatpush.msra.mxu0 %v1067
    %6513 = vmatpush.msra.mxu0 %v1059
    %6514 = vmatpush.msra.mxu0 %v1051
    %6515 = vmatpush.msra.mxu0 %v1043
    %6516 = vmatpush.msra.mxu0 %v1035
    %6517 = vmatpush.msra.mxu0 %v1027
    %6518 = vmatpush.msra.mxu0 %v1019
    %6519 = vmatpush.msra.mxu0 %v1011
    %6520 = vmatpush.msra.mxu0 %v1003
    %6521 = vmatpush.msra.mxu0 %v995
    %6522 = vmatmul.f32.gmra.mxu0 %v6363
    %v6523 = vpop.f32.mrf.mxu0
    %v6524 = vadd.f32 %v6504, %v6523
    %6525 = vdwg.mxu0
    %6526 = vmatpush.msra.mxu0 %v988
    %6527 = vmatpush.msra.mxu0 %v980
    %6528 = vmatpush.msra.mxu0 %v972
    %6529 = vmatpush.msra.mxu0 %v964
    %6530 = vmatpush.msra.mxu0 %v956
    %6531 = vmatpush.msra.mxu0 %v948
    %6532 = vmatpush.msra.mxu0 %v940
    %6533 = vmatpush.msra.mxu0 %v932
    %6534 = vmatpush.msra.mxu0 %v924
    %6535 = vmatpush.msra.mxu0 %v916
    %6536 = vmatpush.msra.mxu0 %v908
    %6537 = vmatpush.msra.mxu0 %v900
    %6538 = vmatpush.msra.mxu0 %v892
    %6539 = vmatpush.msra.mxu0 %v884
    %6540 = vmatpush.msra.mxu0 %v876
    %6541 = vmatpush.msra.mxu0 %v868
    %6542 = vmatmul.f32.gmra.mxu0 %v6362
    %v6543 = vpop.f32.mrf.mxu0
    %v6544 = vadd.f32 0.0, %v6543
    %6545 = vdwg.mxu0
    %6546 = vmatpush.msra.mxu0 %v1116
    %6547 = vmatpush.msra.mxu0 %v1108
    %6548 = vmatpush.msra.mxu0 %v1100
    %6549 = vmatpush.msra.mxu0 %v1092
    %6550 = vmatpush.msra.mxu0 %v1084
    %6551 = vmatpush.msra.mxu0 %v1076
    %6552 = vmatpush.msra.mxu0 %v1068
    %6553 = vmatpush.msra.mxu0 %v1060
    %6554 = vmatpush.msra.mxu0 %v1052
    %6555 = vmatpush.msra.mxu0 %v1044
    %6556 = vmatpush.msra.mxu0 %v1036
    %6557 = vmatpush.msra.mxu0 %v1028
    %6558 = vmatpush.msra.mxu0 %v1020
    %6559 = vmatpush.msra.mxu0 %v1012
    %6560 = vmatpush.msra.mxu0 %v1004
    %6561 = vmatpush.msra.mxu0 %v996
    %6562 = vmatmul.f32.gmra.mxu0 %v6363
    %v6563 = vpop.f32.mrf.mxu0
    %v6564 = vadd.f32 %v6544, %v6563
    %6565 = vdwg.mxu0
    %6566 = vmatpush.msra.mxu0 %v989
    %6567 = vmatpush.msra.mxu0 %v981
    %6568 = vmatpush.msra.mxu0 %v973
    %6569 = vmatpush.msra.mxu0 %v965
    %6570 = vmatpush.msra.mxu0 %v957
    %6571 = vmatpush.msra.mxu0 %v949
    %6572 = vmatpush.msra.mxu0 %v941
    %6573 = vmatpush.msra.mxu0 %v933
    %6574 = vmatpush.msra.mxu0 %v925
    %6575 = vmatpush.msra.mxu0 %v917
    %6576 = vmatpush.msra.mxu0 %v909
    %6577 = vmatpush.msra.mxu0 %v901
    %6578 = vmatpush.msra.mxu0 %v893
    %6579 = vmatpush.msra.mxu0 %v885
    %6580 = vmatpush.msra.mxu0 %v877
    %6581 = vmatpush.msra.mxu0 %v869
    %6582 = vmatmul.f32.gmra.mxu0 %v6362
    %v6583 = vpop.f32.mrf.mxu0
    %v6584 = vadd.f32 0.0, %v6583
    %6585 = vdwg.mxu0
    %6586 = vmatpush.msra.mxu0 %v1117
    %6587 = vmatpush.msra.mxu0 %v1109
    %6588 = vmatpush.msra.mxu0 %v1101
    %6589 = vmatpush.msra.mxu0 %v1093
    %6590 = vmatpush.msra.mxu0 %v1085
    %6591 = vmatpush.msra.mxu0 %v1077
    %6592 = vmatpush.msra.mxu0 %v1069
    %6593 = vmatpush.msra.mxu0 %v1061
    %6594 = vmatpush.msra.mxu0 %v1053
    %6595 = vmatpush.msra.mxu0 %v1045
    %6596 = vmatpush.msra.mxu0 %v1037
    %6597 = vmatpush.msra.mxu0 %v1029
    %6598 = vmatpush.msra.mxu0 %v1021
    %6599 = vmatpush.msra.mxu0 %v1013
    %6600 = vmatpush.msra.mxu0 %v1005
    %6601 = vmatpush.msra.mxu0 %v997
    %6602 = vmatmul.f32.gmra.mxu0 %v6363
    %v6603 = vpop.f32.mrf.mxu0
    %v6604 = vadd.f32 %v6584, %v6603
    %6605 = vdwg.mxu0
    %6606 = vmatpush.msra.mxu0 %v990
    %6607 = vmatpush.msra.mxu0 %v982
    %6608 = vmatpush.msra.mxu0 %v974
    %6609 = vmatpush.msra.mxu0 %v966
    %6610 = vmatpush.msra.mxu0 %v958
    %6611 = vmatpush.msra.mxu0 %v950
    %6612 = vmatpush.msra.mxu0 %v942
    %6613 = vmatpush.msra.mxu0 %v934
    %6614 = vmatpush.msra.mxu0 %v926
    %6615 = vmatpush.msra.mxu0 %v918
    %6616 = vmatpush.msra.mxu0 %v910
    %6617 = vmatpush.msra.mxu0 %v902
    %6618 = vmatpush.msra.mxu0 %v894
    %6619 = vmatpush.msra.mxu0 %v886
    %6620 = vmatpush.msra.mxu0 %v878
    %6621 = vmatpush.msra.mxu0 %v870
    %6622 = vmatmul.f32.gmra.mxu0 %v6362
    %v6623 = vpop.f32.mrf.mxu0
    %v6624 = vadd.f32 0.0, %v6623
    %6625 = vdwg.mxu0
    %6626 = vmatpush.msra.mxu0 %v1118
    %6627 = vmatpush.msra.mxu0 %v1110
    %6628 = vmatpush.msra.mxu0 %v1102
    %6629 = vmatpush.msra.mxu0 %v1094
    %6630 = vmatpush.msra.mxu0 %v1086
    %6631 = vmatpush.msra.mxu0 %v1078
    %6632 = vmatpush.msra.mxu0 %v1070
    %6633 = vmatpush.msra.mxu0 %v1062
    %6634 = vmatpush.msra.mxu0 %v1054
    %6635 = vmatpush.msra.mxu0 %v1046
    %6636 = vmatpush.msra.mxu0 %v1038
    %6637 = vmatpush.msra.mxu0 %v1030
    %6638 = vmatpush.msra.mxu0 %v1022
    %6639 = vmatpush.msra.mxu0 %v1014
    %6640 = vmatpush.msra.mxu0 %v1006
    %6641 = vmatpush.msra.mxu0 %v998
    %6642 = vmatmul.f32.gmra.mxu0 %v6363
    %v6643 = vpop.f32.mrf.mxu0
    %v6644 = vadd.f32 %v6624, %v6643
    %6645 = vdwg.mxu0
    %6646 = vmatpush.msra.mxu0 %v991
    %6647 = vmatpush.msra.mxu0 %v983
    %6648 = vmatpush.msra.mxu0 %v975
    %6649 = vmatpush.msra.mxu0 %v967
    %6650 = vmatpush.msra.mxu0 %v959
    %6651 = vmatpush.msra.mxu0 %v951
    %6652 = vmatpush.msra.mxu0 %v943
    %6653 = vmatpush.msra.mxu0 %v935
    %6654 = vmatpush.msra.mxu0 %v927
    %6655 = vmatpush.msra.mxu0 %v919
    %6656 = vmatpush.msra.mxu0 %v911
    %6657 = vmatpush.msra.mxu0 %v903
    %6658 = vmatpush.msra.mxu0 %v895
    %6659 = vmatpush.msra.mxu0 %v887
    %6660 = vmatpush.msra.mxu0 %v879
    %6661 = vmatpush.msra.mxu0 %v871
    %6662 = vmatmul.f32.gmra.mxu0 %v6362
    %v6663 = vpop.f32.mrf.mxu0
    %v6664 = vadd.f32 0.0, %v6663
    %6665 = vdwg.mxu0
    %6666 = vmatpush.msra.mxu0 %v1119
    %6667 = vmatpush.msra.mxu0 %v1111
    %6668 = vmatpush.msra.mxu0 %v1103
    %6669 = vmatpush.msra.mxu0 %v1095
    %6670 = vmatpush.msra.mxu0 %v1087
    %6671 = vmatpush.msra.mxu0 %v1079
    %6672 = vmatpush.msra.mxu0 %v1071
    %6673 = vmatpush.msra.mxu0 %v1063
    %6674 = vmatpush.msra.mxu0 %v1055
    %6675 = vmatpush.msra.mxu0 %v1047
    %6676 = vmatpush.msra.mxu0 %v1039
    %6677 = vmatpush.msra.mxu0 %v1031
    %6678 = vmatpush.msra.mxu0 %v1023
    %6679 = vmatpush.msra.mxu0 %v1015
    %6680 = vmatpush.msra.mxu0 %v1007
    %6681 = vmatpush.msra.mxu0 %v999
    %6682 = vmatmul.f32.gmra.mxu0 %v6363
    %v6683 = vpop.f32.mrf.mxu0
    %v6684 = vadd.f32 %v6664, %v6683
    %6685 = vdwg.mxu0
    %v6694 = vrot.slane %v6404, 4
    %v6695 = vrot.slane %v6444, 4
    %v6696 = vrot.slane %v6484, 4
    %v6697 = vrot.slane %v6524, 4
    %v6698 = vrot.slane %v6564, 4
    %v6699 = vrot.slane %v6604, 4
    %v6700 = vrot.slane %v6644, 4
    %v6701 = vrot.slane %v6684, 4
    %v6710 = vadd.f32 %v6000, %v6694
    %v6711 = vadd.f32 %v6001, %v6695
    %v6712 = vadd.f32 %v6002, %v6696
    %v6713 = vadd.f32 %v6003, %v6697
    %v6714 = vadd.f32 %v6004, %v6698
    %v6715 = vadd.f32 %v6005, %v6699
    %v6716 = vadd.f32 %v6006, %v6700
    %v6717 = vadd.f32 %v6007, %v6701
    %v6718 = vxor.u32 %v6352, 2147483648
    %v6719 = vxor.u32 %v6353, 2147483648
    %v6720 = vmul.f32 %v6718, 1.442695
    %v6721 = vpow.pop %v6720
    %v6722 = vmul.f32 %v6719, 1.442695
    %v6723 = vpow.pop %v6722
    %v6724 = vadd.f32 %v6721, 1.0
    %v6725 = vadd.f32 %v6723, 1.0
    %v6726 = vrcp.pop %v6724
    %v6727 = vmul.f32 %v6724, %v6726
    %v6728 = vsub.f32 1.0, %v6727
    %v6729 = vmul.f32 %v6726, %v6728
    %v6730 = vadd.f32 %v6726, %v6729
    %vm6731 = vweird.f32 %v6724
    %vm6732 = vweird.f32 %v6726
    %vm6733 = vmor %vm6731, %vm6732
    %v6734 = vsel %vm6733, %v6726, %v6730
    %v6735 = vand.u32 2147483647, %v6724
    %vm6736 = vcmp.eq.f32.partialorder %v6735, 8.507059e+37
    %v6737 = vand.u32 %v6724, 2147483648
    %v6738 = vor.u32 1.1754944e-38, %v6737
    %v6739 = vsel %vm6736, %v6738, %v6734
    %v6740 = vmul.f32 1.0, %v6739
    %v6741 = vrcp.pop %v6725
    %v6742 = vmul.f32 %v6725, %v6741
    %v6743 = vsub.f32 1.0, %v6742
    %v6744 = vmul.f32 %v6741, %v6743
    %v6745 = vadd.f32 %v6741, %v6744
    %vm6746 = vweird.f32 %v6725
    %vm6747 = vweird.f32 %v6741
    %vm6748 = vmor %vm6746, %vm6747
    %v6749 = vsel %vm6748, %v6741, %v6745
    %v6750 = vand.u32 2147483647, %v6725
    %vm6751 = vcmp.eq.f32.partialorder %v6750, 8.507059e+37
    %v6752 = vand.u32 %v6725, 2147483648
    %v6753 = vor.u32 1.1754944e-38, %v6752
    %v6754 = vsel %vm6751, %v6753, %v6749
    %v6755 = vmul.f32 1.0, %v6754
    %v6756 = vxor.u32 %v6354, 2147483648
    %v6757 = vxor.u32 %v6355, 2147483648
    %v6758 = vmul.f32 %v6756, 1.442695
    %v6759 = vpow.pop %v6758
    %v6760 = vmul.f32 %v6757, 1.442695
    %v6761 = vpow.pop %v6760
    %v6762 = vadd.f32 %v6759, 1.0
    %v6763 = vadd.f32 %v6761, 1.0
    %v6764 = vrcp.pop %v6762
    %v6765 = vmul.f32 %v6762, %v6764
    %v6766 = vsub.f32 1.0, %v6765
    %v6767 = vmul.f32 %v6764, %v6766
    %v6768 = vadd.f32 %v6764, %v6767
    %vm6769 = vweird.f32 %v6762
    %vm6770 = vweird.f32 %v6764
    %vm6771 = vmor %vm6769, %vm6770
    %v6772 = vsel %vm6771, %v6764, %v6768
    %v6773 = vand.u32 2147483647, %v6762
    %vm6774 = vcmp.eq.f32.partialorder %v6773, 8.507059e+37
    %v6775 = vand.u32 %v6762, 2147483648
    %v6776 = vor.u32 1.1754944e-38, %v6775
    %v6777 = vsel %vm6774, %v6776, %v6772
    %v6778 = vmul.f32 1.0, %v6777
    %v6779 = vrcp.pop %v6763
    %v6780 = vmul.f32 %v6763, %v6779
    %v6781 = vsub.f32 1.0, %v6780
    %v6782 = vmul.f32 %v6779, %v6781
    %v6783 = vadd.f32 %v6779, %v6782
    %vm6784 = vweird.f32 %v6763
    %vm6785 = vweird.f32 %v6779
    %vm6786 = vmor %vm6784, %vm6785
    %v6787 = vsel %vm6786, %v6779, %v6783
    %v6788 = vand.u32 2147483647, %v6763
    %vm6789 = vcmp.eq.f32.partialorder %v6788, 8.507059e+37
    %v6790 = vand.u32 %v6763, 2147483648
    %v6791 = vor.u32 1.1754944e-38, %v6790
    %v6792 = vsel %vm6789, %v6791, %v6787
    %v6793 = vmul.f32 1.0, %v6792
    %v6794 = vtanh.pop %v6356
    %v6795 = vtanh.pop %v6357
    %v6796 = vxor.u32 %v6358, 2147483648
    %v6797 = vxor.u32 %v6359, 2147483648
    %v6798 = vmul.f32 %v6796, 1.442695
    %v6799 = vpow.pop %v6798
    %v6800 = vmul.f32 %v6797, 1.442695
    %v6801 = vpow.pop %v6800
    %v6802 = vadd.f32 %v6799, 1.0
    %v6803 = vadd.f32 %v6801, 1.0
    %v6804 = vrcp.pop %v6802
    %v6805 = vmul.f32 %v6802, %v6804
    %v6806 = vsub.f32 1.0, %v6805
    %v6807 = vmul.f32 %v6804, %v6806
    %v6808 = vadd.f32 %v6804, %v6807
    %vm6809 = vweird.f32 %v6802
    %vm6810 = vweird.f32 %v6804
    %vm6811 = vmor %vm6809, %vm6810
    %v6812 = vsel %vm6811, %v6804, %v6808
    %v6813 = vand.u32 2147483647, %v6802
    %vm6814 = vcmp.eq.f32.partialorder %v6813, 8.507059e+37
    %v6815 = vand.u32 %v6802, 2147483648
    %v6816 = vor.u32 1.1754944e-38, %v6815
    %v6817 = vsel %vm6814, %v6816, %v6812
    %v6818 = vmul.f32 1.0, %v6817
    %v6819 = vrcp.pop %v6803
    %v6820 = vmul.f32 %v6803, %v6819
    %v6821 = vsub.f32 1.0, %v6820
    %v6822 = vmul.f32 %v6819, %v6821
    %v6823 = vadd.f32 %v6819, %v6822
    %vm6824 = vweird.f32 %v6803
    %vm6825 = vweird.f32 %v6819
    %vm6826 = vmor %vm6824, %vm6825
    %v6827 = vsel %vm6826, %v6819, %v6823
    %v6828 = vand.u32 2147483647, %v6803
    %vm6829 = vcmp.eq.f32.partialorder %v6828, 8.507059e+37
    %v6830 = vand.u32 %v6803, 2147483648
    %v6831 = vor.u32 1.1754944e-38, %v6830
    %v6832 = vsel %vm6829, %v6831, %v6827
    %v6833 = vmul.f32 1.0, %v6832
    %v6836 = vrot.slane %v5854, 6
    %v6837 = vrot.slane %v5855, 6
    %v6840 = vmul.f32 %v6778, %v6836
    %v6841 = vmul.f32 %v6793, %v6837
    %v6842 = vmul.f32 %v6740, %v6794
    %v6843 = vmul.f32 %v6755, %v6795
    %v6844 = vadd.f32 %v6840, %v6842
    %v6845 = vadd.f32 %v6841, %v6843
    %v6846 = vtanh.pop %v6844
    %v6847 = vtanh.pop %v6845
    %v6848 = vmul.f32 %v6818, %v6846
    %v6849 = vmul.f32 %v6833, %v6847
    %v6850 = vxor.u32 %v6710, 2147483648
    %v6851 = vxor.u32 %v6711, 2147483648
    %v6852 = vmul.f32 %v6850, 1.442695
    %v6853 = vpow.pop %v6852
    %v6854 = vmul.f32 %v6851, 1.442695
    %v6855 = vpow.pop %v6854
    %v6856 = vadd.f32 %v6853, 1.0
    %v6857 = vadd.f32 %v6855, 1.0
    %v6858 = vrcp.pop %v6856
    %v6859 = vmul.f32 %v6856, %v6858
    %v6860 = vsub.f32 1.0, %v6859
    %v6861 = vmul.f32 %v6858, %v6860
    %v6862 = vadd.f32 %v6858, %v6861
    %vm6863 = vweird.f32 %v6856
    %vm6864 = vweird.f32 %v6858
    %vm6865 = vmor %vm6863, %vm6864
    %v6866 = vsel %vm6865, %v6858, %v6862
    %v6867 = vand.u32 2147483647, %v6856
    %vm6868 = vcmp.eq.f32.partialorder %v6867, 8.507059e+37
    %v6869 = vand.u32 %v6856, 2147483648
    %v6870 = vor.u32 1.1754944e-38, %v6869
    %v6871 = vsel %vm6868, %v6870, %v6866
    %v6872 = vmul.f32 1.0, %v6871
    %v6873 = vrcp.pop %v6857
    %v6874 = vmul.f32 %v6857, %v6873
    %v6875 = vsub.f32 1.0, %v6874
    %v6876 = vmul.f32 %v6873, %v6875
    %v6877 = vadd.f32 %v6873, %v6876
    %vm6878 = vweird.f32 %v6857
    %vm6879 = vweird.f32 %v6873
    %vm6880 = vmor %vm6878, %vm6879
    %v6881 = vsel %vm6880, %v6873, %v6877
    %v6882 = vand.u32 2147483647, %v6857
    %vm6883 = vcmp.eq.f32.partialorder %v6882, 8.507059e+37
    %v6884 = vand.u32 %v6857, 2147483648
    %v6885 = vor.u32 1.1754944e-38, %v6884
    %v6886 = vsel %vm6883, %v6885, %v6881
    %v6887 = vmul.f32 1.0, %v6886
    %v6888 = vxor.u32 %v6712, 2147483648
    %v6889 = vxor.u32 %v6713, 2147483648
    %v6890 = vmul.f32 %v6888, 1.442695
    %v6891 = vpow.pop %v6890
    %v6892 = vmul.f32 %v6889, 1.442695
    %v6893 = vpow.pop %v6892
    %v6894 = vadd.f32 %v6891, 1.0
    %v6895 = vadd.f32 %v6893, 1.0
    %v6896 = vrcp.pop %v6894
    %v6897 = vmul.f32 %v6894, %v6896
    %v6898 = vsub.f32 1.0, %v6897
    %v6899 = vmul.f32 %v6896, %v6898
    %v6900 = vadd.f32 %v6896, %v6899
    %vm6901 = vweird.f32 %v6894
    %vm6902 = vweird.f32 %v6896
    %vm6903 = vmor %vm6901, %vm6902
    %v6904 = vsel %vm6903, %v6896, %v6900
    %v6905 = vand.u32 2147483647, %v6894
    %vm6906 = vcmp.eq.f32.partialorder %v6905, 8.507059e+37
    %v6907 = vand.u32 %v6894, 2147483648
    %v6908 = vor.u32 1.1754944e-38, %v6907
    %v6909 = vsel %vm6906, %v6908, %v6904
    %v6910 = vmul.f32 1.0, %v6909
    %v6911 = vrcp.pop %v6895
    %v6912 = vmul.f32 %v6895, %v6911
    %v6913 = vsub.f32 1.0, %v6912
    %v6914 = vmul.f32 %v6911, %v6913
    %v6915 = vadd.f32 %v6911, %v6914
    %vm6916 = vweird.f32 %v6895
    %vm6917 = vweird.f32 %v6911
    %vm6918 = vmor %vm6916, %vm6917
    %v6919 = vsel %vm6918, %v6911, %v6915
    %v6920 = vand.u32 2147483647, %v6895
    %vm6921 = vcmp.eq.f32.partialorder %v6920, 8.507059e+37
    %v6922 = vand.u32 %v6895, 2147483648
    %v6923 = vor.u32 1.1754944e-38, %v6922
    %v6924 = vsel %vm6921, %v6923, %v6919
    %v6925 = vmul.f32 1.0, %v6924
    %v6926 = vtanh.pop %v6714
    %v6927 = vtanh.pop %v6715
    %v6928 = vxor.u32 %v6716, 2147483648
    %v6929 = vxor.u32 %v6717, 2147483648
    %v6930 = vmul.f32 %v6928, 1.442695
    %v6931 = vpow.pop %v6930
    %v6932 = vmul.f32 %v6929, 1.442695
    %v6933 = vpow.pop %v6932
    %v6934 = vadd.f32 %v6931, 1.0
    %v6935 = vadd.f32 %v6933, 1.0
    %v6936 = vrcp.pop %v6934
    %v6937 = vmul.f32 %v6934, %v6936
    %v6938 = vsub.f32 1.0, %v6937
    %v6939 = vmul.f32 %v6936, %v6938
    %v6940 = vadd.f32 %v6936, %v6939
    %vm6941 = vweird.f32 %v6934
    %vm6942 = vweird.f32 %v6936
    %vm6943 = vmor %vm6941, %vm6942
    %v6944 = vsel %vm6943, %v6936, %v6940
    %v6945 = vand.u32 2147483647, %v6934
    %vm6946 = vcmp.eq.f32.partialorder %v6945, 8.507059e+37
    %v6947 = vand.u32 %v6934, 2147483648
    %v6948 = vor.u32 1.1754944e-38, %v6947
    %v6949 = vsel %vm6946, %v6948, %v6944
    %v6950 = vmul.f32 1.0, %v6949
    %v6951 = vrcp.pop %v6935
    %v6952 = vmul.f32 %v6935, %v6951
    %v6953 = vsub.f32 1.0, %v6952
    %v6954 = vmul.f32 %v6951, %v6953
    %v6955 = vadd.f32 %v6951, %v6954
    %vm6956 = vweird.f32 %v6935
    %vm6957 = vweird.f32 %v6951
    %vm6958 = vmor %vm6956, %vm6957
    %v6959 = vsel %vm6958, %v6951, %v6955
    %v6960 = vand.u32 2147483647, %v6935
    %vm6961 = vcmp.eq.f32.partialorder %v6960, 8.507059e+37
    %v6962 = vand.u32 %v6935, 2147483648
    %v6963 = vor.u32 1.1754944e-38, %v6962
    %v6964 = vsel %vm6961, %v6963, %v6959
    %v6965 = vmul.f32 1.0, %v6964
    %v6968 = vrot.slane %v5986, 2
    %v6969 = vrot.slane %v5987, 2
    %v6972 = vmul.f32 %v6910, %v6968
    %v6973 = vmul.f32 %v6925, %v6969
    %v6974 = vmul.f32 %v6872, %v6926
    %v6975 = vmul.f32 %v6887, %v6927
    %v6976 = vadd.f32 %v6972, %v6974
    %v6977 = vadd.f32 %v6973, %v6975
    %v6978 = vtanh.pop %v6976
    %v6979 = vtanh.pop %v6977
    %v6980 = vmul.f32 %v6950, %v6978
    %v6981 = vmul.f32 %v6965, %v6979
    %v6982 = vld [vmem:[#allocation2 + $0x80] sm:$0x30]
    %v6983 = vld [vmem:[#allocation2 + $0x88] sm:$0x30]
    %v6984 = vld [vmem:[#allocation2 + $0x90] sm:$0x30]
    %v6985 = vld [vmem:[#allocation2 + $0x98] sm:$0x30]
    %v6986 = vld [vmem:[#allocation2 + $0xa0] sm:$0x30]
    %v6987 = vld [vmem:[#allocation2 + $0xa8] sm:$0x30]
    %v6988 = vld [vmem:[#allocation2 + $0xb0] sm:$0x30]
    %v6989 = vld [vmem:[#allocation2 + $0xb8] sm:$0x30]
    %v6990 = vld [vmem:[#allocation2 + $0x40] sm:$0xc]
    %v6991 = vld [vmem:[#allocation2 + $0x48] sm:$0xc]
    %v6992 = vld [vmem:[#allocation2 + $0x50] sm:$0xc]
    %v6993 = vld [vmem:[#allocation2 + $0x58] sm:$0xc]
    %v6994 = vld [vmem:[#allocation2 + $0x60] sm:$0xc]
    %v6995 = vld [vmem:[#allocation2 + $0x68] sm:$0xc]
    %v6996 = vld [vmem:[#allocation2 + $0x70] sm:$0xc]
    %v6997 = vld [vmem:[#allocation2 + $0x78] sm:$0xc]
    %v7000 = vrot.slane %v6848, 2
    %v7001 = vrot.slane %v6849, 2
    %7004 = vmatpush.msra.mxu0 %v727
    %7005 = vmatpush.msra.mxu0 %v719
    %7006 = vmatpush.msra.mxu0 %v711
    %7007 = vmatpush.msra.mxu0 %v703
    %7008 = vmatpush.msra.mxu0 %v695
    %7009 = vmatpush.msra.mxu0 %v687
    %7010 = vmatpush.msra.mxu0 %v679
    %7011 = vmatpush.msra.mxu0 %v671
    %7012 = vmatpush.msra.mxu0 %v663
    %7013 = vmatpush.msra.mxu0 %v655
    %7014 = vmatpush.msra.mxu0 %v647
    %7015 = vmatpush.msra.mxu0 %v639
    %7016 = vmatpush.msra.mxu0 %v631
    %7017 = vmatpush.msra.mxu0 %v623
    %7018 = vmatpush.msra.mxu0 %v615
    %7019 = vmatpush.msra.mxu0 %v607
    %7020 = vmatmul.f32.gmra.mxu0 %v7000
    %v7021 = vpop.f32.mrf.mxu0
    %v7022 = vadd.f32 0.0, %v7021
    %7023 = vdwg.mxu0
    %7024 = vmatpush.msra.mxu0 %v855
    %7025 = vmatpush.msra.mxu0 %v847
    %7026 = vmatpush.msra.mxu0 %v839
    %7027 = vmatpush.msra.mxu0 %v831
    %7028 = vmatpush.msra.mxu0 %v823
    %7029 = vmatpush.msra.mxu0 %v815
    %7030 = vmatpush.msra.mxu0 %v807
    %7031 = vmatpush.msra.mxu0 %v799
    %7032 = vmatpush.msra.mxu0 %v791
    %7033 = vmatpush.msra.mxu0 %v783
    %7034 = vmatpush.msra.mxu0 %v775
    %7035 = vmatpush.msra.mxu0 %v767
    %7036 = vmatpush.msra.mxu0 %v759
    %7037 = vmatpush.msra.mxu0 %v751
    %7038 = vmatpush.msra.mxu0 %v743
    %7039 = vmatpush.msra.mxu0 %v735
    %7040 = vmatmul.f32.gmra.mxu0 %v7001
    %v7041 = vpop.f32.mrf.mxu0
    %v7042 = vadd.f32 %v7022, %v7041
    %7043 = vdwg.mxu0
    %7044 = vmatpush.msra.mxu0 %v728
    %7045 = vmatpush.msra.mxu0 %v720
    %7046 = vmatpush.msra.mxu0 %v712
    %7047 = vmatpush.msra.mxu0 %v704
    %7048 = vmatpush.msra.mxu0 %v696
    %7049 = vmatpush.msra.mxu0 %v688
    %7050 = vmatpush.msra.mxu0 %v680
    %7051 = vmatpush.msra.mxu0 %v672
    %7052 = vmatpush.msra.mxu0 %v664
    %7053 = vmatpush.msra.mxu0 %v656
    %7054 = vmatpush.msra.mxu0 %v648
    %7055 = vmatpush.msra.mxu0 %v640
    %7056 = vmatpush.msra.mxu0 %v632
    %7057 = vmatpush.msra.mxu0 %v624
    %7058 = vmatpush.msra.mxu0 %v616
    %7059 = vmatpush.msra.mxu0 %v608
    %7060 = vmatmul.f32.gmra.mxu0 %v7000
    %v7061 = vpop.f32.mrf.mxu0
    %v7062 = vadd.f32 0.0, %v7061
    %7063 = vdwg.mxu0
    %7064 = vmatpush.msra.mxu0 %v856
    %7065 = vmatpush.msra.mxu0 %v848
    %7066 = vmatpush.msra.mxu0 %v840
    %7067 = vmatpush.msra.mxu0 %v832
    %7068 = vmatpush.msra.mxu0 %v824
    %7069 = vmatpush.msra.mxu0 %v816
    %7070 = vmatpush.msra.mxu0 %v808
    %7071 = vmatpush.msra.mxu0 %v800
    %7072 = vmatpush.msra.mxu0 %v792
    %7073 = vmatpush.msra.mxu0 %v784
    %7074 = vmatpush.msra.mxu0 %v776
    %7075 = vmatpush.msra.mxu0 %v768
    %7076 = vmatpush.msra.mxu0 %v760
    %7077 = vmatpush.msra.mxu0 %v752
    %7078 = vmatpush.msra.mxu0 %v744
    %7079 = vmatpush.msra.mxu0 %v736
    %7080 = vmatmul.f32.gmra.mxu0 %v7001
    %v7081 = vpop.f32.mrf.mxu0
    %v7082 = vadd.f32 %v7062, %v7081
    %7083 = vdwg.mxu0
    %7084 = vmatpush.msra.mxu0 %v729
    %7085 = vmatpush.msra.mxu0 %v721
    %7086 = vmatpush.msra.mxu0 %v713
    %7087 = vmatpush.msra.mxu0 %v705
    %7088 = vmatpush.msra.mxu0 %v697
    %7089 = vmatpush.msra.mxu0 %v689
    %7090 = vmatpush.msra.mxu0 %v681
    %7091 = vmatpush.msra.mxu0 %v673
    %7092 = vmatpush.msra.mxu0 %v665
    %7093 = vmatpush.msra.mxu0 %v657
    %7094 = vmatpush.msra.mxu0 %v649
    %7095 = vmatpush.msra.mxu0 %v641
    %7096 = vmatpush.msra.mxu0 %v633
    %7097 = vmatpush.msra.mxu0 %v625
    %7098 = vmatpush.msra.mxu0 %v617
    %7099 = vmatpush.msra.mxu0 %v609
    %7100 = vmatmul.f32.gmra.mxu0 %v7000
    %v7101 = vpop.f32.mrf.mxu0
    %v7102 = vadd.f32 0.0, %v7101
    %7103 = vdwg.mxu0
    %7104 = vmatpush.msra.mxu0 %v857
    %7105 = vmatpush.msra.mxu0 %v849
    %7106 = vmatpush.msra.mxu0 %v841
    %7107 = vmatpush.msra.mxu0 %v833
    %7108 = vmatpush.msra.mxu0 %v825
    %7109 = vmatpush.msra.mxu0 %v817
    %7110 = vmatpush.msra.mxu0 %v809
    %7111 = vmatpush.msra.mxu0 %v801
    %7112 = vmatpush.msra.mxu0 %v793
    %7113 = vmatpush.msra.mxu0 %v785
    %7114 = vmatpush.msra.mxu0 %v777
    %7115 = vmatpush.msra.mxu0 %v769
    %7116 = vmatpush.msra.mxu0 %v761
    %7117 = vmatpush.msra.mxu0 %v753
    %7118 = vmatpush.msra.mxu0 %v745
    %7119 = vmatpush.msra.mxu0 %v737
    %7120 = vmatmul.f32.gmra.mxu0 %v7001
    %v7121 = vpop.f32.mrf.mxu0
    %v7122 = vadd.f32 %v7102, %v7121
    %7123 = vdwg.mxu0
    %7124 = vmatpush.msra.mxu0 %v730
    %7125 = vmatpush.msra.mxu0 %v722
    %7126 = vmatpush.msra.mxu0 %v714
    %7127 = vmatpush.msra.mxu0 %v706
    %7128 = vmatpush.msra.mxu0 %v698
    %7129 = vmatpush.msra.mxu0 %v690
    %7130 = vmatpush.msra.mxu0 %v682
    %7131 = vmatpush.msra.mxu0 %v674
    %7132 = vmatpush.msra.mxu0 %v666
    %7133 = vmatpush.msra.mxu0 %v658
    %7134 = vmatpush.msra.mxu0 %v650
    %7135 = vmatpush.msra.mxu0 %v642
    %7136 = vmatpush.msra.mxu0 %v634
    %7137 = vmatpush.msra.mxu0 %v626
    %7138 = vmatpush.msra.mxu0 %v618
    %7139 = vmatpush.msra.mxu0 %v610
    %7140 = vmatmul.f32.gmra.mxu0 %v7000
    %v7141 = vpop.f32.mrf.mxu0
    %v7142 = vadd.f32 0.0, %v7141
    %7143 = vdwg.mxu0
    %7144 = vmatpush.msra.mxu0 %v858
    %7145 = vmatpush.msra.mxu0 %v850
    %7146 = vmatpush.msra.mxu0 %v842
    %7147 = vmatpush.msra.mxu0 %v834
    %7148 = vmatpush.msra.mxu0 %v826
    %7149 = vmatpush.msra.mxu0 %v818
    %7150 = vmatpush.msra.mxu0 %v810
    %7151 = vmatpush.msra.mxu0 %v802
    %7152 = vmatpush.msra.mxu0 %v794
    %7153 = vmatpush.msra.mxu0 %v786
    %7154 = vmatpush.msra.mxu0 %v778
    %7155 = vmatpush.msra.mxu0 %v770
    %7156 = vmatpush.msra.mxu0 %v762
    %7157 = vmatpush.msra.mxu0 %v754
    %7158 = vmatpush.msra.mxu0 %v746
    %7159 = vmatpush.msra.mxu0 %v738
    %7160 = vmatmul.f32.gmra.mxu0 %v7001
    %v7161 = vpop.f32.mrf.mxu0
    %v7162 = vadd.f32 %v7142, %v7161
    %7163 = vdwg.mxu0
    %7164 = vmatpush.msra.mxu0 %v731
    %7165 = vmatpush.msra.mxu0 %v723
    %7166 = vmatpush.msra.mxu0 %v715
    %7167 = vmatpush.msra.mxu0 %v707
    %7168 = vmatpush.msra.mxu0 %v699
    %7169 = vmatpush.msra.mxu0 %v691
    %7170 = vmatpush.msra.mxu0 %v683
    %7171 = vmatpush.msra.mxu0 %v675
    %7172 = vmatpush.msra.mxu0 %v667
    %7173 = vmatpush.msra.mxu0 %v659
    %7174 = vmatpush.msra.mxu0 %v651
    %7175 = vmatpush.msra.mxu0 %v643
    %7176 = vmatpush.msra.mxu0 %v635
    %7177 = vmatpush.msra.mxu0 %v627
    %7178 = vmatpush.msra.mxu0 %v619
    %7179 = vmatpush.msra.mxu0 %v611
    %7180 = vmatmul.f32.gmra.mxu0 %v7000
    %v7181 = vpop.f32.mrf.mxu0
    %v7182 = vadd.f32 0.0, %v7181
    %7183 = vdwg.mxu0
    %7184 = vmatpush.msra.mxu0 %v859
    %7185 = vmatpush.msra.mxu0 %v851
    %7186 = vmatpush.msra.mxu0 %v843
    %7187 = vmatpush.msra.mxu0 %v835
    %7188 = vmatpush.msra.mxu0 %v827
    %7189 = vmatpush.msra.mxu0 %v819
    %7190 = vmatpush.msra.mxu0 %v811
    %7191 = vmatpush.msra.mxu0 %v803
    %7192 = vmatpush.msra.mxu0 %v795
    %7193 = vmatpush.msra.mxu0 %v787
    %7194 = vmatpush.msra.mxu0 %v779
    %7195 = vmatpush.msra.mxu0 %v771
    %7196 = vmatpush.msra.mxu0 %v763
    %7197 = vmatpush.msra.mxu0 %v755
    %7198 = vmatpush.msra.mxu0 %v747
    %7199 = vmatpush.msra.mxu0 %v739
    %7200 = vmatmul.f32.gmra.mxu0 %v7001
    %v7201 = vpop.f32.mrf.mxu0
    %v7202 = vadd.f32 %v7182, %v7201
    %7203 = vdwg.mxu0
    %7204 = vmatpush.msra.mxu0 %v732
    %7205 = vmatpush.msra.mxu0 %v724
    %7206 = vmatpush.msra.mxu0 %v716
    %7207 = vmatpush.msra.mxu0 %v708
    %7208 = vmatpush.msra.mxu0 %v700
    %7209 = vmatpush.msra.mxu0 %v692
    %7210 = vmatpush.msra.mxu0 %v684
    %7211 = vmatpush.msra.mxu0 %v676
    %7212 = vmatpush.msra.mxu0 %v668
    %7213 = vmatpush.msra.mxu0 %v660
    %7214 = vmatpush.msra.mxu0 %v652
    %7215 = vmatpush.msra.mxu0 %v644
    %7216 = vmatpush.msra.mxu0 %v636
    %7217 = vmatpush.msra.mxu0 %v628
    %7218 = vmatpush.msra.mxu0 %v620
    %7219 = vmatpush.msra.mxu0 %v612
    %7220 = vmatmul.f32.gmra.mxu0 %v7000
    %v7221 = vpop.f32.mrf.mxu0
    %v7222 = vadd.f32 0.0, %v7221
    %7223 = vdwg.mxu0
    %7224 = vmatpush.msra.mxu0 %v860
    %7225 = vmatpush.msra.mxu0 %v852
    %7226 = vmatpush.msra.mxu0 %v844
    %7227 = vmatpush.msra.mxu0 %v836
    %7228 = vmatpush.msra.mxu0 %v828
    %7229 = vmatpush.msra.mxu0 %v820
    %7230 = vmatpush.msra.mxu0 %v812
    %7231 = vmatpush.msra.mxu0 %v804
    %7232 = vmatpush.msra.mxu0 %v796
    %7233 = vmatpush.msra.mxu0 %v788
    %7234 = vmatpush.msra.mxu0 %v780
    %7235 = vmatpush.msra.mxu0 %v772
    %7236 = vmatpush.msra.mxu0 %v764
    %7237 = vmatpush.msra.mxu0 %v756
    %7238 = vmatpush.msra.mxu0 %v748
    %7239 = vmatpush.msra.mxu0 %v740
    %7240 = vmatmul.f32.gmra.mxu0 %v7001
    %v7241 = vpop.f32.mrf.mxu0
    %v7242 = vadd.f32 %v7222, %v7241
    %7243 = vdwg.mxu0
    %7244 = vmatpush.msra.mxu0 %v733
    %7245 = vmatpush.msra.mxu0 %v725
    %7246 = vmatpush.msra.mxu0 %v717
    %7247 = vmatpush.msra.mxu0 %v709
    %7248 = vmatpush.msra.mxu0 %v701
    %7249 = vmatpush.msra.mxu0 %v693
    %7250 = vmatpush.msra.mxu0 %v685
    %7251 = vmatpush.msra.mxu0 %v677
    %7252 = vmatpush.msra.mxu0 %v669
    %7253 = vmatpush.msra.mxu0 %v661
    %7254 = vmatpush.msra.mxu0 %v653
    %7255 = vmatpush.msra.mxu0 %v645
    %7256 = vmatpush.msra.mxu0 %v637
    %7257 = vmatpush.msra.mxu0 %v629
    %7258 = vmatpush.msra.mxu0 %v621
    %7259 = vmatpush.msra.mxu0 %v613
    %7260 = vmatmul.f32.gmra.mxu0 %v7000
    %v7261 = vpop.f32.mrf.mxu0
    %v7262 = vadd.f32 0.0, %v7261
    %7263 = vdwg.mxu0
    %7264 = vmatpush.msra.mxu0 %v861
    %7265 = vmatpush.msra.mxu0 %v853
    %7266 = vmatpush.msra.mxu0 %v845
    %7267 = vmatpush.msra.mxu0 %v837
    %7268 = vmatpush.msra.mxu0 %v829
    %7269 = vmatpush.msra.mxu0 %v821
    %7270 = vmatpush.msra.mxu0 %v813
    %7271 = vmatpush.msra.mxu0 %v805
    %7272 = vmatpush.msra.mxu0 %v797
    %7273 = vmatpush.msra.mxu0 %v789
    %7274 = vmatpush.msra.mxu0 %v781
    %7275 = vmatpush.msra.mxu0 %v773
    %7276 = vmatpush.msra.mxu0 %v765
    %7277 = vmatpush.msra.mxu0 %v757
    %7278 = vmatpush.msra.mxu0 %v749
    %7279 = vmatpush.msra.mxu0 %v741
    %7280 = vmatmul.f32.gmra.mxu0 %v7001
    %v7281 = vpop.f32.mrf.mxu0
    %v7282 = vadd.f32 %v7262, %v7281
    %7283 = vdwg.mxu0
    %7284 = vmatpush.msra.mxu0 %v734
    %7285 = vmatpush.msra.mxu0 %v726
    %7286 = vmatpush.msra.mxu0 %v718
    %7287 = vmatpush.msra.mxu0 %v710
    %7288 = vmatpush.msra.mxu0 %v702
    %7289 = vmatpush.msra.mxu0 %v694
    %7290 = vmatpush.msra.mxu0 %v686
    %7291 = vmatpush.msra.mxu0 %v678
    %7292 = vmatpush.msra.mxu0 %v670
    %7293 = vmatpush.msra.mxu0 %v662
    %7294 = vmatpush.msra.mxu0 %v654
    %7295 = vmatpush.msra.mxu0 %v646
    %7296 = vmatpush.msra.mxu0 %v638
    %7297 = vmatpush.msra.mxu0 %v630
    %7298 = vmatpush.msra.mxu0 %v622
    %7299 = vmatpush.msra.mxu0 %v614
    %7300 = vmatmul.f32.gmra.mxu0 %v7000
    %v7301 = vpop.f32.mrf.mxu0
    %v7302 = vadd.f32 0.0, %v7301
    %7303 = vdwg.mxu0
    %7304 = vmatpush.msra.mxu0 %v862
    %7305 = vmatpush.msra.mxu0 %v854
    %7306 = vmatpush.msra.mxu0 %v846
    %7307 = vmatpush.msra.mxu0 %v838
    %7308 = vmatpush.msra.mxu0 %v830
    %7309 = vmatpush.msra.mxu0 %v822
    %7310 = vmatpush.msra.mxu0 %v814
    %7311 = vmatpush.msra.mxu0 %v806
    %7312 = vmatpush.msra.mxu0 %v798
    %7313 = vmatpush.msra.mxu0 %v790
    %7314 = vmatpush.msra.mxu0 %v782
    %7315 = vmatpush.msra.mxu0 %v774
    %7316 = vmatpush.msra.mxu0 %v766
    %7317 = vmatpush.msra.mxu0 %v758
    %7318 = vmatpush.msra.mxu0 %v750
    %7319 = vmatpush.msra.mxu0 %v742
    %7320 = vmatmul.f32.gmra.mxu0 %v7001
    %v7321 = vpop.f32.mrf.mxu0
    %v7322 = vadd.f32 %v7302, %v7321
    %7323 = vdwg.mxu0
    %v7332 = vrot.slane %v7042, 4
    %v7333 = vrot.slane %v7082, 4
    %v7334 = vrot.slane %v7122, 4
    %v7335 = vrot.slane %v7162, 4
    %v7336 = vrot.slane %v7202, 4
    %v7337 = vrot.slane %v7242, 4
    %v7338 = vrot.slane %v7282, 4
    %v7339 = vrot.slane %v7322, 4
    %v7348 = vadd.f32 %v6982, %v7332
    %v7349 = vadd.f32 %v6983, %v7333
    %v7350 = vadd.f32 %v6984, %v7334
    %v7351 = vadd.f32 %v6985, %v7335
    %v7352 = vadd.f32 %v6986, %v7336
    %v7353 = vadd.f32 %v6987, %v7337
    %v7354 = vadd.f32 %v6988, %v7338
    %v7355 = vadd.f32 %v6989, %v7339
    %v7358 = vrot.slane %v6980, 4
    %v7359 = vrot.slane %v6981, 4
    %7362 = vmatpush.msra.mxu0 %v984
    %7363 = vmatpush.msra.mxu0 %v976
    %7364 = vmatpush.msra.mxu0 %v968
    %7365 = vmatpush.msra.mxu0 %v960
    %7366 = vmatpush.msra.mxu0 %v952
    %7367 = vmatpush.msra.mxu0 %v944
    %7368 = vmatpush.msra.mxu0 %v936
    %7369 = vmatpush.msra.mxu0 %v928
    %7370 = vmatpush.msra.mxu0 %v920
    %7371 = vmatpush.msra.mxu0 %v912
    %7372 = vmatpush.msra.mxu0 %v904
    %7373 = vmatpush.msra.mxu0 %v896
    %7374 = vmatpush.msra.mxu0 %v888
    %7375 = vmatpush.msra.mxu0 %v880
    %7376 = vmatpush.msra.mxu0 %v872
    %7377 = vmatpush.msra.mxu0 %v864
    %7378 = vmatmul.f32.gmra.mxu0 %v7358
    %v7379 = vpop.f32.mrf.mxu0
    %v7380 = vadd.f32 0.0, %v7379
    %7381 = vdwg.mxu0
    %7382 = vmatpush.msra.mxu0 %v1112
    %7383 = vmatpush.msra.mxu0 %v1104
    %7384 = vmatpush.msra.mxu0 %v1096
    %7385 = vmatpush.msra.mxu0 %v1088
    %7386 = vmatpush.msra.mxu0 %v1080
    %7387 = vmatpush.msra.mxu0 %v1072
    %7388 = vmatpush.msra.mxu0 %v1064
    %7389 = vmatpush.msra.mxu0 %v1056
    %7390 = vmatpush.msra.mxu0 %v1048
    %7391 = vmatpush.msra.mxu0 %v1040
    %7392 = vmatpush.msra.mxu0 %v1032
    %7393 = vmatpush.msra.mxu0 %v1024
    %7394 = vmatpush.msra.mxu0 %v1016
    %7395 = vmatpush.msra.mxu0 %v1008
    %7396 = vmatpush.msra.mxu0 %v1000
    %7397 = vmatpush.msra.mxu0 %v992
    %7398 = vmatmul.f32.gmra.mxu0 %v7359
    %v7399 = vpop.f32.mrf.mxu0
    %v7400 = vadd.f32 %v7380, %v7399
    %7401 = vdwg.mxu0
    %7402 = vmatpush.msra.mxu0 %v985
    %7403 = vmatpush.msra.mxu0 %v977
    %7404 = vmatpush.msra.mxu0 %v969
    %7405 = vmatpush.msra.mxu0 %v961
    %7406 = vmatpush.msra.mxu0 %v953
    %7407 = vmatpush.msra.mxu0 %v945
    %7408 = vmatpush.msra.mxu0 %v937
    %7409 = vmatpush.msra.mxu0 %v929
    %7410 = vmatpush.msra.mxu0 %v921
    %7411 = vmatpush.msra.mxu0 %v913
    %7412 = vmatpush.msra.mxu0 %v905
    %7413 = vmatpush.msra.mxu0 %v897
    %7414 = vmatpush.msra.mxu0 %v889
    %7415 = vmatpush.msra.mxu0 %v881
    %7416 = vmatpush.msra.mxu0 %v873
    %7417 = vmatpush.msra.mxu0 %v865
    %7418 = vmatmul.f32.gmra.mxu0 %v7358
    %v7419 = vpop.f32.mrf.mxu0
    %v7420 = vadd.f32 0.0, %v7419
    %7421 = vdwg.mxu0
    %7422 = vmatpush.msra.mxu0 %v1113
    %7423 = vmatpush.msra.mxu0 %v1105
    %7424 = vmatpush.msra.mxu0 %v1097
    %7425 = vmatpush.msra.mxu0 %v1089
    %7426 = vmatpush.msra.mxu0 %v1081
    %7427 = vmatpush.msra.mxu0 %v1073
    %7428 = vmatpush.msra.mxu0 %v1065
    %7429 = vmatpush.msra.mxu0 %v1057
    %7430 = vmatpush.msra.mxu0 %v1049
    %7431 = vmatpush.msra.mxu0 %v1041
    %7432 = vmatpush.msra.mxu0 %v1033
    %7433 = vmatpush.msra.mxu0 %v1025
    %7434 = vmatpush.msra.mxu0 %v1017
    %7435 = vmatpush.msra.mxu0 %v1009
    %7436 = vmatpush.msra.mxu0 %v1001
    %7437 = vmatpush.msra.mxu0 %v993
    %7438 = vmatmul.f32.gmra.mxu0 %v7359
    %v7439 = vpop.f32.mrf.mxu0
    %v7440 = vadd.f32 %v7420, %v7439
    %7441 = vdwg.mxu0
    %7442 = vmatpush.msra.mxu0 %v986
    %7443 = vmatpush.msra.mxu0 %v978
    %7444 = vmatpush.msra.mxu0 %v970
    %7445 = vmatpush.msra.mxu0 %v962
    %7446 = vmatpush.msra.mxu0 %v954
    %7447 = vmatpush.msra.mxu0 %v946
    %7448 = vmatpush.msra.mxu0 %v938
    %7449 = vmatpush.msra.mxu0 %v930
    %7450 = vmatpush.msra.mxu0 %v922
    %7451 = vmatpush.msra.mxu0 %v914
    %7452 = vmatpush.msra.mxu0 %v906
    %7453 = vmatpush.msra.mxu0 %v898
    %7454 = vmatpush.msra.mxu0 %v890
    %7455 = vmatpush.msra.mxu0 %v882
    %7456 = vmatpush.msra.mxu0 %v874
    %7457 = vmatpush.msra.mxu0 %v866
    %7458 = vmatmul.f32.gmra.mxu0 %v7358
    %v7459 = vpop.f32.mrf.mxu0
    %v7460 = vadd.f32 0.0, %v7459
    %7461 = vdwg.mxu0
    %7462 = vmatpush.msra.mxu0 %v1114
    %7463 = vmatpush.msra.mxu0 %v1106
    %7464 = vmatpush.msra.mxu0 %v1098
    %7465 = vmatpush.msra.mxu0 %v1090
    %7466 = vmatpush.msra.mxu0 %v1082
    %7467 = vmatpush.msra.mxu0 %v1074
    %7468 = vmatpush.msra.mxu0 %v1066
    %7469 = vmatpush.msra.mxu0 %v1058
    %7470 = vmatpush.msra.mxu0 %v1050
    %7471 = vmatpush.msra.mxu0 %v1042
    %7472 = vmatpush.msra.mxu0 %v1034
    %7473 = vmatpush.msra.mxu0 %v1026
    %7474 = vmatpush.msra.mxu0 %v1018
    %7475 = vmatpush.msra.mxu0 %v1010
    %7476 = vmatpush.msra.mxu0 %v1002
    %7477 = vmatpush.msra.mxu0 %v994
    %7478 = vmatmul.f32.gmra.mxu0 %v7359
    %v7479 = vpop.f32.mrf.mxu0
    %v7480 = vadd.f32 %v7460, %v7479
    %7481 = vdwg.mxu0
    %7482 = vmatpush.msra.mxu0 %v987
    %7483 = vmatpush.msra.mxu0 %v979
    %7484 = vmatpush.msra.mxu0 %v971
    %7485 = vmatpush.msra.mxu0 %v963
    %7486 = vmatpush.msra.mxu0 %v955
    %7487 = vmatpush.msra.mxu0 %v947
    %7488 = vmatpush.msra.mxu0 %v939
    %7489 = vmatpush.msra.mxu0 %v931
    %7490 = vmatpush.msra.mxu0 %v923
    %7491 = vmatpush.msra.mxu0 %v915
    %7492 = vmatpush.msra.mxu0 %v907
    %7493 = vmatpush.msra.mxu0 %v899
    %7494 = vmatpush.msra.mxu0 %v891
    %7495 = vmatpush.msra.mxu0 %v883
    %7496 = vmatpush.msra.mxu0 %v875
    %7497 = vmatpush.msra.mxu0 %v867
    %7498 = vmatmul.f32.gmra.mxu0 %v7358
    %v7499 = vpop.f32.mrf.mxu0
    %v7500 = vadd.f32 0.0, %v7499
    %7501 = vdwg.mxu0
    %7502 = vmatpush.msra.mxu0 %v1115
    %7503 = vmatpush.msra.mxu0 %v1107
    %7504 = vmatpush.msra.mxu0 %v1099
    %7505 = vmatpush.msra.mxu0 %v1091
    %7506 = vmatpush.msra.mxu0 %v1083
    %7507 = vmatpush.msra.mxu0 %v1075
    %7508 = vmatpush.msra.mxu0 %v1067
    %7509 = vmatpush.msra.mxu0 %v1059
    %7510 = vmatpush.msra.mxu0 %v1051
    %7511 = vmatpush.msra.mxu0 %v1043
    %7512 = vmatpush.msra.mxu0 %v1035
    %7513 = vmatpush.msra.mxu0 %v1027
    %7514 = vmatpush.msra.mxu0 %v1019
    %7515 = vmatpush.msra.mxu0 %v1011
    %7516 = vmatpush.msra.mxu0 %v1003
    %7517 = vmatpush.msra.mxu0 %v995
    %7518 = vmatmul.f32.gmra.mxu0 %v7359
    %v7519 = vpop.f32.mrf.mxu0
    %v7520 = vadd.f32 %v7500, %v7519
    %7521 = vdwg.mxu0
    %7522 = vmatpush.msra.mxu0 %v988
    %7523 = vmatpush.msra.mxu0 %v980
    %7524 = vmatpush.msra.mxu0 %v972
    %7525 = vmatpush.msra.mxu0 %v964
    %7526 = vmatpush.msra.mxu0 %v956
    %7527 = vmatpush.msra.mxu0 %v948
    %7528 = vmatpush.msra.mxu0 %v940
    %7529 = vmatpush.msra.mxu0 %v932
    %7530 = vmatpush.msra.mxu0 %v924
    %7531 = vmatpush.msra.mxu0 %v916
    %7532 = vmatpush.msra.mxu0 %v908
    %7533 = vmatpush.msra.mxu0 %v900
    %7534 = vmatpush.msra.mxu0 %v892
    %7535 = vmatpush.msra.mxu0 %v884
    %7536 = vmatpush.msra.mxu0 %v876
    %7537 = vmatpush.msra.mxu0 %v868
    %7538 = vmatmul.f32.gmra.mxu0 %v7358
    %v7539 = vpop.f32.mrf.mxu0
    %v7540 = vadd.f32 0.0, %v7539
    %7541 = vdwg.mxu0
    %7542 = vmatpush.msra.mxu0 %v1116
    %7543 = vmatpush.msra.mxu0 %v1108
    %7544 = vmatpush.msra.mxu0 %v1100
    %7545 = vmatpush.msra.mxu0 %v1092
    %7546 = vmatpush.msra.mxu0 %v1084
    %7547 = vmatpush.msra.mxu0 %v1076
    %7548 = vmatpush.msra.mxu0 %v1068
    %7549 = vmatpush.msra.mxu0 %v1060
    %7550 = vmatpush.msra.mxu0 %v1052
    %7551 = vmatpush.msra.mxu0 %v1044
    %7552 = vmatpush.msra.mxu0 %v1036
    %7553 = vmatpush.msra.mxu0 %v1028
    %7554 = vmatpush.msra.mxu0 %v1020
    %7555 = vmatpush.msra.mxu0 %v1012
    %7556 = vmatpush.msra.mxu0 %v1004
    %7557 = vmatpush.msra.mxu0 %v996
    %7558 = vmatmul.f32.gmra.mxu0 %v7359
    %v7559 = vpop.f32.mrf.mxu0
    %v7560 = vadd.f32 %v7540, %v7559
    %7561 = vdwg.mxu0
    %7562 = vmatpush.msra.mxu0 %v989
    %7563 = vmatpush.msra.mxu0 %v981
    %7564 = vmatpush.msra.mxu0 %v973
    %7565 = vmatpush.msra.mxu0 %v965
    %7566 = vmatpush.msra.mxu0 %v957
    %7567 = vmatpush.msra.mxu0 %v949
    %7568 = vmatpush.msra.mxu0 %v941
    %7569 = vmatpush.msra.mxu0 %v933
    %7570 = vmatpush.msra.mxu0 %v925
    %7571 = vmatpush.msra.mxu0 %v917
    %7572 = vmatpush.msra.mxu0 %v909
    %7573 = vmatpush.msra.mxu0 %v901
    %7574 = vmatpush.msra.mxu0 %v893
    %7575 = vmatpush.msra.mxu0 %v885
    %7576 = vmatpush.msra.mxu0 %v877
    %7577 = vmatpush.msra.mxu0 %v869
    %7578 = vmatmul.f32.gmra.mxu0 %v7358
    %v7579 = vpop.f32.mrf.mxu0
    %v7580 = vadd.f32 0.0, %v7579
    %7581 = vdwg.mxu0
    %7582 = vmatpush.msra.mxu0 %v1117
    %7583 = vmatpush.msra.mxu0 %v1109
    %7584 = vmatpush.msra.mxu0 %v1101
    %7585 = vmatpush.msra.mxu0 %v1093
    %7586 = vmatpush.msra.mxu0 %v1085
    %7587 = vmatpush.msra.mxu0 %v1077
    %7588 = vmatpush.msra.mxu0 %v1069
    %7589 = vmatpush.msra.mxu0 %v1061
    %7590 = vmatpush.msra.mxu0 %v1053
    %7591 = vmatpush.msra.mxu0 %v1045
    %7592 = vmatpush.msra.mxu0 %v1037
    %7593 = vmatpush.msra.mxu0 %v1029
    %7594 = vmatpush.msra.mxu0 %v1021
    %7595 = vmatpush.msra.mxu0 %v1013
    %7596 = vmatpush.msra.mxu0 %v1005
    %7597 = vmatpush.msra.mxu0 %v997
    %7598 = vmatmul.f32.gmra.mxu0 %v7359
    %v7599 = vpop.f32.mrf.mxu0
    %v7600 = vadd.f32 %v7580, %v7599
    %7601 = vdwg.mxu0
    %7602 = vmatpush.msra.mxu0 %v990
    %7603 = vmatpush.msra.mxu0 %v982
    %7604 = vmatpush.msra.mxu0 %v974
    %7605 = vmatpush.msra.mxu0 %v966
    %7606 = vmatpush.msra.mxu0 %v958
    %7607 = vmatpush.msra.mxu0 %v950
    %7608 = vmatpush.msra.mxu0 %v942
    %7609 = vmatpush.msra.mxu0 %v934
    %7610 = vmatpush.msra.mxu0 %v926
    %7611 = vmatpush.msra.mxu0 %v918
    %7612 = vmatpush.msra.mxu0 %v910
    %7613 = vmatpush.msra.mxu0 %v902
    %7614 = vmatpush.msra.mxu0 %v894
    %7615 = vmatpush.msra.mxu0 %v886
    %7616 = vmatpush.msra.mxu0 %v878
    %7617 = vmatpush.msra.mxu0 %v870
    %7618 = vmatmul.f32.gmra.mxu0 %v7358
    %v7619 = vpop.f32.mrf.mxu0
    %v7620 = vadd.f32 0.0, %v7619
    %7621 = vdwg.mxu0
    %7622 = vmatpush.msra.mxu0 %v1118
    %7623 = vmatpush.msra.mxu0 %v1110
    %7624 = vmatpush.msra.mxu0 %v1102
    %7625 = vmatpush.msra.mxu0 %v1094
    %7626 = vmatpush.msra.mxu0 %v1086
    %7627 = vmatpush.msra.mxu0 %v1078
    %7628 = vmatpush.msra.mxu0 %v1070
    %7629 = vmatpush.msra.mxu0 %v1062
    %7630 = vmatpush.msra.mxu0 %v1054
    %7631 = vmatpush.msra.mxu0 %v1046
    %7632 = vmatpush.msra.mxu0 %v1038
    %7633 = vmatpush.msra.mxu0 %v1030
    %7634 = vmatpush.msra.mxu0 %v1022
    %7635 = vmatpush.msra.mxu0 %v1014
    %7636 = vmatpush.msra.mxu0 %v1006
    %7637 = vmatpush.msra.mxu0 %v998
    %7638 = vmatmul.f32.gmra.mxu0 %v7359
    %v7639 = vpop.f32.mrf.mxu0
    %v7640 = vadd.f32 %v7620, %v7639
    %7641 = vdwg.mxu0
    %7642 = vmatpush.msra.mxu0 %v991
    %7643 = vmatpush.msra.mxu0 %v983
    %7644 = vmatpush.msra.mxu0 %v975
    %7645 = vmatpush.msra.mxu0 %v967
    %7646 = vmatpush.msra.mxu0 %v959
    %7647 = vmatpush.msra.mxu0 %v951
    %7648 = vmatpush.msra.mxu0 %v943
    %7649 = vmatpush.msra.mxu0 %v935
    %7650 = vmatpush.msra.mxu0 %v927
    %7651 = vmatpush.msra.mxu0 %v919
    %7652 = vmatpush.msra.mxu0 %v911
    %7653 = vmatpush.msra.mxu0 %v903
    %7654 = vmatpush.msra.mxu0 %v895
    %7655 = vmatpush.msra.mxu0 %v887
    %7656 = vmatpush.msra.mxu0 %v879
    %7657 = vmatpush.msra.mxu0 %v871
    %7658 = vmatmul.f32.gmra.mxu0 %v7358
    %v7659 = vpop.f32.mrf.mxu0
    %v7660 = vadd.f32 0.0, %v7659
    %7661 = vdwg.mxu0
    %7662 = vmatpush.msra.mxu0 %v1119
    %7663 = vmatpush.msra.mxu0 %v1111
    %7664 = vmatpush.msra.mxu0 %v1103
    %7665 = vmatpush.msra.mxu0 %v1095
    %7666 = vmatpush.msra.mxu0 %v1087
    %7667 = vmatpush.msra.mxu0 %v1079
    %7668 = vmatpush.msra.mxu0 %v1071
    %7669 = vmatpush.msra.mxu0 %v1063
    %7670 = vmatpush.msra.mxu0 %v1055
    %7671 = vmatpush.msra.mxu0 %v1047
    %7672 = vmatpush.msra.mxu0 %v1039
    %7673 = vmatpush.msra.mxu0 %v1031
    %7674 = vmatpush.msra.mxu0 %v1023
    %7675 = vmatpush.msra.mxu0 %v1015
    %7676 = vmatpush.msra.mxu0 %v1007
    %7677 = vmatpush.msra.mxu0 %v999
    %7678 = vmatmul.f32.gmra.mxu0 %v7359
    %v7679 = vpop.f32.mrf.mxu0
    %v7680 = vadd.f32 %v7660, %v7679
    %7681 = vdwg.mxu0
    %v7690 = vrot.slane %v7400, 6
    %v7691 = vrot.slane %v7440, 6
    %v7692 = vrot.slane %v7480, 6
    %v7693 = vrot.slane %v7520, 6
    %v7694 = vrot.slane %v7560, 6
    %v7695 = vrot.slane %v7600, 6
    %v7696 = vrot.slane %v7640, 6
    %v7697 = vrot.slane %v7680, 6
    %v7706 = vadd.f32 %v6990, %v7690
    %v7707 = vadd.f32 %v6991, %v7691
    %v7708 = vadd.f32 %v6992, %v7692
    %v7709 = vadd.f32 %v6993, %v7693
    %v7710 = vadd.f32 %v6994, %v7694
    %v7711 = vadd.f32 %v6995, %v7695
    %v7712 = vadd.f32 %v6996, %v7696
    %v7713 = vadd.f32 %v6997, %v7697
    %v7714 = vxor.u32 %v7348, 2147483648
    %v7715 = vxor.u32 %v7349, 2147483648
    %v7716 = vmul.f32 %v7714, 1.442695
    %v7717 = vpow.pop %v7716
    %v7718 = vmul.f32 %v7715, 1.442695
    %v7719 = vpow.pop %v7718
    %v7720 = vadd.f32 %v7717, 1.0
    %v7721 = vadd.f32 %v7719, 1.0
    %v7722 = vrcp.pop %v7720
    %v7723 = vmul.f32 %v7720, %v7722
    %v7724 = vsub.f32 1.0, %v7723
    %v7725 = vmul.f32 %v7722, %v7724
    %v7726 = vadd.f32 %v7722, %v7725
    %vm7727 = vweird.f32 %v7720
    %vm7728 = vweird.f32 %v7722
    %vm7729 = vmor %vm7727, %vm7728
    %v7730 = vsel %vm7729, %v7722, %v7726
    %v7731 = vand.u32 2147483647, %v7720
    %vm7732 = vcmp.eq.f32.partialorder %v7731, 8.507059e+37
    %v7733 = vand.u32 %v7720, 2147483648
    %v7734 = vor.u32 1.1754944e-38, %v7733
    %v7735 = vsel %vm7732, %v7734, %v7730
    %v7736 = vmul.f32 1.0, %v7735
    %v7737 = vrcp.pop %v7721
    %v7738 = vmul.f32 %v7721, %v7737
    %v7739 = vsub.f32 1.0, %v7738
    %v7740 = vmul.f32 %v7737, %v7739
    %v7741 = vadd.f32 %v7737, %v7740
    %vm7742 = vweird.f32 %v7721
    %vm7743 = vweird.f32 %v7737
    %vm7744 = vmor %vm7742, %vm7743
    %v7745 = vsel %vm7744, %v7737, %v7741
    %v7746 = vand.u32 2147483647, %v7721
    %vm7747 = vcmp.eq.f32.partialorder %v7746, 8.507059e+37
    %v7748 = vand.u32 %v7721, 2147483648
    %v7749 = vor.u32 1.1754944e-38, %v7748
    %v7750 = vsel %vm7747, %v7749, %v7745
    %v7751 = vmul.f32 1.0, %v7750
    %v7752 = vxor.u32 %v7350, 2147483648
    %v7753 = vxor.u32 %v7351, 2147483648
    %v7754 = vmul.f32 %v7752, 1.442695
    %v7755 = vpow.pop %v7754
    %v7756 = vmul.f32 %v7753, 1.442695
    %v7757 = vpow.pop %v7756
    %v7758 = vadd.f32 %v7755, 1.0
    %v7759 = vadd.f32 %v7757, 1.0
    %v7760 = vrcp.pop %v7758
    %v7761 = vmul.f32 %v7758, %v7760
    %v7762 = vsub.f32 1.0, %v7761
    %v7763 = vmul.f32 %v7760, %v7762
    %v7764 = vadd.f32 %v7760, %v7763
    %vm7765 = vweird.f32 %v7758
    %vm7766 = vweird.f32 %v7760
    %vm7767 = vmor %vm7765, %vm7766
    %v7768 = vsel %vm7767, %v7760, %v7764
    %v7769 = vand.u32 2147483647, %v7758
    %vm7770 = vcmp.eq.f32.partialorder %v7769, 8.507059e+37
    %v7771 = vand.u32 %v7758, 2147483648
    %v7772 = vor.u32 1.1754944e-38, %v7771
    %v7773 = vsel %vm7770, %v7772, %v7768
    %v7774 = vmul.f32 1.0, %v7773
    %v7775 = vrcp.pop %v7759
    %v7776 = vmul.f32 %v7759, %v7775
    %v7777 = vsub.f32 1.0, %v7776
    %v7778 = vmul.f32 %v7775, %v7777
    %v7779 = vadd.f32 %v7775, %v7778
    %vm7780 = vweird.f32 %v7759
    %vm7781 = vweird.f32 %v7775
    %vm7782 = vmor %vm7780, %vm7781
    %v7783 = vsel %vm7782, %v7775, %v7779
    %v7784 = vand.u32 2147483647, %v7759
    %vm7785 = vcmp.eq.f32.partialorder %v7784, 8.507059e+37
    %v7786 = vand.u32 %v7759, 2147483648
    %v7787 = vor.u32 1.1754944e-38, %v7786
    %v7788 = vsel %vm7785, %v7787, %v7783
    %v7789 = vmul.f32 1.0, %v7788
    %v7790 = vtanh.pop %v7352
    %v7791 = vtanh.pop %v7353
    %v7792 = vxor.u32 %v7354, 2147483648
    %v7793 = vxor.u32 %v7355, 2147483648
    %v7794 = vmul.f32 %v7792, 1.442695
    %v7795 = vpow.pop %v7794
    %v7796 = vmul.f32 %v7793, 1.442695
    %v7797 = vpow.pop %v7796
    %v7798 = vadd.f32 %v7795, 1.0
    %v7799 = vadd.f32 %v7797, 1.0
    %v7800 = vrcp.pop %v7798
    %v7801 = vmul.f32 %v7798, %v7800
    %v7802 = vsub.f32 1.0, %v7801
    %v7803 = vmul.f32 %v7800, %v7802
    %v7804 = vadd.f32 %v7800, %v7803
    %vm7805 = vweird.f32 %v7798
    %vm7806 = vweird.f32 %v7800
    %vm7807 = vmor %vm7805, %vm7806
    %v7808 = vsel %vm7807, %v7800, %v7804
    %v7809 = vand.u32 2147483647, %v7798
    %vm7810 = vcmp.eq.f32.partialorder %v7809, 8.507059e+37
    %v7811 = vand.u32 %v7798, 2147483648
    %v7812 = vor.u32 1.1754944e-38, %v7811
    %v7813 = vsel %vm7810, %v7812, %v7808
    %v7814 = vmul.f32 1.0, %v7813
    %v7815 = vrcp.pop %v7799
    %v7816 = vmul.f32 %v7799, %v7815
    %v7817 = vsub.f32 1.0, %v7816
    %v7818 = vmul.f32 %v7815, %v7817
    %v7819 = vadd.f32 %v7815, %v7818
    %vm7820 = vweird.f32 %v7799
    %vm7821 = vweird.f32 %v7815
    %vm7822 = vmor %vm7820, %vm7821
    %v7823 = vsel %vm7822, %v7815, %v7819
    %v7824 = vand.u32 2147483647, %v7799
    %vm7825 = vcmp.eq.f32.partialorder %v7824, 8.507059e+37
    %v7826 = vand.u32 %v7799, 2147483648
    %v7827 = vor.u32 1.1754944e-38, %v7826
    %v7828 = vsel %vm7825, %v7827, %v7823
    %v7829 = vmul.f32 1.0, %v7828
    %v7832 = vrot.slane %v6844, 6
    %v7833 = vrot.slane %v6845, 6
    %v7836 = vmul.f32 %v7774, %v7832
    %v7837 = vmul.f32 %v7789, %v7833
    %v7838 = vmul.f32 %v7736, %v7790
    %v7839 = vmul.f32 %v7751, %v7791
    %v7840 = vadd.f32 %v7836, %v7838
    %v7841 = vadd.f32 %v7837, %v7839
    %v7842 = vtanh.pop %v7840
    %v7843 = vtanh.pop %v7841
    %v7844 = vmul.f32 %v7814, %v7842
    %v7845 = vmul.f32 %v7829, %v7843
    %v7846 = vxor.u32 %v7706, 2147483648
    %v7847 = vxor.u32 %v7707, 2147483648
    %v7848 = vmul.f32 %v7846, 1.442695
    %v7849 = vpow.pop %v7848
    %v7850 = vmul.f32 %v7847, 1.442695
    %v7851 = vpow.pop %v7850
    %v7852 = vadd.f32 %v7849, 1.0
    %v7853 = vadd.f32 %v7851, 1.0
    %v7854 = vrcp.pop %v7852
    %v7855 = vmul.f32 %v7852, %v7854
    %v7856 = vsub.f32 1.0, %v7855
    %v7857 = vmul.f32 %v7854, %v7856
    %v7858 = vadd.f32 %v7854, %v7857
    %vm7859 = vweird.f32 %v7852
    %vm7860 = vweird.f32 %v7854
    %vm7861 = vmor %vm7859, %vm7860
    %v7862 = vsel %vm7861, %v7854, %v7858
    %v7863 = vand.u32 2147483647, %v7852
    %vm7864 = vcmp.eq.f32.partialorder %v7863, 8.507059e+37
    %v7865 = vand.u32 %v7852, 2147483648
    %v7866 = vor.u32 1.1754944e-38, %v7865
    %v7867 = vsel %vm7864, %v7866, %v7862
    %v7868 = vmul.f32 1.0, %v7867
    %v7869 = vrcp.pop %v7853
    %v7870 = vmul.f32 %v7853, %v7869
    %v7871 = vsub.f32 1.0, %v7870
    %v7872 = vmul.f32 %v7869, %v7871
    %v7873 = vadd.f32 %v7869, %v7872
    %vm7874 = vweird.f32 %v7853
    %vm7875 = vweird.f32 %v7869
    %vm7876 = vmor %vm7874, %vm7875
    %v7877 = vsel %vm7876, %v7869, %v7873
    %v7878 = vand.u32 2147483647, %v7853
    %vm7879 = vcmp.eq.f32.partialorder %v7878, 8.507059e+37
    %v7880 = vand.u32 %v7853, 2147483648
    %v7881 = vor.u32 1.1754944e-38, %v7880
    %v7882 = vsel %vm7879, %v7881, %v7877
    %v7883 = vmul.f32 1.0, %v7882
    %v7884 = vxor.u32 %v7708, 2147483648
    %v7885 = vxor.u32 %v7709, 2147483648
    %v7886 = vmul.f32 %v7884, 1.442695
    %v7887 = vpow.pop %v7886
    %v7888 = vmul.f32 %v7885, 1.442695
    %v7889 = vpow.pop %v7888
    %v7890 = vadd.f32 %v7887, 1.0
    %v7891 = vadd.f32 %v7889, 1.0
    %v7892 = vrcp.pop %v7890
    %v7893 = vmul.f32 %v7890, %v7892
    %v7894 = vsub.f32 1.0, %v7893
    %v7895 = vmul.f32 %v7892, %v7894
    %v7896 = vadd.f32 %v7892, %v7895
    %vm7897 = vweird.f32 %v7890
    %vm7898 = vweird.f32 %v7892
    %vm7899 = vmor %vm7897, %vm7898
    %v7900 = vsel %vm7899, %v7892, %v7896
    %v7901 = vand.u32 2147483647, %v7890
    %vm7902 = vcmp.eq.f32.partialorder %v7901, 8.507059e+37
    %v7903 = vand.u32 %v7890, 2147483648
    %v7904 = vor.u32 1.1754944e-38, %v7903
    %v7905 = vsel %vm7902, %v7904, %v7900
    %v7906 = vmul.f32 1.0, %v7905
    %v7907 = vrcp.pop %v7891
    %v7908 = vmul.f32 %v7891, %v7907
    %v7909 = vsub.f32 1.0, %v7908
    %v7910 = vmul.f32 %v7907, %v7909
    %v7911 = vadd.f32 %v7907, %v7910
    %vm7912 = vweird.f32 %v7891
    %vm7913 = vweird.f32 %v7907
    %vm7914 = vmor %vm7912, %vm7913
    %v7915 = vsel %vm7914, %v7907, %v7911
    %v7916 = vand.u32 2147483647, %v7891
    %vm7917 = vcmp.eq.f32.partialorder %v7916, 8.507059e+37
    %v7918 = vand.u32 %v7891, 2147483648
    %v7919 = vor.u32 1.1754944e-38, %v7918
    %v7920 = vsel %vm7917, %v7919, %v7915
    %v7921 = vmul.f32 1.0, %v7920
    %v7922 = vtanh.pop %v7710
    %v7923 = vtanh.pop %v7711
    %v7924 = vxor.u32 %v7712, 2147483648
    %v7925 = vxor.u32 %v7713, 2147483648
    %v7926 = vmul.f32 %v7924, 1.442695
    %v7927 = vpow.pop %v7926
    %v7928 = vmul.f32 %v7925, 1.442695
    %v7929 = vpow.pop %v7928
    %v7930 = vadd.f32 %v7927, 1.0
    %v7931 = vadd.f32 %v7929, 1.0
    %v7932 = vrcp.pop %v7930
    %v7933 = vmul.f32 %v7930, %v7932
    %v7934 = vsub.f32 1.0, %v7933
    %v7935 = vmul.f32 %v7932, %v7934
    %v7936 = vadd.f32 %v7932, %v7935
    %vm7937 = vweird.f32 %v7930
    %vm7938 = vweird.f32 %v7932
    %vm7939 = vmor %vm7937, %vm7938
    %v7940 = vsel %vm7939, %v7932, %v7936
    %v7941 = vand.u32 2147483647, %v7930
    %vm7942 = vcmp.eq.f32.partialorder %v7941, 8.507059e+37
    %v7943 = vand.u32 %v7930, 2147483648
    %v7944 = vor.u32 1.1754944e-38, %v7943
    %v7945 = vsel %vm7942, %v7944, %v7940
    %v7946 = vmul.f32 1.0, %v7945
    %v7947 = vrcp.pop %v7931
    %v7948 = vmul.f32 %v7931, %v7947
    %v7949 = vsub.f32 1.0, %v7948
    %v7950 = vmul.f32 %v7947, %v7949
    %v7951 = vadd.f32 %v7947, %v7950
    %vm7952 = vweird.f32 %v7931
    %vm7953 = vweird.f32 %v7947
    %vm7954 = vmor %vm7952, %vm7953
    %v7955 = vsel %vm7954, %v7947, %v7951
    %v7956 = vand.u32 2147483647, %v7931
    %vm7957 = vcmp.eq.f32.partialorder %v7956, 8.507059e+37
    %v7958 = vand.u32 %v7931, 2147483648
    %v7959 = vor.u32 1.1754944e-38, %v7958
    %v7960 = vsel %vm7957, %v7959, %v7955
    %v7961 = vmul.f32 1.0, %v7960
    %v7964 = vrot.slane %v6976, 2
    %v7965 = vrot.slane %v6977, 2
    %v7968 = vmul.f32 %v7906, %v7964
    %v7969 = vmul.f32 %v7921, %v7965
    %v7970 = vmul.f32 %v7868, %v7922
    %v7971 = vmul.f32 %v7883, %v7923
    %v7972 = vadd.f32 %v7968, %v7970
    %v7973 = vadd.f32 %v7969, %v7971
    %v7974 = vtanh.pop %v7972
    %v7975 = vtanh.pop %v7973
    %v7976 = vmul.f32 %v7946, %v7974
    %v7977 = vmul.f32 %v7961, %v7975
    %v7978 = vld [vmem:[#allocation2 + $0x80] sm:$0xc0]
    %v7979 = vld [vmem:[#allocation2 + $0x88] sm:$0xc0]
    %v7980 = vld [vmem:[#allocation2 + $0x90] sm:$0xc0]
    %v7981 = vld [vmem:[#allocation2 + $0x98] sm:$0xc0]
    %v7982 = vld [vmem:[#allocation2 + $0xa0] sm:$0xc0]
    %v7983 = vld [vmem:[#allocation2 + $0xa8] sm:$0xc0]
    %v7984 = vld [vmem:[#allocation2 + $0xb0] sm:$0xc0]
    %v7985 = vld [vmem:[#allocation2 + $0xb8] sm:$0xc0]
    %v7986 = vld [vmem:[#allocation2 + $0x40] sm:$0x3]
    %v7987 = vld [vmem:[#allocation2 + $0x48] sm:$0x3]
    %v7988 = vld [vmem:[#allocation2 + $0x50] sm:$0x3]
    %v7989 = vld [vmem:[#allocation2 + $0x58] sm:$0x3]
    %v7990 = vld [vmem:[#allocation2 + $0x60] sm:$0x3]
    %v7991 = vld [vmem:[#allocation2 + $0x68] sm:$0x3]
    %v7992 = vld [vmem:[#allocation2 + $0x70] sm:$0x3]
    %v7993 = vld [vmem:[#allocation2 + $0x78] sm:$0x3]
    %v7996 = vrot.slane %v7844, 4
    %v7997 = vrot.slane %v7845, 4
    %8000 = vmatpush.msra.mxu0 %v727
    %8001 = vmatpush.msra.mxu0 %v719
    %8002 = vmatpush.msra.mxu0 %v711
    %8003 = vmatpush.msra.mxu0 %v703
    %8004 = vmatpush.msra.mxu0 %v695
    %8005 = vmatpush.msra.mxu0 %v687
    %8006 = vmatpush.msra.mxu0 %v679
    %8007 = vmatpush.msra.mxu0 %v671
    %8008 = vmatpush.msra.mxu0 %v663
    %8009 = vmatpush.msra.mxu0 %v655
    %8010 = vmatpush.msra.mxu0 %v647
    %8011 = vmatpush.msra.mxu0 %v639
    %8012 = vmatpush.msra.mxu0 %v631
    %8013 = vmatpush.msra.mxu0 %v623
    %8014 = vmatpush.msra.mxu0 %v615
    %8015 = vmatpush.msra.mxu0 %v607
    %8016 = vmatmul.f32.gmra.mxu0 %v7996
    %v8017 = vpop.f32.mrf.mxu0
    %v8018 = vadd.f32 0.0, %v8017
    %8019 = vdwg.mxu0
    %8020 = vmatpush.msra.mxu0 %v855
    %8021 = vmatpush.msra.mxu0 %v847
    %8022 = vmatpush.msra.mxu0 %v839
    %8023 = vmatpush.msra.mxu0 %v831
    %8024 = vmatpush.msra.mxu0 %v823
    %8025 = vmatpush.msra.mxu0 %v815
    %8026 = vmatpush.msra.mxu0 %v807
    %8027 = vmatpush.msra.mxu0 %v799
    %8028 = vmatpush.msra.mxu0 %v791
    %8029 = vmatpush.msra.mxu0 %v783
    %8030 = vmatpush.msra.mxu0 %v775
    %8031 = vmatpush.msra.mxu0 %v767
    %8032 = vmatpush.msra.mxu0 %v759
    %8033 = vmatpush.msra.mxu0 %v751
    %8034 = vmatpush.msra.mxu0 %v743
    %8035 = vmatpush.msra.mxu0 %v735
    %8036 = vmatmul.f32.gmra.mxu0 %v7997
    %v8037 = vpop.f32.mrf.mxu0
    %v8038 = vadd.f32 %v8018, %v8037
    %8039 = vdwg.mxu0
    %8040 = vmatpush.msra.mxu0 %v728
    %8041 = vmatpush.msra.mxu0 %v720
    %8042 = vmatpush.msra.mxu0 %v712
    %8043 = vmatpush.msra.mxu0 %v704
    %8044 = vmatpush.msra.mxu0 %v696
    %8045 = vmatpush.msra.mxu0 %v688
    %8046 = vmatpush.msra.mxu0 %v680
    %8047 = vmatpush.msra.mxu0 %v672
    %8048 = vmatpush.msra.mxu0 %v664
    %8049 = vmatpush.msra.mxu0 %v656
    %8050 = vmatpush.msra.mxu0 %v648
    %8051 = vmatpush.msra.mxu0 %v640
    %8052 = vmatpush.msra.mxu0 %v632
    %8053 = vmatpush.msra.mxu0 %v624
    %8054 = vmatpush.msra.mxu0 %v616
    %8055 = vmatpush.msra.mxu0 %v608
    %8056 = vmatmul.f32.gmra.mxu0 %v7996
    %v8057 = vpop.f32.mrf.mxu0
    %v8058 = vadd.f32 0.0, %v8057
    %8059 = vdwg.mxu0
    %8060 = vmatpush.msra.mxu0 %v856
    %8061 = vmatpush.msra.mxu0 %v848
    %8062 = vmatpush.msra.mxu0 %v840
    %8063 = vmatpush.msra.mxu0 %v832
    %8064 = vmatpush.msra.mxu0 %v824
    %8065 = vmatpush.msra.mxu0 %v816
    %8066 = vmatpush.msra.mxu0 %v808
    %8067 = vmatpush.msra.mxu0 %v800
    %8068 = vmatpush.msra.mxu0 %v792
    %8069 = vmatpush.msra.mxu0 %v784
    %8070 = vmatpush.msra.mxu0 %v776
    %8071 = vmatpush.msra.mxu0 %v768
    %8072 = vmatpush.msra.mxu0 %v760
    %8073 = vmatpush.msra.mxu0 %v752
    %8074 = vmatpush.msra.mxu0 %v744
    %8075 = vmatpush.msra.mxu0 %v736
    %8076 = vmatmul.f32.gmra.mxu0 %v7997
    %v8077 = vpop.f32.mrf.mxu0
    %v8078 = vadd.f32 %v8058, %v8077
    %8079 = vdwg.mxu0
    %8080 = vmatpush.msra.mxu0 %v729
    %8081 = vmatpush.msra.mxu0 %v721
    %8082 = vmatpush.msra.mxu0 %v713
    %8083 = vmatpush.msra.mxu0 %v705
    %8084 = vmatpush.msra.mxu0 %v697
    %8085 = vmatpush.msra.mxu0 %v689
    %8086 = vmatpush.msra.mxu0 %v681
    %8087 = vmatpush.msra.mxu0 %v673
    %8088 = vmatpush.msra.mxu0 %v665
    %8089 = vmatpush.msra.mxu0 %v657
    %8090 = vmatpush.msra.mxu0 %v649
    %8091 = vmatpush.msra.mxu0 %v641
    %8092 = vmatpush.msra.mxu0 %v633
    %8093 = vmatpush.msra.mxu0 %v625
    %8094 = vmatpush.msra.mxu0 %v617
    %8095 = vmatpush.msra.mxu0 %v609
    %8096 = vmatmul.f32.gmra.mxu0 %v7996
    %v8097 = vpop.f32.mrf.mxu0
    %v8098 = vadd.f32 0.0, %v8097
    %8099 = vdwg.mxu0
    %8100 = vmatpush.msra.mxu0 %v857
    %8101 = vmatpush.msra.mxu0 %v849
    %8102 = vmatpush.msra.mxu0 %v841
    %8103 = vmatpush.msra.mxu0 %v833
    %8104 = vmatpush.msra.mxu0 %v825
    %8105 = vmatpush.msra.mxu0 %v817
    %8106 = vmatpush.msra.mxu0 %v809
    %8107 = vmatpush.msra.mxu0 %v801
    %8108 = vmatpush.msra.mxu0 %v793
    %8109 = vmatpush.msra.mxu0 %v785
    %8110 = vmatpush.msra.mxu0 %v777
    %8111 = vmatpush.msra.mxu0 %v769
    %8112 = vmatpush.msra.mxu0 %v761
    %8113 = vmatpush.msra.mxu0 %v753
    %8114 = vmatpush.msra.mxu0 %v745
    %8115 = vmatpush.msra.mxu0 %v737
    %8116 = vmatmul.f32.gmra.mxu0 %v7997
    %v8117 = vpop.f32.mrf.mxu0
    %v8118 = vadd.f32 %v8098, %v8117
    %8119 = vdwg.mxu0
    %8120 = vmatpush.msra.mxu0 %v730
    %8121 = vmatpush.msra.mxu0 %v722
    %8122 = vmatpush.msra.mxu0 %v714
    %8123 = vmatpush.msra.mxu0 %v706
    %8124 = vmatpush.msra.mxu0 %v698
    %8125 = vmatpush.msra.mxu0 %v690
    %8126 = vmatpush.msra.mxu0 %v682
    %8127 = vmatpush.msra.mxu0 %v674
    %8128 = vmatpush.msra.mxu0 %v666
    %8129 = vmatpush.msra.mxu0 %v658
    %8130 = vmatpush.msra.mxu0 %v650
    %8131 = vmatpush.msra.mxu0 %v642
    %8132 = vmatpush.msra.mxu0 %v634
    %8133 = vmatpush.msra.mxu0 %v626
    %8134 = vmatpush.msra.mxu0 %v618
    %8135 = vmatpush.msra.mxu0 %v610
    %8136 = vmatmul.f32.gmra.mxu0 %v7996
    %v8137 = vpop.f32.mrf.mxu0
    %v8138 = vadd.f32 0.0, %v8137
    %8139 = vdwg.mxu0
    %8140 = vmatpush.msra.mxu0 %v858
    %8141 = vmatpush.msra.mxu0 %v850
    %8142 = vmatpush.msra.mxu0 %v842
    %8143 = vmatpush.msra.mxu0 %v834
    %8144 = vmatpush.msra.mxu0 %v826
    %8145 = vmatpush.msra.mxu0 %v818
    %8146 = vmatpush.msra.mxu0 %v810
    %8147 = vmatpush.msra.mxu0 %v802
    %8148 = vmatpush.msra.mxu0 %v794
    %8149 = vmatpush.msra.mxu0 %v786
    %8150 = vmatpush.msra.mxu0 %v778
    %8151 = vmatpush.msra.mxu0 %v770
    %8152 = vmatpush.msra.mxu0 %v762
    %8153 = vmatpush.msra.mxu0 %v754
    %8154 = vmatpush.msra.mxu0 %v746
    %8155 = vmatpush.msra.mxu0 %v738
    %8156 = vmatmul.f32.gmra.mxu0 %v7997
    %v8157 = vpop.f32.mrf.mxu0
    %v8158 = vadd.f32 %v8138, %v8157
    %8159 = vdwg.mxu0
    %8160 = vmatpush.msra.mxu0 %v731
    %8161 = vmatpush.msra.mxu0 %v723
    %8162 = vmatpush.msra.mxu0 %v715
    %8163 = vmatpush.msra.mxu0 %v707
    %8164 = vmatpush.msra.mxu0 %v699
    %8165 = vmatpush.msra.mxu0 %v691
    %8166 = vmatpush.msra.mxu0 %v683
    %8167 = vmatpush.msra.mxu0 %v675
    %8168 = vmatpush.msra.mxu0 %v667
    %8169 = vmatpush.msra.mxu0 %v659
    %8170 = vmatpush.msra.mxu0 %v651
    %8171 = vmatpush.msra.mxu0 %v643
    %8172 = vmatpush.msra.mxu0 %v635
    %8173 = vmatpush.msra.mxu0 %v627
    %8174 = vmatpush.msra.mxu0 %v619
    %8175 = vmatpush.msra.mxu0 %v611
    %8176 = vmatmul.f32.gmra.mxu0 %v7996
    %v8177 = vpop.f32.mrf.mxu0
    %v8178 = vadd.f32 0.0, %v8177
    %8179 = vdwg.mxu0
    %8180 = vmatpush.msra.mxu0 %v859
    %8181 = vmatpush.msra.mxu0 %v851
    %8182 = vmatpush.msra.mxu0 %v843
    %8183 = vmatpush.msra.mxu0 %v835
    %8184 = vmatpush.msra.mxu0 %v827
    %8185 = vmatpush.msra.mxu0 %v819
    %8186 = vmatpush.msra.mxu0 %v811
    %8187 = vmatpush.msra.mxu0 %v803
    %8188 = vmatpush.msra.mxu0 %v795
    %8189 = vmatpush.msra.mxu0 %v787
    %8190 = vmatpush.msra.mxu0 %v779
    %8191 = vmatpush.msra.mxu0 %v771
    %8192 = vmatpush.msra.mxu0 %v763
    %8193 = vmatpush.msra.mxu0 %v755
    %8194 = vmatpush.msra.mxu0 %v747
    %8195 = vmatpush.msra.mxu0 %v739
    %8196 = vmatmul.f32.gmra.mxu0 %v7997
    %v8197 = vpop.f32.mrf.mxu0
    %v8198 = vadd.f32 %v8178, %v8197
    %8199 = vdwg.mxu0
    %8200 = vmatpush.msra.mxu0 %v732
    %8201 = vmatpush.msra.mxu0 %v724
    %8202 = vmatpush.msra.mxu0 %v716
    %8203 = vmatpush.msra.mxu0 %v708
    %8204 = vmatpush.msra.mxu0 %v700
    %8205 = vmatpush.msra.mxu0 %v692
    %8206 = vmatpush.msra.mxu0 %v684
    %8207 = vmatpush.msra.mxu0 %v676
    %8208 = vmatpush.msra.mxu0 %v668
    %8209 = vmatpush.msra.mxu0 %v660
    %8210 = vmatpush.msra.mxu0 %v652
    %8211 = vmatpush.msra.mxu0 %v644
    %8212 = vmatpush.msra.mxu0 %v636
    %8213 = vmatpush.msra.mxu0 %v628
    %8214 = vmatpush.msra.mxu0 %v620
    %8215 = vmatpush.msra.mxu0 %v612
    %8216 = vmatmul.f32.gmra.mxu0 %v7996
    %v8217 = vpop.f32.mrf.mxu0
    %v8218 = vadd.f32 0.0, %v8217
    %8219 = vdwg.mxu0
    %8220 = vmatpush.msra.mxu0 %v860
    %8221 = vmatpush.msra.mxu0 %v852
    %8222 = vmatpush.msra.mxu0 %v844
    %8223 = vmatpush.msra.mxu0 %v836
    %8224 = vmatpush.msra.mxu0 %v828
    %8225 = vmatpush.msra.mxu0 %v820
    %8226 = vmatpush.msra.mxu0 %v812
    %8227 = vmatpush.msra.mxu0 %v804
    %8228 = vmatpush.msra.mxu0 %v796
    %8229 = vmatpush.msra.mxu0 %v788
    %8230 = vmatpush.msra.mxu0 %v780
    %8231 = vmatpush.msra.mxu0 %v772
    %8232 = vmatpush.msra.mxu0 %v764
    %8233 = vmatpush.msra.mxu0 %v756
    %8234 = vmatpush.msra.mxu0 %v748
    %8235 = vmatpush.msra.mxu0 %v740
    %8236 = vmatmul.f32.gmra.mxu0 %v7997
    %v8237 = vpop.f32.mrf.mxu0
    %v8238 = vadd.f32 %v8218, %v8237
    %8239 = vdwg.mxu0
    %8240 = vmatpush.msra.mxu0 %v733
    %8241 = vmatpush.msra.mxu0 %v725
    %8242 = vmatpush.msra.mxu0 %v717
    %8243 = vmatpush.msra.mxu0 %v709
    %8244 = vmatpush.msra.mxu0 %v701
    %8245 = vmatpush.msra.mxu0 %v693
    %8246 = vmatpush.msra.mxu0 %v685
    %8247 = vmatpush.msra.mxu0 %v677
    %8248 = vmatpush.msra.mxu0 %v669
    %8249 = vmatpush.msra.mxu0 %v661
    %8250 = vmatpush.msra.mxu0 %v653
    %8251 = vmatpush.msra.mxu0 %v645
    %8252 = vmatpush.msra.mxu0 %v637
    %8253 = vmatpush.msra.mxu0 %v629
    %8254 = vmatpush.msra.mxu0 %v621
    %8255 = vmatpush.msra.mxu0 %v613
    %8256 = vmatmul.f32.gmra.mxu0 %v7996
    %v8257 = vpop.f32.mrf.mxu0
    %v8258 = vadd.f32 0.0, %v8257
    %8259 = vdwg.mxu0
    %8260 = vmatpush.msra.mxu0 %v861
    %8261 = vmatpush.msra.mxu0 %v853
    %8262 = vmatpush.msra.mxu0 %v845
    %8263 = vmatpush.msra.mxu0 %v837
    %8264 = vmatpush.msra.mxu0 %v829
    %8265 = vmatpush.msra.mxu0 %v821
    %8266 = vmatpush.msra.mxu0 %v813
    %8267 = vmatpush.msra.mxu0 %v805
    %8268 = vmatpush.msra.mxu0 %v797
    %8269 = vmatpush.msra.mxu0 %v789
    %8270 = vmatpush.msra.mxu0 %v781
    %8271 = vmatpush.msra.mxu0 %v773
    %8272 = vmatpush.msra.mxu0 %v765
    %8273 = vmatpush.msra.mxu0 %v757
    %8274 = vmatpush.msra.mxu0 %v749
    %8275 = vmatpush.msra.mxu0 %v741
    %8276 = vmatmul.f32.gmra.mxu0 %v7997
    %v8277 = vpop.f32.mrf.mxu0
    %v8278 = vadd.f32 %v8258, %v8277
    %8279 = vdwg.mxu0
    %8280 = vmatpush.msra.mxu0 %v734
    %8281 = vmatpush.msra.mxu0 %v726
    %8282 = vmatpush.msra.mxu0 %v718
    %8283 = vmatpush.msra.mxu0 %v710
    %8284 = vmatpush.msra.mxu0 %v702
    %8285 = vmatpush.msra.mxu0 %v694
    %8286 = vmatpush.msra.mxu0 %v686
    %8287 = vmatpush.msra.mxu0 %v678
    %8288 = vmatpush.msra.mxu0 %v670
    %8289 = vmatpush.msra.mxu0 %v662
    %8290 = vmatpush.msra.mxu0 %v654
    %8291 = vmatpush.msra.mxu0 %v646
    %8292 = vmatpush.msra.mxu0 %v638
    %8293 = vmatpush.msra.mxu0 %v630
    %8294 = vmatpush.msra.mxu0 %v622
    %8295 = vmatpush.msra.mxu0 %v614
    %8296 = vmatmul.f32.gmra.mxu0 %v7996
    %v8297 = vpop.f32.mrf.mxu0
    %v8298 = vadd.f32 0.0, %v8297
    %8299 = vdwg.mxu0
    %8300 = vmatpush.msra.mxu0 %v862
    %8301 = vmatpush.msra.mxu0 %v854
    %8302 = vmatpush.msra.mxu0 %v846
    %8303 = vmatpush.msra.mxu0 %v838
    %8304 = vmatpush.msra.mxu0 %v830
    %8305 = vmatpush.msra.mxu0 %v822
    %8306 = vmatpush.msra.mxu0 %v814
    %8307 = vmatpush.msra.mxu0 %v806
    %8308 = vmatpush.msra.mxu0 %v798
    %8309 = vmatpush.msra.mxu0 %v790
    %8310 = vmatpush.msra.mxu0 %v782
    %8311 = vmatpush.msra.mxu0 %v774
    %8312 = vmatpush.msra.mxu0 %v766
    %8313 = vmatpush.msra.mxu0 %v758
    %8314 = vmatpush.msra.mxu0 %v750
    %8315 = vmatpush.msra.mxu0 %v742
    %8316 = vmatmul.f32.gmra.mxu0 %v7997
    %v8317 = vpop.f32.mrf.mxu0
    %v8318 = vadd.f32 %v8298, %v8317
    %8319 = vdwg.mxu0
    %v8328 = vrot.slane %v8038, 2
    %v8329 = vrot.slane %v8078, 2
    %v8330 = vrot.slane %v8118, 2
    %v8331 = vrot.slane %v8158, 2
    %v8332 = vrot.slane %v8198, 2
    %v8333 = vrot.slane %v8238, 2
    %v8334 = vrot.slane %v8278, 2
    %v8335 = vrot.slane %v8318, 2
    %v8344 = vadd.f32 %v7978, %v8328
    %v8345 = vadd.f32 %v7979, %v8329
    %v8346 = vadd.f32 %v7980, %v8330
    %v8347 = vadd.f32 %v7981, %v8331
    %v8348 = vadd.f32 %v7982, %v8332
    %v8349 = vadd.f32 %v7983, %v8333
    %v8350 = vadd.f32 %v7984, %v8334
    %v8351 = vadd.f32 %v7985, %v8335
    %v8354 = vrot.slane %v7976, 2
    %v8355 = vrot.slane %v7977, 2
    %8358 = vmatpush.msra.mxu0 %v984
    %8359 = vmatpush.msra.mxu0 %v976
    %8360 = vmatpush.msra.mxu0 %v968
    %8361 = vmatpush.msra.mxu0 %v960
    %8362 = vmatpush.msra.mxu0 %v952
    %8363 = vmatpush.msra.mxu0 %v944
    %8364 = vmatpush.msra.mxu0 %v936
    %8365 = vmatpush.msra.mxu0 %v928
    %8366 = vmatpush.msra.mxu0 %v920
    %8367 = vmatpush.msra.mxu0 %v912
    %8368 = vmatpush.msra.mxu0 %v904
    %8369 = vmatpush.msra.mxu0 %v896
    %8370 = vmatpush.msra.mxu0 %v888
    %8371 = vmatpush.msra.mxu0 %v880
    %8372 = vmatpush.msra.mxu0 %v872
    %8373 = vmatpush.msra.mxu0 %v864
    %8374 = vmatmul.f32.gmra.mxu0 %v8354
    %v8375 = vpop.f32.mrf.mxu0
    %v8376 = vadd.f32 0.0, %v8375
    %8377 = vdwg.mxu0
    %8378 = vmatpush.msra.mxu0 %v1112
    %8379 = vmatpush.msra.mxu0 %v1104
    %8380 = vmatpush.msra.mxu0 %v1096
    %8381 = vmatpush.msra.mxu0 %v1088
    %8382 = vmatpush.msra.mxu0 %v1080
    %8383 = vmatpush.msra.mxu0 %v1072
    %8384 = vmatpush.msra.mxu0 %v1064
    %8385 = vmatpush.msra.mxu0 %v1056
    %8386 = vmatpush.msra.mxu0 %v1048
    %8387 = vmatpush.msra.mxu0 %v1040
    %8388 = vmatpush.msra.mxu0 %v1032
    %8389 = vmatpush.msra.mxu0 %v1024
    %8390 = vmatpush.msra.mxu0 %v1016
    %8391 = vmatpush.msra.mxu0 %v1008
    %8392 = vmatpush.msra.mxu0 %v1000
    %8393 = vmatpush.msra.mxu0 %v992
    %8394 = vmatmul.f32.gmra.mxu0 %v8355
    %v8395 = vpop.f32.mrf.mxu0
    %v8396 = vadd.f32 %v8376, %v8395
    %8397 = vdwg.mxu0
    %8398 = vmatpush.msra.mxu0 %v985
    %8399 = vmatpush.msra.mxu0 %v977
    %8400 = vmatpush.msra.mxu0 %v969
    %8401 = vmatpush.msra.mxu0 %v961
    %8402 = vmatpush.msra.mxu0 %v953
    %8403 = vmatpush.msra.mxu0 %v945
    %8404 = vmatpush.msra.mxu0 %v937
    %8405 = vmatpush.msra.mxu0 %v929
    %8406 = vmatpush.msra.mxu0 %v921
    %8407 = vmatpush.msra.mxu0 %v913
    %8408 = vmatpush.msra.mxu0 %v905
    %8409 = vmatpush.msra.mxu0 %v897
    %8410 = vmatpush.msra.mxu0 %v889
    %8411 = vmatpush.msra.mxu0 %v881
    %8412 = vmatpush.msra.mxu0 %v873
    %8413 = vmatpush.msra.mxu0 %v865
    %8414 = vmatmul.f32.gmra.mxu0 %v8354
    %v8415 = vpop.f32.mrf.mxu0
    %v8416 = vadd.f32 0.0, %v8415
    %8417 = vdwg.mxu0
    %8418 = vmatpush.msra.mxu0 %v1113
    %8419 = vmatpush.msra.mxu0 %v1105
    %8420 = vmatpush.msra.mxu0 %v1097
    %8421 = vmatpush.msra.mxu0 %v1089
    %8422 = vmatpush.msra.mxu0 %v1081
    %8423 = vmatpush.msra.mxu0 %v1073
    %8424 = vmatpush.msra.mxu0 %v1065
    %8425 = vmatpush.msra.mxu0 %v1057
    %8426 = vmatpush.msra.mxu0 %v1049
    %8427 = vmatpush.msra.mxu0 %v1041
    %8428 = vmatpush.msra.mxu0 %v1033
    %8429 = vmatpush.msra.mxu0 %v1025
    %8430 = vmatpush.msra.mxu0 %v1017
    %8431 = vmatpush.msra.mxu0 %v1009
    %8432 = vmatpush.msra.mxu0 %v1001
    %8433 = vmatpush.msra.mxu0 %v993
    %8434 = vmatmul.f32.gmra.mxu0 %v8355
    %v8435 = vpop.f32.mrf.mxu0
    %v8436 = vadd.f32 %v8416, %v8435
    %8437 = vdwg.mxu0
    %8438 = vmatpush.msra.mxu0 %v986
    %8439 = vmatpush.msra.mxu0 %v978
    %8440 = vmatpush.msra.mxu0 %v970
    %8441 = vmatpush.msra.mxu0 %v962
    %8442 = vmatpush.msra.mxu0 %v954
    %8443 = vmatpush.msra.mxu0 %v946
    %8444 = vmatpush.msra.mxu0 %v938
    %8445 = vmatpush.msra.mxu0 %v930
    %8446 = vmatpush.msra.mxu0 %v922
    %8447 = vmatpush.msra.mxu0 %v914
    %8448 = vmatpush.msra.mxu0 %v906
    %8449 = vmatpush.msra.mxu0 %v898
    %8450 = vmatpush.msra.mxu0 %v890
    %8451 = vmatpush.msra.mxu0 %v882
    %8452 = vmatpush.msra.mxu0 %v874
    %8453 = vmatpush.msra.mxu0 %v866
    %8454 = vmatmul.f32.gmra.mxu0 %v8354
    %v8455 = vpop.f32.mrf.mxu0
    %v8456 = vadd.f32 0.0, %v8455
    %8457 = vdwg.mxu0
    %8458 = vmatpush.msra.mxu0 %v1114
    %8459 = vmatpush.msra.mxu0 %v1106
    %8460 = vmatpush.msra.mxu0 %v1098
    %8461 = vmatpush.msra.mxu0 %v1090
    %8462 = vmatpush.msra.mxu0 %v1082
    %8463 = vmatpush.msra.mxu0 %v1074
    %8464 = vmatpush.msra.mxu0 %v1066
    %8465 = vmatpush.msra.mxu0 %v1058
    %8466 = vmatpush.msra.mxu0 %v1050
    %8467 = vmatpush.msra.mxu0 %v1042
    %8468 = vmatpush.msra.mxu0 %v1034
    %8469 = vmatpush.msra.mxu0 %v1026
    %8470 = vmatpush.msra.mxu0 %v1018
    %8471 = vmatpush.msra.mxu0 %v1010
    %8472 = vmatpush.msra.mxu0 %v1002
    %8473 = vmatpush.msra.mxu0 %v994
    %8474 = vmatmul.f32.gmra.mxu0 %v8355
    %v8475 = vpop.f32.mrf.mxu0
    %v8476 = vadd.f32 %v8456, %v8475
    %8477 = vdwg.mxu0
    %8478 = vmatpush.msra.mxu0 %v987
    %8479 = vmatpush.msra.mxu0 %v979
    %8480 = vmatpush.msra.mxu0 %v971
    %8481 = vmatpush.msra.mxu0 %v963
    %8482 = vmatpush.msra.mxu0 %v955
    %8483 = vmatpush.msra.mxu0 %v947
    %8484 = vmatpush.msra.mxu0 %v939
    %8485 = vmatpush.msra.mxu0 %v931
    %8486 = vmatpush.msra.mxu0 %v923
    %8487 = vmatpush.msra.mxu0 %v915
    %8488 = vmatpush.msra.mxu0 %v907
    %8489 = vmatpush.msra.mxu0 %v899
    %8490 = vmatpush.msra.mxu0 %v891
    %8491 = vmatpush.msra.mxu0 %v883
    %8492 = vmatpush.msra.mxu0 %v875
    %8493 = vmatpush.msra.mxu0 %v867
    %8494 = vmatmul.f32.gmra.mxu0 %v8354
    %v8495 = vpop.f32.mrf.mxu0
    %v8496 = vadd.f32 0.0, %v8495
    %8497 = vdwg.mxu0
    %8498 = vmatpush.msra.mxu0 %v1115
    %8499 = vmatpush.msra.mxu0 %v1107
    %8500 = vmatpush.msra.mxu0 %v1099
    %8501 = vmatpush.msra.mxu0 %v1091
    %8502 = vmatpush.msra.mxu0 %v1083
    %8503 = vmatpush.msra.mxu0 %v1075
    %8504 = vmatpush.msra.mxu0 %v1067
    %8505 = vmatpush.msra.mxu0 %v1059
    %8506 = vmatpush.msra.mxu0 %v1051
    %8507 = vmatpush.msra.mxu0 %v1043
    %8508 = vmatpush.msra.mxu0 %v1035
    %8509 = vmatpush.msra.mxu0 %v1027
    %8510 = vmatpush.msra.mxu0 %v1019
    %8511 = vmatpush.msra.mxu0 %v1011
    %8512 = vmatpush.msra.mxu0 %v1003
    %8513 = vmatpush.msra.mxu0 %v995
    %8514 = vmatmul.f32.gmra.mxu0 %v8355
    %v8515 = vpop.f32.mrf.mxu0
    %v8516 = vadd.f32 %v8496, %v8515
    %8517 = vdwg.mxu0
    %8518 = vmatpush.msra.mxu0 %v988
    %8519 = vmatpush.msra.mxu0 %v980
    %8520 = vmatpush.msra.mxu0 %v972
    %8521 = vmatpush.msra.mxu0 %v964
    %8522 = vmatpush.msra.mxu0 %v956
    %8523 = vmatpush.msra.mxu0 %v948
    %8524 = vmatpush.msra.mxu0 %v940
    %8525 = vmatpush.msra.mxu0 %v932
    %8526 = vmatpush.msra.mxu0 %v924
    %8527 = vmatpush.msra.mxu0 %v916
    %8528 = vmatpush.msra.mxu0 %v908
    %8529 = vmatpush.msra.mxu0 %v900
    %8530 = vmatpush.msra.mxu0 %v892
    %8531 = vmatpush.msra.mxu0 %v884
    %8532 = vmatpush.msra.mxu0 %v876
    %8533 = vmatpush.msra.mxu0 %v868
    %8534 = vmatmul.f32.gmra.mxu0 %v8354
    %v8535 = vpop.f32.mrf.mxu0
    %v8536 = vadd.f32 0.0, %v8535
    %8537 = vdwg.mxu0
    %8538 = vmatpush.msra.mxu0 %v1116
    %8539 = vmatpush.msra.mxu0 %v1108
    %8540 = vmatpush.msra.mxu0 %v1100
    %8541 = vmatpush.msra.mxu0 %v1092
    %8542 = vmatpush.msra.mxu0 %v1084
    %8543 = vmatpush.msra.mxu0 %v1076
    %8544 = vmatpush.msra.mxu0 %v1068
    %8545 = vmatpush.msra.mxu0 %v1060
    %8546 = vmatpush.msra.mxu0 %v1052
    %8547 = vmatpush.msra.mxu0 %v1044
    %8548 = vmatpush.msra.mxu0 %v1036
    %8549 = vmatpush.msra.mxu0 %v1028
    %8550 = vmatpush.msra.mxu0 %v1020
    %8551 = vmatpush.msra.mxu0 %v1012
    %8552 = vmatpush.msra.mxu0 %v1004
    %8553 = vmatpush.msra.mxu0 %v996
    %8554 = vmatmul.f32.gmra.mxu0 %v8355
    %v8555 = vpop.f32.mrf.mxu0
    %v8556 = vadd.f32 %v8536, %v8555
    %8557 = vdwg.mxu0
    %8558 = vmatpush.msra.mxu0 %v989
    %8559 = vmatpush.msra.mxu0 %v981
    %8560 = vmatpush.msra.mxu0 %v973
    %8561 = vmatpush.msra.mxu0 %v965
    %8562 = vmatpush.msra.mxu0 %v957
    %8563 = vmatpush.msra.mxu0 %v949
    %8564 = vmatpush.msra.mxu0 %v941
    %8565 = vmatpush.msra.mxu0 %v933
    %8566 = vmatpush.msra.mxu0 %v925
    %8567 = vmatpush.msra.mxu0 %v917
    %8568 = vmatpush.msra.mxu0 %v909
    %8569 = vmatpush.msra.mxu0 %v901
    %8570 = vmatpush.msra.mxu0 %v893
    %8571 = vmatpush.msra.mxu0 %v885
    %8572 = vmatpush.msra.mxu0 %v877
    %8573 = vmatpush.msra.mxu0 %v869
    %8574 = vmatmul.f32.gmra.mxu0 %v8354
    %v8575 = vpop.f32.mrf.mxu0
    %v8576 = vadd.f32 0.0, %v8575
    %8577 = vdwg.mxu0
    %8578 = vmatpush.msra.mxu0 %v1117
    %8579 = vmatpush.msra.mxu0 %v1109
    %8580 = vmatpush.msra.mxu0 %v1101
    %8581 = vmatpush.msra.mxu0 %v1093
    %8582 = vmatpush.msra.mxu0 %v1085
    %8583 = vmatpush.msra.mxu0 %v1077
    %8584 = vmatpush.msra.mxu0 %v1069
    %8585 = vmatpush.msra.mxu0 %v1061
    %8586 = vmatpush.msra.mxu0 %v1053
    %8587 = vmatpush.msra.mxu0 %v1045
    %8588 = vmatpush.msra.mxu0 %v1037
    %8589 = vmatpush.msra.mxu0 %v1029
    %8590 = vmatpush.msra.mxu0 %v1021
    %8591 = vmatpush.msra.mxu0 %v1013
    %8592 = vmatpush.msra.mxu0 %v1005
    %8593 = vmatpush.msra.mxu0 %v997
    %8594 = vmatmul.f32.gmra.mxu0 %v8355
    %v8595 = vpop.f32.mrf.mxu0
    %v8596 = vadd.f32 %v8576, %v8595
    %8597 = vdwg.mxu0
    %8598 = vmatpush.msra.mxu0 %v990
    %8599 = vmatpush.msra.mxu0 %v982
    %8600 = vmatpush.msra.mxu0 %v974
    %8601 = vmatpush.msra.mxu0 %v966
    %8602 = vmatpush.msra.mxu0 %v958
    %8603 = vmatpush.msra.mxu0 %v950
    %8604 = vmatpush.msra.mxu0 %v942
    %8605 = vmatpush.msra.mxu0 %v934
    %8606 = vmatpush.msra.mxu0 %v926
    %8607 = vmatpush.msra.mxu0 %v918
    %8608 = vmatpush.msra.mxu0 %v910
    %8609 = vmatpush.msra.mxu0 %v902
    %8610 = vmatpush.msra.mxu0 %v894
    %8611 = vmatpush.msra.mxu0 %v886
    %8612 = vmatpush.msra.mxu0 %v878
    %8613 = vmatpush.msra.mxu0 %v870
    %8614 = vmatmul.f32.gmra.mxu0 %v8354
    %v8615 = vpop.f32.mrf.mxu0
    %v8616 = vadd.f32 0.0, %v8615
    %8617 = vdwg.mxu0
    %8618 = vmatpush.msra.mxu0 %v1118
    %8619 = vmatpush.msra.mxu0 %v1110
    %8620 = vmatpush.msra.mxu0 %v1102
    %8621 = vmatpush.msra.mxu0 %v1094
    %8622 = vmatpush.msra.mxu0 %v1086
    %8623 = vmatpush.msra.mxu0 %v1078
    %8624 = vmatpush.msra.mxu0 %v1070
    %8625 = vmatpush.msra.mxu0 %v1062
    %8626 = vmatpush.msra.mxu0 %v1054
    %8627 = vmatpush.msra.mxu0 %v1046
    %8628 = vmatpush.msra.mxu0 %v1038
    %8629 = vmatpush.msra.mxu0 %v1030
    %8630 = vmatpush.msra.mxu0 %v1022
    %8631 = vmatpush.msra.mxu0 %v1014
    %8632 = vmatpush.msra.mxu0 %v1006
    %8633 = vmatpush.msra.mxu0 %v998
    %8634 = vmatmul.f32.gmra.mxu0 %v8355
    %v8635 = vpop.f32.mrf.mxu0
    %v8636 = vadd.f32 %v8616, %v8635
    %8637 = vdwg.mxu0
    %8638 = vmatpush.msra.mxu0 %v991
    %8639 = vmatpush.msra.mxu0 %v983
    %8640 = vmatpush.msra.mxu0 %v975
    %8641 = vmatpush.msra.mxu0 %v967
    %8642 = vmatpush.msra.mxu0 %v959
    %8643 = vmatpush.msra.mxu0 %v951
    %8644 = vmatpush.msra.mxu0 %v943
    %8645 = vmatpush.msra.mxu0 %v935
    %8646 = vmatpush.msra.mxu0 %v927
    %8647 = vmatpush.msra.mxu0 %v919
    %8648 = vmatpush.msra.mxu0 %v911
    %8649 = vmatpush.msra.mxu0 %v903
    %8650 = vmatpush.msra.mxu0 %v895
    %8651 = vmatpush.msra.mxu0 %v887
    %8652 = vmatpush.msra.mxu0 %v879
    %8653 = vmatpush.msra.mxu0 %v871
    %8654 = vmatmul.f32.gmra.mxu0 %v8354
    %v8655 = vpop.f32.mrf.mxu0
    %v8656 = vadd.f32 0.0, %v8655
    %8657 = vdwg.mxu0
    %8658 = vmatpush.msra.mxu0 %v1119
    %8659 = vmatpush.msra.mxu0 %v1111
    %8660 = vmatpush.msra.mxu0 %v1103
    %8661 = vmatpush.msra.mxu0 %v1095
    %8662 = vmatpush.msra.mxu0 %v1087
    %8663 = vmatpush.msra.mxu0 %v1079
    %8664 = vmatpush.msra.mxu0 %v1071
    %8665 = vmatpush.msra.mxu0 %v1063
    %8666 = vmatpush.msra.mxu0 %v1055
    %8667 = vmatpush.msra.mxu0 %v1047
    %8668 = vmatpush.msra.mxu0 %v1039
    %8669 = vmatpush.msra.mxu0 %v1031
    %8670 = vmatpush.msra.mxu0 %v1023
    %8671 = vmatpush.msra.mxu0 %v1015
    %8672 = vmatpush.msra.mxu0 %v1007
    %8673 = vmatpush.msra.mxu0 %v999
    %8674 = vmatmul.f32.gmra.mxu0 %v8355
    %v8675 = vpop.f32.mrf.mxu0
    %v8676 = vadd.f32 %v8656, %v8675
    %8677 = vdwg.mxu0
    %v8678 = vadd.f32 %v7986, %v8396
    %v8679 = vadd.f32 %v7987, %v8436
    %v8680 = vadd.f32 %v7988, %v8476
    %v8681 = vadd.f32 %v7989, %v8516
    %v8682 = vadd.f32 %v7990, %v8556
    %v8683 = vadd.f32 %v7991, %v8596
    %v8684 = vadd.f32 %v7992, %v8636
    %v8685 = vadd.f32 %v7993, %v8676
    %v8686 = vxor.u32 %v8344, 2147483648
    %v8687 = vxor.u32 %v8345, 2147483648
    %v8688 = vmul.f32 %v8686, 1.442695
    %v8689 = vpow.pop %v8688
    %v8690 = vmul.f32 %v8687, 1.442695
    %v8691 = vpow.pop %v8690
    %v8692 = vadd.f32 %v8689, 1.0
    %v8693 = vadd.f32 %v8691, 1.0
    %v8694 = vrcp.pop %v8692
    %v8695 = vmul.f32 %v8692, %v8694
    %v8696 = vsub.f32 1.0, %v8695
    %v8697 = vmul.f32 %v8694, %v8696
    %v8698 = vadd.f32 %v8694, %v8697
    %vm8699 = vweird.f32 %v8692
    %vm8700 = vweird.f32 %v8694
    %vm8701 = vmor %vm8699, %vm8700
    %v8702 = vsel %vm8701, %v8694, %v8698
    %v8703 = vand.u32 2147483647, %v8692
    %vm8704 = vcmp.eq.f32.partialorder %v8703, 8.507059e+37
    %v8705 = vand.u32 %v8692, 2147483648
    %v8706 = vor.u32 1.1754944e-38, %v8705
    %v8707 = vsel %vm8704, %v8706, %v8702
    %v8708 = vmul.f32 1.0, %v8707
    %v8709 = vrcp.pop %v8693
    %v8710 = vmul.f32 %v8693, %v8709
    %v8711 = vsub.f32 1.0, %v8710
    %v8712 = vmul.f32 %v8709, %v8711
    %v8713 = vadd.f32 %v8709, %v8712
    %vm8714 = vweird.f32 %v8693
    %vm8715 = vweird.f32 %v8709
    %vm8716 = vmor %vm8714, %vm8715
    %v8717 = vsel %vm8716, %v8709, %v8713
    %v8718 = vand.u32 2147483647, %v8693
    %vm8719 = vcmp.eq.f32.partialorder %v8718, 8.507059e+37
    %v8720 = vand.u32 %v8693, 2147483648
    %v8721 = vor.u32 1.1754944e-38, %v8720
    %v8722 = vsel %vm8719, %v8721, %v8717
    %v8723 = vmul.f32 1.0, %v8722
    %v8724 = vxor.u32 %v8346, 2147483648
    %v8725 = vxor.u32 %v8347, 2147483648
    %v8726 = vmul.f32 %v8724, 1.442695
    %v8727 = vpow.pop %v8726
    %v8728 = vmul.f32 %v8725, 1.442695
    %v8729 = vpow.pop %v8728
    %v8730 = vadd.f32 %v8727, 1.0
    %v8731 = vadd.f32 %v8729, 1.0
    %v8732 = vrcp.pop %v8730
    %v8733 = vmul.f32 %v8730, %v8732
    %v8734 = vsub.f32 1.0, %v8733
    %v8735 = vmul.f32 %v8732, %v8734
    %v8736 = vadd.f32 %v8732, %v8735
    %vm8737 = vweird.f32 %v8730
    %vm8738 = vweird.f32 %v8732
    %vm8739 = vmor %vm8737, %vm8738
    %v8740 = vsel %vm8739, %v8732, %v8736
    %v8741 = vand.u32 2147483647, %v8730
    %vm8742 = vcmp.eq.f32.partialorder %v8741, 8.507059e+37
    %v8743 = vand.u32 %v8730, 2147483648
    %v8744 = vor.u32 1.1754944e-38, %v8743
    %v8745 = vsel %vm8742, %v8744, %v8740
    %v8746 = vmul.f32 1.0, %v8745
    %v8747 = vrcp.pop %v8731
    %v8748 = vmul.f32 %v8731, %v8747
    %v8749 = vsub.f32 1.0, %v8748
    %v8750 = vmul.f32 %v8747, %v8749
    %v8751 = vadd.f32 %v8747, %v8750
    %vm8752 = vweird.f32 %v8731
    %vm8753 = vweird.f32 %v8747
    %vm8754 = vmor %vm8752, %vm8753
    %v8755 = vsel %vm8754, %v8747, %v8751
    %v8756 = vand.u32 2147483647, %v8731
    %vm8757 = vcmp.eq.f32.partialorder %v8756, 8.507059e+37
    %v8758 = vand.u32 %v8731, 2147483648
    %v8759 = vor.u32 1.1754944e-38, %v8758
    %v8760 = vsel %vm8757, %v8759, %v8755
    %v8761 = vmul.f32 1.0, %v8760
    %v8762 = vtanh.pop %v8348
    %v8763 = vtanh.pop %v8349
    %v8764 = vxor.u32 %v8350, 2147483648
    %v8765 = vxor.u32 %v8351, 2147483648
    %v8766 = vmul.f32 %v8764, 1.442695
    %v8767 = vpow.pop %v8766
    %v8768 = vmul.f32 %v8765, 1.442695
    %v8769 = vpow.pop %v8768
    %v8770 = vadd.f32 %v8767, 1.0
    %v8771 = vadd.f32 %v8769, 1.0
    %v8772 = vrcp.pop %v8770
    %v8773 = vmul.f32 %v8770, %v8772
    %v8774 = vsub.f32 1.0, %v8773
    %v8775 = vmul.f32 %v8772, %v8774
    %v8776 = vadd.f32 %v8772, %v8775
    %vm8777 = vweird.f32 %v8770
    %vm8778 = vweird.f32 %v8772
    %vm8779 = vmor %vm8777, %vm8778
    %v8780 = vsel %vm8779, %v8772, %v8776
    %v8781 = vand.u32 2147483647, %v8770
    %vm8782 = vcmp.eq.f32.partialorder %v8781, 8.507059e+37
    %v8783 = vand.u32 %v8770, 2147483648
    %v8784 = vor.u32 1.1754944e-38, %v8783
    %v8785 = vsel %vm8782, %v8784, %v8780
    %v8786 = vmul.f32 1.0, %v8785
    %v8787 = vrcp.pop %v8771
    %v8788 = vmul.f32 %v8771, %v8787
    %v8789 = vsub.f32 1.0, %v8788
    %v8790 = vmul.f32 %v8787, %v8789
    %v8791 = vadd.f32 %v8787, %v8790
    %vm8792 = vweird.f32 %v8771
    %vm8793 = vweird.f32 %v8787
    %vm8794 = vmor %vm8792, %vm8793
    %v8795 = vsel %vm8794, %v8787, %v8791
    %v8796 = vand.u32 2147483647, %v8771
    %vm8797 = vcmp.eq.f32.partialorder %v8796, 8.507059e+37
    %v8798 = vand.u32 %v8771, 2147483648
    %v8799 = vor.u32 1.1754944e-38, %v8798
    %v8800 = vsel %vm8797, %v8799, %v8795
    %v8801 = vmul.f32 1.0, %v8800
    %v8804 = vrot.slane %v7840, 6
    %v8805 = vrot.slane %v7841, 6
    %v8808 = vmul.f32 %v8746, %v8804
    %v8809 = vmul.f32 %v8761, %v8805
    %v8810 = vmul.f32 %v8708, %v8762
    %v8811 = vmul.f32 %v8723, %v8763
    %v8812 = vadd.f32 %v8808, %v8810
    %v8813 = vadd.f32 %v8809, %v8811
    %v8814 = vtanh.pop %v8812
    %v8815 = vtanh.pop %v8813
    %v8816 = vmul.f32 %v8786, %v8814
    %v8817 = vmul.f32 %v8801, %v8815
    %v8818 = vxor.u32 %v8678, 2147483648
    %v8819 = vxor.u32 %v8679, 2147483648
    %v8820 = vmul.f32 %v8818, 1.442695
    %v8821 = vpow.pop %v8820
    %v8822 = vmul.f32 %v8819, 1.442695
    %v8823 = vpow.pop %v8822
    %v8824 = vadd.f32 %v8821, 1.0
    %v8825 = vadd.f32 %v8823, 1.0
    %v8826 = vrcp.pop %v8824
    %v8827 = vmul.f32 %v8824, %v8826
    %v8828 = vsub.f32 1.0, %v8827
    %v8829 = vmul.f32 %v8826, %v8828
    %v8830 = vadd.f32 %v8826, %v8829
    %vm8831 = vweird.f32 %v8824
    %vm8832 = vweird.f32 %v8826
    %vm8833 = vmor %vm8831, %vm8832
    %v8834 = vsel %vm8833, %v8826, %v8830
    %v8835 = vand.u32 2147483647, %v8824
    %vm8836 = vcmp.eq.f32.partialorder %v8835, 8.507059e+37
    %v8837 = vand.u32 %v8824, 2147483648
    %v8838 = vor.u32 1.1754944e-38, %v8837
    %v8839 = vsel %vm8836, %v8838, %v8834
    %v8840 = vmul.f32 1.0, %v8839
    %v8841 = vrcp.pop %v8825
    %v8842 = vmul.f32 %v8825, %v8841
    %v8843 = vsub.f32 1.0, %v8842
    %v8844 = vmul.f32 %v8841, %v8843
    %v8845 = vadd.f32 %v8841, %v8844
    %vm8846 = vweird.f32 %v8825
    %vm8847 = vweird.f32 %v8841
    %vm8848 = vmor %vm8846, %vm8847
    %v8849 = vsel %vm8848, %v8841, %v8845
    %v8850 = vand.u32 2147483647, %v8825
    %vm8851 = vcmp.eq.f32.partialorder %v8850, 8.507059e+37
    %v8852 = vand.u32 %v8825, 2147483648
    %v8853 = vor.u32 1.1754944e-38, %v8852
    %v8854 = vsel %vm8851, %v8853, %v8849
    %v8855 = vmul.f32 1.0, %v8854
    %v8856 = vxor.u32 %v8680, 2147483648
    %v8857 = vxor.u32 %v8681, 2147483648
    %v8858 = vmul.f32 %v8856, 1.442695
    %v8859 = vpow.pop %v8858
    %v8860 = vmul.f32 %v8857, 1.442695
    %v8861 = vpow.pop %v8860
    %v8862 = vadd.f32 %v8859, 1.0
    %v8863 = vadd.f32 %v8861, 1.0
    %v8864 = vrcp.pop %v8862
    %v8865 = vmul.f32 %v8862, %v8864
    %v8866 = vsub.f32 1.0, %v8865
    %v8867 = vmul.f32 %v8864, %v8866
    %v8868 = vadd.f32 %v8864, %v8867
    %vm8869 = vweird.f32 %v8862
    %vm8870 = vweird.f32 %v8864
    %vm8871 = vmor %vm8869, %vm8870
    %v8872 = vsel %vm8871, %v8864, %v8868
    %v8873 = vand.u32 2147483647, %v8862
    %vm8874 = vcmp.eq.f32.partialorder %v8873, 8.507059e+37
    %v8875 = vand.u32 %v8862, 2147483648
    %v8876 = vor.u32 1.1754944e-38, %v8875
    %v8877 = vsel %vm8874, %v8876, %v8872
    %v8878 = vmul.f32 1.0, %v8877
    %v8879 = vrcp.pop %v8863
    %v8880 = vmul.f32 %v8863, %v8879
    %v8881 = vsub.f32 1.0, %v8880
    %v8882 = vmul.f32 %v8879, %v8881
    %v8883 = vadd.f32 %v8879, %v8882
    %vm8884 = vweird.f32 %v8863
    %vm8885 = vweird.f32 %v8879
    %vm8886 = vmor %vm8884, %vm8885
    %v8887 = vsel %vm8886, %v8879, %v8883
    %v8888 = vand.u32 2147483647, %v8863
    %vm8889 = vcmp.eq.f32.partialorder %v8888, 8.507059e+37
    %v8890 = vand.u32 %v8863, 2147483648
    %v8891 = vor.u32 1.1754944e-38, %v8890
    %v8892 = vsel %vm8889, %v8891, %v8887
    %v8893 = vmul.f32 1.0, %v8892
    %v8894 = vtanh.pop %v8682
    %v8895 = vtanh.pop %v8683
    %v8896 = vxor.u32 %v8684, 2147483648
    %v8897 = vxor.u32 %v8685, 2147483648
    %v8898 = vmul.f32 %v8896, 1.442695
    %v8899 = vpow.pop %v8898
    %v8900 = vmul.f32 %v8897, 1.442695
    %v8901 = vpow.pop %v8900
    %v8902 = vadd.f32 %v8899, 1.0
    %v8903 = vadd.f32 %v8901, 1.0
    %v8904 = vrcp.pop %v8902
    %v8905 = vmul.f32 %v8902, %v8904
    %v8906 = vsub.f32 1.0, %v8905
    %v8907 = vmul.f32 %v8904, %v8906
    %v8908 = vadd.f32 %v8904, %v8907
    %vm8909 = vweird.f32 %v8902
    %vm8910 = vweird.f32 %v8904
    %vm8911 = vmor %vm8909, %vm8910
    %v8912 = vsel %vm8911, %v8904, %v8908
    %v8913 = vand.u32 2147483647, %v8902
    %vm8914 = vcmp.eq.f32.partialorder %v8913, 8.507059e+37
    %v8915 = vand.u32 %v8902, 2147483648
    %v8916 = vor.u32 1.1754944e-38, %v8915
    %v8917 = vsel %vm8914, %v8916, %v8912
    %v8918 = vmul.f32 1.0, %v8917
    %v8919 = vrcp.pop %v8903
    %v8920 = vmul.f32 %v8903, %v8919
    %v8921 = vsub.f32 1.0, %v8920
    %v8922 = vmul.f32 %v8919, %v8921
    %v8923 = vadd.f32 %v8919, %v8922
    %vm8924 = vweird.f32 %v8903
    %vm8925 = vweird.f32 %v8919
    %vm8926 = vmor %vm8924, %vm8925
    %v8927 = vsel %vm8926, %v8919, %v8923
    %v8928 = vand.u32 2147483647, %v8903
    %vm8929 = vcmp.eq.f32.partialorder %v8928, 8.507059e+37
    %v8930 = vand.u32 %v8903, 2147483648
    %v8931 = vor.u32 1.1754944e-38, %v8930
    %v8932 = vsel %vm8929, %v8931, %v8927
    %v8933 = vmul.f32 1.0, %v8932
    %v8936 = vrot.slane %v7972, 2
    %v8937 = vrot.slane %v7973, 2
    %v8940 = vmul.f32 %v8878, %v8936
    %v8941 = vmul.f32 %v8893, %v8937
    %v8942 = vmul.f32 %v8840, %v8894
    %v8943 = vmul.f32 %v8855, %v8895
    %v8944 = vadd.f32 %v8940, %v8942
    %v8945 = vadd.f32 %v8941, %v8943
    %v8946 = vtanh.pop %v8944
    %v8947 = vtanh.pop %v8945
    %v8948 = vmul.f32 %v8918, %v8946
    %v8949 = vmul.f32 %v8933, %v8947
    %v8950 = vld [vmem:[%s4] sm:$0xff]
    %v8951 = vld [vmem:[%s4 + $0x8] sm:$0xff]
    %v8952 = vld [vmem:[%s4 + $0x10] sm:$0xff]
    %v8953 = vld [vmem:[%s4 + $0x18] sm:$0xff]
    %v8954 = vld [vmem:[%s4 + $0x20] sm:$0xff]
    %v8955 = vld [vmem:[%s4 + $0x28] sm:$0xff]
    %v8956 = vld [vmem:[%s4 + $0x30] sm:$0xff]
    %v8957 = vld [vmem:[%s4 + $0x38] sm:$0xff]
    %v8958 = vld [vmem:[%s4 + $0x40] sm:$0xff]
    %v8959 = vld [vmem:[%s4 + $0x48] sm:$0xff]
    %v8960 = vld [vmem:[%s4 + $0x50] sm:$0xff]
    %v8961 = vld [vmem:[%s4 + $0x58] sm:$0xff]
    %v8962 = vld [vmem:[%s4 + $0x60] sm:$0xff]
    %v8963 = vld [vmem:[%s4 + $0x68] sm:$0xff]
    %v8964 = vld [vmem:[%s4 + $0x70] sm:$0xff]
    %v8965 = vld [vmem:[%s4 + $0x78] sm:$0xff]
    %v8966 = vld [vmem:[%s4 + $0x80] sm:$0xff]
    %v8967 = vld [vmem:[%s4 + $0x88] sm:$0xff]
    %v8968 = vld [vmem:[%s4 + $0x90] sm:$0xff]
    %v8969 = vld [vmem:[%s4 + $0x98] sm:$0xff]
    %v8970 = vld [vmem:[%s4 + $0xa0] sm:$0xff]
    %v8971 = vld [vmem:[%s4 + $0xa8] sm:$0xff]
    %v8972 = vld [vmem:[%s4 + $0xb0] sm:$0xff]
    %v8973 = vld [vmem:[%s4 + $0xb8] sm:$0xff]
    %v8974 = vld [vmem:[%s4 + $0xc0] sm:$0xff]
    %v8975 = vld [vmem:[%s4 + $0xc8] sm:$0xff]
    %v8976 = vld [vmem:[%s4 + $0xd0] sm:$0xff]
    %v8977 = vld [vmem:[%s4 + $0xd8] sm:$0xff]
    %v8978 = vld [vmem:[%s4 + $0xe0] sm:$0xff]
    %v8979 = vld [vmem:[%s4 + $0xe8] sm:$0xff]
    %v8980 = vld [vmem:[%s4 + $0xf0] sm:$0xff]
    %v8981 = vld [vmem:[%s4 + $0xf8] sm:$0xff]
    %v8982 = vld [vmem:[%s4 + $0x100] sm:$0xff]
    %v8983 = vld [vmem:[%s4 + $0x108] sm:$0xff]
    %v8984 = vld [vmem:[%s4 + $0x110] sm:$0xff]
    %v8985 = vld [vmem:[%s4 + $0x118] sm:$0xff]
    %v8986 = vld [vmem:[%s4 + $0x120] sm:$0xff]
    %v8987 = vld [vmem:[%s4 + $0x128] sm:$0xff]
    %v8988 = vld [vmem:[%s4 + $0x130] sm:$0xff]
    %v8989 = vld [vmem:[%s4 + $0x138] sm:$0xff]
    %v8990 = vld [vmem:[%s4 + $0x140] sm:$0xff]
    %v8991 = vld [vmem:[%s4 + $0x148] sm:$0xff]
    %v8992 = vld [vmem:[%s4 + $0x150] sm:$0xff]
    %v8993 = vld [vmem:[%s4 + $0x158] sm:$0xff]
    %v8994 = vld [vmem:[%s4 + $0x160] sm:$0xff]
    %v8995 = vld [vmem:[%s4 + $0x168] sm:$0xff]
    %v8996 = vld [vmem:[%s4 + $0x170] sm:$0xff]
    %v8997 = vld [vmem:[%s4 + $0x178] sm:$0xff]
    %v8998 = vld [vmem:[%s4 + $0x180] sm:$0xff]
    %v8999 = vld [vmem:[%s4 + $0x188] sm:$0xff]
    %v9000 = vld [vmem:[%s4 + $0x190] sm:$0xff]
    %v9001 = vld [vmem:[%s4 + $0x198] sm:$0xff]
    %v9002 = vld [vmem:[%s4 + $0x1a0] sm:$0xff]
    %v9003 = vld [vmem:[%s4 + $0x1a8] sm:$0xff]
    %v9004 = vld [vmem:[%s4 + $0x1b0] sm:$0xff]
    %v9005 = vld [vmem:[%s4 + $0x1b8] sm:$0xff]
    %v9006 = vld [vmem:[%s4 + $0x1c0] sm:$0xff]
    %v9007 = vld [vmem:[%s4 + $0x1c8] sm:$0xff]
    %v9008 = vld [vmem:[%s4 + $0x1d0] sm:$0xff]
    %v9009 = vld [vmem:[%s4 + $0x1d8] sm:$0xff]
    %v9010 = vld [vmem:[%s4 + $0x1e0] sm:$0xff]
    %v9011 = vld [vmem:[%s4 + $0x1e8] sm:$0xff]
    %v9012 = vld [vmem:[%s4 + $0x1f0] sm:$0xff]
    %v9013 = vld [vmem:[%s4 + $0x1f8] sm:$0xff]
    %v9016 = vrot.slane %v8816, 7
    %v9017 = vrot.slane %v8817, 7
    %9020 = vmatpush.msra.mxu0 %v8997
    %9021 = vmatpush.msra.mxu0 %v8996
    %9022 = vmatpush.msra.mxu0 %v8995
    %9023 = vmatpush.msra.mxu0 %v8994
    %9024 = vmatpush.msra.mxu0 %v8993
    %9025 = vmatpush.msra.mxu0 %v8992
    %9026 = vmatpush.msra.mxu0 %v8991
    %9027 = vmatpush.msra.mxu0 %v8990
    %9028 = vmatpush.msra.mxu0 %v8989
    %9029 = vmatpush.msra.mxu0 %v8988
    %9030 = vmatpush.msra.mxu0 %v8987
    %9031 = vmatpush.msra.mxu0 %v8986
    %9032 = vmatpush.msra.mxu0 %v8985
    %9033 = vmatpush.msra.mxu0 %v8984
    %9034 = vmatpush.msra.mxu0 %v8983
    %9035 = vmatpush.msra.mxu0 %v8982
    %9036 = vmatmul.f32.gmra.mxu0 %v9016
    %v9037 = vpop.f32.mrf.mxu0
    %v9038 = vadd.f32 0.0, %v9037
    %9039 = vdwg.mxu0
    %9040 = vmatpush.msra.mxu0 %v9013
    %9041 = vmatpush.msra.mxu0 %v9012
    %9042 = vmatpush.msra.mxu0 %v9011
    %9043 = vmatpush.msra.mxu0 %v9010
    %9044 = vmatpush.msra.mxu0 %v9009
    %9045 = vmatpush.msra.mxu0 %v9008
    %9046 = vmatpush.msra.mxu0 %v9007
    %9047 = vmatpush.msra.mxu0 %v9006
    %9048 = vmatpush.msra.mxu0 %v9005
    %9049 = vmatpush.msra.mxu0 %v9004
    %9050 = vmatpush.msra.mxu0 %v9003
    %9051 = vmatpush.msra.mxu0 %v9002
    %9052 = vmatpush.msra.mxu0 %v9001
    %9053 = vmatpush.msra.mxu0 %v9000
    %9054 = vmatpush.msra.mxu0 %v8999
    %9055 = vmatpush.msra.mxu0 %v8998
    %9056 = vmatmul.f32.gmra.mxu0 %v9017
    %v9057 = vpop.f32.mrf.mxu0
    %v9058 = vadd.f32 %v9038, %v9057
    %9059 = vdwg.mxu0
    %v9060 = vrot.slane %v8816, 6
    %v9061 = vrot.slane %v8817, 6
    %9064 = vmatpush.msra.mxu0 %v8965
    %9065 = vmatpush.msra.mxu0 %v8964
    %9066 = vmatpush.msra.mxu0 %v8963
    %9067 = vmatpush.msra.mxu0 %v8962
    %9068 = vmatpush.msra.mxu0 %v8961
    %9069 = vmatpush.msra.mxu0 %v8960
    %9070 = vmatpush.msra.mxu0 %v8959
    %9071 = vmatpush.msra.mxu0 %v8958
    %9072 = vmatpush.msra.mxu0 %v8957
    %9073 = vmatpush.msra.mxu0 %v8956
    %9074 = vmatpush.msra.mxu0 %v8955
    %9075 = vmatpush.msra.mxu0 %v8954
    %9076 = vmatpush.msra.mxu0 %v8953
    %9077 = vmatpush.msra.mxu0 %v8952
    %9078 = vmatpush.msra.mxu0 %v8951
    %9079 = vmatpush.msra.mxu0 %v8950
    %9080 = vmatmul.f32.gmra.mxu0 %v9060
    %v9081 = vpop.f32.mrf.mxu0
    %v9082 = vadd.f32 %v9058, %v9081
    %9083 = vdwg.mxu0
    %9084 = vmatpush.msra.mxu0 %v8981
    %9085 = vmatpush.msra.mxu0 %v8980
    %9086 = vmatpush.msra.mxu0 %v8979
    %9087 = vmatpush.msra.mxu0 %v8978
    %9088 = vmatpush.msra.mxu0 %v8977
    %9089 = vmatpush.msra.mxu0 %v8976
    %9090 = vmatpush.msra.mxu0 %v8975
    %9091 = vmatpush.msra.mxu0 %v8974
    %9092 = vmatpush.msra.mxu0 %v8973
    %9093 = vmatpush.msra.mxu0 %v8972
    %9094 = vmatpush.msra.mxu0 %v8971
    %9095 = vmatpush.msra.mxu0 %v8970
    %9096 = vmatpush.msra.mxu0 %v8969
    %9097 = vmatpush.msra.mxu0 %v8968
    %9098 = vmatpush.msra.mxu0 %v8967
    %9099 = vmatpush.msra.mxu0 %v8966
    %9100 = vmatmul.f32.gmra.mxu0 %v9061
    %v9101 = vpop.f32.mrf.mxu0
    %v9102 = vadd.f32 %v9082, %v9101
    %9103 = vdwg.mxu0
    %v9104 = vld [vmem:[#allocation11] sm:$0x1]
    %v9105 = vadd.f32 %v9102, %v9104
    %vm9106 = vcmask 73728
    %9107 = vst.msk [vmem:[#allocation12] sm:$0x1] %vm9106, %v9105
    %v9108 = vld [vmem:[%s4] sm:$0xff]
    %v9109 = vld [vmem:[%s4 + $0x8] sm:$0xff]
    %v9110 = vld [vmem:[%s4 + $0x10] sm:$0xff]
    %v9111 = vld [vmem:[%s4 + $0x18] sm:$0xff]
    %v9112 = vld [vmem:[%s4 + $0x20] sm:$0xff]
    %v9113 = vld [vmem:[%s4 + $0x28] sm:$0xff]
    %v9114 = vld [vmem:[%s4 + $0x30] sm:$0xff]
    %v9115 = vld [vmem:[%s4 + $0x38] sm:$0xff]
    %v9116 = vld [vmem:[%s4 + $0x40] sm:$0xff]
    %v9117 = vld [vmem:[%s4 + $0x48] sm:$0xff]
    %v9118 = vld [vmem:[%s4 + $0x50] sm:$0xff]
    %v9119 = vld [vmem:[%s4 + $0x58] sm:$0xff]
    %v9120 = vld [vmem:[%s4 + $0x60] sm:$0xff]
    %v9121 = vld [vmem:[%s4 + $0x68] sm:$0xff]
    %v9122 = vld [vmem:[%s4 + $0x70] sm:$0xff]
    %v9123 = vld [vmem:[%s4 + $0x78] sm:$0xff]
    %v9124 = vld [vmem:[%s4 + $0x80] sm:$0xff]
    %v9125 = vld [vmem:[%s4 + $0x88] sm:$0xff]
    %v9126 = vld [vmem:[%s4 + $0x90] sm:$0xff]
    %v9127 = vld [vmem:[%s4 + $0x98] sm:$0xff]
    %v9128 = vld [vmem:[%s4 + $0xa0] sm:$0xff]
    %v9129 = vld [vmem:[%s4 + $0xa8] sm:$0xff]
    %v9130 = vld [vmem:[%s4 + $0xb0] sm:$0xff]
    %v9131 = vld [vmem:[%s4 + $0xb8] sm:$0xff]
    %v9132 = vld [vmem:[%s4 + $0xc0] sm:$0xff]
    %v9133 = vld [vmem:[%s4 + $0xc8] sm:$0xff]
    %v9134 = vld [vmem:[%s4 + $0xd0] sm:$0xff]
    %v9135 = vld [vmem:[%s4 + $0xd8] sm:$0xff]
    %v9136 = vld [vmem:[%s4 + $0xe0] sm:$0xff]
    %v9137 = vld [vmem:[%s4 + $0xe8] sm:$0xff]
    %v9138 = vld [vmem:[%s4 + $0xf0] sm:$0xff]
    %v9139 = vld [vmem:[%s4 + $0xf8] sm:$0xff]
    %v9140 = vld [vmem:[%s4 + $0x100] sm:$0xff]
    %v9141 = vld [vmem:[%s4 + $0x108] sm:$0xff]
    %v9142 = vld [vmem:[%s4 + $0x110] sm:$0xff]
    %v9143 = vld [vmem:[%s4 + $0x118] sm:$0xff]
    %v9144 = vld [vmem:[%s4 + $0x120] sm:$0xff]
    %v9145 = vld [vmem:[%s4 + $0x128] sm:$0xff]
    %v9146 = vld [vmem:[%s4 + $0x130] sm:$0xff]
    %v9147 = vld [vmem:[%s4 + $0x138] sm:$0xff]
    %v9148 = vld [vmem:[%s4 + $0x140] sm:$0xff]
    %v9149 = vld [vmem:[%s4 + $0x148] sm:$0xff]
    %v9150 = vld [vmem:[%s4 + $0x150] sm:$0xff]
    %v9151 = vld [vmem:[%s4 + $0x158] sm:$0xff]
    %v9152 = vld [vmem:[%s4 + $0x160] sm:$0xff]
    %v9153 = vld [vmem:[%s4 + $0x168] sm:$0xff]
    %v9154 = vld [vmem:[%s4 + $0x170] sm:$0xff]
    %v9155 = vld [vmem:[%s4 + $0x178] sm:$0xff]
    %v9156 = vld [vmem:[%s4 + $0x180] sm:$0xff]
    %v9157 = vld [vmem:[%s4 + $0x188] sm:$0xff]
    %v9158 = vld [vmem:[%s4 + $0x190] sm:$0xff]
    %v9159 = vld [vmem:[%s4 + $0x198] sm:$0xff]
    %v9160 = vld [vmem:[%s4 + $0x1a0] sm:$0xff]
    %v9161 = vld [vmem:[%s4 + $0x1a8] sm:$0xff]
    %v9162 = vld [vmem:[%s4 + $0x1b0] sm:$0xff]
    %v9163 = vld [vmem:[%s4 + $0x1b8] sm:$0xff]
    %v9164 = vld [vmem:[%s4 + $0x1c0] sm:$0xff]
    %v9165 = vld [vmem:[%s4 + $0x1c8] sm:$0xff]
    %v9166 = vld [vmem:[%s4 + $0x1d0] sm:$0xff]
    %v9167 = vld [vmem:[%s4 + $0x1d8] sm:$0xff]
    %v9168 = vld [vmem:[%s4 + $0x1e0] sm:$0xff]
    %v9169 = vld [vmem:[%s4 + $0x1e8] sm:$0xff]
    %v9170 = vld [vmem:[%s4 + $0x1f0] sm:$0xff]
    %v9171 = vld [vmem:[%s4 + $0x1f8] sm:$0xff]
    %v9174 = vrot.slane %v8948, 1
    %v9175 = vrot.slane %v8949, 1
    %9178 = vmatpush.msra.mxu0 %v9155
    %9179 = vmatpush.msra.mxu0 %v9154
    %9180 = vmatpush.msra.mxu0 %v9153
    %9181 = vmatpush.msra.mxu0 %v9152
    %9182 = vmatpush.msra.mxu0 %v9151
    %9183 = vmatpush.msra.mxu0 %v9150
    %9184 = vmatpush.msra.mxu0 %v9149
    %9185 = vmatpush.msra.mxu0 %v9148
    %9186 = vmatpush.msra.mxu0 %v9147
    %9187 = vmatpush.msra.mxu0 %v9146
    %9188 = vmatpush.msra.mxu0 %v9145
    %9189 = vmatpush.msra.mxu0 %v9144
    %9190 = vmatpush.msra.mxu0 %v9143
    %9191 = vmatpush.msra.mxu0 %v9142
    %9192 = vmatpush.msra.mxu0 %v9141
    %9193 = vmatpush.msra.mxu0 %v9140
    %9194 = vmatmul.f32.gmra.mxu0 %v9174
    %v9195 = vpop.f32.mrf.mxu0
    %v9196 = vadd.f32 0.0, %v9195
    %9197 = vdwg.mxu0
    %9198 = vmatpush.msra.mxu0 %v9171
    %9199 = vmatpush.msra.mxu0 %v9170
    %9200 = vmatpush.msra.mxu0 %v9169
    %9201 = vmatpush.msra.mxu0 %v9168
    %9202 = vmatpush.msra.mxu0 %v9167
    %9203 = vmatpush.msra.mxu0 %v9166
    %9204 = vmatpush.msra.mxu0 %v9165
    %9205 = vmatpush.msra.mxu0 %v9164
    %9206 = vmatpush.msra.mxu0 %v9163
    %9207 = vmatpush.msra.mxu0 %v9162
    %9208 = vmatpush.msra.mxu0 %v9161
    %9209 = vmatpush.msra.mxu0 %v9160
    %9210 = vmatpush.msra.mxu0 %v9159
    %9211 = vmatpush.msra.mxu0 %v9158
    %9212 = vmatpush.msra.mxu0 %v9157
    %9213 = vmatpush.msra.mxu0 %v9156
    %9214 = vmatmul.f32.gmra.mxu0 %v9175
    %v9215 = vpop.f32.mrf.mxu0
    %v9216 = vadd.f32 %v9196, %v9215
    %9217 = vdwg.mxu0
    %9218 = vmatpush.msra.mxu0 %v9123
    %9219 = vmatpush.msra.mxu0 %v9122
    %9220 = vmatpush.msra.mxu0 %v9121
    %9221 = vmatpush.msra.mxu0 %v9120
    %9222 = vmatpush.msra.mxu0 %v9119
    %9223 = vmatpush.msra.mxu0 %v9118
    %9224 = vmatpush.msra.mxu0 %v9117
    %9225 = vmatpush.msra.mxu0 %v9116
    %9226 = vmatpush.msra.mxu0 %v9115
    %9227 = vmatpush.msra.mxu0 %v9114
    %9228 = vmatpush.msra.mxu0 %v9113
    %9229 = vmatpush.msra.mxu0 %v9112
    %9230 = vmatpush.msra.mxu0 %v9111
    %9231 = vmatpush.msra.mxu0 %v9110
    %9232 = vmatpush.msra.mxu0 %v9109
    %9233 = vmatpush.msra.mxu0 %v9108
    %9234 = vmatmul.f32.gmra.mxu0 %v8948
    %v9235 = vpop.f32.mrf.mxu0
    %v9236 = vadd.f32 %v9216, %v9235
    %9237 = vdwg.mxu0
    %9238 = vmatpush.msra.mxu0 %v9139
    %9239 = vmatpush.msra.mxu0 %v9138
    %9240 = vmatpush.msra.mxu0 %v9137
    %9241 = vmatpush.msra.mxu0 %v9136
    %9242 = vmatpush.msra.mxu0 %v9135
    %9243 = vmatpush.msra.mxu0 %v9134
    %9244 = vmatpush.msra.mxu0 %v9133
    %9245 = vmatpush.msra.mxu0 %v9132
    %9246 = vmatpush.msra.mxu0 %v9131
    %9247 = vmatpush.msra.mxu0 %v9130
    %9248 = vmatpush.msra.mxu0 %v9129
    %9249 = vmatpush.msra.mxu0 %v9128
    %9250 = vmatpush.msra.mxu0 %v9127
    %9251 = vmatpush.msra.mxu0 %v9126
    %9252 = vmatpush.msra.mxu0 %v9125
    %9253 = vmatpush.msra.mxu0 %v9124
    %9254 = vmatmul.f32.gmra.mxu0 %v8949
    %v9255 = vpop.f32.mrf.mxu0
    %v9256 = vadd.f32 %v9236, %v9255
    %9257 = vdwg.mxu0
    %v9258 = vld [vmem:[#allocation11] sm:$0x1]
    %v9259 = vadd.f32 %v9256, %v9258
    %9260 = vst.msk [vmem:[#allocation12 + $0x1] sm:$0x1] %vm9106, %v9259
    // Predicated region
    $region46: #{tpu_custom_call.1} parent=1 // pred_check
      _
    $region47: #{tpu_custom_call.1} parent=1 // pred_check_branch
      %9262 = sbr.rel (0) target = $region49
    $region48: #{tpu_custom_call.1} parent=1 // pred_region
      %9264 = vsyncadd [#allocation5], 0
      %s9266 = sshll.u32 [#allocation12], 4
      %s9267 = int_to_ptr.vmem [resolvable:$true] %s9266
      %s9268 = sshll.u32 %s6, 4
      %s9269 = int_to_ptr.hbm [resolvable:$true] %s9268
      %9271 = dma.vmem_to_hbm [thread:$0]  %s9267, 32, %s9269, [#allocation5]
    $region49: #{tpu_custom_call.1} parent=1 // pred_fallthru
      _
    // Predicated region
    $region50: #{tpu_custom_call.1} parent=1 // pred_check
      _
    $region51: #{tpu_custom_call.1} parent=1 // pred_check_branch
      %9273 = sbr.rel (0) target = $region53
    $region52: #{tpu_custom_call.1} parent=1 // pred_region
      %9275 = dma.done [#allocation5], 32
    $region53: #{tpu_custom_call.1} parent=1 // pred_fallthru
      _
    %9276 = vsyncpa [#allocation4], 1
    %9277 = vsyncpa [#allocation7], 1
    %9278 = vsyncpa [#allocation10], 1
    %9279 = vsyncpa [#allocation5], 1

</llo_original>
